<compile_context>
chip_gen: v7x
topology: tpu7x:2x2x1
jax: 0.10.0
libtpu: 0.0.40
codegen_flags: <defaults>
</compile_context>

<pallas_src>
import jax
import jax.numpy as jnp
from jax.experimental import pallas as pl
from jax.experimental.pallas import tpu as pltpu

NUM_VOCAB = 1000
EMBED_DIM = 256
PAD_IDX = 0
REGION_K = 3
CNN_CH = 256
CNN_K = 3
NUM_CLASSES = 2
NPAD = 128  # lane-dense padded logits width


def dpcnn_kernel(emb_ref, wr_ref, br_ref, wc_ref, bc_ref, wf_ref, bf_ref,
                 se_ref, so_ref, probs_ref, rep_ref, pad_ref):
    T, E = emb_ref.shape
    C = wc_ref.shape[-1]

    br = br_ref[...]          # (1, C)  hoisted biases
    bc = bc_ref[...]          # (1, C)
    zrow = jnp.zeros((1, C), jnp.float32)

    def conv_k3(x0, x1, x2, w_ref, b):
        # y[t] = x0[t] @ W0 + x1[t] @ W1 + x2[t] @ W2 + b
        return (jnp.dot(x0, w_ref[0], preferred_element_type=jnp.float32)
                + jnp.dot(x1, w_ref[1], preferred_element_type=jnp.float32)
                + jnp.dot(x2, w_ref[2], preferred_element_type=jnp.float32)
                + b)

    def conv_same(x):
        # zero-pad (1, 1) along time, then the shared k=3 conv -> same length.
        L = x.shape[0]
        pad_ref[0:1, :] = zrow
        pad_ref[L + 1:L + 2, :] = zrow
        pad_ref[1:L + 1, :] = x
        return conv_k3(pad_ref[0:L, :], pad_ref[1:L + 1, :],
                       pad_ref[2:L + 2, :], wc_ref, bc)

    # --- region embedding conv (valid, k=3): (T, E) -> (T-2, C) ---
    yr = conv_k3(emb_ref[0:T - 2, :], emb_ref[1:T - 1, :], emb_ref[2:T, :],
                 wr_ref, br)

    # --- padding1 = ConstantPad1d((1, 1), 0) -> (T, C) ---
    pad_ref[0:1, :] = zrow
    pad_ref[T - 1:T, :] = zrow
    pad_ref[1:T - 1, :] = yr
    embp = pad_ref[0:T, :]

    # --- conv = embp + cnn(relu(cnn(relu(embp)))) ---
    h = conv_same(jnp.maximum(embp, 0.0))
    h = conv_same(jnp.maximum(h, 0.0))
    x = embp + h                                   # (T, C)

    # --- repeat-block pyramid, fully unrolled (lengths are static) ---
    L = T
    while L >= 2:
        M = (L + 1) // 2
        se = se_ref[0:M, 0:L]                      # selects rows 2t
        so = so_ref[0:M, 0:L]                      # selects rows 2t+1 (0 if past pad)
        px = jnp.maximum(
            jnp.dot(se, x, preferred_element_type=jnp.float32),
            jnp.dot(so, x, preferred_element_type=jnp.float32))   # maxpool k=2
        h = conv_same(jnp.maximum(px, 0.0))
        h = conv_same(jnp.maximum(h, 0.0))
        x = px + h                                 # (M, C)
        L = M

    rep = x                                        # (1, C)
    rep_ref[...] = rep

    logits = (jnp.dot(rep, wf_ref[...], preferred_element_type=jnp.float32)
              + bf_ref[...])                       # (1, 128), padded cols ~ -1e30
    m = jnp.max(logits, axis=-1, keepdims=True)
    e = jnp.exp(logits - m)
    probs_ref[...] = e / jnp.sum(e, axis=-1, keepdims=True)


def init_params(key):
    ks = jax.random.split(key, 7)
    emb = jax.random.normal(ks[0], (NUM_VOCAB, EMBED_DIM), jnp.float32) * 0.1
    emb = emb.at[PAD_IDX, :].set(0.0)              # padding_idx row, like nn.Embedding
    kr = (EMBED_DIM * REGION_K) ** -0.5
    kc = (CNN_CH * CNN_K) ** -0.5
    kf = CNN_CH ** -0.5
    u = jax.random.uniform
    return {
        "embedding": emb,
        "region_w": u(ks[1], (CNN_CH, EMBED_DIM, REGION_K), jnp.float32, -kr, kr),
        "region_b": u(ks[2], (CNN_CH,), jnp.float32, -kr, kr),
        "cnn_w":    u(ks[3], (CNN_CH, CNN_CH, CNN_K), jnp.float32, -kc, kc),
        "cnn_b":    u(ks[4], (CNN_CH,), jnp.float32, -kc, kc),
        "fc_w":     u(ks[5], (NUM_CLASSES, CNN_CH), jnp.float32, -kf, kf),
        "fc_b":     u(ks[6], (NUM_CLASSES,), jnp.float32, -kf, kf),
    }


def dpcnn_forward(x_ids, params):
    emb = jnp.take(params["embedding"], x_ids, axis=0)        # (B, T, E)
    B, T, E = emb.shape
    C = CNN_CH
    L0 = T                       # length after region conv (T-2) + padding1 (1,1)
    Mmax = (L0 + 1) // 2

    # Conv1d weights (C_out, C_in, K) -> (K, C_in, C_out) so conv is x @ W_k.
    wr = jnp.transpose(params["region_w"], (2, 1, 0)).astype(jnp.float32)
    br = params["region_b"].reshape(1, C).astype(jnp.float32)
    wc = jnp.transpose(params["cnn_w"], (2, 1, 0)).astype(jnp.float32)
    bc = params["cnn_b"].reshape(1, C).astype(jnp.float32)

    # fc padded to 128 lanes; padded bias columns -1e30 so softmax ignores them.
    wf = jnp.zeros((C, NPAD), jnp.float32).at[:, :NUM_CLASSES].set(params["fc_w"].T)
    bf = jnp.full((1, NPAD), -1e30, jnp.float32).at[0, :NUM_CLASSES].set(params["fc_b"])

    # Max-pool selection matrices (shared across pyramid levels via slicing).
    rows = jnp.arange(Mmax)[:, None]
    cols = jnp.arange(L0)[None, :]
    s_even = (cols == 2 * rows).astype(jnp.float32)
    s_odd = (cols == 2 * rows + 1).astype(jnp.float32)

    def full_spec(shape):
        zeros = (0,) * len(shape)
        return pl.BlockSpec(shape, lambda b: zeros)

    probs_pad, rep = pl.pallas_call(
        dpcnn_kernel,
        out_shape=(
            jax.ShapeDtypeStruct((B, 1, NPAD), jnp.float32),
            jax.ShapeDtypeStruct((B, 1, C), jnp.float32),
        ),
        grid=(B,),
        in_specs=[
            pl.BlockSpec((None, T, E), lambda b: (b, 0, 0)),
            full_spec((3, E, C)), full_spec((1, C)),
            full_spec((3, C, C)), full_spec((1, C)),
            full_spec((C, NPAD)), full_spec((1, NPAD)),
            full_spec((Mmax, L0)), full_spec((Mmax, L0)),
        ],
        out_specs=(
            pl.BlockSpec((None, 1, NPAD), lambda b: (b, 0, 0)),
            pl.BlockSpec((None, 1, C), lambda b: (b, 0, 0)),
        ),
        scratch_shapes=[pltpu.VMEM((L0 + 2, C), jnp.float32)],
        compiler_params=pltpu.CompilerParams(
            dimension_semantics=("parallel",)),
    )(emb.astype(jnp.float32), wr, br, wc, bc, wf, bf, s_even, s_odd)

    out = probs_pad[:, 0, :NUM_CLASSES]
    representation = rep[:, 0, :]
    return out, representation


def dpcnn_reference(x_ids, params):
    # Pure-JAX mirror of the PyTorch module (for numerical verification).
    hp = jax.lax.Precision.HIGHEST
    emb = jnp.take(params["embedding"], x_ids, axis=0)        # (B, T, E)
    wr = jnp.transpose(params["region_w"], (2, 1, 0))
    wc = jnp.transpose(params["cnn_w"], (2, 1, 0))

    def conv1d(x, w, b, pad):
        if pad:
            x = jnp.pad(x, ((0, 0), (1, 1), (0, 0)))
        L = x.shape[1] - 2
        y = sum(jnp.einsum("blc,cd->bld", x[:, j:j + L], w[j], precision=hp)
                for j in range(3))
        return y + b

    y = conv1d(emb, wr, params["region_b"], pad=False)        # region_cnn
    y = jnp.pad(y, ((0, 0), (1, 1), (0, 0)))                  # padding1

    def block1(x):
        return conv1d(jax.nn.relu(x), wc, params["cnn_b"], pad=True)

    x = y + block1(block1(y))
    while x.shape[1] >= 2:
        L = x.shape[1]
        M = (L + 1) // 2
        xp = jnp.pad(x, ((0, 0), (0, 1), (0, 0)))             # padding2
        px = jnp.max(xp[:, :2 * M].reshape(x.shape[0], M, 2, x.shape[2]), axis=2)
        h = conv1d(jax.nn.relu(px), wc, params["cnn_b"], pad=True)
        h = conv1d(jax.nn.relu(h), wc, params["cnn_b"], pad=True)
        x = px + h
    rep = x[:, 0, :]
    logits = jnp.dot(rep, params["fc_w"].T, precision=hp) + params["fc_b"]
    return jax.nn.softmax(logits, axis=-1), rep


if __name__ == "__main__":
    key = jax.random.PRNGKey(0)
    pkey, xkey = jax.random.split(key)
    params = init_params(pkey)

    B, T = 2, 16
    x_ids = jax.random.randint(xkey, (B, T), 0, NUM_VOCAB, dtype=jnp.int32)

    out, representation = jax.jit(dpcnn_forward)(x_ids, params)
    jax.block_until_ready((out, representation))

    assert out.shape == (B, NUM_CLASSES)
    assert representation.shape == (B, CNN_CH)

    out_expected, rep_expected = jax.jit(dpcnn_reference)(x_ids, params)
    jax.block_until_ready((out_expected, rep_expected))
    assert jnp.allclose(out, out_expected, rtol=1e-2, atol=1e-2)
    assert jnp.allclose(representation, rep_expected, rtol=1e-2, atol=1e-2)
    assert jnp.allclose(jnp.sum(out, axis=-1), 1.0, atol=1e-3)

    print("KERNEL_OK")
</pallas_src>

<mosaic_0001>
module attributes {stable_mosaic.version = 11 : i64} {
  func.func @dpcnn_kernel(%arg0: i32, %arg1: memref<1x16x256xf32, #tpu.memory_space<vmem>>, %arg2: memref<3x256x256xf32, #tpu.memory_space<vmem>>, %arg3: memref<1x256xf32, #tpu.memory_space<vmem>>, %arg4: memref<3x256x256xf32, #tpu.memory_space<vmem>>, %arg5: memref<1x256xf32, #tpu.memory_space<vmem>>, %arg6: memref<256x128xf32, #tpu.memory_space<vmem>>, %arg7: memref<1x128xf32, #tpu.memory_space<vmem>>, %arg8: memref<8x16xf32, #tpu.memory_space<vmem>>, %arg9: memref<8x16xf32, #tpu.memory_space<vmem>>, %arg10: memref<1x1x128xf32, #tpu.memory_space<vmem>>, %arg11: memref<1x1x256xf32, #tpu.memory_space<vmem>>, %arg12: memref<18x256xf32, #tpu.memory_space<vmem>>) attributes {dimension_semantics = [#tpu.dimension_semantics<parallel>], iteration_bounds = array<i64: 2>, scalar_prefetch = 0 : i64, scratch_operands = 1 : i64, tpu.core_type = #tpu.core_type<tc>, window_params = [{transform_indices = @transform_0, window_bounds = array<i64: 1, 16, 256>}, {pipeline_mode = #tpu.pipeline_mode<synchronous>, transform_indices = @transform_1, window_bounds = array<i64: 3, 256, 256>}, {pipeline_mode = #tpu.pipeline_mode<synchronous>, transform_indices = @transform_2, window_bounds = array<i64: 1, 256>}, {pipeline_mode = #tpu.pipeline_mode<synchronous>, transform_indices = @transform_3, window_bounds = array<i64: 3, 256, 256>}, {pipeline_mode = #tpu.pipeline_mode<synchronous>, transform_indices = @transform_4, window_bounds = array<i64: 1, 256>}, {pipeline_mode = #tpu.pipeline_mode<synchronous>, transform_indices = @transform_5, window_bounds = array<i64: 256, 128>}, {pipeline_mode = #tpu.pipeline_mode<synchronous>, transform_indices = @transform_6, window_bounds = array<i64: 1, 128>}, {pipeline_mode = #tpu.pipeline_mode<synchronous>, transform_indices = @transform_7, window_bounds = array<i64: 8, 16>}, {pipeline_mode = #tpu.pipeline_mode<synchronous>, transform_indices = @transform_8, window_bounds = array<i64: 8, 16>}, {transform_indices = @transform_9, window_bounds = array<i64: 1, 1, 128>}, {transform_indices = @transform_10, window_bounds = array<i64: 1, 1, 256>}]} {
    %c0 = arith.constant 0 : index
    %c0_0 = arith.constant 0 : index
    %0 = vector.load %arg3[%c0, %c0_0] : memref<1x256xf32, #tpu.memory_space<vmem>>, vector<1x256xf32>
    %c0_1 = arith.constant 0 : index
    %c0_2 = arith.constant 0 : index
    %1 = vector.load %arg5[%c0_1, %c0_2] : memref<1x256xf32, #tpu.memory_space<vmem>>, vector<1x256xf32>
    %cst = arith.constant 0.000000e+00 : f32
    %2 = vector.broadcast %cst : f32 to vector<1x256xf32>
    %c0_3 = arith.constant 0 : index
    %c0_4 = arith.constant 0 : index
    %c0_5 = arith.constant 0 : index
    %3 = vector.load %arg1[%c0_3, %c0_4, %c0_5] : memref<1x16x256xf32, #tpu.memory_space<vmem>>, vector<1x14x256xf32>
    %4 = vector.shape_cast %3 : vector<1x14x256xf32> to vector<14x256xf32>
    %c0_6 = arith.constant 0 : index
    %c1 = arith.constant 1 : index
    %c0_7 = arith.constant 0 : index
    %5 = vector.load %arg1[%c0_6, %c1, %c0_7] : memref<1x16x256xf32, #tpu.memory_space<vmem>>, vector<1x14x256xf32>
    %6 = vector.shape_cast %5 : vector<1x14x256xf32> to vector<14x256xf32>
    %c0_8 = arith.constant 0 : index
    %c2 = arith.constant 2 : index
    %c0_9 = arith.constant 0 : index
    %7 = vector.load %arg1[%c0_8, %c2, %c0_9] : memref<1x16x256xf32, #tpu.memory_space<vmem>>, vector<1x14x256xf32>
    %8 = vector.shape_cast %7 : vector<1x14x256xf32> to vector<14x256xf32>
    %c0_10 = arith.constant 0 : index
    %c0_11 = arith.constant 0 : index
    %c0_12 = arith.constant 0 : index
    %9 = vector.load %arg2[%c0_10, %c0_11, %c0_12] : memref<3x256x256xf32, #tpu.memory_space<vmem>>, vector<1x256x256xf32>
    %10 = vector.shape_cast %9 : vector<1x256x256xf32> to vector<256x256xf32>
    %cst_13 = arith.constant dense<0.000000e+00> : vector<14x256xf32>
    %11 = tpu.matmul %4, %10, %cst_13 {dimension_numbers = #tpu.dot_dimension_numbers<[1], [0], [0], [1], [0, 0, 1, 1], [], []>} : vector<14x256xf32>, vector<256x256xf32>, vector<14x256xf32> -> vector<14x256xf32>
    %c1_14 = arith.constant 1 : index
    %c0_15 = arith.constant 0 : index
    %c0_16 = arith.constant 0 : index
    %12 = vector.load %arg2[%c1_14, %c0_15, %c0_16] : memref<3x256x256xf32, #tpu.memory_space<vmem>>, vector<1x256x256xf32>
    %13 = vector.shape_cast %12 : vector<1x256x256xf32> to vector<256x256xf32>
    %cst_17 = arith.constant dense<0.000000e+00> : vector<14x256xf32>
    %14 = tpu.matmul %6, %13, %cst_17 {dimension_numbers = #tpu.dot_dimension_numbers<[1], [0], [0], [1], [0, 0, 1, 1], [], []>} : vector<14x256xf32>, vector<256x256xf32>, vector<14x256xf32> -> vector<14x256xf32>
    %15 = arith.addf %11, %14 : vector<14x256xf32>
    %c2_18 = arith.constant 2 : index
    %c0_19 = arith.constant 0 : index
    %c0_20 = arith.constant 0 : index
    %16 = vector.load %arg2[%c2_18, %c0_19, %c0_20] : memref<3x256x256xf32, #tpu.memory_space<vmem>>, vector<1x256x256xf32>
    %17 = vector.shape_cast %16 : vector<1x256x256xf32> to vector<256x256xf32>
    %cst_21 = arith.constant dense<0.000000e+00> : vector<14x256xf32>
    %18 = tpu.matmul %8, %17, %cst_21 {dimension_numbers = #tpu.dot_dimension_numbers<[1], [0], [0], [1], [0, 0, 1, 1], [], []>} : vector<14x256xf32>, vector<256x256xf32>, vector<14x256xf32> -> vector<14x256xf32>
    %19 = arith.addf %15, %18 : vector<14x256xf32>
    %20 = vector.broadcast %0 : vector<1x256xf32> to vector<14x256xf32>
    %21 = arith.addf %19, %20 : vector<14x256xf32>
    %c0_22 = arith.constant 0 : index
    %c0_23 = arith.constant 0 : index
    %22 = vector.load %arg12[%c0_22, %c0_23] : memref<18x256xf32, #tpu.memory_space<vmem>>, vector<1x256xf32>
    tpu.vector_store %arg12[%c0_22, %c0_23], %2 {strides = array<i32>} : memref<18x256xf32, #tpu.memory_space<vmem>>, vector<1x256xf32>,
    %c15 = arith.constant 15 : index
    %c0_24 = arith.constant 0 : index
    %23 = vector.load %arg12[%c15, %c0_24] : memref<18x256xf32, #tpu.memory_space<vmem>>, vector<1x256xf32>
    tpu.vector_store %arg12[%c15, %c0_24], %2 {strides = array<i32>} : memref<18x256xf32, #tpu.memory_space<vmem>>, vector<1x256xf32>,
    %c1_25 = arith.constant 1 : index
    %c0_26 = arith.constant 0 : index
    %24 = vector.load %arg12[%c1_25, %c0_26] : memref<18x256xf32, #tpu.memory_space<vmem>>, vector<14x256xf32>
    tpu.vector_store %arg12[%c1_25, %c0_26], %21 {strides = array<i32>} : memref<18x256xf32, #tpu.memory_space<vmem>>, vector<14x256xf32>,
    %c0_27 = arith.constant 0 : index
    %c0_28 = arith.constant 0 : index
    %25 = vector.load %arg12[%c0_27, %c0_28] : memref<18x256xf32, #tpu.memory_space<vmem>>, vector<16x256xf32>
    %cst_29 = arith.constant 0.000000e+00 : f32
    %26 = vector.broadcast %cst_29 : f32 to vector<16x256xf32>
    %27 = arith.maximumf %25, %26 : vector<16x256xf32>
    %c0_30 = arith.constant 0 : index
    %c0_31 = arith.constant 0 : index
    %28 = vector.load %arg12[%c0_30, %c0_31] : memref<18x256xf32, #tpu.memory_space<vmem>>, vector<1x256xf32>
    tpu.vector_store %arg12[%c0_30, %c0_31], %2 {strides = array<i32>} : memref<18x256xf32, #tpu.memory_space<vmem>>, vector<1x256xf32>,
    %c17 = arith.constant 17 : index
    %c0_32 = arith.constant 0 : index
    %29 = vector.load %arg12[%c17, %c0_32] : memref<18x256xf32, #tpu.memory_space<vmem>>, vector<1x256xf32>
    tpu.vector_store %arg12[%c17, %c0_32], %2 {strides = array<i32>} : memref<18x256xf32, #tpu.memory_space<vmem>>, vector<1x256xf32>,
    %c1_33 = arith.constant 1 : index
    %c0_34 = arith.constant 0 : index
    %30 = vector.load %arg12[%c1_33, %c0_34] : memref<18x256xf32, #tpu.memory_space<vmem>>, vector<16x256xf32>
    tpu.vector_store %arg12[%c1_33, %c0_34], %27 {strides = array<i32>} : memref<18x256xf32, #tpu.memory_space<vmem>>, vector<16x256xf32>,
    %c0_35 = arith.constant 0 : index
    %c0_36 = arith.constant 0 : index
    %31 = vector.load %arg12[%c0_35, %c0_36] : memref<18x256xf32, #tpu.memory_space<vmem>>, vector<16x256xf32>
    %c1_37 = arith.constant 1 : index
    %c0_38 = arith.constant 0 : index
    %32 = vector.load %arg12[%c1_37, %c0_38] : memref<18x256xf32, #tpu.memory_space<vmem>>, vector<16x256xf32>
    %c2_39 = arith.constant 2 : index
    %c0_40 = arith.constant 0 : index
    %33 = vector.load %arg12[%c2_39, %c0_40] : memref<18x256xf32, #tpu.memory_space<vmem>>, vector<16x256xf32>
    %c0_41 = arith.constant 0 : index
    %c0_42 = arith.constant 0 : index
    %c0_43 = arith.constant 0 : index
    %34 = vector.load %arg4[%c0_41, %c0_42, %c0_43] : memref<3x256x256xf32, #tpu.memory_space<vmem>>, vector<1x256x256xf32>
    %35 = vector.shape_cast %34 : vector<1x256x256xf32> to vector<256x256xf32>
    %cst_44 = arith.constant dense<0.000000e+00> : vector<16x256xf32>
    %36 = tpu.matmul %31, %35, %cst_44 {dimension_numbers = #tpu.dot_dimension_numbers<[1], [0], [0], [1], [0, 0, 1, 1], [], []>} : vector<16x256xf32>, vector<256x256xf32>, vector<16x256xf32> -> vector<16x256xf32>
    %c1_45 = arith.constant 1 : index
    %c0_46 = arith.constant 0 : index
    %c0_47 = arith.constant 0 : index
    %37 = vector.load %arg4[%c1_45, %c0_46, %c0_47] : memref<3x256x256xf32, #tpu.memory_space<vmem>>, vector<1x256x256xf32>
    %38 = vector.shape_cast %37 : vector<1x256x256xf32> to vector<256x256xf32>
    %cst_48 = arith.constant dense<0.000000e+00> : vector<16x256xf32>
    %39 = tpu.matmul %32, %38, %cst_48 {dimension_numbers = #tpu.dot_dimension_numbers<[1], [0], [0], [1], [0, 0, 1, 1], [], []>} : vector<16x256xf32>, vector<256x256xf32>, vector<16x256xf32> -> vector<16x256xf32>
    %40 = arith.addf %36, %39 : vector<16x256xf32>
    %c2_49 = arith.constant 2 : index
    %c0_50 = arith.constant 0 : index
    %c0_51 = arith.constant 0 : index
    %41 = vector.load %arg4[%c2_49, %c0_50, %c0_51] : memref<3x256x256xf32, #tpu.memory_space<vmem>>, vector<1x256x256xf32>
    %42 = vector.shape_cast %41 : vector<1x256x256xf32> to vector<256x256xf32>
    %cst_52 = arith.constant dense<0.000000e+00> : vector<16x256xf32>
    %43 = tpu.matmul %33, %42, %cst_52 {dimension_numbers = #tpu.dot_dimension_numbers<[1], [0], [0], [1], [0, 0, 1, 1], [], []>} : vector<16x256xf32>, vector<256x256xf32>, vector<16x256xf32> -> vector<16x256xf32>
    %44 = arith.addf %40, %43 : vector<16x256xf32>
    %45 = vector.broadcast %1 : vector<1x256xf32> to vector<16x256xf32>
    %46 = arith.addf %44, %45 : vector<16x256xf32>
    %cst_53 = arith.constant 0.000000e+00 : f32
    %47 = vector.broadcast %cst_53 : f32 to vector<16x256xf32>
    %48 = arith.maximumf %46, %47 : vector<16x256xf32>
    %c0_54 = arith.constant 0 : index
    %c0_55 = arith.constant 0 : index
    %49 = vector.load %arg12[%c0_54, %c0_55] : memref<18x256xf32, #tpu.memory_space<vmem>>, vector<1x256xf32>
    tpu.vector_store %arg12[%c0_54, %c0_55], %2 {strides = array<i32>} : memref<18x256xf32, #tpu.memory_space<vmem>>, vector<1x256xf32>,
    %c17_56 = arith.constant 17 : index
    %c0_57 = arith.constant 0 : index
    %50 = vector.load %arg12[%c17_56, %c0_57] : memref<18x256xf32, #tpu.memory_space<vmem>>, vector<1x256xf32>
    tpu.vector_store %arg12[%c17_56, %c0_57], %2 {strides = array<i32>} : memref<18x256xf32, #tpu.memory_space<vmem>>, vector<1x256xf32>,
    %c1_58 = arith.constant 1 : index
    %c0_59 = arith.constant 0 : index
    %51 = vector.load %arg12[%c1_58, %c0_59] : memref<18x256xf32, #tpu.memory_space<vmem>>, vector<16x256xf32>
    tpu.vector_store %arg12[%c1_58, %c0_59], %48 {strides = array<i32>} : memref<18x256xf32, #tpu.memory_space<vmem>>, vector<16x256xf32>,
    %c0_60 = arith.constant 0 : index
    %c0_61 = arith.constant 0 : index
    %52 = vector.load %arg12[%c0_60, %c0_61] : memref<18x256xf32, #tpu.memory_space<vmem>>, vector<16x256xf32>
    %c1_62 = arith.constant 1 : index
    %c0_63 = arith.constant 0 : index
    %53 = vector.load %arg12[%c1_62, %c0_63] : memref<18x256xf32, #tpu.memory_space<vmem>>, vector<16x256xf32>
    %c2_64 = arith.constant 2 : index
    %c0_65 = arith.constant 0 : index
    %54 = vector.load %arg12[%c2_64, %c0_65] : memref<18x256xf32, #tpu.memory_space<vmem>>, vector<16x256xf32>
    %c0_66 = arith.constant 0 : index
    %c0_67 = arith.constant 0 : index
    %c0_68 = arith.constant 0 : index
    %55 = vector.load %arg4[%c0_66, %c0_67, %c0_68] : memref<3x256x256xf32, #tpu.memory_space<vmem>>, vector<1x256x256xf32>
    %56 = vector.shape_cast %55 : vector<1x256x256xf32> to vector<256x256xf32>
    %cst_69 = arith.constant dense<0.000000e+00> : vector<16x256xf32>
    %57 = tpu.matmul %52, %56, %cst_69 {dimension_numbers = #tpu.dot_dimension_numbers<[1], [0], [0], [1], [0, 0, 1, 1], [], []>} : vector<16x256xf32>, vector<256x256xf32>, vector<16x256xf32> -> vector<16x256xf32>
    %c1_70 = arith.constant 1 : index
    %c0_71 = arith.constant 0 : index
    %c0_72 = arith.constant 0 : index
    %58 = vector.load %arg4[%c1_70, %c0_71, %c0_72] : memref<3x256x256xf32, #tpu.memory_space<vmem>>, vector<1x256x256xf32>
    %59 = vector.shape_cast %58 : vector<1x256x256xf32> to vector<256x256xf32>
    %cst_73 = arith.constant dense<0.000000e+00> : vector<16x256xf32>
    %60 = tpu.matmul %53, %59, %cst_73 {dimension_numbers = #tpu.dot_dimension_numbers<[1], [0], [0], [1], [0, 0, 1, 1], [], []>} : vector<16x256xf32>, vector<256x256xf32>, vector<16x256xf32> -> vector<16x256xf32>
    %61 = arith.addf %57, %60 : vector<16x256xf32>
    %c2_74 = arith.constant 2 : index
    %c0_75 = arith.constant 0 : index
    %c0_76 = arith.constant 0 : index
    %62 = vector.load %arg4[%c2_74, %c0_75, %c0_76] : memref<3x256x256xf32, #tpu.memory_space<vmem>>, vector<1x256x256xf32>
    %63 = vector.shape_cast %62 : vector<1x256x256xf32> to vector<256x256xf32>
    %cst_77 = arith.constant dense<0.000000e+00> : vector<16x256xf32>
    %64 = tpu.matmul %54, %63, %cst_77 {dimension_numbers = #tpu.dot_dimension_numbers<[1], [0], [0], [1], [0, 0, 1, 1], [], []>} : vector<16x256xf32>, vector<256x256xf32>, vector<16x256xf32> -> vector<16x256xf32>
    %65 = arith.addf %61, %64 : vector<16x256xf32>
    %66 = vector.broadcast %1 : vector<1x256xf32> to vector<16x256xf32>
    %67 = arith.addf %65, %66 : vector<16x256xf32>
    %68 = arith.addf %25, %67 : vector<16x256xf32>
    %c0_78 = arith.constant 0 : index
    %c0_79 = arith.constant 0 : index
    %69 = vector.load %arg8[%c0_78, %c0_79] : memref<8x16xf32, #tpu.memory_space<vmem>>, vector<8x16xf32>
    %c0_80 = arith.constant 0 : index
    %c0_81 = arith.constant 0 : index
    %70 = vector.load %arg9[%c0_80, %c0_81] : memref<8x16xf32, #tpu.memory_space<vmem>>, vector<8x16xf32>
    %cst_82 = arith.constant dense<0.000000e+00> : vector<8x256xf32>
    %71 = tpu.matmul %69, %68, %cst_82 {dimension_numbers = #tpu.dot_dimension_numbers<[1], [0], [0], [1], [0, 0, 1, 1], [], []>} : vector<8x16xf32>, vector<16x256xf32>, vector<8x256xf32> -> vector<8x256xf32>
    %cst_83 = arith.constant dense<0.000000e+00> : vector<8x256xf32>
    %72 = tpu.matmul %70, %68, %cst_83 {dimension_numbers = #tpu.dot_dimension_numbers<[1], [0], [0], [1], [0, 0, 1, 1], [], []>} : vector<8x16xf32>, vector<16x256xf32>, vector<8x256xf32> -> vector<8x256xf32>
    %73 = arith.maximumf %71, %72 : vector<8x256xf32>
    %cst_84 = arith.constant 0.000000e+00 : f32
    %74 = vector.broadcast %cst_84 : f32 to vector<8x256xf32>
    %75 = arith.maximumf %73, %74 : vector<8x256xf32>
    %c0_85 = arith.constant 0 : index
    %c0_86 = arith.constant 0 : index
    %76 = vector.load %arg12[%c0_85, %c0_86] : memref<18x256xf32, #tpu.memory_space<vmem>>, vector<1x256xf32>
    tpu.vector_store %arg12[%c0_85, %c0_86], %2 {strides = array<i32>} : memref<18x256xf32, #tpu.memory_space<vmem>>, vector<1x256xf32>,
    %c9 = arith.constant 9 : index
    %c0_87 = arith.constant 0 : index
    %77 = vector.load %arg12[%c9, %c0_87] : memref<18x256xf32, #tpu.memory_space<vmem>>, vector<1x256xf32>
    tpu.vector_store %arg12[%c9, %c0_87], %2 {strides = array<i32>} : memref<18x256xf32, #tpu.memory_space<vmem>>, vector<1x256xf32>,
    %c1_88 = arith.constant 1 : index
    %c0_89 = arith.constant 0 : index
    %78 = vector.load %arg12[%c1_88, %c0_89] : memref<18x256xf32, #tpu.memory_space<vmem>>, vector<8x256xf32>
    tpu.vector_store %arg12[%c1_88, %c0_89], %75 {strides = array<i32>} : memref<18x256xf32, #tpu.memory_space<vmem>>, vector<8x256xf32>,
    %c0_90 = arith.constant 0 : index
    %c0_91 = arith.constant 0 : index
    %79 = vector.load %arg12[%c0_90, %c0_91] : memref<18x256xf32, #tpu.memory_space<vmem>>, vector<8x256xf32>
    %c1_92 = arith.constant 1 : index
    %c0_93 = arith.constant 0 : index
    %80 = vector.load %arg12[%c1_92, %c0_93] : memref<18x256xf32, #tpu.memory_space<vmem>>, vector<8x256xf32>
    %c2_94 = arith.constant 2 : index
    %c0_95 = arith.constant 0 : index
    %81 = vector.load %arg12[%c2_94, %c0_95] : memref<18x256xf32, #tpu.memory_space<vmem>>, vector<8x256xf32>
    %c0_96 = arith.constant 0 : index
    %c0_97 = arith.constant 0 : index
    %c0_98 = arith.constant 0 : index
    %82 = vector.load %arg4[%c0_96, %c0_97, %c0_98] : memref<3x256x256xf32, #tpu.memory_space<vmem>>, vector<1x256x256xf32>
    %83 = vector.shape_cast %82 : vector<1x256x256xf32> to vector<256x256xf32>
    %cst_99 = arith.constant dense<0.000000e+00> : vector<8x256xf32>
    %84 = tpu.matmul %79, %83, %cst_99 {dimension_numbers = #tpu.dot_dimension_numbers<[1], [0], [0], [1], [0, 0, 1, 1], [], []>} : vector<8x256xf32>, vector<256x256xf32>, vector<8x256xf32> -> vector<8x256xf32>
    %c1_100 = arith.constant 1 : index
    %c0_101 = arith.constant 0 : index
    %c0_102 = arith.constant 0 : index
    %85 = vector.load %arg4[%c1_100, %c0_101, %c0_102] : memref<3x256x256xf32, #tpu.memory_space<vmem>>, vector<1x256x256xf32>
    %86 = vector.shape_cast %85 : vector<1x256x256xf32> to vector<256x256xf32>
    %cst_103 = arith.constant dense<0.000000e+00> : vector<8x256xf32>
    %87 = tpu.matmul %80, %86, %cst_103 {dimension_numbers = #tpu.dot_dimension_numbers<[1], [0], [0], [1], [0, 0, 1, 1], [], []>} : vector<8x256xf32>, vector<256x256xf32>, vector<8x256xf32> -> vector<8x256xf32>
    %88 = arith.addf %84, %87 : vector<8x256xf32>
    %c2_104 = arith.constant 2 : index
    %c0_105 = arith.constant 0 : index
    %c0_106 = arith.constant 0 : index
    %89 = vector.load %arg4[%c2_104, %c0_105, %c0_106] : memref<3x256x256xf32, #tpu.memory_space<vmem>>, vector<1x256x256xf32>
    %90 = vector.shape_cast %89 : vector<1x256x256xf32> to vector<256x256xf32>
    %cst_107 = arith.constant dense<0.000000e+00> : vector<8x256xf32>
    %91 = tpu.matmul %81, %90, %cst_107 {dimension_numbers = #tpu.dot_dimension_numbers<[1], [0], [0], [1], [0, 0, 1, 1], [], []>} : vector<8x256xf32>, vector<256x256xf32>, vector<8x256xf32> -> vector<8x256xf32>
    %92 = arith.addf %88, %91 : vector<8x256xf32>
    %93 = vector.broadcast %1 : vector<1x256xf32> to vector<8x256xf32>
    %94 = arith.addf %92, %93 : vector<8x256xf32>
    %cst_108 = arith.constant 0.000000e+00 : f32
    %95 = vector.broadcast %cst_108 : f32 to vector<8x256xf32>
    %96 = arith.maximumf %94, %95 : vector<8x256xf32>
    %c0_109 = arith.constant 0 : index
    %c0_110 = arith.constant 0 : index
    %97 = vector.load %arg12[%c0_109, %c0_110] : memref<18x256xf32, #tpu.memory_space<vmem>>, vector<1x256xf32>
    tpu.vector_store %arg12[%c0_109, %c0_110], %2 {strides = array<i32>} : memref<18x256xf32, #tpu.memory_space<vmem>>, vector<1x256xf32>,
    %c9_111 = arith.constant 9 : index
    %c0_112 = arith.constant 0 : index
    %98 = vector.load %arg12[%c9_111, %c0_112] : memref<18x256xf32, #tpu.memory_space<vmem>>, vector<1x256xf32>
    tpu.vector_store %arg12[%c9_111, %c0_112], %2 {strides = array<i32>} : memref<18x256xf32, #tpu.memory_space<vmem>>, vector<1x256xf32>,
    %c1_113 = arith.constant 1 : index
    %c0_114 = arith.constant 0 : index
    %99 = vector.load %arg12[%c1_113, %c0_114] : memref<18x256xf32, #tpu.memory_space<vmem>>, vector<8x256xf32>
    tpu.vector_store %arg12[%c1_113, %c0_114], %96 {strides = array<i32>} : memref<18x256xf32, #tpu.memory_space<vmem>>, vector<8x256xf32>,
    %c0_115 = arith.constant 0 : index
    %c0_116 = arith.constant 0 : index
    %100 = vector.load %arg12[%c0_115, %c0_116] : memref<18x256xf32, #tpu.memory_space<vmem>>, vector<8x256xf32>
    %c1_117 = arith.constant 1 : index
    %c0_118 = arith.constant 0 : index
    %101 = vector.load %arg12[%c1_117, %c0_118] : memref<18x256xf32, #tpu.memory_space<vmem>>, vector<8x256xf32>
    %c2_119 = arith.constant 2 : index
    %c0_120 = arith.constant 0 : index
    %102 = vector.load %arg12[%c2_119, %c0_120] : memref<18x256xf32, #tpu.memory_space<vmem>>, vector<8x256xf32>
    %c0_121 = arith.constant 0 : index
    %c0_122 = arith.constant 0 : index
    %c0_123 = arith.constant 0 : index
    %103 = vector.load %arg4[%c0_121, %c0_122, %c0_123] : memref<3x256x256xf32, #tpu.memory_space<vmem>>, vector<1x256x256xf32>
    %104 = vector.shape_cast %103 : vector<1x256x256xf32> to vector<256x256xf32>
    %cst_124 = arith.constant dense<0.000000e+00> : vector<8x256xf32>
    %105 = tpu.matmul %100, %104, %cst_124 {dimension_numbers = #tpu.dot_dimension_numbers<[1], [0], [0], [1], [0, 0, 1, 1], [], []>} : vector<8x256xf32>, vector<256x256xf32>, vector<8x256xf32> -> vector<8x256xf32>
    %c1_125 = arith.constant 1 : index
    %c0_126 = arith.constant 0 : index
    %c0_127 = arith.constant 0 : index
    %106 = vector.load %arg4[%c1_125, %c0_126, %c0_127] : memref<3x256x256xf32, #tpu.memory_space<vmem>>, vector<1x256x256xf32>
    %107 = vector.shape_cast %106 : vector<1x256x256xf32> to vector<256x256xf32>
    %cst_128 = arith.constant dense<0.000000e+00> : vector<8x256xf32>
    %108 = tpu.matmul %101, %107, %cst_128 {dimension_numbers = #tpu.dot_dimension_numbers<[1], [0], [0], [1], [0, 0, 1, 1], [], []>} : vector<8x256xf32>, vector<256x256xf32>, vector<8x256xf32> -> vector<8x256xf32>
    %109 = arith.addf %105, %108 : vector<8x256xf32>
    %c2_129 = arith.constant 2 : index
    %c0_130 = arith.constant 0 : index
    %c0_131 = arith.constant 0 : index
    %110 = vector.load %arg4[%c2_129, %c0_130, %c0_131] : memref<3x256x256xf32, #tpu.memory_space<vmem>>, vector<1x256x256xf32>
    %111 = vector.shape_cast %110 : vector<1x256x256xf32> to vector<256x256xf32>
    %cst_132 = arith.constant dense<0.000000e+00> : vector<8x256xf32>
    %112 = tpu.matmul %102, %111, %cst_132 {dimension_numbers = #tpu.dot_dimension_numbers<[1], [0], [0], [1], [0, 0, 1, 1], [], []>} : vector<8x256xf32>, vector<256x256xf32>, vector<8x256xf32> -> vector<8x256xf32>
    %113 = arith.addf %109, %112 : vector<8x256xf32>
    %114 = vector.broadcast %1 : vector<1x256xf32> to vector<8x256xf32>
    %115 = arith.addf %113, %114 : vector<8x256xf32>
    %116 = arith.addf %73, %115 : vector<8x256xf32>
    %c0_133 = arith.constant 0 : index
    %c0_134 = arith.constant 0 : index
    %117 = vector.load %arg8[%c0_133, %c0_134] : memref<8x16xf32, #tpu.memory_space<vmem>>, vector<4x8xf32>
    %c0_135 = arith.constant 0 : index
    %c0_136 = arith.constant 0 : index
    %118 = vector.load %arg9[%c0_135, %c0_136] : memref<8x16xf32, #tpu.memory_space<vmem>>, vector<4x8xf32>
    %cst_137 = arith.constant dense<0.000000e+00> : vector<4x256xf32>
    %119 = tpu.matmul %117, %116, %cst_137 {dimension_numbers = #tpu.dot_dimension_numbers<[1], [0], [0], [1], [0, 0, 1, 1], [], []>} : vector<4x8xf32>, vector<8x256xf32>, vector<4x256xf32> -> vector<4x256xf32>
    %cst_138 = arith.constant dense<0.000000e+00> : vector<4x256xf32>
    %120 = tpu.matmul %118, %116, %cst_138 {dimension_numbers = #tpu.dot_dimension_numbers<[1], [0], [0], [1], [0, 0, 1, 1], [], []>} : vector<4x8xf32>, vector<8x256xf32>, vector<4x256xf32> -> vector<4x256xf32>
    %121 = arith.maximumf %119, %120 : vector<4x256xf32>
    %cst_139 = arith.constant 0.000000e+00 : f32
    %122 = vector.broadcast %cst_139 : f32 to vector<4x256xf32>
    %123 = arith.maximumf %121, %122 : vector<4x256xf32>
    %c0_140 = arith.constant 0 : index
    %c0_141 = arith.constant 0 : index
    %124 = vector.load %arg12[%c0_140, %c0_141] : memref<18x256xf32, #tpu.memory_space<vmem>>, vector<1x256xf32>
    tpu.vector_store %arg12[%c0_140, %c0_141], %2 {strides = array<i32>} : memref<18x256xf32, #tpu.memory_space<vmem>>, vector<1x256xf32>,
    %c5 = arith.constant 5 : index
    %c0_142 = arith.constant 0 : index
    %125 = vector.load %arg12[%c5, %c0_142] : memref<18x256xf32, #tpu.memory_space<vmem>>, vector<1x256xf32>
    tpu.vector_store %arg12[%c5, %c0_142], %2 {strides = array<i32>} : memref<18x256xf32, #tpu.memory_space<vmem>>, vector<1x256xf32>,
    %c1_143 = arith.constant 1 : index
    %c0_144 = arith.constant 0 : index
    %126 = vector.load %arg12[%c1_143, %c0_144] : memref<18x256xf32, #tpu.memory_space<vmem>>, vector<4x256xf32>
    tpu.vector_store %arg12[%c1_143, %c0_144], %123 {strides = array<i32>} : memref<18x256xf32, #tpu.memory_space<vmem>>, vector<4x256xf32>,
    %c0_145 = arith.constant 0 : index
    %c0_146 = arith.constant 0 : index
    %127 = vector.load %arg12[%c0_145, %c0_146] : memref<18x256xf32, #tpu.memory_space<vmem>>, vector<4x256xf32>
    %c1_147 = arith.constant 1 : index
    %c0_148 = arith.constant 0 : index
    %128 = vector.load %arg12[%c1_147, %c0_148] : memref<18x256xf32, #tpu.memory_space<vmem>>, vector<4x256xf32>
    %c2_149 = arith.constant 2 : index
    %c0_150 = arith.constant 0 : index
    %129 = vector.load %arg12[%c2_149, %c0_150] : memref<18x256xf32, #tpu.memory_space<vmem>>, vector<4x256xf32>
    %c0_151 = arith.constant 0 : index
    %c0_152 = arith.constant 0 : index
    %c0_153 = arith.constant 0 : index
    %130 = vector.load %arg4[%c0_151, %c0_152, %c0_153] : memref<3x256x256xf32, #tpu.memory_space<vmem>>, vector<1x256x256xf32>
    %131 = vector.shape_cast %130 : vector<1x256x256xf32> to vector<256x256xf32>
    %cst_154 = arith.constant dense<0.000000e+00> : vector<4x256xf32>
    %132 = tpu.matmul %127, %131, %cst_154 {dimension_numbers = #tpu.dot_dimension_numbers<[1], [0], [0], [1], [0, 0, 1, 1], [], []>} : vector<4x256xf32>, vector<256x256xf32>, vector<4x256xf32> -> vector<4x256xf32>
    %c1_155 = arith.constant 1 : index
    %c0_156 = arith.constant 0 : index
    %c0_157 = arith.constant 0 : index
    %133 = vector.load %arg4[%c1_155, %c0_156, %c0_157] : memref<3x256x256xf32, #tpu.memory_space<vmem>>, vector<1x256x256xf32>
    %134 = vector.shape_cast %133 : vector<1x256x256xf32> to vector<256x256xf32>
    %cst_158 = arith.constant dense<0.000000e+00> : vector<4x256xf32>
    %135 = tpu.matmul %128, %134, %cst_158 {dimension_numbers = #tpu.dot_dimension_numbers<[1], [0], [0], [1], [0, 0, 1, 1], [], []>} : vector<4x256xf32>, vector<256x256xf32>, vector<4x256xf32> -> vector<4x256xf32>
    %136 = arith.addf %132, %135 : vector<4x256xf32>
    %c2_159 = arith.constant 2 : index
    %c0_160 = arith.constant 0 : index
    %c0_161 = arith.constant 0 : index
    %137 = vector.load %arg4[%c2_159, %c0_160, %c0_161] : memref<3x256x256xf32, #tpu.memory_space<vmem>>, vector<1x256x256xf32>
    %138 = vector.shape_cast %137 : vector<1x256x256xf32> to vector<256x256xf32>
    %cst_162 = arith.constant dense<0.000000e+00> : vector<4x256xf32>
    %139 = tpu.matmul %129, %138, %cst_162 {dimension_numbers = #tpu.dot_dimension_numbers<[1], [0], [0], [1], [0, 0, 1, 1], [], []>} : vector<4x256xf32>, vector<256x256xf32>, vector<4x256xf32> -> vector<4x256xf32>
    %140 = arith.addf %136, %139 : vector<4x256xf32>
    %141 = vector.broadcast %1 : vector<1x256xf32> to vector<4x256xf32>
    %142 = arith.addf %140, %141 : vector<4x256xf32>
    %cst_163 = arith.constant 0.000000e+00 : f32
    %143 = vector.broadcast %cst_163 : f32 to vector<4x256xf32>
    %144 = arith.maximumf %142, %143 : vector<4x256xf32>
    %c0_164 = arith.constant 0 : index
    %c0_165 = arith.constant 0 : index
    %145 = vector.load %arg12[%c0_164, %c0_165] : memref<18x256xf32, #tpu.memory_space<vmem>>, vector<1x256xf32>
    tpu.vector_store %arg12[%c0_164, %c0_165], %2 {strides = array<i32>} : memref<18x256xf32, #tpu.memory_space<vmem>>, vector<1x256xf32>,
    %c5_166 = arith.constant 5 : index
    %c0_167 = arith.constant 0 : index
    %146 = vector.load %arg12[%c5_166, %c0_167] : memref<18x256xf32, #tpu.memory_space<vmem>>, vector<1x256xf32>
    tpu.vector_store %arg12[%c5_166, %c0_167], %2 {strides = array<i32>} : memref<18x256xf32, #tpu.memory_space<vmem>>, vector<1x256xf32>,
    %c1_168 = arith.constant 1 : index
    %c0_169 = arith.constant 0 : index
    %147 = vector.load %arg12[%c1_168, %c0_169] : memref<18x256xf32, #tpu.memory_space<vmem>>, vector<4x256xf32>
    tpu.vector_store %arg12[%c1_168, %c0_169], %144 {strides = array<i32>} : memref<18x256xf32, #tpu.memory_space<vmem>>, vector<4x256xf32>,
    %c0_170 = arith.constant 0 : index
    %c0_171 = arith.constant 0 : index
    %148 = vector.load %arg12[%c0_170, %c0_171] : memref<18x256xf32, #tpu.memory_space<vmem>>, vector<4x256xf32>
    %c1_172 = arith.constant 1 : index
    %c0_173 = arith.constant 0 : index
    %149 = vector.load %arg12[%c1_172, %c0_173] : memref<18x256xf32, #tpu.memory_space<vmem>>, vector<4x256xf32>
    %c2_174 = arith.constant 2 : index
    %c0_175 = arith.constant 0 : index
    %150 = vector.load %arg12[%c2_174, %c0_175] : memref<18x256xf32, #tpu.memory_space<vmem>>, vector<4x256xf32>
    %c0_176 = arith.constant 0 : index
    %c0_177 = arith.constant 0 : index
    %c0_178 = arith.constant 0 : index
    %151 = vector.load %arg4[%c0_176, %c0_177, %c0_178] : memref<3x256x256xf32, #tpu.memory_space<vmem>>, vector<1x256x256xf32>
    %152 = vector.shape_cast %151 : vector<1x256x256xf32> to vector<256x256xf32>
    %cst_179 = arith.constant dense<0.000000e+00> : vector<4x256xf32>
    %153 = tpu.matmul %148, %152, %cst_179 {dimension_numbers = #tpu.dot_dimension_numbers<[1], [0], [0], [1], [0, 0, 1, 1], [], []>} : vector<4x256xf32>, vector<256x256xf32>, vector<4x256xf32> -> vector<4x256xf32>
    %c1_180 = arith.constant 1 : index
    %c0_181 = arith.constant 0 : index
    %c0_182 = arith.constant 0 : index
    %154 = vector.load %arg4[%c1_180, %c0_181, %c0_182] : memref<3x256x256xf32, #tpu.memory_space<vmem>>, vector<1x256x256xf32>
    %155 = vector.shape_cast %154 : vector<1x256x256xf32> to vector<256x256xf32>
    %cst_183 = arith.constant dense<0.000000e+00> : vector<4x256xf32>
    %156 = tpu.matmul %149, %155, %cst_183 {dimension_numbers = #tpu.dot_dimension_numbers<[1], [0], [0], [1], [0, 0, 1, 1], [], []>} : vector<4x256xf32>, vector<256x256xf32>, vector<4x256xf32> -> vector<4x256xf32>
    %157 = arith.addf %153, %156 : vector<4x256xf32>
    %c2_184 = arith.constant 2 : index
    %c0_185 = arith.constant 0 : index
    %c0_186 = arith.constant 0 : index
    %158 = vector.load %arg4[%c2_184, %c0_185, %c0_186] : memref<3x256x256xf32, #tpu.memory_space<vmem>>, vector<1x256x256xf32>
    %159 = vector.shape_cast %158 : vector<1x256x256xf32> to vector<256x256xf32>
    %cst_187 = arith.constant dense<0.000000e+00> : vector<4x256xf32>
    %160 = tpu.matmul %150, %159, %cst_187 {dimension_numbers = #tpu.dot_dimension_numbers<[1], [0], [0], [1], [0, 0, 1, 1], [], []>} : vector<4x256xf32>, vector<256x256xf32>, vector<4x256xf32> -> vector<4x256xf32>
    %161 = arith.addf %157, %160 : vector<4x256xf32>
    %162 = vector.broadcast %1 : vector<1x256xf32> to vector<4x256xf32>
    %163 = arith.addf %161, %162 : vector<4x256xf32>
    %164 = arith.addf %121, %163 : vector<4x256xf32>
    %c0_188 = arith.constant 0 : index
    %c0_189 = arith.constant 0 : index
    %165 = vector.load %arg8[%c0_188, %c0_189] : memref<8x16xf32, #tpu.memory_space<vmem>>, vector<2x4xf32>
    %c0_190 = arith.constant 0 : index
    %c0_191 = arith.constant 0 : index
    %166 = vector.load %arg9[%c0_190, %c0_191] : memref<8x16xf32, #tpu.memory_space<vmem>>, vector<2x4xf32>
    %cst_192 = arith.constant dense<0.000000e+00> : vector<2x256xf32>
    %167 = tpu.matmul %165, %164, %cst_192 {dimension_numbers = #tpu.dot_dimension_numbers<[1], [0], [0], [1], [0, 0, 1, 1], [], []>} : vector<2x4xf32>, vector<4x256xf32>, vector<2x256xf32> -> vector<2x256xf32>
    %cst_193 = arith.constant dense<0.000000e+00> : vector<2x256xf32>
    %168 = tpu.matmul %166, %164, %cst_193 {dimension_numbers = #tpu.dot_dimension_numbers<[1], [0], [0], [1], [0, 0, 1, 1], [], []>} : vector<2x4xf32>, vector<4x256xf32>, vector<2x256xf32> -> vector<2x256xf32>
    %169 = arith.maximumf %167, %168 : vector<2x256xf32>
    %cst_194 = arith.constant 0.000000e+00 : f32
    %170 = vector.broadcast %cst_194 : f32 to vector<2x256xf32>
    %171 = arith.maximumf %169, %170 : vector<2x256xf32>
    %c0_195 = arith.constant 0 : index
    %c0_196 = arith.constant 0 : index
    %172 = vector.load %arg12[%c0_195, %c0_196] : memref<18x256xf32, #tpu.memory_space<vmem>>, vector<1x256xf32>
    tpu.vector_store %arg12[%c0_195, %c0_196], %2 {strides = array<i32>} : memref<18x256xf32, #tpu.memory_space<vmem>>, vector<1x256xf32>,
    %c3 = arith.constant 3 : index
    %c0_197 = arith.constant 0 : index
    %173 = vector.load %arg12[%c3, %c0_197] : memref<18x256xf32, #tpu.memory_space<vmem>>, vector<1x256xf32>
    tpu.vector_store %arg12[%c3, %c0_197], %2 {strides = array<i32>} : memref<18x256xf32, #tpu.memory_space<vmem>>, vector<1x256xf32>,
    %c1_198 = arith.constant 1 : index
    %c0_199 = arith.constant 0 : index
    %174 = vector.load %arg12[%c1_198, %c0_199] : memref<18x256xf32, #tpu.memory_space<vmem>>, vector<2x256xf32>
    tpu.vector_store %arg12[%c1_198, %c0_199], %171 {strides = array<i32>} : memref<18x256xf32, #tpu.memory_space<vmem>>, vector<2x256xf32>,
    %c0_200 = arith.constant 0 : index
    %c0_201 = arith.constant 0 : index
    %175 = vector.load %arg12[%c0_200, %c0_201] : memref<18x256xf32, #tpu.memory_space<vmem>>, vector<2x256xf32>
    %c1_202 = arith.constant 1 : index
    %c0_203 = arith.constant 0 : index
    %176 = vector.load %arg12[%c1_202, %c0_203] : memref<18x256xf32, #tpu.memory_space<vmem>>, vector<2x256xf32>
    %c2_204 = arith.constant 2 : index
    %c0_205 = arith.constant 0 : index
    %177 = vector.load %arg12[%c2_204, %c0_205] : memref<18x256xf32, #tpu.memory_space<vmem>>, vector<2x256xf32>
    %c0_206 = arith.constant 0 : index
    %c0_207 = arith.constant 0 : index
    %c0_208 = arith.constant 0 : index
    %178 = vector.load %arg4[%c0_206, %c0_207, %c0_208] : memref<3x256x256xf32, #tpu.memory_space<vmem>>, vector<1x256x256xf32>
    %179 = vector.shape_cast %178 : vector<1x256x256xf32> to vector<256x256xf32>
    %cst_209 = arith.constant dense<0.000000e+00> : vector<2x256xf32>
    %180 = tpu.matmul %175, %179, %cst_209 {dimension_numbers = #tpu.dot_dimension_numbers<[1], [0], [0], [1], [0, 0, 1, 1], [], []>} : vector<2x256xf32>, vector<256x256xf32>, vector<2x256xf32> -> vector<2x256xf32>
    %c1_210 = arith.constant 1 : index
    %c0_211 = arith.constant 0 : index
    %c0_212 = arith.constant 0 : index
    %181 = vector.load %arg4[%c1_210, %c0_211, %c0_212] : memref<3x256x256xf32, #tpu.memory_space<vmem>>, vector<1x256x256xf32>
    %182 = vector.shape_cast %181 : vector<1x256x256xf32> to vector<256x256xf32>
    %cst_213 = arith.constant dense<0.000000e+00> : vector<2x256xf32>
    %183 = tpu.matmul %176, %182, %cst_213 {dimension_numbers = #tpu.dot_dimension_numbers<[1], [0], [0], [1], [0, 0, 1, 1], [], []>} : vector<2x256xf32>, vector<256x256xf32>, vector<2x256xf32> -> vector<2x256xf32>
    %184 = arith.addf %180, %183 : vector<2x256xf32>
    %c2_214 = arith.constant 2 : index
    %c0_215 = arith.constant 0 : index
    %c0_216 = arith.constant 0 : index
    %185 = vector.load %arg4[%c2_214, %c0_215, %c0_216] : memref<3x256x256xf32, #tpu.memory_space<vmem>>, vector<1x256x256xf32>
    %186 = vector.shape_cast %185 : vector<1x256x256xf32> to vector<256x256xf32>
    %cst_217 = arith.constant dense<0.000000e+00> : vector<2x256xf32>
    %187 = tpu.matmul %177, %186, %cst_217 {dimension_numbers = #tpu.dot_dimension_numbers<[1], [0], [0], [1], [0, 0, 1, 1], [], []>} : vector<2x256xf32>, vector<256x256xf32>, vector<2x256xf32> -> vector<2x256xf32>
    %188 = arith.addf %184, %187 : vector<2x256xf32>
    %189 = vector.broadcast %1 : vector<1x256xf32> to vector<2x256xf32>
    %190 = arith.addf %188, %189 : vector<2x256xf32>
    %cst_218 = arith.constant 0.000000e+00 : f32
    %191 = vector.broadcast %cst_218 : f32 to vector<2x256xf32>
    %192 = arith.maximumf %190, %191 : vector<2x256xf32>
    %c0_219 = arith.constant 0 : index
    %c0_220 = arith.constant 0 : index
    %193 = vector.load %arg12[%c0_219, %c0_220] : memref<18x256xf32, #tpu.memory_space<vmem>>, vector<1x256xf32>
    tpu.vector_store %arg12[%c0_219, %c0_220], %2 {strides = array<i32>} : memref<18x256xf32, #tpu.memory_space<vmem>>, vector<1x256xf32>,
    %c3_221 = arith.constant 3 : index
    %c0_222 = arith.constant 0 : index
    %194 = vector.load %arg12[%c3_221, %c0_222] : memref<18x256xf32, #tpu.memory_space<vmem>>, vector<1x256xf32>
    tpu.vector_store %arg12[%c3_221, %c0_222], %2 {strides = array<i32>} : memref<18x256xf32, #tpu.memory_space<vmem>>, vector<1x256xf32>,
    %c1_223 = arith.constant 1 : index
    %c0_224 = arith.constant 0 : index
    %195 = vector.load %arg12[%c1_223, %c0_224] : memref<18x256xf32, #tpu.memory_space<vmem>>, vector<2x256xf32>
    tpu.vector_store %arg12[%c1_223, %c0_224], %192 {strides = array<i32>} : memref<18x256xf32, #tpu.memory_space<vmem>>, vector<2x256xf32>,
    %c0_225 = arith.constant 0 : index
    %c0_226 = arith.constant 0 : index
    %196 = vector.load %arg12[%c0_225, %c0_226] : memref<18x256xf32, #tpu.memory_space<vmem>>, vector<2x256xf32>
    %c1_227 = arith.constant 1 : index
    %c0_228 = arith.constant 0 : index
    %197 = vector.load %arg12[%c1_227, %c0_228] : memref<18x256xf32, #tpu.memory_space<vmem>>, vector<2x256xf32>
    %c2_229 = arith.constant 2 : index
    %c0_230 = arith.constant 0 : index
    %198 = vector.load %arg12[%c2_229, %c0_230] : memref<18x256xf32, #tpu.memory_space<vmem>>, vector<2x256xf32>
    %c0_231 = arith.constant 0 : index
    %c0_232 = arith.constant 0 : index
    %c0_233 = arith.constant 0 : index
    %199 = vector.load %arg4[%c0_231, %c0_232, %c0_233] : memref<3x256x256xf32, #tpu.memory_space<vmem>>, vector<1x256x256xf32>
    %200 = vector.shape_cast %199 : vector<1x256x256xf32> to vector<256x256xf32>
    %cst_234 = arith.constant dense<0.000000e+00> : vector<2x256xf32>
    %201 = tpu.matmul %196, %200, %cst_234 {dimension_numbers = #tpu.dot_dimension_numbers<[1], [0], [0], [1], [0, 0, 1, 1], [], []>} : vector<2x256xf32>, vector<256x256xf32>, vector<2x256xf32> -> vector<2x256xf32>
    %c1_235 = arith.constant 1 : index
    %c0_236 = arith.constant 0 : index
    %c0_237 = arith.constant 0 : index
    %202 = vector.load %arg4[%c1_235, %c0_236, %c0_237] : memref<3x256x256xf32, #tpu.memory_space<vmem>>, vector<1x256x256xf32>
    %203 = vector.shape_cast %202 : vector<1x256x256xf32> to vector<256x256xf32>
    %cst_238 = arith.constant dense<0.000000e+00> : vector<2x256xf32>
    %204 = tpu.matmul %197, %203, %cst_238 {dimension_numbers = #tpu.dot_dimension_numbers<[1], [0], [0], [1], [0, 0, 1, 1], [], []>} : vector<2x256xf32>, vector<256x256xf32>, vector<2x256xf32> -> vector<2x256xf32>
    %205 = arith.addf %201, %204 : vector<2x256xf32>
    %c2_239 = arith.constant 2 : index
    %c0_240 = arith.constant 0 : index
    %c0_241 = arith.constant 0 : index
    %206 = vector.load %arg4[%c2_239, %c0_240, %c0_241] : memref<3x256x256xf32, #tpu.memory_space<vmem>>, vector<1x256x256xf32>
    %207 = vector.shape_cast %206 : vector<1x256x256xf32> to vector<256x256xf32>
    %cst_242 = arith.constant dense<0.000000e+00> : vector<2x256xf32>
    %208 = tpu.matmul %198, %207, %cst_242 {dimension_numbers = #tpu.dot_dimension_numbers<[1], [0], [0], [1], [0, 0, 1, 1], [], []>} : vector<2x256xf32>, vector<256x256xf32>, vector<2x256xf32> -> vector<2x256xf32>
    %209 = arith.addf %205, %208 : vector<2x256xf32>
    %210 = vector.broadcast %1 : vector<1x256xf32> to vector<2x256xf32>
    %211 = arith.addf %209, %210 : vector<2x256xf32>
    %212 = arith.addf %169, %211 : vector<2x256xf32>
    %c0_243 = arith.constant 0 : index
    %c0_244 = arith.constant 0 : index
    %213 = vector.load %arg8[%c0_243, %c0_244] : memref<8x16xf32, #tpu.memory_space<vmem>>, vector<1x2xf32>
    %c0_245 = arith.constant 0 : index
    %c0_246 = arith.constant 0 : index
    %214 = vector.load %arg9[%c0_245, %c0_246] : memref<8x16xf32, #tpu.memory_space<vmem>>, vector<1x2xf32>
    %cst_247 = arith.constant dense<0.000000e+00> : vector<1x256xf32>
    %215 = tpu.matmul %213, %212, %cst_247 {dimension_numbers = #tpu.dot_dimension_numbers<[1], [0], [0], [1], [0, 0, 1, 1], [], []>} : vector<1x2xf32>, vector<2x256xf32>, vector<1x256xf32> -> vector<1x256xf32>
    %cst_248 = arith.constant dense<0.000000e+00> : vector<1x256xf32>
    %216 = tpu.matmul %214, %212, %cst_248 {dimension_numbers = #tpu.dot_dimension_numbers<[1], [0], [0], [1], [0, 0, 1, 1], [], []>} : vector<1x2xf32>, vector<2x256xf32>, vector<1x256xf32> -> vector<1x256xf32>
    %217 = arith.maximumf %215, %216 : vector<1x256xf32>
    %cst_249 = arith.constant 0.000000e+00 : f32
    %218 = vector.broadcast %cst_249 : f32 to vector<1x256xf32>
    %219 = arith.maximumf %217, %218 : vector<1x256xf32>
    %c0_250 = arith.constant 0 : index
    %c0_251 = arith.constant 0 : index
    %220 = vector.load %arg12[%c0_250, %c0_251] : memref<18x256xf32, #tpu.memory_space<vmem>>, vector<1x256xf32>
    tpu.vector_store %arg12[%c0_250, %c0_251], %2 {strides = array<i32>} : memref<18x256xf32, #tpu.memory_space<vmem>>, vector<1x256xf32>,
    %c2_252 = arith.constant 2 : index
    %c0_253 = arith.constant 0 : index
    %221 = vector.load %arg12[%c2_252, %c0_253] : memref<18x256xf32, #tpu.memory_space<vmem>>, vector<1x256xf32>
    tpu.vector_store %arg12[%c2_252, %c0_253], %2 {strides = array<i32>} : memref<18x256xf32, #tpu.memory_space<vmem>>, vector<1x256xf32>,
    %c1_254 = arith.constant 1 : index
    %c0_255 = arith.constant 0 : index
    %222 = vector.load %arg12[%c1_254, %c0_255] : memref<18x256xf32, #tpu.memory_space<vmem>>, vector<1x256xf32>
    tpu.vector_store %arg12[%c1_254, %c0_255], %219 {strides = array<i32>} : memref<18x256xf32, #tpu.memory_space<vmem>>, vector<1x256xf32>,
    %c0_256 = arith.constant 0 : index
    %c0_257 = arith.constant 0 : index
    %223 = vector.load %arg12[%c0_256, %c0_257] : memref<18x256xf32, #tpu.memory_space<vmem>>, vector<1x256xf32>
    %c1_258 = arith.constant 1 : index
    %c0_259 = arith.constant 0 : index
    %224 = vector.load %arg12[%c1_258, %c0_259] : memref<18x256xf32, #tpu.memory_space<vmem>>, vector<1x256xf32>
    %c2_260 = arith.constant 2 : index
    %c0_261 = arith.constant 0 : index
    %225 = vector.load %arg12[%c2_260, %c0_261] : memref<18x256xf32, #tpu.memory_space<vmem>>, vector<1x256xf32>
    %c0_262 = arith.constant 0 : index
    %c0_263 = arith.constant 0 : index
    %c0_264 = arith.constant 0 : index
    %226 = vector.load %arg4[%c0_262, %c0_263, %c0_264] : memref<3x256x256xf32, #tpu.memory_space<vmem>>, vector<1x256x256xf32>
    %227 = vector.shape_cast %226 : vector<1x256x256xf32> to vector<256x256xf32>
    %cst_265 = arith.constant dense<0.000000e+00> : vector<1x256xf32>
    %228 = tpu.matmul %223, %227, %cst_265 {dimension_numbers = #tpu.dot_dimension_numbers<[1], [0], [0], [1], [0, 0, 1, 1], [], []>} : vector<1x256xf32>, vector<256x256xf32>, vector<1x256xf32> -> vector<1x256xf32>
    %c1_266 = arith.constant 1 : index
    %c0_267 = arith.constant 0 : index
    %c0_268 = arith.constant 0 : index
    %229 = vector.load %arg4[%c1_266, %c0_267, %c0_268] : memref<3x256x256xf32, #tpu.memory_space<vmem>>, vector<1x256x256xf32>
    %230 = vector.shape_cast %229 : vector<1x256x256xf32> to vector<256x256xf32>
    %cst_269 = arith.constant dense<0.000000e+00> : vector<1x256xf32>
    %231 = tpu.matmul %224, %230, %cst_269 {dimension_numbers = #tpu.dot_dimension_numbers<[1], [0], [0], [1], [0, 0, 1, 1], [], []>} : vector<1x256xf32>, vector<256x256xf32>, vector<1x256xf32> -> vector<1x256xf32>
    %232 = arith.addf %228, %231 : vector<1x256xf32>
    %c2_270 = arith.constant 2 : index
    %c0_271 = arith.constant 0 : index
    %c0_272 = arith.constant 0 : index
    %233 = vector.load %arg4[%c2_270, %c0_271, %c0_272] : memref<3x256x256xf32, #tpu.memory_space<vmem>>, vector<1x256x256xf32>
    %234 = vector.shape_cast %233 : vector<1x256x256xf32> to vector<256x256xf32>
    %cst_273 = arith.constant dense<0.000000e+00> : vector<1x256xf32>
    %235 = tpu.matmul %225, %234, %cst_273 {dimension_numbers = #tpu.dot_dimension_numbers<[1], [0], [0], [1], [0, 0, 1, 1], [], []>} : vector<1x256xf32>, vector<256x256xf32>, vector<1x256xf32> -> vector<1x256xf32>
    %236 = arith.addf %232, %235 : vector<1x256xf32>
    %237 = arith.addf %236, %1 : vector<1x256xf32>
    %cst_274 = arith.constant 0.000000e+00 : f32
    %238 = vector.broadcast %cst_274 : f32 to vector<1x256xf32>
    %239 = arith.maximumf %237, %238 : vector<1x256xf32>
    %c0_275 = arith.constant 0 : index
    %c0_276 = arith.constant 0 : index
    %240 = vector.load %arg12[%c0_275, %c0_276] : memref<18x256xf32, #tpu.memory_space<vmem>>, vector<1x256xf32>
    tpu.vector_store %arg12[%c0_275, %c0_276], %2 {strides = array<i32>} : memref<18x256xf32, #tpu.memory_space<vmem>>, vector<1x256xf32>,
    %c2_277 = arith.constant 2 : index
    %c0_278 = arith.constant 0 : index
    %241 = vector.load %arg12[%c2_277, %c0_278] : memref<18x256xf32, #tpu.memory_space<vmem>>, vector<1x256xf32>
    tpu.vector_store %arg12[%c2_277, %c0_278], %2 {strides = array<i32>} : memref<18x256xf32, #tpu.memory_space<vmem>>, vector<1x256xf32>,
    %c1_279 = arith.constant 1 : index
    %c0_280 = arith.constant 0 : index
    %242 = vector.load %arg12[%c1_279, %c0_280] : memref<18x256xf32, #tpu.memory_space<vmem>>, vector<1x256xf32>
    tpu.vector_store %arg12[%c1_279, %c0_280], %239 {strides = array<i32>} : memref<18x256xf32, #tpu.memory_space<vmem>>, vector<1x256xf32>,
    %c0_281 = arith.constant 0 : index
    %c0_282 = arith.constant 0 : index
    %243 = vector.load %arg12[%c0_281, %c0_282] : memref<18x256xf32, #tpu.memory_space<vmem>>, vector<1x256xf32>
    %c1_283 = arith.constant 1 : index
    %c0_284 = arith.constant 0 : index
    %244 = vector.load %arg12[%c1_283, %c0_284] : memref<18x256xf32, #tpu.memory_space<vmem>>, vector<1x256xf32>
    %c2_285 = arith.constant 2 : index
    %c0_286 = arith.constant 0 : index
    %245 = vector.load %arg12[%c2_285, %c0_286] : memref<18x256xf32, #tpu.memory_space<vmem>>, vector<1x256xf32>
    %c0_287 = arith.constant 0 : index
    %c0_288 = arith.constant 0 : index
    %c0_289 = arith.constant 0 : index
    %246 = vector.load %arg4[%c0_287, %c0_288, %c0_289] : memref<3x256x256xf32, #tpu.memory_space<vmem>>, vector<1x256x256xf32>
    %247 = vector.shape_cast %246 : vector<1x256x256xf32> to vector<256x256xf32>
    %cst_290 = arith.constant dense<0.000000e+00> : vector<1x256xf32>
    %248 = tpu.matmul %243, %247, %cst_290 {dimension_numbers = #tpu.dot_dimension_numbers<[1], [0], [0], [1], [0, 0, 1, 1], [], []>} : vector<1x256xf32>, vector<256x256xf32>, vector<1x256xf32> -> vector<1x256xf32>
    %c1_291 = arith.constant 1 : index
    %c0_292 = arith.constant 0 : index
    %c0_293 = arith.constant 0 : index
    %249 = vector.load %arg4[%c1_291, %c0_292, %c0_293] : memref<3x256x256xf32, #tpu.memory_space<vmem>>, vector<1x256x256xf32>
    %250 = vector.shape_cast %249 : vector<1x256x256xf32> to vector<256x256xf32>
    %cst_294 = arith.constant dense<0.000000e+00> : vector<1x256xf32>
    %251 = tpu.matmul %244, %250, %cst_294 {dimension_numbers = #tpu.dot_dimension_numbers<[1], [0], [0], [1], [0, 0, 1, 1], [], []>} : vector<1x256xf32>, vector<256x256xf32>, vector<1x256xf32> -> vector<1x256xf32>
    %252 = arith.addf %248, %251 : vector<1x256xf32>
    %c2_295 = arith.constant 2 : index
    %c0_296 = arith.constant 0 : index
    %c0_297 = arith.constant 0 : index
    %253 = vector.load %arg4[%c2_295, %c0_296, %c0_297] : memref<3x256x256xf32, #tpu.memory_space<vmem>>, vector<1x256x256xf32>
    %254 = vector.shape_cast %253 : vector<1x256x256xf32> to vector<256x256xf32>
    %cst_298 = arith.constant dense<0.000000e+00> : vector<1x256xf32>
    %255 = tpu.matmul %245, %254, %cst_298 {dimension_numbers = #tpu.dot_dimension_numbers<[1], [0], [0], [1], [0, 0, 1, 1], [], []>} : vector<1x256xf32>, vector<256x256xf32>, vector<1x256xf32> -> vector<1x256xf32>
    %256 = arith.addf %252, %255 : vector<1x256xf32>
    %257 = arith.addf %256, %1 : vector<1x256xf32>
    %258 = arith.addf %217, %257 : vector<1x256xf32>
    %c0_299 = arith.constant 0 : index
    %c0_300 = arith.constant 0 : index
    %c0_301 = arith.constant 0 : index
    %259 = vector.load %arg11[%c0_299, %c0_300, %c0_301] : memref<1x1x256xf32, #tpu.memory_space<vmem>>, vector<1x1x256xf32>
    %260 = vector.shape_cast %259 : vector<1x1x256xf32> to vector<1x256xf32>
    %261 = vector.shape_cast %258 : vector<1x256xf32> to vector<1x1x256xf32>
    tpu.vector_store %arg11[%c0_299, %c0_300, %c0_301], %261 {strides = array<i32>} : memref<1x1x256xf32, #tpu.memory_space<vmem>>, vector<1x1x256xf32>,
    %c0_302 = arith.constant 0 : index
    %c0_303 = arith.constant 0 : index
    %262 = vector.load %arg6[%c0_302, %c0_303] : memref<256x128xf32, #tpu.memory_space<vmem>>, vector<256x128xf32>
    %cst_304 = arith.constant dense<0.000000e+00> : vector<1x128xf32>
    %263 = tpu.matmul %258, %262, %cst_304 {dimension_numbers = #tpu.dot_dimension_numbers<[1], [0], [0], [1], [0, 0, 1, 1], [], []>} : vector<1x256xf32>, vector<256x128xf32>, vector<1x128xf32> -> vector<1x128xf32>
    %c0_305 = arith.constant 0 : index
    %c0_306 = arith.constant 0 : index
    %264 = vector.load %arg7[%c0_305, %c0_306] : memref<1x128xf32, #tpu.memory_space<vmem>>, vector<1x128xf32>
    %265 = arith.addf %263, %264 : vector<1x128xf32>
    %cst_307 = arith.constant dense<0xFF800000> : vector<1xf32>
    %266 = vector.multi_reduction <maximumf>, %265, %cst_307 [1] : vector<1x128xf32> to vector<1xf32>
    %267 = vector.shape_cast %266 : vector<1xf32> to vector<1x1xf32>
    %268 = vector.broadcast %267 : vector<1x1xf32> to vector<1x128xf32>
    %269 = arith.subf %265, %268 : vector<1x128xf32>
    %270 = math.exp %269 : vector<1x128xf32>
    %cst_308 = arith.constant dense<0.000000e+00> : vector<1xf32>
    %271 = vector.multi_reduction <add>, %270, %cst_308 [1] : vector<1x128xf32> to vector<1xf32>
    %272 = vector.shape_cast %271 : vector<1xf32> to vector<1x1xf32>
    %273 = vector.broadcast %272 : vector<1x1xf32> to vector<1x128xf32>
    %274 = arith.divf %270, %273 : vector<1x128xf32>
    %c0_309 = arith.constant 0 : index
    %c0_310 = arith.constant 0 : index
    %c0_311 = arith.constant 0 : index
    %275 = vector.load %arg10[%c0_309, %c0_310, %c0_311] : memref<1x1x128xf32, #tpu.memory_space<vmem>>, vector<1x1x128xf32>
    %276 = vector.shape_cast %275 : vector<1x1x128xf32> to vector<1x128xf32>
    %277 = vector.shape_cast %274 : vector<1x128xf32> to vector<1x1x128xf32>
    tpu.vector_store %arg10[%c0_309, %c0_310, %c0_311], %277 {strides = array<i32>} : memref<1x1x128xf32, #tpu.memory_space<vmem>>, vector<1x1x128xf32>,
    return
  }
  func.func @transform_0(%arg0: i32) -> (i32, i32, i32) {
    %c0_i32 = arith.constant 0 : i32
    %c0_i32_0 = arith.constant 0 : i32
    %c0_i32_1 = arith.constant 0 : i32
    return %arg0, %c0_i32, %c0_i32_0 : i32, i32, i32
  }
  func.func @transform_1(%arg0: i32) -> (i32, i32, i32) {
    %c0_i32 = arith.constant 0 : i32
    %c0_i32_0 = arith.constant 0 : i32
    %c0_i32_1 = arith.constant 0 : i32
    %c0_i32_2 = arith.constant 0 : i32
    return %c0_i32, %c0_i32_0, %c0_i32_1 : i32, i32, i32
  }
  func.func @transform_2(%arg0: i32) -> (i32, i32) {
    %c0_i32 = arith.constant 0 : i32
    %c0_i32_0 = arith.constant 0 : i32
    %c0_i32_1 = arith.constant 0 : i32
    return %c0_i32, %c0_i32_0 : i32, i32
  }
  func.func @transform_3(%arg0: i32) -> (i32, i32, i32) {
    %c0_i32 = arith.constant 0 : i32
    %c0_i32_0 = arith.constant 0 : i32
    %c0_i32_1 = arith.constant 0 : i32
    %c0_i32_2 = arith.constant 0 : i32
    return %c0_i32, %c0_i32_0, %c0_i32_1 : i32, i32, i32
  }
  func.func @transform_4(%arg0: i32) -> (i32, i32) {
    %c0_i32 = arith.constant 0 : i32
    %c0_i32_0 = arith.constant 0 : i32
    %c0_i32_1 = arith.constant 0 : i32
    return %c0_i32, %c0_i32_0 : i32, i32
  }
  func.func @transform_5(%arg0: i32) -> (i32, i32) {
    %c0_i32 = arith.constant 0 : i32
    %c0_i32_0 = arith.constant 0 : i32
    %c0_i32_1 = arith.constant 0 : i32
    return %c0_i32, %c0_i32_0 : i32, i32
  }
  func.func @transform_6(%arg0: i32) -> (i32, i32) {
    %c0_i32 = arith.constant 0 : i32
    %c0_i32_0 = arith.constant 0 : i32
    %c0_i32_1 = arith.constant 0 : i32
    return %c0_i32, %c0_i32_0 : i32, i32
  }
  func.func @transform_7(%arg0: i32) -> (i32, i32) {
    %c0_i32 = arith.constant 0 : i32
    %c0_i32_0 = arith.constant 0 : i32
    %c0_i32_1 = arith.constant 0 : i32
    return %c0_i32, %c0_i32_0 : i32, i32
  }
  func.func @transform_8(%arg0: i32) -> (i32, i32) {
    %c0_i32 = arith.constant 0 : i32
    %c0_i32_0 = arith.constant 0 : i32
    %c0_i32_1 = arith.constant 0 : i32
    return %c0_i32, %c0_i32_0 : i32, i32
  }
  func.func @transform_9(%arg0: i32) -> (i32, i32, i32) {
    %c0_i32 = arith.constant 0 : i32
    %c0_i32_0 = arith.constant 0 : i32
    %c0_i32_1 = arith.constant 0 : i32
    return %arg0, %c0_i32, %c0_i32_0 : i32, i32, i32
  }
  func.func @transform_10(%arg0: i32) -> (i32, i32, i32) {
    %c0_i32 = arith.constant 0 : i32
    %c0_i32_0 = arith.constant 0 : i32
    %c0_i32_1 = arith.constant 0 : i32
    return %arg0, %c0_i32, %c0_i32_0 : i32, i32, i32
  }
}

</mosaic_0001>

<llo_original>
// kernel: dpcnn_forward.1
$region0: #{dpcnn_forward.1}
  #allocation0 [shape = 'u32[]', space=smem, size = 0x4, offset = 0x4, fixed_abs, tag = 'smem constant byte address 0x4 - core index']
  #allocation1 [shape = 'u32[144,128]{1,0:T(1,128)}', space=vmem, size = 0x12000, scoped, tag = 'internal scratch']
  #allocation2 [shape = 'f32[18,256]{1,0:T(8,128)}', space=vmem, size = 0x6000, scoped, tag = 'scratch operand']
  %s0 = inlined_call_operand.vmem [shape: f32[2,16,256], index: 0, kind: input, shape index: {}]
  %s1 = inlined_call_operand.vmem [shape: f32[3,256,256], index: 1, kind: input, shape index: {}]
  %s2 = inlined_call_operand.vmem [shape: f32[1,256], index: 2, kind: input, shape index: {}]
  %s3 = inlined_call_operand.vmem [shape: f32[3,256,256], index: 3, kind: input, shape index: {}]
  %s4 = inlined_call_operand.vmem [shape: f32[1,256], index: 4, kind: input, shape index: {}]
  %s5 = inlined_call_operand.vmem [shape: f32[256,128], index: 5, kind: input, shape index: {}]
  %s6 = inlined_call_operand.vmem [shape: f32[1,128], index: 6, kind: input, shape index: {}]
  %s7 = inlined_call_operand.vmem [shape: f32[8,16], index: 7, kind: input, shape index: {}]
  %s8 = inlined_call_operand.vmem [shape: f32[8,16], index: 8, kind: input, shape index: {}]
  %s9 = inlined_call_operand.hbm [shape: f32[2,1,128], index: 9, kind: output, shape index: {0}]
  %s10 = inlined_call_operand.vmem [shape: f32[2,1,256], index: 10, kind: output, shape index: {1}]
  %11 = xla_tuple %s9, %s10
  %s12 = sld [smem:[#allocation0]]
  $region77: #{dpcnn_forward.1} parent=0
    _
  %s14 = ssub.s32 1, %s12
  %s15 = scalar_select 0, %s14, %s12
  $region1: #{dpcnn_forward.1} parent=0
    #allocation3 [shape = 'u8[1024]{0}', space=vmem, size = 0x400, scoped, tag = 'output window, operand 0']
    #allocation4 [shape = 's32[2]{0}', space=sflag, size = 0x8, scoped, tag = 'scoped memory for dpcnn_forward.1']
    %16 = vsyncpa [#allocation4], 0
    %s17 = scalar_lea.sflag [#allocation4], 1
    %18 = vsyncpa %s17, 0
    loop: start=0, step=1, limit=4
    $region2: #{dpcnn_forward.1} parent=1 // loop_pre_header
      _
    $region3: #{dpcnn_forward.1} parent=1 // loop_header
      %s20 = sphi 0, %s24
      %p21 = scmp.ge.s32.totalorder %s20, 4
      %s30 = sphi 0, %s32
      %s33 = sphi 0, %s30
      %s34 = sphi 0, %s33
      %s50 = sphi 0, %s34
      %s54 = sphi 0, %s54
      %s56 = sphi 0, %s54
      %s57 = sphi 0, %s56
      %s71 = sphi 0, %s57
      %s75 = sphi 0, %s75
      %s77 = sphi 0, %s75
      %s78 = sphi 0, %s77
      %s92 = sphi 0, %s78
      %s96 = sphi 0, %s96
      %s98 = sphi 0, %s96
      %s99 = sphi 0, %s98
      %s113 = sphi 0, %s99
      %s117 = sphi 0, %s117
      %s119 = sphi 0, %s117
      %s120 = sphi 0, %s119
      %s134 = sphi 0, %s120
      %s138 = sphi 0, %s138
      %s140 = sphi 0, %s138
      %s141 = sphi 0, %s140
      %s155 = sphi 0, %s141
      %s159 = sphi 0, %s159
      %s161 = sphi 0, %s159
      %s162 = sphi 0, %s161
      %s176 = sphi 0, %s162
      %s180 = sphi 0, %s180
      %s182 = sphi 0, %s180
      %s183 = sphi 0, %s182
      %s197 = sphi 0, %s183
      %s201 = sphi 0, %s201
      %s203 = sphi 0, %s201
      %s204 = sphi 0, %s203
      %s218 = sphi 0, %s204
      %s224 = sphi 0, %s226
      %s227 = sphi 0, %s224
      %s228 = sphi 0, %s227
      %s244 = sphi 0, %s228
      %s250 = sphi 0, %s252
      %s253 = sphi 0, %s250
      %s254 = sphi 0, %s253
      %s270 = sphi 0, %s254
    $region4: #{dpcnn_forward.1} parent=1 // loop_header_branch
      %23 = sbr.rel (%p21) target = $region8
    $region5: #{dpcnn_forward.1} parent=1 // loop_body
      %s25 = ssub.s32 %s20, 1
      %s26 = ssub.s32 %s20, 2
      %s27 = sadd.s32 %s20, 1
      %s28 = ssub.s32 %s20, %s27
      %p29 = scmp.eq.s32.totalorder %s28, 0
      %s31 = sadd.s32 %s30, 1
      %s32 = scalar_select %p29, %s30, %s31
      %p35 = pneg %p29
      %p36 = scmp.eq.s32.totalorder %s20, 1
      %p37 = por %p35, %p36
      %p38 = scmp.ne.s32.totalorder %s30, %s33
      %p39 = scmp.eq.s32.totalorder %s20, 0
      %p40 = por %p38, %p39
      %p41 = scmp.ne.s32.totalorder %s30, %s33
      %p42 = scmp.eq.s32.totalorder %s25, 1
      %p43 = por %p41, %p42
      %p44 = scmp.ne.s32.totalorder %s33, %s34
      %p45 = scmp.eq.s32.totalorder %s25, 0
      %p46 = por %p44, %p45
      %p47 = scmp.ne.s32.totalorder %s33, %s34
      %p48 = scmp.eq.s32.totalorder %s26, 1
      %p49 = por %p47, %p48
      %p51 = scmp.ne.s32.totalorder %s34, %s50
      %p52 = scmp.eq.s32.totalorder %s26, 0
      %p53 = por %p51, %p52
      %s55 = sadd.s32 %s54, 1
      %p58 = scmp.eq.s32.totalorder %s20, 1
      %p59 = scmp.ne.s32.totalorder %s54, %s56
      %p60 = scmp.eq.s32.totalorder %s20, 0
      %p61 = por %p59, %p60
      %p62 = scmp.ne.s32.totalorder %s54, %s56
      %p63 = scmp.eq.s32.totalorder %s25, 1
      %p64 = por %p62, %p63
      %p65 = scmp.ne.s32.totalorder %s56, %s57
      %p66 = scmp.eq.s32.totalorder %s25, 0
      %p67 = por %p65, %p66
      %p68 = scmp.ne.s32.totalorder %s56, %s57
      %p69 = scmp.eq.s32.totalorder %s26, 1
      %p70 = por %p68, %p69
      %p72 = scmp.ne.s32.totalorder %s57, %s71
      %p73 = scmp.eq.s32.totalorder %s26, 0
      %p74 = por %p72, %p73
      %s76 = sadd.s32 %s75, 1
      %p79 = scmp.eq.s32.totalorder %s20, 1
      %p80 = scmp.ne.s32.totalorder %s75, %s77
      %p81 = scmp.eq.s32.totalorder %s20, 0
      %p82 = por %p80, %p81
      %p83 = scmp.ne.s32.totalorder %s75, %s77
      %p84 = scmp.eq.s32.totalorder %s25, 1
      %p85 = por %p83, %p84
      %p86 = scmp.ne.s32.totalorder %s77, %s78
      %p87 = scmp.eq.s32.totalorder %s25, 0
      %p88 = por %p86, %p87
      %p89 = scmp.ne.s32.totalorder %s77, %s78
      %p90 = scmp.eq.s32.totalorder %s26, 1
      %p91 = por %p89, %p90
      %p93 = scmp.ne.s32.totalorder %s78, %s92
      %p94 = scmp.eq.s32.totalorder %s26, 0
      %p95 = por %p93, %p94
      %s97 = sadd.s32 %s96, 1
      %p100 = scmp.eq.s32.totalorder %s20, 1
      %p101 = scmp.ne.s32.totalorder %s96, %s98
      %p102 = scmp.eq.s32.totalorder %s20, 0
      %p103 = por %p101, %p102
      %p104 = scmp.ne.s32.totalorder %s96, %s98
      %p105 = scmp.eq.s32.totalorder %s25, 1
      %p106 = por %p104, %p105
      %p107 = scmp.ne.s32.totalorder %s98, %s99
      %p108 = scmp.eq.s32.totalorder %s25, 0
      %p109 = por %p107, %p108
      %p110 = scmp.ne.s32.totalorder %s98, %s99
      %p111 = scmp.eq.s32.totalorder %s26, 1
      %p112 = por %p110, %p111
      %p114 = scmp.ne.s32.totalorder %s99, %s113
      %p115 = scmp.eq.s32.totalorder %s26, 0
      %p116 = por %p114, %p115
      %s118 = sadd.s32 %s117, 1
      %p121 = scmp.eq.s32.totalorder %s20, 1
      %p122 = scmp.ne.s32.totalorder %s117, %s119
      %p123 = scmp.eq.s32.totalorder %s20, 0
      %p124 = por %p122, %p123
      %p125 = scmp.ne.s32.totalorder %s117, %s119
      %p126 = scmp.eq.s32.totalorder %s25, 1
      %p127 = por %p125, %p126
      %p128 = scmp.ne.s32.totalorder %s119, %s120
      %p129 = scmp.eq.s32.totalorder %s25, 0
      %p130 = por %p128, %p129
      %p131 = scmp.ne.s32.totalorder %s119, %s120
      %p132 = scmp.eq.s32.totalorder %s26, 1
      %p133 = por %p131, %p132
      %p135 = scmp.ne.s32.totalorder %s120, %s134
      %p136 = scmp.eq.s32.totalorder %s26, 0
      %p137 = por %p135, %p136
      %s139 = sadd.s32 %s138, 1
      %p142 = scmp.eq.s32.totalorder %s20, 1
      %p143 = scmp.ne.s32.totalorder %s138, %s140
      %p144 = scmp.eq.s32.totalorder %s20, 0
      %p145 = por %p143, %p144
      %p146 = scmp.ne.s32.totalorder %s138, %s140
      %p147 = scmp.eq.s32.totalorder %s25, 1
      %p148 = por %p146, %p147
      %p149 = scmp.ne.s32.totalorder %s140, %s141
      %p150 = scmp.eq.s32.totalorder %s25, 0
      %p151 = por %p149, %p150
      %p152 = scmp.ne.s32.totalorder %s140, %s141
      %p153 = scmp.eq.s32.totalorder %s26, 1
      %p154 = por %p152, %p153
      %p156 = scmp.ne.s32.totalorder %s141, %s155
      %p157 = scmp.eq.s32.totalorder %s26, 0
      %p158 = por %p156, %p157
      %s160 = sadd.s32 %s159, 1
      %p163 = scmp.eq.s32.totalorder %s20, 1
      %p164 = scmp.ne.s32.totalorder %s159, %s161
      %p165 = scmp.eq.s32.totalorder %s20, 0
      %p166 = por %p164, %p165
      %p167 = scmp.ne.s32.totalorder %s159, %s161
      %p168 = scmp.eq.s32.totalorder %s25, 1
      %p169 = por %p167, %p168
      %p170 = scmp.ne.s32.totalorder %s161, %s162
      %p171 = scmp.eq.s32.totalorder %s25, 0
      %p172 = por %p170, %p171
      %p173 = scmp.ne.s32.totalorder %s161, %s162
      %p174 = scmp.eq.s32.totalorder %s26, 1
      %p175 = por %p173, %p174
      %p177 = scmp.ne.s32.totalorder %s162, %s176
      %p178 = scmp.eq.s32.totalorder %s26, 0
      %p179 = por %p177, %p178
      %s181 = sadd.s32 %s180, 1
      %p184 = scmp.eq.s32.totalorder %s20, 1
      %p185 = scmp.ne.s32.totalorder %s180, %s182
      %p186 = scmp.eq.s32.totalorder %s20, 0
      %p187 = por %p185, %p186
      %p188 = scmp.ne.s32.totalorder %s180, %s182
      %p189 = scmp.eq.s32.totalorder %s25, 1
      %p190 = por %p188, %p189
      %p191 = scmp.ne.s32.totalorder %s182, %s183
      %p192 = scmp.eq.s32.totalorder %s25, 0
      %p193 = por %p191, %p192
      %p194 = scmp.ne.s32.totalorder %s182, %s183
      %p195 = scmp.eq.s32.totalorder %s26, 1
      %p196 = por %p194, %p195
      %p198 = scmp.ne.s32.totalorder %s183, %s197
      %p199 = scmp.eq.s32.totalorder %s26, 0
      %p200 = por %p198, %p199
      %s202 = sadd.s32 %s201, 1
      %p205 = scmp.eq.s32.totalorder %s20, 1
      %p206 = scmp.ne.s32.totalorder %s201, %s203
      %p207 = scmp.eq.s32.totalorder %s20, 0
      %p208 = por %p206, %p207
      %p209 = scmp.ne.s32.totalorder %s201, %s203
      %p210 = scmp.eq.s32.totalorder %s25, 1
      %p211 = por %p209, %p210
      %p212 = scmp.ne.s32.totalorder %s203, %s204
      %p213 = scmp.eq.s32.totalorder %s25, 0
      %p214 = por %p212, %p213
      %p215 = scmp.ne.s32.totalorder %s203, %s204
      %p216 = scmp.eq.s32.totalorder %s26, 1
      %p217 = por %p215, %p216
      %p219 = scmp.ne.s32.totalorder %s204, %s218
      %p220 = scmp.eq.s32.totalorder %s26, 0
      %p221 = por %p219, %p220
      %s222 = ssub.s32 %s20, %s27
      %p223 = scmp.eq.s32.totalorder %s222, 0
      %s225 = sadd.s32 %s224, 1
      %s226 = scalar_select %p223, %s224, %s225
      %p229 = pneg %p223
      %p230 = scmp.eq.s32.totalorder %s20, 1
      %p231 = por %p229, %p230
      %p232 = scmp.ne.s32.totalorder %s224, %s227
      %p233 = scmp.eq.s32.totalorder %s20, 0
      %p234 = por %p232, %p233
      %p235 = scmp.ne.s32.totalorder %s224, %s227
      %p236 = scmp.eq.s32.totalorder %s25, 1
      %p237 = por %p235, %p236
      %p238 = scmp.ne.s32.totalorder %s227, %s228
      %p239 = scmp.eq.s32.totalorder %s25, 0
      %p240 = por %p238, %p239
      %p241 = scmp.ne.s32.totalorder %s227, %s228
      %p242 = scmp.eq.s32.totalorder %s26, 1
      %p243 = por %p241, %p242
      %p245 = scmp.ne.s32.totalorder %s228, %s244
      %p246 = scmp.eq.s32.totalorder %s26, 0
      %p247 = por %p245, %p246
      %s248 = ssub.s32 %s20, %s27
      %p249 = scmp.eq.s32.totalorder %s248, 0
      %s251 = sadd.s32 %s250, 1
      %s252 = scalar_select %p249, %s250, %s251
      %p255 = pneg %p249
      %p256 = scmp.eq.s32.totalorder %s20, 1
      %p257 = por %p255, %p256
      %p258 = scmp.ne.s32.totalorder %s250, %s253
      %p259 = scmp.eq.s32.totalorder %s20, 0
      %p260 = por %p258, %p259
      %p261 = scmp.ne.s32.totalorder %s250, %s253
      %p262 = scmp.eq.s32.totalorder %s25, 1
      %p263 = por %p261, %p262
      %p264 = scmp.ne.s32.totalorder %s253, %s254
      %p265 = scmp.eq.s32.totalorder %s25, 0
      %p266 = por %p264, %p265
      %p267 = scmp.ne.s32.totalorder %s253, %s254
      %p268 = scmp.eq.s32.totalorder %s26, 1
      %p269 = por %p267, %p268
      %p271 = scmp.ne.s32.totalorder %s254, %s270
      %p272 = scmp.eq.s32.totalorder %s26, 0
      %p273 = por %p271, %p272
      %p274 = scmp.le.s32.totalorder 1, %s20
      %p275 = scmp.lt.s32.totalorder %s20, 3
      %p276 = pnand %p274, %p275
      %p277 = pneg %p276
      // Predicated region
      $region9: #{dpcnn_forward.1} parent=5 // pred_check
        _
      $region10: #{dpcnn_forward.1} parent=5 // pred_check_branch
        %279 = sbr.rel (%p276) target = $region12
      $region11: #{dpcnn_forward.1} parent=5 // pred_region
        %s280 = ssub.s32 %s20, 1
        // Predicated region
        $region13: #{dpcnn_forward.1} parent=11 // pred_check
          %p281 = pneg %p67
        $region14: #{dpcnn_forward.1} parent=11 // pred_check_branch
          %283 = sbr.rel (%p281) target = $region16
        $region15: #{dpcnn_forward.1} parent=11 // pred_region
          _
        $region16: #{dpcnn_forward.1} parent=11 // pred_fallthru
          _
        // Predicated region
        $region17: #{dpcnn_forward.1} parent=11 // pred_check
          %p284 = pneg %p88
        $region18: #{dpcnn_forward.1} parent=11 // pred_check_branch
          %286 = sbr.rel (%p284) target = $region20
        $region19: #{dpcnn_forward.1} parent=11 // pred_region
          _
        $region20: #{dpcnn_forward.1} parent=11 // pred_fallthru
          _
        // Predicated region
        $region21: #{dpcnn_forward.1} parent=11 // pred_check
          %p287 = pneg %p109
        $region22: #{dpcnn_forward.1} parent=11 // pred_check_branch
          %289 = sbr.rel (%p287) target = $region24
        $region23: #{dpcnn_forward.1} parent=11 // pred_region
          _
        $region24: #{dpcnn_forward.1} parent=11 // pred_fallthru
          _
        // Predicated region
        $region25: #{dpcnn_forward.1} parent=11 // pred_check
          %p290 = pneg %p130
        $region26: #{dpcnn_forward.1} parent=11 // pred_check_branch
          %292 = sbr.rel (%p290) target = $region28
        $region27: #{dpcnn_forward.1} parent=11 // pred_region
          _
        $region28: #{dpcnn_forward.1} parent=11 // pred_fallthru
          _
        // Predicated region
        $region29: #{dpcnn_forward.1} parent=11 // pred_check
          %p293 = pneg %p151
        $region30: #{dpcnn_forward.1} parent=11 // pred_check_branch
          %295 = sbr.rel (%p293) target = $region32
        $region31: #{dpcnn_forward.1} parent=11 // pred_region
          _
        $region32: #{dpcnn_forward.1} parent=11 // pred_fallthru
          _
        // Predicated region
        $region33: #{dpcnn_forward.1} parent=11 // pred_check
          %p296 = pneg %p172
        $region34: #{dpcnn_forward.1} parent=11 // pred_check_branch
          %298 = sbr.rel (%p296) target = $region36
        $region35: #{dpcnn_forward.1} parent=11 // pred_region
          _
        $region36: #{dpcnn_forward.1} parent=11 // pred_fallthru
          _
        // Predicated region
        $region37: #{dpcnn_forward.1} parent=11 // pred_check
          %p299 = pneg %p193
        $region38: #{dpcnn_forward.1} parent=11 // pred_check_branch
          %301 = sbr.rel (%p299) target = $region40
        $region39: #{dpcnn_forward.1} parent=11 // pred_region
          _
        $region40: #{dpcnn_forward.1} parent=11 // pred_fallthru
          _
        // Predicated region
        $region41: #{dpcnn_forward.1} parent=11 // pred_check
          %p302 = pneg %p214
        $region42: #{dpcnn_forward.1} parent=11 // pred_check_branch
          %304 = sbr.rel (%p302) target = $region44
        $region43: #{dpcnn_forward.1} parent=11 // pred_region
          _
        $region44: #{dpcnn_forward.1} parent=11 // pred_fallthru
          _
      $region12: #{dpcnn_forward.1} parent=5 // pred_fallthru
        _
      %p305 = scmp.lt.s32.totalorder %s20, 2
      // Predicated region
      $region45: #{dpcnn_forward.1} parent=5 // pred_check
        %p306 = pneg %p305
      $region46: #{dpcnn_forward.1} parent=5 // pred_check_branch
        %308 = sbr.rel (%p306) target = $region48
      $region47: #{dpcnn_forward.1} parent=5 // pred_region
        // Predicated region
        $region49: #{dpcnn_forward.1} parent=47 // pred_check
          %p309 = pneg %p40
        $region50: #{dpcnn_forward.1} parent=47 // pred_check_branch
          %311 = sbr.rel (%p309) target = $region52
        $region51: #{dpcnn_forward.1} parent=47 // pred_region
          %p312 = scmp.lt.s32.totalorder %s20, 1
          %s313 = scalar_select %p312, %s20, 1
          %s314 = smul.addr %s313, 4
          %s315 = smul.addr %s314, 8
          %s316 = scalar_lea.vmem %s0, %s315
        $region52: #{dpcnn_forward.1} parent=47 // pred_fallthru
          _
      $region48: #{dpcnn_forward.1} parent=5 // pred_fallthru
        _
      %p317 = scmp.le.s32.totalorder 1, %s20
      %p318 = scmp.lt.s32.totalorder %s20, 3
      %p319 = pnand %p317, %p318
      %p320 = pneg %p319
      // Predicated region
      $region53: #{dpcnn_forward.1} parent=5 // pred_check
        _
      $region54: #{dpcnn_forward.1} parent=5 // pred_check_branch
        %322 = sbr.rel (%p319) target = $region56
      $region55: #{dpcnn_forward.1} parent=5 // pred_region
        %s323 = ssub.s32 %s20, 1
        %p324 = scmp.lt.s32.totalorder %s25, 1
        %s325 = scalar_select %p324, %s25, 1
        %s326 = smul.addr %s325, 4
        %s327 = smul.addr %s326, 8
        %s328 = scalar_lea.vmem %s0, %s327
        %p329 = pneg %p46
        %p330 = pneg %p43
        %p331 = pneg %p67
        %p332 = pneg %p64
        %p333 = pneg %p88
        %p334 = pneg %p85
        %p335 = pneg %p109
        %p336 = pneg %p106
        %p337 = pneg %p130
        %p338 = pneg %p127
        %p339 = pneg %p151
        %p340 = pneg %p148
        %p341 = pneg %p172
        %p342 = pneg %p169
        %p343 = pneg %p193
        %p344 = pneg %p190
        %p345 = pneg %p214
        %p346 = pneg %p211
        %p347 = pneg %p240
        %p348 = pneg %p237
        %s349 = sand.u32 %s227, 1
        %s350 = scalar_lea.sflag [#allocation4], %s349
        %s351 = sand.u32 %s227, 1
        %s352 = scalar_lea.vmem [#allocation3], %s351
        %p353 = pneg %p266
        %p354 = pneg %p263
        %p355 = scmp.lt.s32.totalorder %s25, 1
        %s356 = scalar_select %p355, %s25, 1
        %s357 = smul.addr %s356, 2
        %s358 = scalar_lea.vmem %s10, %s357
        %p359 = scmp.lt.s32.totalorder %s25, 1
        %s360 = scalar_select %p359, %s25, 1
        %s361 = smul.addr %s360, 4
        %s362 = smul.addr %s361, 8
        %s363 = scalar_lea.vmem %s0, %s362
        %p364 = scmp.lt.s32.totalorder %s25, 1
        %s365 = scalar_select %p364, %s25, 1
        %s366 = smul.addr %s365, 2
        %s367 = scalar_lea.vmem %s10, %s366
        %v368 = vld [vmem:[%s2] sm:$0x3]
        %v369 = vld [vmem:[%s4] sm:$0x3]
        %v370 = vld [vmem:[%s363] sm:$0xff]
        %v371 = vld [vmem:[%s363 + $0x8] sm:$0xff]
        %v372 = vld [vmem:[%s363 + $0x10] sm:$0x3f]
        %v373 = vld [vmem:[%s363 + $0x18] sm:$0x3f]
        %v374 = vld [vmem:[%s363] sm:$0xfe]
        %v375 = vld [vmem:[%s363 + $0x8] sm:$0xfe]
        %v376 = vld [vmem:[%s363 + $0x10] sm:$0x7f]
        %v377 = vld [vmem:[%s363 + $0x18] sm:$0x7f]
        %v378 = vld [vmem:[%s363] sm:$0xfc]
        %v379 = vld [vmem:[%s363 + $0x8] sm:$0xfc]
        %v380 = vld [vmem:[%s363 + $0x10] sm:$0xff]
        %v381 = vld [vmem:[%s363 + $0x18] sm:$0xff]
        %v382 = vld [vmem:[%s1] sm:$0xff]
        %v383 = vld [vmem:[%s1 + $0x8] sm:$0xff]
        %v384 = vld [vmem:[%s1 + $0x10] sm:$0xff]
        %v385 = vld [vmem:[%s1 + $0x18] sm:$0xff]
        %v386 = vld [vmem:[%s1 + $0x20] sm:$0xff]
        %v387 = vld [vmem:[%s1 + $0x28] sm:$0xff]
        %v388 = vld [vmem:[%s1 + $0x30] sm:$0xff]
        %v389 = vld [vmem:[%s1 + $0x38] sm:$0xff]
        %v390 = vld [vmem:[%s1 + $0x40] sm:$0xff]
        %v391 = vld [vmem:[%s1 + $0x48] sm:$0xff]
        %v392 = vld [vmem:[%s1 + $0x50] sm:$0xff]
        %v393 = vld [vmem:[%s1 + $0x58] sm:$0xff]
        %v394 = vld [vmem:[%s1 + $0x60] sm:$0xff]
        %v395 = vld [vmem:[%s1 + $0x68] sm:$0xff]
        %v396 = vld [vmem:[%s1 + $0x70] sm:$0xff]
        %v397 = vld [vmem:[%s1 + $0x78] sm:$0xff]
        %v398 = vld [vmem:[%s1 + $0x80] sm:$0xff]
        %v399 = vld [vmem:[%s1 + $0x88] sm:$0xff]
        %v400 = vld [vmem:[%s1 + $0x90] sm:$0xff]
        %v401 = vld [vmem:[%s1 + $0x98] sm:$0xff]
        %v402 = vld [vmem:[%s1 + $0xa0] sm:$0xff]
        %v403 = vld [vmem:[%s1 + $0xa8] sm:$0xff]
        %v404 = vld [vmem:[%s1 + $0xb0] sm:$0xff]
        %v405 = vld [vmem:[%s1 + $0xb8] sm:$0xff]
        %v406 = vld [vmem:[%s1 + $0xc0] sm:$0xff]
        %v407 = vld [vmem:[%s1 + $0xc8] sm:$0xff]
        %v408 = vld [vmem:[%s1 + $0xd0] sm:$0xff]
        %v409 = vld [vmem:[%s1 + $0xd8] sm:$0xff]
        %v410 = vld [vmem:[%s1 + $0xe0] sm:$0xff]
        %v411 = vld [vmem:[%s1 + $0xe8] sm:$0xff]
        %v412 = vld [vmem:[%s1 + $0xf0] sm:$0xff]
        %v413 = vld [vmem:[%s1 + $0xf8] sm:$0xff]
        %v414 = vld [vmem:[%s1 + $0x100] sm:$0xff]
        %v415 = vld [vmem:[%s1 + $0x108] sm:$0xff]
        %v416 = vld [vmem:[%s1 + $0x110] sm:$0xff]
        %v417 = vld [vmem:[%s1 + $0x118] sm:$0xff]
        %v418 = vld [vmem:[%s1 + $0x120] sm:$0xff]
        %v419 = vld [vmem:[%s1 + $0x128] sm:$0xff]
        %v420 = vld [vmem:[%s1 + $0x130] sm:$0xff]
        %v421 = vld [vmem:[%s1 + $0x138] sm:$0xff]
        %v422 = vld [vmem:[%s1 + $0x140] sm:$0xff]
        %v423 = vld [vmem:[%s1 + $0x148] sm:$0xff]
        %v424 = vld [vmem:[%s1 + $0x150] sm:$0xff]
        %v425 = vld [vmem:[%s1 + $0x158] sm:$0xff]
        %v426 = vld [vmem:[%s1 + $0x160] sm:$0xff]
        %v427 = vld [vmem:[%s1 + $0x168] sm:$0xff]
        %v428 = vld [vmem:[%s1 + $0x170] sm:$0xff]
        %v429 = vld [vmem:[%s1 + $0x178] sm:$0xff]
        %v430 = vld [vmem:[%s1 + $0x180] sm:$0xff]
        %v431 = vld [vmem:[%s1 + $0x188] sm:$0xff]
        %v432 = vld [vmem:[%s1 + $0x190] sm:$0xff]
        %v433 = vld [vmem:[%s1 + $0x198] sm:$0xff]
        %v434 = vld [vmem:[%s1 + $0x1a0] sm:$0xff]
        %v435 = vld [vmem:[%s1 + $0x1a8] sm:$0xff]
        %v436 = vld [vmem:[%s1 + $0x1b0] sm:$0xff]
        %v437 = vld [vmem:[%s1 + $0x1b8] sm:$0xff]
        %v438 = vld [vmem:[%s1 + $0x1c0] sm:$0xff]
        %v439 = vld [vmem:[%s1 + $0x1c8] sm:$0xff]
        %v440 = vld [vmem:[%s1 + $0x1d0] sm:$0xff]
        %v441 = vld [vmem:[%s1 + $0x1d8] sm:$0xff]
        %v442 = vld [vmem:[%s1 + $0x1e0] sm:$0xff]
        %v443 = vld [vmem:[%s1 + $0x1e8] sm:$0xff]
        %v444 = vld [vmem:[%s1 + $0x1f0] sm:$0xff]
        %v445 = vld [vmem:[%s1 + $0x1f8] sm:$0xff]
        %s446 = scalar_lea.vmem %s1, 512
        %v447 = vld [vmem:[%s446] sm:$0xff]
        %v448 = vld [vmem:[%s446 + $0x8] sm:$0xff]
        %v449 = vld [vmem:[%s446 + $0x10] sm:$0xff]
        %v450 = vld [vmem:[%s446 + $0x18] sm:$0xff]
        %v451 = vld [vmem:[%s446 + $0x20] sm:$0xff]
        %v452 = vld [vmem:[%s446 + $0x28] sm:$0xff]
        %v453 = vld [vmem:[%s446 + $0x30] sm:$0xff]
        %v454 = vld [vmem:[%s446 + $0x38] sm:$0xff]
        %v455 = vld [vmem:[%s446 + $0x40] sm:$0xff]
        %v456 = vld [vmem:[%s446 + $0x48] sm:$0xff]
        %v457 = vld [vmem:[%s446 + $0x50] sm:$0xff]
        %v458 = vld [vmem:[%s446 + $0x58] sm:$0xff]
        %v459 = vld [vmem:[%s446 + $0x60] sm:$0xff]
        %v460 = vld [vmem:[%s446 + $0x68] sm:$0xff]
        %v461 = vld [vmem:[%s446 + $0x70] sm:$0xff]
        %v462 = vld [vmem:[%s446 + $0x78] sm:$0xff]
        %v463 = vld [vmem:[%s446 + $0x80] sm:$0xff]
        %v464 = vld [vmem:[%s446 + $0x88] sm:$0xff]
        %v465 = vld [vmem:[%s446 + $0x90] sm:$0xff]
        %v466 = vld [vmem:[%s446 + $0x98] sm:$0xff]
        %v467 = vld [vmem:[%s446 + $0xa0] sm:$0xff]
        %v468 = vld [vmem:[%s446 + $0xa8] sm:$0xff]
        %v469 = vld [vmem:[%s446 + $0xb0] sm:$0xff]
        %v470 = vld [vmem:[%s446 + $0xb8] sm:$0xff]
        %v471 = vld [vmem:[%s446 + $0xc0] sm:$0xff]
        %v472 = vld [vmem:[%s446 + $0xc8] sm:$0xff]
        %v473 = vld [vmem:[%s446 + $0xd0] sm:$0xff]
        %v474 = vld [vmem:[%s446 + $0xd8] sm:$0xff]
        %v475 = vld [vmem:[%s446 + $0xe0] sm:$0xff]
        %v476 = vld [vmem:[%s446 + $0xe8] sm:$0xff]
        %v477 = vld [vmem:[%s446 + $0xf0] sm:$0xff]
        %v478 = vld [vmem:[%s446 + $0xf8] sm:$0xff]
        %v479 = vld [vmem:[%s446 + $0x100] sm:$0xff]
        %v480 = vld [vmem:[%s446 + $0x108] sm:$0xff]
        %v481 = vld [vmem:[%s446 + $0x110] sm:$0xff]
        %v482 = vld [vmem:[%s446 + $0x118] sm:$0xff]
        %v483 = vld [vmem:[%s446 + $0x120] sm:$0xff]
        %v484 = vld [vmem:[%s446 + $0x128] sm:$0xff]
        %v485 = vld [vmem:[%s446 + $0x130] sm:$0xff]
        %v486 = vld [vmem:[%s446 + $0x138] sm:$0xff]
        %v487 = vld [vmem:[%s446 + $0x140] sm:$0xff]
        %v488 = vld [vmem:[%s446 + $0x148] sm:$0xff]
        %v489 = vld [vmem:[%s446 + $0x150] sm:$0xff]
        %v490 = vld [vmem:[%s446 + $0x158] sm:$0xff]
        %v491 = vld [vmem:[%s446 + $0x160] sm:$0xff]
        %v492 = vld [vmem:[%s446 + $0x168] sm:$0xff]
        %v493 = vld [vmem:[%s446 + $0x170] sm:$0xff]
        %v494 = vld [vmem:[%s446 + $0x178] sm:$0xff]
        %v495 = vld [vmem:[%s446 + $0x180] sm:$0xff]
        %v496 = vld [vmem:[%s446 + $0x188] sm:$0xff]
        %v497 = vld [vmem:[%s446 + $0x190] sm:$0xff]
        %v498 = vld [vmem:[%s446 + $0x198] sm:$0xff]
        %v499 = vld [vmem:[%s446 + $0x1a0] sm:$0xff]
        %v500 = vld [vmem:[%s446 + $0x1a8] sm:$0xff]
        %v501 = vld [vmem:[%s446 + $0x1b0] sm:$0xff]
        %v502 = vld [vmem:[%s446 + $0x1b8] sm:$0xff]
        %v503 = vld [vmem:[%s446 + $0x1c0] sm:$0xff]
        %v504 = vld [vmem:[%s446 + $0x1c8] sm:$0xff]
        %v505 = vld [vmem:[%s446 + $0x1d0] sm:$0xff]
        %v506 = vld [vmem:[%s446 + $0x1d8] sm:$0xff]
        %v507 = vld [vmem:[%s446 + $0x1e0] sm:$0xff]
        %v508 = vld [vmem:[%s446 + $0x1e8] sm:$0xff]
        %v509 = vld [vmem:[%s446 + $0x1f0] sm:$0xff]
        %v510 = vld [vmem:[%s446 + $0x1f8] sm:$0xff]
        %vm515 = vcmask 1046528
        %v516 = vrot.slane %v374, 1
        %v517 = vrot.slane %v376, 1
        %v518 = vsel %vm515, %v516, %v517
        %v519 = vrot.slane %v375, 1
        %v520 = vrot.slane %v377, 1
        %v521 = vsel %vm515, %v519, %v520
        %526 = vmatprep.subr.mxu0 %v448
        %527 = vmatpush1.msra.mxu0 %v447
        %528 = vmatprep.subr.mxu0 %v450
        %529 = vmatpush1.msra.mxu0 %v449
        %530 = vmatprep.subr.mxu0 %v452
        %531 = vmatpush1.msra.mxu0 %v451
        %532 = vmatprep.subr.mxu0 %v454
        %533 = vmatpush1.msra.mxu0 %v453
        %534 = vmatprep.subr.mxu0 %v456
        %535 = vmatpush1.msra.mxu0 %v455
        %536 = vmatprep.subr.mxu0 %v458
        %537 = vmatpush1.msra.mxu0 %v457
        %538 = vmatprep.subr.mxu0 %v460
        %539 = vmatpush1.msra.mxu0 %v459
        %540 = vmatprep.subr.mxu0 %v462
        %541 = vmatpush1.msra.mxu0 %v461
        %542 = vmatprep.subr.mxu0 %v464
        %543 = vmatpush1.msra.mxu0 %v463
        %544 = vmatprep.subr.mxu0 %v466
        %545 = vmatpush1.msra.mxu0 %v465
        %546 = vmatprep.subr.mxu0 %v468
        %547 = vmatpush1.msra.mxu0 %v467
        %548 = vmatprep.subr.mxu0 %v470
        %549 = vmatpush1.msra.mxu0 %v469
        %550 = vmatprep.subr.mxu0 %v472
        %551 = vmatpush1.msra.mxu0 %v471
        %552 = vmatprep.subr.mxu0 %v474
        %553 = vmatpush1.msra.mxu0 %v473
        %554 = vmatprep.subr.mxu0 %v476
        %555 = vmatpush1.msra.mxu0 %v475
        %556 = vmatprep.subr.mxu0 %v478
        %557 = vmatpush1.msra.mxu0 %v477
        %558 = vmatprep.subr.mxu0 %v480
        %559 = vmatpush1.msra.mxu0 %v479
        %560 = vmatprep.subr.mxu0 %v482
        %561 = vmatpush1.msra.mxu0 %v481
        %562 = vmatprep.subr.mxu0 %v484
        %563 = vmatpush1.msra.mxu0 %v483
        %564 = vmatprep.subr.mxu0 %v486
        %565 = vmatpush1.msra.mxu0 %v485
        %566 = vmatprep.subr.mxu0 %v488
        %567 = vmatpush1.msra.mxu0 %v487
        %568 = vmatprep.subr.mxu0 %v490
        %569 = vmatpush1.msra.mxu0 %v489
        %570 = vmatprep.subr.mxu0 %v492
        %571 = vmatpush1.msra.mxu0 %v491
        %572 = vmatprep.subr.mxu0 %v494
        %573 = vmatpush1.msra.mxu0 %v493
        %574 = vmatprep.subr.mxu0 %v496
        %575 = vmatpush1.msra.mxu0 %v495
        %576 = vmatprep.subr.mxu0 %v498
        %577 = vmatpush1.msra.mxu0 %v497
        %578 = vmatprep.subr.mxu0 %v500
        %579 = vmatpush1.msra.mxu0 %v499
        %580 = vmatprep.subr.mxu0 %v502
        %581 = vmatpush1.msra.mxu0 %v501
        %582 = vmatprep.subr.mxu0 %v504
        %583 = vmatpush1.msra.mxu0 %v503
        %584 = vmatprep.subr.mxu0 %v506
        %585 = vmatpush1.msra.mxu0 %v505
        %586 = vmatprep.subr.mxu0 %v508
        %587 = vmatpush1.msra.mxu0 %v507
        %588 = vmatprep.subr.mxu0 %v510
        %589 = vmatpush1.msra.mxu0 %v509
        %590 = vmatprep.mubr.f32.mxu0 %v521
        %591 = vmatmul.mubr.f32.gmra.mrb[0].mxu0 %v518
        %v592 = vpop.f32.mrb[0].mxu0
        %v593 = vadd.f32 0.0, %v592
        %v594 = vpop.f32.mrb[0].mxu0
        %v595 = vadd.f32 0.0, %v594
        %596 = vmatprep.mubr.f32.mxu0 %v520
        %597 = vmatmul.mubr.f32.gmra.mrb[0].mxu0 %v517
        %v598 = vpop.f32.mrb[0].mxu0
        %v599 = vadd.f32 0.0, %v598
        %v600 = vpop.f32.mrb[0].mxu0
        %v601 = vadd.f32 0.0, %v600
        %602 = vdwg.mxu0
        %603 = vmatprep.subr.mxu0 %v383
        %604 = vmatpush1.msra.mxu0 %v382
        %605 = vmatprep.subr.mxu0 %v385
        %606 = vmatpush1.msra.mxu0 %v384
        %607 = vmatprep.subr.mxu0 %v387
        %608 = vmatpush1.msra.mxu0 %v386
        %609 = vmatprep.subr.mxu0 %v389
        %610 = vmatpush1.msra.mxu0 %v388
        %611 = vmatprep.subr.mxu0 %v391
        %612 = vmatpush1.msra.mxu0 %v390
        %613 = vmatprep.subr.mxu0 %v393
        %614 = vmatpush1.msra.mxu0 %v392
        %615 = vmatprep.subr.mxu0 %v395
        %616 = vmatpush1.msra.mxu0 %v394
        %617 = vmatprep.subr.mxu0 %v397
        %618 = vmatpush1.msra.mxu0 %v396
        %619 = vmatprep.subr.mxu0 %v399
        %620 = vmatpush1.msra.mxu0 %v398
        %621 = vmatprep.subr.mxu0 %v401
        %622 = vmatpush1.msra.mxu0 %v400
        %623 = vmatprep.subr.mxu0 %v403
        %624 = vmatpush1.msra.mxu0 %v402
        %625 = vmatprep.subr.mxu0 %v405
        %626 = vmatpush1.msra.mxu0 %v404
        %627 = vmatprep.subr.mxu0 %v407
        %628 = vmatpush1.msra.mxu0 %v406
        %629 = vmatprep.subr.mxu0 %v409
        %630 = vmatpush1.msra.mxu0 %v408
        %631 = vmatprep.subr.mxu0 %v411
        %632 = vmatpush1.msra.mxu0 %v410
        %633 = vmatprep.subr.mxu0 %v413
        %634 = vmatpush1.msra.mxu0 %v412
        %635 = vmatprep.subr.mxu0 %v415
        %636 = vmatpush1.msra.mxu0 %v414
        %637 = vmatprep.subr.mxu0 %v417
        %638 = vmatpush1.msra.mxu0 %v416
        %639 = vmatprep.subr.mxu0 %v419
        %640 = vmatpush1.msra.mxu0 %v418
        %641 = vmatprep.subr.mxu0 %v421
        %642 = vmatpush1.msra.mxu0 %v420
        %643 = vmatprep.subr.mxu0 %v423
        %644 = vmatpush1.msra.mxu0 %v422
        %645 = vmatprep.subr.mxu0 %v425
        %646 = vmatpush1.msra.mxu0 %v424
        %647 = vmatprep.subr.mxu0 %v427
        %648 = vmatpush1.msra.mxu0 %v426
        %649 = vmatprep.subr.mxu0 %v429
        %650 = vmatpush1.msra.mxu0 %v428
        %651 = vmatprep.subr.mxu0 %v431
        %652 = vmatpush1.msra.mxu0 %v430
        %653 = vmatprep.subr.mxu0 %v433
        %654 = vmatpush1.msra.mxu0 %v432
        %655 = vmatprep.subr.mxu0 %v435
        %656 = vmatpush1.msra.mxu0 %v434
        %657 = vmatprep.subr.mxu0 %v437
        %658 = vmatpush1.msra.mxu0 %v436
        %659 = vmatprep.subr.mxu0 %v439
        %660 = vmatpush1.msra.mxu0 %v438
        %661 = vmatprep.subr.mxu0 %v441
        %662 = vmatpush1.msra.mxu0 %v440
        %663 = vmatprep.subr.mxu0 %v443
        %664 = vmatpush1.msra.mxu0 %v442
        %665 = vmatprep.subr.mxu0 %v445
        %666 = vmatpush1.msra.mxu0 %v444
        %667 = vmatprep.mubr.f32.mxu0 %v371
        %668 = vmatmul.mubr.f32.gmra.mrb[0].mxu0 %v370
        %v669 = vpop.f32.mrb[0].mxu0
        %v670 = vadd.f32 %v593, %v669
        %v671 = vpop.f32.mrb[0].mxu0
        %v672 = vadd.f32 %v595, %v671
        %673 = vmatprep.mubr.f32.mxu0 %v373
        %674 = vmatmul.mubr.f32.gmra.mrb[0].mxu0 %v372
        %v675 = vpop.f32.mrb[0].mxu0
        %v676 = vadd.f32 %v599, %v675
        %v677 = vpop.f32.mrb[0].mxu0
        %v678 = vadd.f32 %v601, %v677
        %679 = vdwg.mxu0
        %s680 = scalar_lea.vmem %s1, 1024
        %v681 = vld [vmem:[%s680] sm:$0xff]
        %v682 = vld [vmem:[%s680 + $0x8] sm:$0xff]
        %v683 = vld [vmem:[%s680 + $0x10] sm:$0xff]
        %v684 = vld [vmem:[%s680 + $0x18] sm:$0xff]
        %v685 = vld [vmem:[%s680 + $0x20] sm:$0xff]
        %v686 = vld [vmem:[%s680 + $0x28] sm:$0xff]
        %v687 = vld [vmem:[%s680 + $0x30] sm:$0xff]
        %v688 = vld [vmem:[%s680 + $0x38] sm:$0xff]
        %v689 = vld [vmem:[%s680 + $0x40] sm:$0xff]
        %v690 = vld [vmem:[%s680 + $0x48] sm:$0xff]
        %v691 = vld [vmem:[%s680 + $0x50] sm:$0xff]
        %v692 = vld [vmem:[%s680 + $0x58] sm:$0xff]
        %v693 = vld [vmem:[%s680 + $0x60] sm:$0xff]
        %v694 = vld [vmem:[%s680 + $0x68] sm:$0xff]
        %v695 = vld [vmem:[%s680 + $0x70] sm:$0xff]
        %v696 = vld [vmem:[%s680 + $0x78] sm:$0xff]
        %v697 = vld [vmem:[%s680 + $0x80] sm:$0xff]
        %v698 = vld [vmem:[%s680 + $0x88] sm:$0xff]
        %v699 = vld [vmem:[%s680 + $0x90] sm:$0xff]
        %v700 = vld [vmem:[%s680 + $0x98] sm:$0xff]
        %v701 = vld [vmem:[%s680 + $0xa0] sm:$0xff]
        %v702 = vld [vmem:[%s680 + $0xa8] sm:$0xff]
        %v703 = vld [vmem:[%s680 + $0xb0] sm:$0xff]
        %v704 = vld [vmem:[%s680 + $0xb8] sm:$0xff]
        %v705 = vld [vmem:[%s680 + $0xc0] sm:$0xff]
        %v706 = vld [vmem:[%s680 + $0xc8] sm:$0xff]
        %v707 = vld [vmem:[%s680 + $0xd0] sm:$0xff]
        %v708 = vld [vmem:[%s680 + $0xd8] sm:$0xff]
        %v709 = vld [vmem:[%s680 + $0xe0] sm:$0xff]
        %v710 = vld [vmem:[%s680 + $0xe8] sm:$0xff]
        %v711 = vld [vmem:[%s680 + $0xf0] sm:$0xff]
        %v712 = vld [vmem:[%s680 + $0xf8] sm:$0xff]
        %v713 = vld [vmem:[%s680 + $0x100] sm:$0xff]
        %v714 = vld [vmem:[%s680 + $0x108] sm:$0xff]
        %v715 = vld [vmem:[%s680 + $0x110] sm:$0xff]
        %v716 = vld [vmem:[%s680 + $0x118] sm:$0xff]
        %v717 = vld [vmem:[%s680 + $0x120] sm:$0xff]
        %v718 = vld [vmem:[%s680 + $0x128] sm:$0xff]
        %v719 = vld [vmem:[%s680 + $0x130] sm:$0xff]
        %v720 = vld [vmem:[%s680 + $0x138] sm:$0xff]
        %v721 = vld [vmem:[%s680 + $0x140] sm:$0xff]
        %v722 = vld [vmem:[%s680 + $0x148] sm:$0xff]
        %v723 = vld [vmem:[%s680 + $0x150] sm:$0xff]
        %v724 = vld [vmem:[%s680 + $0x158] sm:$0xff]
        %v725 = vld [vmem:[%s680 + $0x160] sm:$0xff]
        %v726 = vld [vmem:[%s680 + $0x168] sm:$0xff]
        %v727 = vld [vmem:[%s680 + $0x170] sm:$0xff]
        %v728 = vld [vmem:[%s680 + $0x178] sm:$0xff]
        %v729 = vld [vmem:[%s680 + $0x180] sm:$0xff]
        %v730 = vld [vmem:[%s680 + $0x188] sm:$0xff]
        %v731 = vld [vmem:[%s680 + $0x190] sm:$0xff]
        %v732 = vld [vmem:[%s680 + $0x198] sm:$0xff]
        %v733 = vld [vmem:[%s680 + $0x1a0] sm:$0xff]
        %v734 = vld [vmem:[%s680 + $0x1a8] sm:$0xff]
        %v735 = vld [vmem:[%s680 + $0x1b0] sm:$0xff]
        %v736 = vld [vmem:[%s680 + $0x1b8] sm:$0xff]
        %v737 = vld [vmem:[%s680 + $0x1c0] sm:$0xff]
        %v738 = vld [vmem:[%s680 + $0x1c8] sm:$0xff]
        %v739 = vld [vmem:[%s680 + $0x1d0] sm:$0xff]
        %v740 = vld [vmem:[%s680 + $0x1d8] sm:$0xff]
        %v741 = vld [vmem:[%s680 + $0x1e0] sm:$0xff]
        %v742 = vld [vmem:[%s680 + $0x1e8] sm:$0xff]
        %v743 = vld [vmem:[%s680 + $0x1f0] sm:$0xff]
        %v744 = vld [vmem:[%s680 + $0x1f8] sm:$0xff]
        %vm749 = vcmask 1045504
        %v750 = vrot.slane %v378, 2
        %v751 = vrot.slane %v380, 2
        %v752 = vsel %vm749, %v750, %v751
        %v753 = vrot.slane %v379, 2
        %v754 = vrot.slane %v381, 2
        %v755 = vsel %vm749, %v753, %v754
        %760 = vmatprep.subr.mxu0 %v682
        %761 = vmatpush1.msra.mxu0 %v681
        %762 = vmatprep.subr.mxu0 %v684
        %763 = vmatpush1.msra.mxu0 %v683
        %764 = vmatprep.subr.mxu0 %v686
        %765 = vmatpush1.msra.mxu0 %v685
        %766 = vmatprep.subr.mxu0 %v688
        %767 = vmatpush1.msra.mxu0 %v687
        %768 = vmatprep.subr.mxu0 %v690
        %769 = vmatpush1.msra.mxu0 %v689
        %770 = vmatprep.subr.mxu0 %v692
        %771 = vmatpush1.msra.mxu0 %v691
        %772 = vmatprep.subr.mxu0 %v694
        %773 = vmatpush1.msra.mxu0 %v693
        %774 = vmatprep.subr.mxu0 %v696
        %775 = vmatpush1.msra.mxu0 %v695
        %776 = vmatprep.subr.mxu0 %v698
        %777 = vmatpush1.msra.mxu0 %v697
        %778 = vmatprep.subr.mxu0 %v700
        %779 = vmatpush1.msra.mxu0 %v699
        %780 = vmatprep.subr.mxu0 %v702
        %781 = vmatpush1.msra.mxu0 %v701
        %782 = vmatprep.subr.mxu0 %v704
        %783 = vmatpush1.msra.mxu0 %v703
        %784 = vmatprep.subr.mxu0 %v706
        %785 = vmatpush1.msra.mxu0 %v705
        %786 = vmatprep.subr.mxu0 %v708
        %787 = vmatpush1.msra.mxu0 %v707
        %788 = vmatprep.subr.mxu0 %v710
        %789 = vmatpush1.msra.mxu0 %v709
        %790 = vmatprep.subr.mxu0 %v712
        %791 = vmatpush1.msra.mxu0 %v711
        %792 = vmatprep.subr.mxu0 %v714
        %793 = vmatpush1.msra.mxu0 %v713
        %794 = vmatprep.subr.mxu0 %v716
        %795 = vmatpush1.msra.mxu0 %v715
        %796 = vmatprep.subr.mxu0 %v718
        %797 = vmatpush1.msra.mxu0 %v717
        %798 = vmatprep.subr.mxu0 %v720
        %799 = vmatpush1.msra.mxu0 %v719
        %800 = vmatprep.subr.mxu0 %v722
        %801 = vmatpush1.msra.mxu0 %v721
        %802 = vmatprep.subr.mxu0 %v724
        %803 = vmatpush1.msra.mxu0 %v723
        %804 = vmatprep.subr.mxu0 %v726
        %805 = vmatpush1.msra.mxu0 %v725
        %806 = vmatprep.subr.mxu0 %v728
        %807 = vmatpush1.msra.mxu0 %v727
        %808 = vmatprep.subr.mxu0 %v730
        %809 = vmatpush1.msra.mxu0 %v729
        %810 = vmatprep.subr.mxu0 %v732
        %811 = vmatpush1.msra.mxu0 %v731
        %812 = vmatprep.subr.mxu0 %v734
        %813 = vmatpush1.msra.mxu0 %v733
        %814 = vmatprep.subr.mxu0 %v736
        %815 = vmatpush1.msra.mxu0 %v735
        %816 = vmatprep.subr.mxu0 %v738
        %817 = vmatpush1.msra.mxu0 %v737
        %818 = vmatprep.subr.mxu0 %v740
        %819 = vmatpush1.msra.mxu0 %v739
        %820 = vmatprep.subr.mxu0 %v742
        %821 = vmatpush1.msra.mxu0 %v741
        %822 = vmatprep.subr.mxu0 %v744
        %823 = vmatpush1.msra.mxu0 %v743
        %824 = vmatprep.mubr.f32.mxu0 %v755
        %825 = vmatmul.mubr.f32.gmra.mrb[0].mxu0 %v752
        %v826 = vpop.f32.mrb[0].mxu0
        %v827 = vadd.f32 0.0, %v826
        %v828 = vpop.f32.mrb[0].mxu0
        %v829 = vadd.f32 0.0, %v828
        %830 = vmatprep.mubr.f32.mxu0 %v754
        %831 = vmatmul.mubr.f32.gmra.mrb[0].mxu0 %v751
        %v832 = vpop.f32.mrb[0].mxu0
        %v833 = vadd.f32 0.0, %v832
        %v834 = vpop.f32.mrb[0].mxu0
        %v835 = vadd.f32 0.0, %v834
        %836 = vdwg.mxu0
        %v837 = vadd.f32 %v670, %v827
        %v838 = vadd.f32 %v672, %v829
        %v839 = vadd.f32 %v676, %v833
        %v840 = vadd.f32 %v678, %v835
        %v842 = vlaneseq
        %v843 = vshrl.u32 %v842, 7
        %v844 = vsub.s32 0, %v843
        %v845 = vrot.slane %v368, %v844
        %v846 = vlaneseq
        %v847 = vshrl.u32 %v846, 7
        %v848 = vsub.s32 1, %v847
        %v849 = vrot.slane %v368, %v848
        %v852 = vadd.f32 %v837, %v845
        %v853 = vadd.f32 %v838, %v849
        %v854 = vadd.f32 %v839, %v845
        %v855 = vadd.f32 %v840, %v849
        %v856 = vlaneseq
        %vm857 = vcmp.ge.s32.totalorder %v856, 0
        %vm858 = vcmp.lt.s32.totalorder %v856, 256
        %vm859 = vmand %vm857, %vm858
        %860 = vst.msk [vmem:[#allocation2] ss:$8 sm:$0x3] %vm859, 0.0
        %861 = vst.msk [vmem:[#allocation2] ss:$8 sm:$0x0] %vm859, 0.0
        %s862 = scalar_lea.vmem [#allocation2], 23
        %863 = vst.msk [vmem:[%s862] ss:$8 sm:$0x3] %vm859, 0.0
        %864 = vst.msk [vmem:[%s862] ss:$8 sm:$0x0] %vm859, 0.0
        %vm869 = vcmask 1040384
        %v870 = vrot.slane %v852, 7
        %v871 = vrot.slane %v853, 7
        %v872 = vrot.slane %v854, 7
        %v873 = vsel %vm869, %v870, %v872
        %v874 = vrot.slane %v855, 7
        %v875 = vsel %vm869, %v871, %v874
        %880 = vst [vmem:[#allocation2] sm:$0xfe] %v870
        %881 = vst [vmem:[#allocation2 + $0x8] sm:$0xfe] %v871
        %882 = vst [vmem:[#allocation2 + $0x10] sm:$0x7f] %v873
        %883 = vst [vmem:[#allocation2 + $0x18] sm:$0x7f] %v875
        %v884 = vld [vmem:[#allocation2] sm:$0xff]
        %v885 = vld [vmem:[#allocation2 + $0x8] sm:$0xff]
        %v886 = vld [vmem:[#allocation2 + $0x10] sm:$0xff]
        %v887 = vld [vmem:[#allocation2 + $0x18] sm:$0xff]
        %v888 = vmax.f32 %v884, 0.0
        %v889 = vmax.f32 %v885, 0.0
        %v890 = vmax.f32 %v886, 0.0
        %v891 = vmax.f32 %v887, 0.0
        %892 = vst.msk [vmem:[#allocation2] ss:$8 sm:$0x3] %vm859, 0.0
        %893 = vst.msk [vmem:[#allocation2] ss:$8 sm:$0x0] %vm859, 0.0
        %s894 = scalar_lea.vmem [#allocation2], 33
        %895 = vst.msk [vmem:[%s894] ss:$8 sm:$0x3] %vm859, 0.0
        %896 = vst.msk [vmem:[%s894] ss:$8 sm:$0x0] %vm859, 0.0
        %v901 = vrot.slane %v888, 7
        %v902 = vrot.slane %v889, 7
        %v903 = vrot.slane %v890, 7
        %v904 = vsel %vm869, %v901, %v903
        %v905 = vrot.slane %v891, 7
        %v906 = vsel %vm869, %v902, %v905
        %913 = vst [vmem:[#allocation2] sm:$0xfe] %v901
        %914 = vst [vmem:[#allocation2 + $0x8] sm:$0xfe] %v902
        %915 = vst [vmem:[#allocation2 + $0x10] sm:$0xff] %v904
        %916 = vst [vmem:[#allocation2 + $0x18] sm:$0xff] %v906
        %917 = vst [vmem:[#allocation2 + $0x20] sm:$0x1] %v903
        %918 = vst [vmem:[#allocation2 + $0x28] sm:$0x1] %v905
        %v919 = vld [vmem:[#allocation2] sm:$0xff]
        %v920 = vld [vmem:[#allocation2 + $0x8] sm:$0xff]
        %v921 = vld [vmem:[#allocation2 + $0x10] sm:$0xff]
        %v922 = vld [vmem:[#allocation2 + $0x18] sm:$0xff]
        %v923 = vld [vmem:[#allocation2] sm:$0xfe]
        %v924 = vld [vmem:[#allocation2 + $0x8] sm:$0xfe]
        %v925 = vld [vmem:[#allocation2 + $0x20] sm:$0x1]
        %v926 = vld [vmem:[#allocation2 + $0x28] sm:$0x1]
        %v927 = vld [vmem:[#allocation2] sm:$0xfc]
        %v928 = vld [vmem:[#allocation2 + $0x8] sm:$0xfc]
        %v929 = vld [vmem:[#allocation2 + $0x20] sm:$0x3]
        %v930 = vld [vmem:[#allocation2 + $0x28] sm:$0x3]
        %v931 = vld [vmem:[%s3] sm:$0xff]
        %v932 = vld [vmem:[%s3 + $0x8] sm:$0xff]
        %v933 = vld [vmem:[%s3 + $0x10] sm:$0xff]
        %v934 = vld [vmem:[%s3 + $0x18] sm:$0xff]
        %v935 = vld [vmem:[%s3 + $0x20] sm:$0xff]
        %v936 = vld [vmem:[%s3 + $0x28] sm:$0xff]
        %v937 = vld [vmem:[%s3 + $0x30] sm:$0xff]
        %v938 = vld [vmem:[%s3 + $0x38] sm:$0xff]
        %v939 = vld [vmem:[%s3 + $0x40] sm:$0xff]
        %v940 = vld [vmem:[%s3 + $0x48] sm:$0xff]
        %v941 = vld [vmem:[%s3 + $0x50] sm:$0xff]
        %v942 = vld [vmem:[%s3 + $0x58] sm:$0xff]
        %v943 = vld [vmem:[%s3 + $0x60] sm:$0xff]
        %v944 = vld [vmem:[%s3 + $0x68] sm:$0xff]
        %v945 = vld [vmem:[%s3 + $0x70] sm:$0xff]
        %v946 = vld [vmem:[%s3 + $0x78] sm:$0xff]
        %v947 = vld [vmem:[%s3 + $0x80] sm:$0xff]
        %v948 = vld [vmem:[%s3 + $0x88] sm:$0xff]
        %v949 = vld [vmem:[%s3 + $0x90] sm:$0xff]
        %v950 = vld [vmem:[%s3 + $0x98] sm:$0xff]
        %v951 = vld [vmem:[%s3 + $0xa0] sm:$0xff]
        %v952 = vld [vmem:[%s3 + $0xa8] sm:$0xff]
        %v953 = vld [vmem:[%s3 + $0xb0] sm:$0xff]
        %v954 = vld [vmem:[%s3 + $0xb8] sm:$0xff]
        %v955 = vld [vmem:[%s3 + $0xc0] sm:$0xff]
        %v956 = vld [vmem:[%s3 + $0xc8] sm:$0xff]
        %v957 = vld [vmem:[%s3 + $0xd0] sm:$0xff]
        %v958 = vld [vmem:[%s3 + $0xd8] sm:$0xff]
        %v959 = vld [vmem:[%s3 + $0xe0] sm:$0xff]
        %v960 = vld [vmem:[%s3 + $0xe8] sm:$0xff]
        %v961 = vld [vmem:[%s3 + $0xf0] sm:$0xff]
        %v962 = vld [vmem:[%s3 + $0xf8] sm:$0xff]
        %v963 = vld [vmem:[%s3 + $0x100] sm:$0xff]
        %v964 = vld [vmem:[%s3 + $0x108] sm:$0xff]
        %v965 = vld [vmem:[%s3 + $0x110] sm:$0xff]
        %v966 = vld [vmem:[%s3 + $0x118] sm:$0xff]
        %v967 = vld [vmem:[%s3 + $0x120] sm:$0xff]
        %v968 = vld [vmem:[%s3 + $0x128] sm:$0xff]
        %v969 = vld [vmem:[%s3 + $0x130] sm:$0xff]
        %v970 = vld [vmem:[%s3 + $0x138] sm:$0xff]
        %v971 = vld [vmem:[%s3 + $0x140] sm:$0xff]
        %v972 = vld [vmem:[%s3 + $0x148] sm:$0xff]
        %v973 = vld [vmem:[%s3 + $0x150] sm:$0xff]
        %v974 = vld [vmem:[%s3 + $0x158] sm:$0xff]
        %v975 = vld [vmem:[%s3 + $0x160] sm:$0xff]
        %v976 = vld [vmem:[%s3 + $0x168] sm:$0xff]
        %v977 = vld [vmem:[%s3 + $0x170] sm:$0xff]
        %v978 = vld [vmem:[%s3 + $0x178] sm:$0xff]
        %v979 = vld [vmem:[%s3 + $0x180] sm:$0xff]
        %v980 = vld [vmem:[%s3 + $0x188] sm:$0xff]
        %v981 = vld [vmem:[%s3 + $0x190] sm:$0xff]
        %v982 = vld [vmem:[%s3 + $0x198] sm:$0xff]
        %v983 = vld [vmem:[%s3 + $0x1a0] sm:$0xff]
        %v984 = vld [vmem:[%s3 + $0x1a8] sm:$0xff]
        %v985 = vld [vmem:[%s3 + $0x1b0] sm:$0xff]
        %v986 = vld [vmem:[%s3 + $0x1b8] sm:$0xff]
        %v987 = vld [vmem:[%s3 + $0x1c0] sm:$0xff]
        %v988 = vld [vmem:[%s3 + $0x1c8] sm:$0xff]
        %v989 = vld [vmem:[%s3 + $0x1d0] sm:$0xff]
        %v990 = vld [vmem:[%s3 + $0x1d8] sm:$0xff]
        %v991 = vld [vmem:[%s3 + $0x1e0] sm:$0xff]
        %v992 = vld [vmem:[%s3 + $0x1e8] sm:$0xff]
        %v993 = vld [vmem:[%s3 + $0x1f0] sm:$0xff]
        %v994 = vld [vmem:[%s3 + $0x1f8] sm:$0xff]
        %s995 = scalar_lea.vmem %s3, 512
        %v996 = vld [vmem:[%s995] sm:$0xff]
        %v997 = vld [vmem:[%s995 + $0x8] sm:$0xff]
        %v998 = vld [vmem:[%s995 + $0x10] sm:$0xff]
        %v999 = vld [vmem:[%s995 + $0x18] sm:$0xff]
        %v1000 = vld [vmem:[%s995 + $0x20] sm:$0xff]
        %v1001 = vld [vmem:[%s995 + $0x28] sm:$0xff]
        %v1002 = vld [vmem:[%s995 + $0x30] sm:$0xff]
        %v1003 = vld [vmem:[%s995 + $0x38] sm:$0xff]
        %v1004 = vld [vmem:[%s995 + $0x40] sm:$0xff]
        %v1005 = vld [vmem:[%s995 + $0x48] sm:$0xff]
        %v1006 = vld [vmem:[%s995 + $0x50] sm:$0xff]
        %v1007 = vld [vmem:[%s995 + $0x58] sm:$0xff]
        %v1008 = vld [vmem:[%s995 + $0x60] sm:$0xff]
        %v1009 = vld [vmem:[%s995 + $0x68] sm:$0xff]
        %v1010 = vld [vmem:[%s995 + $0x70] sm:$0xff]
        %v1011 = vld [vmem:[%s995 + $0x78] sm:$0xff]
        %v1012 = vld [vmem:[%s995 + $0x80] sm:$0xff]
        %v1013 = vld [vmem:[%s995 + $0x88] sm:$0xff]
        %v1014 = vld [vmem:[%s995 + $0x90] sm:$0xff]
        %v1015 = vld [vmem:[%s995 + $0x98] sm:$0xff]
        %v1016 = vld [vmem:[%s995 + $0xa0] sm:$0xff]
        %v1017 = vld [vmem:[%s995 + $0xa8] sm:$0xff]
        %v1018 = vld [vmem:[%s995 + $0xb0] sm:$0xff]
        %v1019 = vld [vmem:[%s995 + $0xb8] sm:$0xff]
        %v1020 = vld [vmem:[%s995 + $0xc0] sm:$0xff]
        %v1021 = vld [vmem:[%s995 + $0xc8] sm:$0xff]
        %v1022 = vld [vmem:[%s995 + $0xd0] sm:$0xff]
        %v1023 = vld [vmem:[%s995 + $0xd8] sm:$0xff]
        %v1024 = vld [vmem:[%s995 + $0xe0] sm:$0xff]
        %v1025 = vld [vmem:[%s995 + $0xe8] sm:$0xff]
        %v1026 = vld [vmem:[%s995 + $0xf0] sm:$0xff]
        %v1027 = vld [vmem:[%s995 + $0xf8] sm:$0xff]
        %v1028 = vld [vmem:[%s995 + $0x100] sm:$0xff]
        %v1029 = vld [vmem:[%s995 + $0x108] sm:$0xff]
        %v1030 = vld [vmem:[%s995 + $0x110] sm:$0xff]
        %v1031 = vld [vmem:[%s995 + $0x118] sm:$0xff]
        %v1032 = vld [vmem:[%s995 + $0x120] sm:$0xff]
        %v1033 = vld [vmem:[%s995 + $0x128] sm:$0xff]
        %v1034 = vld [vmem:[%s995 + $0x130] sm:$0xff]
        %v1035 = vld [vmem:[%s995 + $0x138] sm:$0xff]
        %v1036 = vld [vmem:[%s995 + $0x140] sm:$0xff]
        %v1037 = vld [vmem:[%s995 + $0x148] sm:$0xff]
        %v1038 = vld [vmem:[%s995 + $0x150] sm:$0xff]
        %v1039 = vld [vmem:[%s995 + $0x158] sm:$0xff]
        %v1040 = vld [vmem:[%s995 + $0x160] sm:$0xff]
        %v1041 = vld [vmem:[%s995 + $0x168] sm:$0xff]
        %v1042 = vld [vmem:[%s995 + $0x170] sm:$0xff]
        %v1043 = vld [vmem:[%s995 + $0x178] sm:$0xff]
        %v1044 = vld [vmem:[%s995 + $0x180] sm:$0xff]
        %v1045 = vld [vmem:[%s995 + $0x188] sm:$0xff]
        %v1046 = vld [vmem:[%s995 + $0x190] sm:$0xff]
        %v1047 = vld [vmem:[%s995 + $0x198] sm:$0xff]
        %v1048 = vld [vmem:[%s995 + $0x1a0] sm:$0xff]
        %v1049 = vld [vmem:[%s995 + $0x1a8] sm:$0xff]
        %v1050 = vld [vmem:[%s995 + $0x1b0] sm:$0xff]
        %v1051 = vld [vmem:[%s995 + $0x1b8] sm:$0xff]
        %v1052 = vld [vmem:[%s995 + $0x1c0] sm:$0xff]
        %v1053 = vld [vmem:[%s995 + $0x1c8] sm:$0xff]
        %v1054 = vld [vmem:[%s995 + $0x1d0] sm:$0xff]
        %v1055 = vld [vmem:[%s995 + $0x1d8] sm:$0xff]
        %v1056 = vld [vmem:[%s995 + $0x1e0] sm:$0xff]
        %v1057 = vld [vmem:[%s995 + $0x1e8] sm:$0xff]
        %v1058 = vld [vmem:[%s995 + $0x1f0] sm:$0xff]
        %v1059 = vld [vmem:[%s995 + $0x1f8] sm:$0xff]
        %v1066 = vrot.slane %v923, 1
        %v1067 = vrot.slane %v921, 1
        %v1068 = vsel %vm515, %v1066, %v1067
        %v1069 = vrot.slane %v924, 1
        %v1070 = vrot.slane %v922, 1
        %v1071 = vsel %vm515, %v1069, %v1070
        %v1072 = vrot.slane %v925, 1
        %v1073 = vsel %vm515, %v1067, %v1072
        %v1074 = vrot.slane %v926, 1
        %v1075 = vsel %vm515, %v1070, %v1074
        %1080 = vmatprep.subr.mxu0 %v997
        %1081 = vmatpush1.msra.mxu0 %v996
        %1082 = vmatprep.subr.mxu0 %v999
        %1083 = vmatpush1.msra.mxu0 %v998
        %1084 = vmatprep.subr.mxu0 %v1001
        %1085 = vmatpush1.msra.mxu0 %v1000
        %1086 = vmatprep.subr.mxu0 %v1003
        %1087 = vmatpush1.msra.mxu0 %v1002
        %1088 = vmatprep.subr.mxu0 %v1005
        %1089 = vmatpush1.msra.mxu0 %v1004
        %1090 = vmatprep.subr.mxu0 %v1007
        %1091 = vmatpush1.msra.mxu0 %v1006
        %1092 = vmatprep.subr.mxu0 %v1009
        %1093 = vmatpush1.msra.mxu0 %v1008
        %1094 = vmatprep.subr.mxu0 %v1011
        %1095 = vmatpush1.msra.mxu0 %v1010
        %1096 = vmatprep.subr.mxu0 %v1013
        %1097 = vmatpush1.msra.mxu0 %v1012
        %1098 = vmatprep.subr.mxu0 %v1015
        %1099 = vmatpush1.msra.mxu0 %v1014
        %1100 = vmatprep.subr.mxu0 %v1017
        %1101 = vmatpush1.msra.mxu0 %v1016
        %1102 = vmatprep.subr.mxu0 %v1019
        %1103 = vmatpush1.msra.mxu0 %v1018
        %1104 = vmatprep.subr.mxu0 %v1021
        %1105 = vmatpush1.msra.mxu0 %v1020
        %1106 = vmatprep.subr.mxu0 %v1023
        %1107 = vmatpush1.msra.mxu0 %v1022
        %1108 = vmatprep.subr.mxu0 %v1025
        %1109 = vmatpush1.msra.mxu0 %v1024
        %1110 = vmatprep.subr.mxu0 %v1027
        %1111 = vmatpush1.msra.mxu0 %v1026
        %1112 = vmatprep.subr.mxu0 %v1029
        %1113 = vmatpush1.msra.mxu0 %v1028
        %1114 = vmatprep.subr.mxu0 %v1031
        %1115 = vmatpush1.msra.mxu0 %v1030
        %1116 = vmatprep.subr.mxu0 %v1033
        %1117 = vmatpush1.msra.mxu0 %v1032
        %1118 = vmatprep.subr.mxu0 %v1035
        %1119 = vmatpush1.msra.mxu0 %v1034
        %1120 = vmatprep.subr.mxu0 %v1037
        %1121 = vmatpush1.msra.mxu0 %v1036
        %1122 = vmatprep.subr.mxu0 %v1039
        %1123 = vmatpush1.msra.mxu0 %v1038
        %1124 = vmatprep.subr.mxu0 %v1041
        %1125 = vmatpush1.msra.mxu0 %v1040
        %1126 = vmatprep.subr.mxu0 %v1043
        %1127 = vmatpush1.msra.mxu0 %v1042
        %1128 = vmatprep.subr.mxu0 %v1045
        %1129 = vmatpush1.msra.mxu0 %v1044
        %1130 = vmatprep.subr.mxu0 %v1047
        %1131 = vmatpush1.msra.mxu0 %v1046
        %1132 = vmatprep.subr.mxu0 %v1049
        %1133 = vmatpush1.msra.mxu0 %v1048
        %1134 = vmatprep.subr.mxu0 %v1051
        %1135 = vmatpush1.msra.mxu0 %v1050
        %1136 = vmatprep.subr.mxu0 %v1053
        %1137 = vmatpush1.msra.mxu0 %v1052
        %1138 = vmatprep.subr.mxu0 %v1055
        %1139 = vmatpush1.msra.mxu0 %v1054
        %1140 = vmatprep.subr.mxu0 %v1057
        %1141 = vmatpush1.msra.mxu0 %v1056
        %1142 = vmatprep.subr.mxu0 %v1059
        %1143 = vmatpush1.msra.mxu0 %v1058
        %1144 = vmatprep.mubr.f32.mxu0 %v1071
        %1145 = vmatmul.mubr.f32.gmra.mrb[0].mxu0 %v1068
        %v1146 = vpop.f32.mrb[0].mxu0
        %v1147 = vadd.f32 0.0, %v1146
        %v1148 = vpop.f32.mrb[0].mxu0
        %v1149 = vadd.f32 0.0, %v1148
        %1150 = vmatprep.mubr.f32.mxu0 %v1075
        %1151 = vmatmul.mubr.f32.gmra.mrb[0].mxu0 %v1073
        %v1152 = vpop.f32.mrb[0].mxu0
        %v1153 = vadd.f32 0.0, %v1152
        %v1154 = vpop.f32.mrb[0].mxu0
        %v1155 = vadd.f32 0.0, %v1154
        %1156 = vdwg.mxu0
        %1157 = vmatprep.subr.mxu0 %v932
        %1158 = vmatpush1.msra.mxu0 %v931
        %1159 = vmatprep.subr.mxu0 %v934
        %1160 = vmatpush1.msra.mxu0 %v933
        %1161 = vmatprep.subr.mxu0 %v936
        %1162 = vmatpush1.msra.mxu0 %v935
        %1163 = vmatprep.subr.mxu0 %v938
        %1164 = vmatpush1.msra.mxu0 %v937
        %1165 = vmatprep.subr.mxu0 %v940
        %1166 = vmatpush1.msra.mxu0 %v939
        %1167 = vmatprep.subr.mxu0 %v942
        %1168 = vmatpush1.msra.mxu0 %v941
        %1169 = vmatprep.subr.mxu0 %v944
        %1170 = vmatpush1.msra.mxu0 %v943
        %1171 = vmatprep.subr.mxu0 %v946
        %1172 = vmatpush1.msra.mxu0 %v945
        %1173 = vmatprep.subr.mxu0 %v948
        %1174 = vmatpush1.msra.mxu0 %v947
        %1175 = vmatprep.subr.mxu0 %v950
        %1176 = vmatpush1.msra.mxu0 %v949
        %1177 = vmatprep.subr.mxu0 %v952
        %1178 = vmatpush1.msra.mxu0 %v951
        %1179 = vmatprep.subr.mxu0 %v954
        %1180 = vmatpush1.msra.mxu0 %v953
        %1181 = vmatprep.subr.mxu0 %v956
        %1182 = vmatpush1.msra.mxu0 %v955
        %1183 = vmatprep.subr.mxu0 %v958
        %1184 = vmatpush1.msra.mxu0 %v957
        %1185 = vmatprep.subr.mxu0 %v960
        %1186 = vmatpush1.msra.mxu0 %v959
        %1187 = vmatprep.subr.mxu0 %v962
        %1188 = vmatpush1.msra.mxu0 %v961
        %1189 = vmatprep.subr.mxu0 %v964
        %1190 = vmatpush1.msra.mxu0 %v963
        %1191 = vmatprep.subr.mxu0 %v966
        %1192 = vmatpush1.msra.mxu0 %v965
        %1193 = vmatprep.subr.mxu0 %v968
        %1194 = vmatpush1.msra.mxu0 %v967
        %1195 = vmatprep.subr.mxu0 %v970
        %1196 = vmatpush1.msra.mxu0 %v969
        %1197 = vmatprep.subr.mxu0 %v972
        %1198 = vmatpush1.msra.mxu0 %v971
        %1199 = vmatprep.subr.mxu0 %v974
        %1200 = vmatpush1.msra.mxu0 %v973
        %1201 = vmatprep.subr.mxu0 %v976
        %1202 = vmatpush1.msra.mxu0 %v975
        %1203 = vmatprep.subr.mxu0 %v978
        %1204 = vmatpush1.msra.mxu0 %v977
        %1205 = vmatprep.subr.mxu0 %v980
        %1206 = vmatpush1.msra.mxu0 %v979
        %1207 = vmatprep.subr.mxu0 %v982
        %1208 = vmatpush1.msra.mxu0 %v981
        %1209 = vmatprep.subr.mxu0 %v984
        %1210 = vmatpush1.msra.mxu0 %v983
        %1211 = vmatprep.subr.mxu0 %v986
        %1212 = vmatpush1.msra.mxu0 %v985
        %1213 = vmatprep.subr.mxu0 %v988
        %1214 = vmatpush1.msra.mxu0 %v987
        %1215 = vmatprep.subr.mxu0 %v990
        %1216 = vmatpush1.msra.mxu0 %v989
        %1217 = vmatprep.subr.mxu0 %v992
        %1218 = vmatpush1.msra.mxu0 %v991
        %1219 = vmatprep.subr.mxu0 %v994
        %1220 = vmatpush1.msra.mxu0 %v993
        %1221 = vmatprep.mubr.f32.mxu0 %v920
        %1222 = vmatmul.mubr.f32.gmra.mrb[0].mxu0 %v919
        %v1223 = vpop.f32.mrb[0].mxu0
        %v1224 = vadd.f32 %v1147, %v1223
        %v1225 = vpop.f32.mrb[0].mxu0
        %v1226 = vadd.f32 %v1149, %v1225
        %1227 = vmatprep.mubr.f32.mxu0 %v922
        %1228 = vmatmul.mubr.f32.gmra.mrb[0].mxu0 %v921
        %v1229 = vpop.f32.mrb[0].mxu0
        %v1230 = vadd.f32 %v1153, %v1229
        %v1231 = vpop.f32.mrb[0].mxu0
        %v1232 = vadd.f32 %v1155, %v1231
        %1233 = vdwg.mxu0
        %s1234 = scalar_lea.vmem %s3, 1024
        %v1235 = vld [vmem:[%s1234] sm:$0xff]
        %v1236 = vld [vmem:[%s1234 + $0x8] sm:$0xff]
        %v1237 = vld [vmem:[%s1234 + $0x10] sm:$0xff]
        %v1238 = vld [vmem:[%s1234 + $0x18] sm:$0xff]
        %v1239 = vld [vmem:[%s1234 + $0x20] sm:$0xff]
        %v1240 = vld [vmem:[%s1234 + $0x28] sm:$0xff]
        %v1241 = vld [vmem:[%s1234 + $0x30] sm:$0xff]
        %v1242 = vld [vmem:[%s1234 + $0x38] sm:$0xff]
        %v1243 = vld [vmem:[%s1234 + $0x40] sm:$0xff]
        %v1244 = vld [vmem:[%s1234 + $0x48] sm:$0xff]
        %v1245 = vld [vmem:[%s1234 + $0x50] sm:$0xff]
        %v1246 = vld [vmem:[%s1234 + $0x58] sm:$0xff]
        %v1247 = vld [vmem:[%s1234 + $0x60] sm:$0xff]
        %v1248 = vld [vmem:[%s1234 + $0x68] sm:$0xff]
        %v1249 = vld [vmem:[%s1234 + $0x70] sm:$0xff]
        %v1250 = vld [vmem:[%s1234 + $0x78] sm:$0xff]
        %v1251 = vld [vmem:[%s1234 + $0x80] sm:$0xff]
        %v1252 = vld [vmem:[%s1234 + $0x88] sm:$0xff]
        %v1253 = vld [vmem:[%s1234 + $0x90] sm:$0xff]
        %v1254 = vld [vmem:[%s1234 + $0x98] sm:$0xff]
        %v1255 = vld [vmem:[%s1234 + $0xa0] sm:$0xff]
        %v1256 = vld [vmem:[%s1234 + $0xa8] sm:$0xff]
        %v1257 = vld [vmem:[%s1234 + $0xb0] sm:$0xff]
        %v1258 = vld [vmem:[%s1234 + $0xb8] sm:$0xff]
        %v1259 = vld [vmem:[%s1234 + $0xc0] sm:$0xff]
        %v1260 = vld [vmem:[%s1234 + $0xc8] sm:$0xff]
        %v1261 = vld [vmem:[%s1234 + $0xd0] sm:$0xff]
        %v1262 = vld [vmem:[%s1234 + $0xd8] sm:$0xff]
        %v1263 = vld [vmem:[%s1234 + $0xe0] sm:$0xff]
        %v1264 = vld [vmem:[%s1234 + $0xe8] sm:$0xff]
        %v1265 = vld [vmem:[%s1234 + $0xf0] sm:$0xff]
        %v1266 = vld [vmem:[%s1234 + $0xf8] sm:$0xff]
        %v1267 = vld [vmem:[%s1234 + $0x100] sm:$0xff]
        %v1268 = vld [vmem:[%s1234 + $0x108] sm:$0xff]
        %v1269 = vld [vmem:[%s1234 + $0x110] sm:$0xff]
        %v1270 = vld [vmem:[%s1234 + $0x118] sm:$0xff]
        %v1271 = vld [vmem:[%s1234 + $0x120] sm:$0xff]
        %v1272 = vld [vmem:[%s1234 + $0x128] sm:$0xff]
        %v1273 = vld [vmem:[%s1234 + $0x130] sm:$0xff]
        %v1274 = vld [vmem:[%s1234 + $0x138] sm:$0xff]
        %v1275 = vld [vmem:[%s1234 + $0x140] sm:$0xff]
        %v1276 = vld [vmem:[%s1234 + $0x148] sm:$0xff]
        %v1277 = vld [vmem:[%s1234 + $0x150] sm:$0xff]
        %v1278 = vld [vmem:[%s1234 + $0x158] sm:$0xff]
        %v1279 = vld [vmem:[%s1234 + $0x160] sm:$0xff]
        %v1280 = vld [vmem:[%s1234 + $0x168] sm:$0xff]
        %v1281 = vld [vmem:[%s1234 + $0x170] sm:$0xff]
        %v1282 = vld [vmem:[%s1234 + $0x178] sm:$0xff]
        %v1283 = vld [vmem:[%s1234 + $0x180] sm:$0xff]
        %v1284 = vld [vmem:[%s1234 + $0x188] sm:$0xff]
        %v1285 = vld [vmem:[%s1234 + $0x190] sm:$0xff]
        %v1286 = vld [vmem:[%s1234 + $0x198] sm:$0xff]
        %v1287 = vld [vmem:[%s1234 + $0x1a0] sm:$0xff]
        %v1288 = vld [vmem:[%s1234 + $0x1a8] sm:$0xff]
        %v1289 = vld [vmem:[%s1234 + $0x1b0] sm:$0xff]
        %v1290 = vld [vmem:[%s1234 + $0x1b8] sm:$0xff]
        %v1291 = vld [vmem:[%s1234 + $0x1c0] sm:$0xff]
        %v1292 = vld [vmem:[%s1234 + $0x1c8] sm:$0xff]
        %v1293 = vld [vmem:[%s1234 + $0x1d0] sm:$0xff]
        %v1294 = vld [vmem:[%s1234 + $0x1d8] sm:$0xff]
        %v1295 = vld [vmem:[%s1234 + $0x1e0] sm:$0xff]
        %v1296 = vld [vmem:[%s1234 + $0x1e8] sm:$0xff]
        %v1297 = vld [vmem:[%s1234 + $0x1f0] sm:$0xff]
        %v1298 = vld [vmem:[%s1234 + $0x1f8] sm:$0xff]
        %v1303 = vrot.slane %v927, 2
        %v1304 = vrot.slane %v921, 2
        %v1305 = vsel %vm749, %v1303, %v1304
        %v1306 = vrot.slane %v928, 2
        %v1307 = vrot.slane %v922, 2
        %v1308 = vsel %vm749, %v1306, %v1307
        %v1309 = vrot.slane %v929, 2
        %v1310 = vsel %vm749, %v1304, %v1309
        %v1311 = vrot.slane %v930, 2
        %v1312 = vsel %vm749, %v1307, %v1311
        %1317 = vmatprep.subr.mxu0 %v1236
        %1318 = vmatpush1.msra.mxu0 %v1235
        %1319 = vmatprep.subr.mxu0 %v1238
        %1320 = vmatpush1.msra.mxu0 %v1237
        %1321 = vmatprep.subr.mxu0 %v1240
        %1322 = vmatpush1.msra.mxu0 %v1239
        %1323 = vmatprep.subr.mxu0 %v1242
        %1324 = vmatpush1.msra.mxu0 %v1241
        %1325 = vmatprep.subr.mxu0 %v1244
        %1326 = vmatpush1.msra.mxu0 %v1243
        %1327 = vmatprep.subr.mxu0 %v1246
        %1328 = vmatpush1.msra.mxu0 %v1245
        %1329 = vmatprep.subr.mxu0 %v1248
        %1330 = vmatpush1.msra.mxu0 %v1247
        %1331 = vmatprep.subr.mxu0 %v1250
        %1332 = vmatpush1.msra.mxu0 %v1249
        %1333 = vmatprep.subr.mxu0 %v1252
        %1334 = vmatpush1.msra.mxu0 %v1251
        %1335 = vmatprep.subr.mxu0 %v1254
        %1336 = vmatpush1.msra.mxu0 %v1253
        %1337 = vmatprep.subr.mxu0 %v1256
        %1338 = vmatpush1.msra.mxu0 %v1255
        %1339 = vmatprep.subr.mxu0 %v1258
        %1340 = vmatpush1.msra.mxu0 %v1257
        %1341 = vmatprep.subr.mxu0 %v1260
        %1342 = vmatpush1.msra.mxu0 %v1259
        %1343 = vmatprep.subr.mxu0 %v1262
        %1344 = vmatpush1.msra.mxu0 %v1261
        %1345 = vmatprep.subr.mxu0 %v1264
        %1346 = vmatpush1.msra.mxu0 %v1263
        %1347 = vmatprep.subr.mxu0 %v1266
        %1348 = vmatpush1.msra.mxu0 %v1265
        %1349 = vmatprep.subr.mxu0 %v1268
        %1350 = vmatpush1.msra.mxu0 %v1267
        %1351 = vmatprep.subr.mxu0 %v1270
        %1352 = vmatpush1.msra.mxu0 %v1269
        %1353 = vmatprep.subr.mxu0 %v1272
        %1354 = vmatpush1.msra.mxu0 %v1271
        %1355 = vmatprep.subr.mxu0 %v1274
        %1356 = vmatpush1.msra.mxu0 %v1273
        %1357 = vmatprep.subr.mxu0 %v1276
        %1358 = vmatpush1.msra.mxu0 %v1275
        %1359 = vmatprep.subr.mxu0 %v1278
        %1360 = vmatpush1.msra.mxu0 %v1277
        %1361 = vmatprep.subr.mxu0 %v1280
        %1362 = vmatpush1.msra.mxu0 %v1279
        %1363 = vmatprep.subr.mxu0 %v1282
        %1364 = vmatpush1.msra.mxu0 %v1281
        %1365 = vmatprep.subr.mxu0 %v1284
        %1366 = vmatpush1.msra.mxu0 %v1283
        %1367 = vmatprep.subr.mxu0 %v1286
        %1368 = vmatpush1.msra.mxu0 %v1285
        %1369 = vmatprep.subr.mxu0 %v1288
        %1370 = vmatpush1.msra.mxu0 %v1287
        %1371 = vmatprep.subr.mxu0 %v1290
        %1372 = vmatpush1.msra.mxu0 %v1289
        %1373 = vmatprep.subr.mxu0 %v1292
        %1374 = vmatpush1.msra.mxu0 %v1291
        %1375 = vmatprep.subr.mxu0 %v1294
        %1376 = vmatpush1.msra.mxu0 %v1293
        %1377 = vmatprep.subr.mxu0 %v1296
        %1378 = vmatpush1.msra.mxu0 %v1295
        %1379 = vmatprep.subr.mxu0 %v1298
        %1380 = vmatpush1.msra.mxu0 %v1297
        %1381 = vmatprep.mubr.f32.mxu0 %v1308
        %1382 = vmatmul.mubr.f32.gmra.mrb[0].mxu0 %v1305
        %v1383 = vpop.f32.mrb[0].mxu0
        %v1384 = vadd.f32 0.0, %v1383
        %v1385 = vpop.f32.mrb[0].mxu0
        %v1386 = vadd.f32 0.0, %v1385
        %1387 = vmatprep.mubr.f32.mxu0 %v1312
        %1388 = vmatmul.mubr.f32.gmra.mrb[0].mxu0 %v1310
        %v1389 = vpop.f32.mrb[0].mxu0
        %v1390 = vadd.f32 0.0, %v1389
        %v1391 = vpop.f32.mrb[0].mxu0
        %v1392 = vadd.f32 0.0, %v1391
        %1393 = vdwg.mxu0
        %v1394 = vadd.f32 %v1224, %v1384
        %v1395 = vadd.f32 %v1226, %v1386
        %v1396 = vadd.f32 %v1230, %v1390
        %v1397 = vadd.f32 %v1232, %v1392
        %v1399 = vlaneseq
        %v1400 = vshrl.u32 %v1399, 7
        %v1401 = vsub.s32 0, %v1400
        %v1402 = vrot.slane %v369, %v1401
        %v1403 = vlaneseq
        %v1404 = vshrl.u32 %v1403, 7
        %v1405 = vsub.s32 1, %v1404
        %v1406 = vrot.slane %v369, %v1405
        %v1409 = vadd.f32 %v1394, %v1402
        %v1410 = vadd.f32 %v1395, %v1406
        %v1411 = vadd.f32 %v1396, %v1402
        %v1412 = vadd.f32 %v1397, %v1406
        %v1413 = vmax.f32 %v1409, 0.0
        %v1414 = vmax.f32 %v1410, 0.0
        %v1415 = vmax.f32 %v1411, 0.0
        %v1416 = vmax.f32 %v1412, 0.0
        %1417 = vst.msk [vmem:[#allocation2] ss:$8 sm:$0x3] %vm859, 0.0
        %1418 = vst.msk [vmem:[#allocation2] ss:$8 sm:$0x0] %vm859, 0.0
        %1419 = vst.msk [vmem:[%s894] ss:$8 sm:$0x3] %vm859, 0.0
        %1420 = vst.msk [vmem:[%s894] ss:$8 sm:$0x0] %vm859, 0.0
        %v1425 = vrot.slane %v1413, 7
        %v1426 = vrot.slane %v1414, 7
        %v1427 = vrot.slane %v1415, 7
        %v1428 = vsel %vm869, %v1425, %v1427
        %v1429 = vrot.slane %v1416, 7
        %v1430 = vsel %vm869, %v1426, %v1429
        %1437 = vst [vmem:[#allocation2] sm:$0xfe] %v1425
        %1438 = vst [vmem:[#allocation2 + $0x8] sm:$0xfe] %v1426
        %1439 = vst [vmem:[#allocation2 + $0x10] sm:$0xff] %v1428
        %1440 = vst [vmem:[#allocation2 + $0x18] sm:$0xff] %v1430
        %1441 = vst [vmem:[#allocation2 + $0x20] sm:$0x1] %v1427
        %1442 = vst [vmem:[#allocation2 + $0x28] sm:$0x1] %v1429
        %v1443 = vld [vmem:[#allocation2] sm:$0xff]
        %v1444 = vld [vmem:[#allocation2 + $0x8] sm:$0xff]
        %v1445 = vld [vmem:[#allocation2 + $0x10] sm:$0xff]
        %v1446 = vld [vmem:[#allocation2 + $0x18] sm:$0xff]
        %v1447 = vld [vmem:[#allocation2] sm:$0xfe]
        %v1448 = vld [vmem:[#allocation2 + $0x8] sm:$0xfe]
        %v1449 = vld [vmem:[#allocation2 + $0x20] sm:$0x1]
        %v1450 = vld [vmem:[#allocation2 + $0x28] sm:$0x1]
        %v1451 = vld [vmem:[#allocation2] sm:$0xfc]
        %v1452 = vld [vmem:[#allocation2 + $0x8] sm:$0xfc]
        %v1453 = vld [vmem:[#allocation2 + $0x20] sm:$0x3]
        %v1454 = vld [vmem:[#allocation2 + $0x28] sm:$0x3]
        %v1455 = vld [vmem:[%s3] sm:$0xff]
        %v1456 = vld [vmem:[%s3 + $0x8] sm:$0xff]
        %v1457 = vld [vmem:[%s3 + $0x10] sm:$0xff]
        %v1458 = vld [vmem:[%s3 + $0x18] sm:$0xff]
        %v1459 = vld [vmem:[%s3 + $0x20] sm:$0xff]
        %v1460 = vld [vmem:[%s3 + $0x28] sm:$0xff]
        %v1461 = vld [vmem:[%s3 + $0x30] sm:$0xff]
        %v1462 = vld [vmem:[%s3 + $0x38] sm:$0xff]
        %v1463 = vld [vmem:[%s3 + $0x40] sm:$0xff]
        %v1464 = vld [vmem:[%s3 + $0x48] sm:$0xff]
        %v1465 = vld [vmem:[%s3 + $0x50] sm:$0xff]
        %v1466 = vld [vmem:[%s3 + $0x58] sm:$0xff]
        %v1467 = vld [vmem:[%s3 + $0x60] sm:$0xff]
        %v1468 = vld [vmem:[%s3 + $0x68] sm:$0xff]
        %v1469 = vld [vmem:[%s3 + $0x70] sm:$0xff]
        %v1470 = vld [vmem:[%s3 + $0x78] sm:$0xff]
        %v1471 = vld [vmem:[%s3 + $0x80] sm:$0xff]
        %v1472 = vld [vmem:[%s3 + $0x88] sm:$0xff]
        %v1473 = vld [vmem:[%s3 + $0x90] sm:$0xff]
        %v1474 = vld [vmem:[%s3 + $0x98] sm:$0xff]
        %v1475 = vld [vmem:[%s3 + $0xa0] sm:$0xff]
        %v1476 = vld [vmem:[%s3 + $0xa8] sm:$0xff]
        %v1477 = vld [vmem:[%s3 + $0xb0] sm:$0xff]
        %v1478 = vld [vmem:[%s3 + $0xb8] sm:$0xff]
        %v1479 = vld [vmem:[%s3 + $0xc0] sm:$0xff]
        %v1480 = vld [vmem:[%s3 + $0xc8] sm:$0xff]
        %v1481 = vld [vmem:[%s3 + $0xd0] sm:$0xff]
        %v1482 = vld [vmem:[%s3 + $0xd8] sm:$0xff]
        %v1483 = vld [vmem:[%s3 + $0xe0] sm:$0xff]
        %v1484 = vld [vmem:[%s3 + $0xe8] sm:$0xff]
        %v1485 = vld [vmem:[%s3 + $0xf0] sm:$0xff]
        %v1486 = vld [vmem:[%s3 + $0xf8] sm:$0xff]
        %v1487 = vld [vmem:[%s3 + $0x100] sm:$0xff]
        %v1488 = vld [vmem:[%s3 + $0x108] sm:$0xff]
        %v1489 = vld [vmem:[%s3 + $0x110] sm:$0xff]
        %v1490 = vld [vmem:[%s3 + $0x118] sm:$0xff]
        %v1491 = vld [vmem:[%s3 + $0x120] sm:$0xff]
        %v1492 = vld [vmem:[%s3 + $0x128] sm:$0xff]
        %v1493 = vld [vmem:[%s3 + $0x130] sm:$0xff]
        %v1494 = vld [vmem:[%s3 + $0x138] sm:$0xff]
        %v1495 = vld [vmem:[%s3 + $0x140] sm:$0xff]
        %v1496 = vld [vmem:[%s3 + $0x148] sm:$0xff]
        %v1497 = vld [vmem:[%s3 + $0x150] sm:$0xff]
        %v1498 = vld [vmem:[%s3 + $0x158] sm:$0xff]
        %v1499 = vld [vmem:[%s3 + $0x160] sm:$0xff]
        %v1500 = vld [vmem:[%s3 + $0x168] sm:$0xff]
        %v1501 = vld [vmem:[%s3 + $0x170] sm:$0xff]
        %v1502 = vld [vmem:[%s3 + $0x178] sm:$0xff]
        %v1503 = vld [vmem:[%s3 + $0x180] sm:$0xff]
        %v1504 = vld [vmem:[%s3 + $0x188] sm:$0xff]
        %v1505 = vld [vmem:[%s3 + $0x190] sm:$0xff]
        %v1506 = vld [vmem:[%s3 + $0x198] sm:$0xff]
        %v1507 = vld [vmem:[%s3 + $0x1a0] sm:$0xff]
        %v1508 = vld [vmem:[%s3 + $0x1a8] sm:$0xff]
        %v1509 = vld [vmem:[%s3 + $0x1b0] sm:$0xff]
        %v1510 = vld [vmem:[%s3 + $0x1b8] sm:$0xff]
        %v1511 = vld [vmem:[%s3 + $0x1c0] sm:$0xff]
        %v1512 = vld [vmem:[%s3 + $0x1c8] sm:$0xff]
        %v1513 = vld [vmem:[%s3 + $0x1d0] sm:$0xff]
        %v1514 = vld [vmem:[%s3 + $0x1d8] sm:$0xff]
        %v1515 = vld [vmem:[%s3 + $0x1e0] sm:$0xff]
        %v1516 = vld [vmem:[%s3 + $0x1e8] sm:$0xff]
        %v1517 = vld [vmem:[%s3 + $0x1f0] sm:$0xff]
        %v1518 = vld [vmem:[%s3 + $0x1f8] sm:$0xff]
        %v1519 = vld [vmem:[%s995] sm:$0xff]
        %v1520 = vld [vmem:[%s995 + $0x8] sm:$0xff]
        %v1521 = vld [vmem:[%s995 + $0x10] sm:$0xff]
        %v1522 = vld [vmem:[%s995 + $0x18] sm:$0xff]
        %v1523 = vld [vmem:[%s995 + $0x20] sm:$0xff]
        %v1524 = vld [vmem:[%s995 + $0x28] sm:$0xff]
        %v1525 = vld [vmem:[%s995 + $0x30] sm:$0xff]
        %v1526 = vld [vmem:[%s995 + $0x38] sm:$0xff]
        %v1527 = vld [vmem:[%s995 + $0x40] sm:$0xff]
        %v1528 = vld [vmem:[%s995 + $0x48] sm:$0xff]
        %v1529 = vld [vmem:[%s995 + $0x50] sm:$0xff]
        %v1530 = vld [vmem:[%s995 + $0x58] sm:$0xff]
        %v1531 = vld [vmem:[%s995 + $0x60] sm:$0xff]
        %v1532 = vld [vmem:[%s995 + $0x68] sm:$0xff]
        %v1533 = vld [vmem:[%s995 + $0x70] sm:$0xff]
        %v1534 = vld [vmem:[%s995 + $0x78] sm:$0xff]
        %v1535 = vld [vmem:[%s995 + $0x80] sm:$0xff]
        %v1536 = vld [vmem:[%s995 + $0x88] sm:$0xff]
        %v1537 = vld [vmem:[%s995 + $0x90] sm:$0xff]
        %v1538 = vld [vmem:[%s995 + $0x98] sm:$0xff]
        %v1539 = vld [vmem:[%s995 + $0xa0] sm:$0xff]
        %v1540 = vld [vmem:[%s995 + $0xa8] sm:$0xff]
        %v1541 = vld [vmem:[%s995 + $0xb0] sm:$0xff]
        %v1542 = vld [vmem:[%s995 + $0xb8] sm:$0xff]
        %v1543 = vld [vmem:[%s995 + $0xc0] sm:$0xff]
        %v1544 = vld [vmem:[%s995 + $0xc8] sm:$0xff]
        %v1545 = vld [vmem:[%s995 + $0xd0] sm:$0xff]
        %v1546 = vld [vmem:[%s995 + $0xd8] sm:$0xff]
        %v1547 = vld [vmem:[%s995 + $0xe0] sm:$0xff]
        %v1548 = vld [vmem:[%s995 + $0xe8] sm:$0xff]
        %v1549 = vld [vmem:[%s995 + $0xf0] sm:$0xff]
        %v1550 = vld [vmem:[%s995 + $0xf8] sm:$0xff]
        %v1551 = vld [vmem:[%s995 + $0x100] sm:$0xff]
        %v1552 = vld [vmem:[%s995 + $0x108] sm:$0xff]
        %v1553 = vld [vmem:[%s995 + $0x110] sm:$0xff]
        %v1554 = vld [vmem:[%s995 + $0x118] sm:$0xff]
        %v1555 = vld [vmem:[%s995 + $0x120] sm:$0xff]
        %v1556 = vld [vmem:[%s995 + $0x128] sm:$0xff]
        %v1557 = vld [vmem:[%s995 + $0x130] sm:$0xff]
        %v1558 = vld [vmem:[%s995 + $0x138] sm:$0xff]
        %v1559 = vld [vmem:[%s995 + $0x140] sm:$0xff]
        %v1560 = vld [vmem:[%s995 + $0x148] sm:$0xff]
        %v1561 = vld [vmem:[%s995 + $0x150] sm:$0xff]
        %v1562 = vld [vmem:[%s995 + $0x158] sm:$0xff]
        %v1563 = vld [vmem:[%s995 + $0x160] sm:$0xff]
        %v1564 = vld [vmem:[%s995 + $0x168] sm:$0xff]
        %v1565 = vld [vmem:[%s995 + $0x170] sm:$0xff]
        %v1566 = vld [vmem:[%s995 + $0x178] sm:$0xff]
        %v1567 = vld [vmem:[%s995 + $0x180] sm:$0xff]
        %v1568 = vld [vmem:[%s995 + $0x188] sm:$0xff]
        %v1569 = vld [vmem:[%s995 + $0x190] sm:$0xff]
        %v1570 = vld [vmem:[%s995 + $0x198] sm:$0xff]
        %v1571 = vld [vmem:[%s995 + $0x1a0] sm:$0xff]
        %v1572 = vld [vmem:[%s995 + $0x1a8] sm:$0xff]
        %v1573 = vld [vmem:[%s995 + $0x1b0] sm:$0xff]
        %v1574 = vld [vmem:[%s995 + $0x1b8] sm:$0xff]
        %v1575 = vld [vmem:[%s995 + $0x1c0] sm:$0xff]
        %v1576 = vld [vmem:[%s995 + $0x1c8] sm:$0xff]
        %v1577 = vld [vmem:[%s995 + $0x1d0] sm:$0xff]
        %v1578 = vld [vmem:[%s995 + $0x1d8] sm:$0xff]
        %v1579 = vld [vmem:[%s995 + $0x1e0] sm:$0xff]
        %v1580 = vld [vmem:[%s995 + $0x1e8] sm:$0xff]
        %v1581 = vld [vmem:[%s995 + $0x1f0] sm:$0xff]
        %v1582 = vld [vmem:[%s995 + $0x1f8] sm:$0xff]
        %v1589 = vrot.slane %v1447, 1
        %v1590 = vrot.slane %v1445, 1
        %v1591 = vsel %vm515, %v1589, %v1590
        %v1592 = vrot.slane %v1448, 1
        %v1593 = vrot.slane %v1446, 1
        %v1594 = vsel %vm515, %v1592, %v1593
        %v1595 = vrot.slane %v1449, 1
        %v1596 = vsel %vm515, %v1590, %v1595
        %v1597 = vrot.slane %v1450, 1
        %v1598 = vsel %vm515, %v1593, %v1597
        %1603 = vmatprep.subr.mxu0 %v1520
        %1604 = vmatpush1.msra.mxu0 %v1519
        %1605 = vmatprep.subr.mxu0 %v1522
        %1606 = vmatpush1.msra.mxu0 %v1521
        %1607 = vmatprep.subr.mxu0 %v1524
        %1608 = vmatpush1.msra.mxu0 %v1523
        %1609 = vmatprep.subr.mxu0 %v1526
        %1610 = vmatpush1.msra.mxu0 %v1525
        %1611 = vmatprep.subr.mxu0 %v1528
        %1612 = vmatpush1.msra.mxu0 %v1527
        %1613 = vmatprep.subr.mxu0 %v1530
        %1614 = vmatpush1.msra.mxu0 %v1529
        %1615 = vmatprep.subr.mxu0 %v1532
        %1616 = vmatpush1.msra.mxu0 %v1531
        %1617 = vmatprep.subr.mxu0 %v1534
        %1618 = vmatpush1.msra.mxu0 %v1533
        %1619 = vmatprep.subr.mxu0 %v1536
        %1620 = vmatpush1.msra.mxu0 %v1535
        %1621 = vmatprep.subr.mxu0 %v1538
        %1622 = vmatpush1.msra.mxu0 %v1537
        %1623 = vmatprep.subr.mxu0 %v1540
        %1624 = vmatpush1.msra.mxu0 %v1539
        %1625 = vmatprep.subr.mxu0 %v1542
        %1626 = vmatpush1.msra.mxu0 %v1541
        %1627 = vmatprep.subr.mxu0 %v1544
        %1628 = vmatpush1.msra.mxu0 %v1543
        %1629 = vmatprep.subr.mxu0 %v1546
        %1630 = vmatpush1.msra.mxu0 %v1545
        %1631 = vmatprep.subr.mxu0 %v1548
        %1632 = vmatpush1.msra.mxu0 %v1547
        %1633 = vmatprep.subr.mxu0 %v1550
        %1634 = vmatpush1.msra.mxu0 %v1549
        %1635 = vmatprep.subr.mxu0 %v1552
        %1636 = vmatpush1.msra.mxu0 %v1551
        %1637 = vmatprep.subr.mxu0 %v1554
        %1638 = vmatpush1.msra.mxu0 %v1553
        %1639 = vmatprep.subr.mxu0 %v1556
        %1640 = vmatpush1.msra.mxu0 %v1555
        %1641 = vmatprep.subr.mxu0 %v1558
        %1642 = vmatpush1.msra.mxu0 %v1557
        %1643 = vmatprep.subr.mxu0 %v1560
        %1644 = vmatpush1.msra.mxu0 %v1559
        %1645 = vmatprep.subr.mxu0 %v1562
        %1646 = vmatpush1.msra.mxu0 %v1561
        %1647 = vmatprep.subr.mxu0 %v1564
        %1648 = vmatpush1.msra.mxu0 %v1563
        %1649 = vmatprep.subr.mxu0 %v1566
        %1650 = vmatpush1.msra.mxu0 %v1565
        %1651 = vmatprep.subr.mxu0 %v1568
        %1652 = vmatpush1.msra.mxu0 %v1567
        %1653 = vmatprep.subr.mxu0 %v1570
        %1654 = vmatpush1.msra.mxu0 %v1569
        %1655 = vmatprep.subr.mxu0 %v1572
        %1656 = vmatpush1.msra.mxu0 %v1571
        %1657 = vmatprep.subr.mxu0 %v1574
        %1658 = vmatpush1.msra.mxu0 %v1573
        %1659 = vmatprep.subr.mxu0 %v1576
        %1660 = vmatpush1.msra.mxu0 %v1575
        %1661 = vmatprep.subr.mxu0 %v1578
        %1662 = vmatpush1.msra.mxu0 %v1577
        %1663 = vmatprep.subr.mxu0 %v1580
        %1664 = vmatpush1.msra.mxu0 %v1579
        %1665 = vmatprep.subr.mxu0 %v1582
        %1666 = vmatpush1.msra.mxu0 %v1581
        %1667 = vmatprep.mubr.f32.mxu0 %v1594
        %1668 = vmatmul.mubr.f32.gmra.mrb[0].mxu0 %v1591
        %v1669 = vpop.f32.mrb[0].mxu0
        %v1670 = vadd.f32 0.0, %v1669
        %v1671 = vpop.f32.mrb[0].mxu0
        %v1672 = vadd.f32 0.0, %v1671
        %1673 = vmatprep.mubr.f32.mxu0 %v1598
        %1674 = vmatmul.mubr.f32.gmra.mrb[0].mxu0 %v1596
        %v1675 = vpop.f32.mrb[0].mxu0
        %v1676 = vadd.f32 0.0, %v1675
        %v1677 = vpop.f32.mrb[0].mxu0
        %v1678 = vadd.f32 0.0, %v1677
        %1679 = vdwg.mxu0
        %1680 = vmatprep.subr.mxu0 %v1456
        %1681 = vmatpush1.msra.mxu0 %v1455
        %1682 = vmatprep.subr.mxu0 %v1458
        %1683 = vmatpush1.msra.mxu0 %v1457
        %1684 = vmatprep.subr.mxu0 %v1460
        %1685 = vmatpush1.msra.mxu0 %v1459
        %1686 = vmatprep.subr.mxu0 %v1462
        %1687 = vmatpush1.msra.mxu0 %v1461
        %1688 = vmatprep.subr.mxu0 %v1464
        %1689 = vmatpush1.msra.mxu0 %v1463
        %1690 = vmatprep.subr.mxu0 %v1466
        %1691 = vmatpush1.msra.mxu0 %v1465
        %1692 = vmatprep.subr.mxu0 %v1468
        %1693 = vmatpush1.msra.mxu0 %v1467
        %1694 = vmatprep.subr.mxu0 %v1470
        %1695 = vmatpush1.msra.mxu0 %v1469
        %1696 = vmatprep.subr.mxu0 %v1472
        %1697 = vmatpush1.msra.mxu0 %v1471
        %1698 = vmatprep.subr.mxu0 %v1474
        %1699 = vmatpush1.msra.mxu0 %v1473
        %1700 = vmatprep.subr.mxu0 %v1476
        %1701 = vmatpush1.msra.mxu0 %v1475
        %1702 = vmatprep.subr.mxu0 %v1478
        %1703 = vmatpush1.msra.mxu0 %v1477
        %1704 = vmatprep.subr.mxu0 %v1480
        %1705 = vmatpush1.msra.mxu0 %v1479
        %1706 = vmatprep.subr.mxu0 %v1482
        %1707 = vmatpush1.msra.mxu0 %v1481
        %1708 = vmatprep.subr.mxu0 %v1484
        %1709 = vmatpush1.msra.mxu0 %v1483
        %1710 = vmatprep.subr.mxu0 %v1486
        %1711 = vmatpush1.msra.mxu0 %v1485
        %1712 = vmatprep.subr.mxu0 %v1488
        %1713 = vmatpush1.msra.mxu0 %v1487
        %1714 = vmatprep.subr.mxu0 %v1490
        %1715 = vmatpush1.msra.mxu0 %v1489
        %1716 = vmatprep.subr.mxu0 %v1492
        %1717 = vmatpush1.msra.mxu0 %v1491
        %1718 = vmatprep.subr.mxu0 %v1494
        %1719 = vmatpush1.msra.mxu0 %v1493
        %1720 = vmatprep.subr.mxu0 %v1496
        %1721 = vmatpush1.msra.mxu0 %v1495
        %1722 = vmatprep.subr.mxu0 %v1498
        %1723 = vmatpush1.msra.mxu0 %v1497
        %1724 = vmatprep.subr.mxu0 %v1500
        %1725 = vmatpush1.msra.mxu0 %v1499
        %1726 = vmatprep.subr.mxu0 %v1502
        %1727 = vmatpush1.msra.mxu0 %v1501
        %1728 = vmatprep.subr.mxu0 %v1504
        %1729 = vmatpush1.msra.mxu0 %v1503
        %1730 = vmatprep.subr.mxu0 %v1506
        %1731 = vmatpush1.msra.mxu0 %v1505
        %1732 = vmatprep.subr.mxu0 %v1508
        %1733 = vmatpush1.msra.mxu0 %v1507
        %1734 = vmatprep.subr.mxu0 %v1510
        %1735 = vmatpush1.msra.mxu0 %v1509
        %1736 = vmatprep.subr.mxu0 %v1512
        %1737 = vmatpush1.msra.mxu0 %v1511
        %1738 = vmatprep.subr.mxu0 %v1514
        %1739 = vmatpush1.msra.mxu0 %v1513
        %1740 = vmatprep.subr.mxu0 %v1516
        %1741 = vmatpush1.msra.mxu0 %v1515
        %1742 = vmatprep.subr.mxu0 %v1518
        %1743 = vmatpush1.msra.mxu0 %v1517
        %1744 = vmatprep.mubr.f32.mxu0 %v1444
        %1745 = vmatmul.mubr.f32.gmra.mrb[0].mxu0 %v1443
        %v1746 = vpop.f32.mrb[0].mxu0
        %v1747 = vadd.f32 %v1670, %v1746
        %v1748 = vpop.f32.mrb[0].mxu0
        %v1749 = vadd.f32 %v1672, %v1748
        %1750 = vmatprep.mubr.f32.mxu0 %v1446
        %1751 = vmatmul.mubr.f32.gmra.mrb[0].mxu0 %v1445
        %v1752 = vpop.f32.mrb[0].mxu0
        %v1753 = vadd.f32 %v1676, %v1752
        %v1754 = vpop.f32.mrb[0].mxu0
        %v1755 = vadd.f32 %v1678, %v1754
        %1756 = vdwg.mxu0
        %v1757 = vld [vmem:[%s1234] sm:$0xff]
        %v1758 = vld [vmem:[%s1234 + $0x8] sm:$0xff]
        %v1759 = vld [vmem:[%s1234 + $0x10] sm:$0xff]
        %v1760 = vld [vmem:[%s1234 + $0x18] sm:$0xff]
        %v1761 = vld [vmem:[%s1234 + $0x20] sm:$0xff]
        %v1762 = vld [vmem:[%s1234 + $0x28] sm:$0xff]
        %v1763 = vld [vmem:[%s1234 + $0x30] sm:$0xff]
        %v1764 = vld [vmem:[%s1234 + $0x38] sm:$0xff]
        %v1765 = vld [vmem:[%s1234 + $0x40] sm:$0xff]
        %v1766 = vld [vmem:[%s1234 + $0x48] sm:$0xff]
        %v1767 = vld [vmem:[%s1234 + $0x50] sm:$0xff]
        %v1768 = vld [vmem:[%s1234 + $0x58] sm:$0xff]
        %v1769 = vld [vmem:[%s1234 + $0x60] sm:$0xff]
        %v1770 = vld [vmem:[%s1234 + $0x68] sm:$0xff]
        %v1771 = vld [vmem:[%s1234 + $0x70] sm:$0xff]
        %v1772 = vld [vmem:[%s1234 + $0x78] sm:$0xff]
        %v1773 = vld [vmem:[%s1234 + $0x80] sm:$0xff]
        %v1774 = vld [vmem:[%s1234 + $0x88] sm:$0xff]
        %v1775 = vld [vmem:[%s1234 + $0x90] sm:$0xff]
        %v1776 = vld [vmem:[%s1234 + $0x98] sm:$0xff]
        %v1777 = vld [vmem:[%s1234 + $0xa0] sm:$0xff]
        %v1778 = vld [vmem:[%s1234 + $0xa8] sm:$0xff]
        %v1779 = vld [vmem:[%s1234 + $0xb0] sm:$0xff]
        %v1780 = vld [vmem:[%s1234 + $0xb8] sm:$0xff]
        %v1781 = vld [vmem:[%s1234 + $0xc0] sm:$0xff]
        %v1782 = vld [vmem:[%s1234 + $0xc8] sm:$0xff]
        %v1783 = vld [vmem:[%s1234 + $0xd0] sm:$0xff]
        %v1784 = vld [vmem:[%s1234 + $0xd8] sm:$0xff]
        %v1785 = vld [vmem:[%s1234 + $0xe0] sm:$0xff]
        %v1786 = vld [vmem:[%s1234 + $0xe8] sm:$0xff]
        %v1787 = vld [vmem:[%s1234 + $0xf0] sm:$0xff]
        %v1788 = vld [vmem:[%s1234 + $0xf8] sm:$0xff]
        %v1789 = vld [vmem:[%s1234 + $0x100] sm:$0xff]
        %v1790 = vld [vmem:[%s1234 + $0x108] sm:$0xff]
        %v1791 = vld [vmem:[%s1234 + $0x110] sm:$0xff]
        %v1792 = vld [vmem:[%s1234 + $0x118] sm:$0xff]
        %v1793 = vld [vmem:[%s1234 + $0x120] sm:$0xff]
        %v1794 = vld [vmem:[%s1234 + $0x128] sm:$0xff]
        %v1795 = vld [vmem:[%s1234 + $0x130] sm:$0xff]
        %v1796 = vld [vmem:[%s1234 + $0x138] sm:$0xff]
        %v1797 = vld [vmem:[%s1234 + $0x140] sm:$0xff]
        %v1798 = vld [vmem:[%s1234 + $0x148] sm:$0xff]
        %v1799 = vld [vmem:[%s1234 + $0x150] sm:$0xff]
        %v1800 = vld [vmem:[%s1234 + $0x158] sm:$0xff]
        %v1801 = vld [vmem:[%s1234 + $0x160] sm:$0xff]
        %v1802 = vld [vmem:[%s1234 + $0x168] sm:$0xff]
        %v1803 = vld [vmem:[%s1234 + $0x170] sm:$0xff]
        %v1804 = vld [vmem:[%s1234 + $0x178] sm:$0xff]
        %v1805 = vld [vmem:[%s1234 + $0x180] sm:$0xff]
        %v1806 = vld [vmem:[%s1234 + $0x188] sm:$0xff]
        %v1807 = vld [vmem:[%s1234 + $0x190] sm:$0xff]
        %v1808 = vld [vmem:[%s1234 + $0x198] sm:$0xff]
        %v1809 = vld [vmem:[%s1234 + $0x1a0] sm:$0xff]
        %v1810 = vld [vmem:[%s1234 + $0x1a8] sm:$0xff]
        %v1811 = vld [vmem:[%s1234 + $0x1b0] sm:$0xff]
        %v1812 = vld [vmem:[%s1234 + $0x1b8] sm:$0xff]
        %v1813 = vld [vmem:[%s1234 + $0x1c0] sm:$0xff]
        %v1814 = vld [vmem:[%s1234 + $0x1c8] sm:$0xff]
        %v1815 = vld [vmem:[%s1234 + $0x1d0] sm:$0xff]
        %v1816 = vld [vmem:[%s1234 + $0x1d8] sm:$0xff]
        %v1817 = vld [vmem:[%s1234 + $0x1e0] sm:$0xff]
        %v1818 = vld [vmem:[%s1234 + $0x1e8] sm:$0xff]
        %v1819 = vld [vmem:[%s1234 + $0x1f0] sm:$0xff]
        %v1820 = vld [vmem:[%s1234 + $0x1f8] sm:$0xff]
        %v1825 = vrot.slane %v1451, 2
        %v1826 = vrot.slane %v1445, 2
        %v1827 = vsel %vm749, %v1825, %v1826
        %v1828 = vrot.slane %v1452, 2
        %v1829 = vrot.slane %v1446, 2
        %v1830 = vsel %vm749, %v1828, %v1829
        %v1831 = vrot.slane %v1453, 2
        %v1832 = vsel %vm749, %v1826, %v1831
        %v1833 = vrot.slane %v1454, 2
        %v1834 = vsel %vm749, %v1829, %v1833
        %1839 = vmatprep.subr.mxu0 %v1758
        %1840 = vmatpush1.msra.mxu0 %v1757
        %1841 = vmatprep.subr.mxu0 %v1760
        %1842 = vmatpush1.msra.mxu0 %v1759
        %1843 = vmatprep.subr.mxu0 %v1762
        %1844 = vmatpush1.msra.mxu0 %v1761
        %1845 = vmatprep.subr.mxu0 %v1764
        %1846 = vmatpush1.msra.mxu0 %v1763
        %1847 = vmatprep.subr.mxu0 %v1766
        %1848 = vmatpush1.msra.mxu0 %v1765
        %1849 = vmatprep.subr.mxu0 %v1768
        %1850 = vmatpush1.msra.mxu0 %v1767
        %1851 = vmatprep.subr.mxu0 %v1770
        %1852 = vmatpush1.msra.mxu0 %v1769
        %1853 = vmatprep.subr.mxu0 %v1772
        %1854 = vmatpush1.msra.mxu0 %v1771
        %1855 = vmatprep.subr.mxu0 %v1774
        %1856 = vmatpush1.msra.mxu0 %v1773
        %1857 = vmatprep.subr.mxu0 %v1776
        %1858 = vmatpush1.msra.mxu0 %v1775
        %1859 = vmatprep.subr.mxu0 %v1778
        %1860 = vmatpush1.msra.mxu0 %v1777
        %1861 = vmatprep.subr.mxu0 %v1780
        %1862 = vmatpush1.msra.mxu0 %v1779
        %1863 = vmatprep.subr.mxu0 %v1782
        %1864 = vmatpush1.msra.mxu0 %v1781
        %1865 = vmatprep.subr.mxu0 %v1784
        %1866 = vmatpush1.msra.mxu0 %v1783
        %1867 = vmatprep.subr.mxu0 %v1786
        %1868 = vmatpush1.msra.mxu0 %v1785
        %1869 = vmatprep.subr.mxu0 %v1788
        %1870 = vmatpush1.msra.mxu0 %v1787
        %1871 = vmatprep.subr.mxu0 %v1790
        %1872 = vmatpush1.msra.mxu0 %v1789
        %1873 = vmatprep.subr.mxu0 %v1792
        %1874 = vmatpush1.msra.mxu0 %v1791
        %1875 = vmatprep.subr.mxu0 %v1794
        %1876 = vmatpush1.msra.mxu0 %v1793
        %1877 = vmatprep.subr.mxu0 %v1796
        %1878 = vmatpush1.msra.mxu0 %v1795
        %1879 = vmatprep.subr.mxu0 %v1798
        %1880 = vmatpush1.msra.mxu0 %v1797
        %1881 = vmatprep.subr.mxu0 %v1800
        %1882 = vmatpush1.msra.mxu0 %v1799
        %1883 = vmatprep.subr.mxu0 %v1802
        %1884 = vmatpush1.msra.mxu0 %v1801
        %1885 = vmatprep.subr.mxu0 %v1804
        %1886 = vmatpush1.msra.mxu0 %v1803
        %1887 = vmatprep.subr.mxu0 %v1806
        %1888 = vmatpush1.msra.mxu0 %v1805
        %1889 = vmatprep.subr.mxu0 %v1808
        %1890 = vmatpush1.msra.mxu0 %v1807
        %1891 = vmatprep.subr.mxu0 %v1810
        %1892 = vmatpush1.msra.mxu0 %v1809
        %1893 = vmatprep.subr.mxu0 %v1812
        %1894 = vmatpush1.msra.mxu0 %v1811
        %1895 = vmatprep.subr.mxu0 %v1814
        %1896 = vmatpush1.msra.mxu0 %v1813
        %1897 = vmatprep.subr.mxu0 %v1816
        %1898 = vmatpush1.msra.mxu0 %v1815
        %1899 = vmatprep.subr.mxu0 %v1818
        %1900 = vmatpush1.msra.mxu0 %v1817
        %1901 = vmatprep.subr.mxu0 %v1820
        %1902 = vmatpush1.msra.mxu0 %v1819
        %1903 = vmatprep.mubr.f32.mxu0 %v1830
        %1904 = vmatmul.mubr.f32.gmra.mrb[0].mxu0 %v1827
        %v1905 = vpop.f32.mrb[0].mxu0
        %v1906 = vadd.f32 0.0, %v1905
        %v1907 = vpop.f32.mrb[0].mxu0
        %v1908 = vadd.f32 0.0, %v1907
        %1909 = vmatprep.mubr.f32.mxu0 %v1834
        %1910 = vmatmul.mubr.f32.gmra.mrb[0].mxu0 %v1832
        %v1911 = vpop.f32.mrb[0].mxu0
        %v1912 = vadd.f32 0.0, %v1911
        %v1913 = vpop.f32.mrb[0].mxu0
        %v1914 = vadd.f32 0.0, %v1913
        %1915 = vdwg.mxu0
        %v1916 = vadd.f32 %v1747, %v1906
        %v1917 = vadd.f32 %v1749, %v1908
        %v1918 = vadd.f32 %v1753, %v1912
        %v1919 = vadd.f32 %v1755, %v1914
        %v1920 = vadd.f32 %v1916, %v1402
        %v1921 = vadd.f32 %v1917, %v1406
        %v1922 = vadd.f32 %v1918, %v1402
        %v1923 = vadd.f32 %v1919, %v1406
        %v1924 = vadd.f32 %v884, %v1920
        %v1925 = vadd.f32 %v885, %v1921
        %v1926 = vadd.f32 %v886, %v1922
        %v1927 = vadd.f32 %v887, %v1923
        %v1928 = vld [vmem:[%s7] sm:$0xff]
        %v1929 = vld [vmem:[%s8] sm:$0xff]
        %vm1930 = vcmask 130048
        %v1932 = vsel %vm1930, %v1928, 0
        %1934 = vmatprep.subr.mxu0 %v1925
        %1935 = vmatpush1.msra.mxu0 %v1924
        %1936 = vmatprep.subr.mxu0 %v1927
        %1937 = vmatpush1.msra.mxu0 %v1926
        %1938 = vmatprep.subr.mxu0 0.0
        %1939 = vmatpush1.msra.mxu0 0.0
        %1940 = vmatprep.subr.mxu0 0.0
        %1941 = vmatpush1.msra.mxu0 0.0
        %1942 = vmatprep.subr.mxu0 0.0
        %1943 = vmatpush1.msra.mxu0 0.0
        %1944 = vmatprep.subr.mxu0 0.0
        %1945 = vmatpush1.msra.mxu0 0.0
        %1946 = vmatprep.subr.mxu0 0.0
        %1947 = vmatpush1.msra.mxu0 0.0
        %1948 = vmatprep.subr.mxu0 0.0
        %1949 = vmatpush1.msra.mxu0 0.0
        %1950 = vmatprep.subr.mxu0 0.0
        %1951 = vmatpush1.msra.mxu0 0.0
        %1952 = vmatprep.subr.mxu0 0.0
        %1953 = vmatpush1.msra.mxu0 0.0
        %1954 = vmatprep.subr.mxu0 0.0
        %1955 = vmatpush1.msra.mxu0 0.0
        %1956 = vmatprep.subr.mxu0 0.0
        %1957 = vmatpush1.msra.mxu0 0.0
        %1958 = vmatprep.subr.mxu0 0.0
        %1959 = vmatpush1.msra.mxu0 0.0
        %1960 = vmatprep.subr.mxu0 0.0
        %1961 = vmatpush1.msra.mxu0 0.0
        %1962 = vmatprep.subr.mxu0 0.0
        %1963 = vmatpush1.msra.mxu0 0.0
        %1964 = vmatprep.subr.mxu0 0.0
        %1965 = vmatpush1.msra.mxu0 0.0
        %1966 = vmatprep.subr.mxu0 0.0
        %1967 = vmatpush1.msra.mxu0 0.0
        %1968 = vmatprep.subr.mxu0 0.0
        %1969 = vmatpush1.msra.mxu0 0.0
        %1970 = vmatprep.subr.mxu0 0.0
        %1971 = vmatpush1.msra.mxu0 0.0
        %1972 = vmatprep.subr.mxu0 0.0
        %1973 = vmatpush1.msra.mxu0 0.0
        %1974 = vmatprep.subr.mxu0 0.0
        %1975 = vmatpush1.msra.mxu0 0.0
        %1976 = vmatprep.subr.mxu0 0.0
        %1977 = vmatpush1.msra.mxu0 0.0
        %1978 = vmatprep.subr.mxu0 0.0
        %1979 = vmatpush1.msra.mxu0 0.0
        %1980 = vmatprep.subr.mxu0 0.0
        %1981 = vmatpush1.msra.mxu0 0.0
        %1982 = vmatprep.subr.mxu0 0.0
        %1983 = vmatpush1.msra.mxu0 0.0
        %1984 = vmatprep.subr.mxu0 0.0
        %1985 = vmatpush1.msra.mxu0 0.0
        %1986 = vmatprep.subr.mxu0 0.0
        %1987 = vmatpush1.msra.mxu0 0.0
        %1988 = vmatprep.subr.mxu0 0.0
        %1989 = vmatpush1.msra.mxu0 0.0
        %1990 = vmatprep.subr.mxu0 0.0
        %1991 = vmatpush1.msra.mxu0 0.0
        %1992 = vmatprep.subr.mxu0 0.0
        %1993 = vmatpush1.msra.mxu0 0.0
        %1994 = vmatprep.subr.mxu0 0.0
        %1995 = vmatpush1.msra.mxu0 0.0
        %1996 = vmatprep.subr.mxu0 0.0
        %1997 = vmatpush1.msra.mxu0 0.0
        %1998 = vmatprep.mubr.f32.mxu0 0.0
        %1999 = vmatmul.mubr.f32.gmra.mrb[0].mxu0 %v1932
        %v2000 = vpop.f32.mrb[0].mxu0
        %v2001 = vadd.f32 0.0, %v2000
        %v2002 = vpop.f32.mrb[0].mxu0
        %v2003 = vadd.f32 0.0, %v2002
        %2004 = vdwg.mxu0
        %v2006 = vsel %vm1930, %v1929, 0
        %2008 = vmatprep.subr.mxu0 %v1925
        %2009 = vmatpush1.msra.mxu0 %v1924
        %2010 = vmatprep.subr.mxu0 %v1927
        %2011 = vmatpush1.msra.mxu0 %v1926
        %2012 = vmatprep.subr.mxu0 0.0
        %2013 = vmatpush1.msra.mxu0 0.0
        %2014 = vmatprep.subr.mxu0 0.0
        %2015 = vmatpush1.msra.mxu0 0.0
        %2016 = vmatprep.subr.mxu0 0.0
        %2017 = vmatpush1.msra.mxu0 0.0
        %2018 = vmatprep.subr.mxu0 0.0
        %2019 = vmatpush1.msra.mxu0 0.0
        %2020 = vmatprep.subr.mxu0 0.0
        %2021 = vmatpush1.msra.mxu0 0.0
        %2022 = vmatprep.subr.mxu0 0.0
        %2023 = vmatpush1.msra.mxu0 0.0
        %2024 = vmatprep.subr.mxu0 0.0
        %2025 = vmatpush1.msra.mxu0 0.0
        %2026 = vmatprep.subr.mxu0 0.0
        %2027 = vmatpush1.msra.mxu0 0.0
        %2028 = vmatprep.subr.mxu0 0.0
        %2029 = vmatpush1.msra.mxu0 0.0
        %2030 = vmatprep.subr.mxu0 0.0
        %2031 = vmatpush1.msra.mxu0 0.0
        %2032 = vmatprep.subr.mxu0 0.0
        %2033 = vmatpush1.msra.mxu0 0.0
        %2034 = vmatprep.subr.mxu0 0.0
        %2035 = vmatpush1.msra.mxu0 0.0
        %2036 = vmatprep.subr.mxu0 0.0
        %2037 = vmatpush1.msra.mxu0 0.0
        %2038 = vmatprep.subr.mxu0 0.0
        %2039 = vmatpush1.msra.mxu0 0.0
        %2040 = vmatprep.subr.mxu0 0.0
        %2041 = vmatpush1.msra.mxu0 0.0
        %2042 = vmatprep.subr.mxu0 0.0
        %2043 = vmatpush1.msra.mxu0 0.0
        %2044 = vmatprep.subr.mxu0 0.0
        %2045 = vmatpush1.msra.mxu0 0.0
        %2046 = vmatprep.subr.mxu0 0.0
        %2047 = vmatpush1.msra.mxu0 0.0
        %2048 = vmatprep.subr.mxu0 0.0
        %2049 = vmatpush1.msra.mxu0 0.0
        %2050 = vmatprep.subr.mxu0 0.0
        %2051 = vmatpush1.msra.mxu0 0.0
        %2052 = vmatprep.subr.mxu0 0.0
        %2053 = vmatpush1.msra.mxu0 0.0
        %2054 = vmatprep.subr.mxu0 0.0
        %2055 = vmatpush1.msra.mxu0 0.0
        %2056 = vmatprep.subr.mxu0 0.0
        %2057 = vmatpush1.msra.mxu0 0.0
        %2058 = vmatprep.subr.mxu0 0.0
        %2059 = vmatpush1.msra.mxu0 0.0
        %2060 = vmatprep.subr.mxu0 0.0
        %2061 = vmatpush1.msra.mxu0 0.0
        %2062 = vmatprep.subr.mxu0 0.0
        %2063 = vmatpush1.msra.mxu0 0.0
        %2064 = vmatprep.subr.mxu0 0.0
        %2065 = vmatpush1.msra.mxu0 0.0
        %2066 = vmatprep.subr.mxu0 0.0
        %2067 = vmatpush1.msra.mxu0 0.0
        %2068 = vmatprep.subr.mxu0 0.0
        %2069 = vmatpush1.msra.mxu0 0.0
        %2070 = vmatprep.subr.mxu0 0.0
        %2071 = vmatpush1.msra.mxu0 0.0
        %2072 = vmatprep.mubr.f32.mxu0 0.0
        %2073 = vmatmul.mubr.f32.gmra.mrb[0].mxu0 %v2006
        %v2074 = vpop.f32.mrb[0].mxu0
        %v2075 = vadd.f32 0.0, %v2074
        %v2076 = vpop.f32.mrb[0].mxu0
        %v2077 = vadd.f32 0.0, %v2076
        %2078 = vdwg.mxu0
        %v2079 = vmax.f32 %v2001, %v2075
        %v2080 = vmax.f32 %v2003, %v2077
        %v2081 = vmax.f32 %v2079, 0.0
        %v2082 = vmax.f32 %v2080, 0.0
        %2083 = vst.msk [vmem:[#allocation2] ss:$8 sm:$0x3] %vm859, 0.0
        %2084 = vst.msk [vmem:[#allocation2] ss:$8 sm:$0x0] %vm859, 0.0
        %s2085 = scalar_lea.vmem [#allocation2], 17
        %2086 = vst.msk [vmem:[%s2085] ss:$8 sm:$0x3] %vm859, 0.0
        %2087 = vst.msk [vmem:[%s2085] ss:$8 sm:$0x0] %vm859, 0.0
        %v2090 = vrot.slane %v2081, 7
        %v2091 = vrot.slane %v2082, 7
        %2094 = vst [vmem:[#allocation2] sm:$0xfe] %v2090
        %2095 = vst [vmem:[#allocation2 + $0x8] sm:$0xfe] %v2091
        %2096 = vst [vmem:[#allocation2 + $0x10] sm:$0x1] %v2090
        %2097 = vst [vmem:[#allocation2 + $0x18] sm:$0x1] %v2091
        %v2098 = vld [vmem:[#allocation2] sm:$0xff]
        %v2099 = vld [vmem:[#allocation2 + $0x8] sm:$0xff]
        %v2100 = vld [vmem:[#allocation2] sm:$0xfe]
        %v2101 = vld [vmem:[#allocation2 + $0x8] sm:$0xfe]
        %v2102 = vld [vmem:[#allocation2 + $0x10] sm:$0x1]
        %v2103 = vld [vmem:[#allocation2 + $0x18] sm:$0x1]
        %v2104 = vld [vmem:[#allocation2] sm:$0xfc]
        %v2105 = vld [vmem:[#allocation2 + $0x8] sm:$0xfc]
        %v2106 = vld [vmem:[#allocation2 + $0x10] sm:$0x3]
        %v2107 = vld [vmem:[#allocation2 + $0x18] sm:$0x3]
        %v2108 = vld [vmem:[%s3] sm:$0xff]
        %v2109 = vld [vmem:[%s3 + $0x8] sm:$0xff]
        %v2110 = vld [vmem:[%s3 + $0x10] sm:$0xff]
        %v2111 = vld [vmem:[%s3 + $0x18] sm:$0xff]
        %v2112 = vld [vmem:[%s3 + $0x20] sm:$0xff]
        %v2113 = vld [vmem:[%s3 + $0x28] sm:$0xff]
        %v2114 = vld [vmem:[%s3 + $0x30] sm:$0xff]
        %v2115 = vld [vmem:[%s3 + $0x38] sm:$0xff]
        %v2116 = vld [vmem:[%s3 + $0x40] sm:$0xff]
        %v2117 = vld [vmem:[%s3 + $0x48] sm:$0xff]
        %v2118 = vld [vmem:[%s3 + $0x50] sm:$0xff]
        %v2119 = vld [vmem:[%s3 + $0x58] sm:$0xff]
        %v2120 = vld [vmem:[%s3 + $0x60] sm:$0xff]
        %v2121 = vld [vmem:[%s3 + $0x68] sm:$0xff]
        %v2122 = vld [vmem:[%s3 + $0x70] sm:$0xff]
        %v2123 = vld [vmem:[%s3 + $0x78] sm:$0xff]
        %v2124 = vld [vmem:[%s3 + $0x80] sm:$0xff]
        %v2125 = vld [vmem:[%s3 + $0x88] sm:$0xff]
        %v2126 = vld [vmem:[%s3 + $0x90] sm:$0xff]
        %v2127 = vld [vmem:[%s3 + $0x98] sm:$0xff]
        %v2128 = vld [vmem:[%s3 + $0xa0] sm:$0xff]
        %v2129 = vld [vmem:[%s3 + $0xa8] sm:$0xff]
        %v2130 = vld [vmem:[%s3 + $0xb0] sm:$0xff]
        %v2131 = vld [vmem:[%s3 + $0xb8] sm:$0xff]
        %v2132 = vld [vmem:[%s3 + $0xc0] sm:$0xff]
        %v2133 = vld [vmem:[%s3 + $0xc8] sm:$0xff]
        %v2134 = vld [vmem:[%s3 + $0xd0] sm:$0xff]
        %v2135 = vld [vmem:[%s3 + $0xd8] sm:$0xff]
        %v2136 = vld [vmem:[%s3 + $0xe0] sm:$0xff]
        %v2137 = vld [vmem:[%s3 + $0xe8] sm:$0xff]
        %v2138 = vld [vmem:[%s3 + $0xf0] sm:$0xff]
        %v2139 = vld [vmem:[%s3 + $0xf8] sm:$0xff]
        %v2140 = vld [vmem:[%s3 + $0x100] sm:$0xff]
        %v2141 = vld [vmem:[%s3 + $0x108] sm:$0xff]
        %v2142 = vld [vmem:[%s3 + $0x110] sm:$0xff]
        %v2143 = vld [vmem:[%s3 + $0x118] sm:$0xff]
        %v2144 = vld [vmem:[%s3 + $0x120] sm:$0xff]
        %v2145 = vld [vmem:[%s3 + $0x128] sm:$0xff]
        %v2146 = vld [vmem:[%s3 + $0x130] sm:$0xff]
        %v2147 = vld [vmem:[%s3 + $0x138] sm:$0xff]
        %v2148 = vld [vmem:[%s3 + $0x140] sm:$0xff]
        %v2149 = vld [vmem:[%s3 + $0x148] sm:$0xff]
        %v2150 = vld [vmem:[%s3 + $0x150] sm:$0xff]
        %v2151 = vld [vmem:[%s3 + $0x158] sm:$0xff]
        %v2152 = vld [vmem:[%s3 + $0x160] sm:$0xff]
        %v2153 = vld [vmem:[%s3 + $0x168] sm:$0xff]
        %v2154 = vld [vmem:[%s3 + $0x170] sm:$0xff]
        %v2155 = vld [vmem:[%s3 + $0x178] sm:$0xff]
        %v2156 = vld [vmem:[%s3 + $0x180] sm:$0xff]
        %v2157 = vld [vmem:[%s3 + $0x188] sm:$0xff]
        %v2158 = vld [vmem:[%s3 + $0x190] sm:$0xff]
        %v2159 = vld [vmem:[%s3 + $0x198] sm:$0xff]
        %v2160 = vld [vmem:[%s3 + $0x1a0] sm:$0xff]
        %v2161 = vld [vmem:[%s3 + $0x1a8] sm:$0xff]
        %v2162 = vld [vmem:[%s3 + $0x1b0] sm:$0xff]
        %v2163 = vld [vmem:[%s3 + $0x1b8] sm:$0xff]
        %v2164 = vld [vmem:[%s3 + $0x1c0] sm:$0xff]
        %v2165 = vld [vmem:[%s3 + $0x1c8] sm:$0xff]
        %v2166 = vld [vmem:[%s3 + $0x1d0] sm:$0xff]
        %v2167 = vld [vmem:[%s3 + $0x1d8] sm:$0xff]
        %v2168 = vld [vmem:[%s3 + $0x1e0] sm:$0xff]
        %v2169 = vld [vmem:[%s3 + $0x1e8] sm:$0xff]
        %v2170 = vld [vmem:[%s3 + $0x1f0] sm:$0xff]
        %v2171 = vld [vmem:[%s3 + $0x1f8] sm:$0xff]
        %v2172 = vld [vmem:[%s995] sm:$0xff]
        %v2173 = vld [vmem:[%s995 + $0x8] sm:$0xff]
        %v2174 = vld [vmem:[%s995 + $0x10] sm:$0xff]
        %v2175 = vld [vmem:[%s995 + $0x18] sm:$0xff]
        %v2176 = vld [vmem:[%s995 + $0x20] sm:$0xff]
        %v2177 = vld [vmem:[%s995 + $0x28] sm:$0xff]
        %v2178 = vld [vmem:[%s995 + $0x30] sm:$0xff]
        %v2179 = vld [vmem:[%s995 + $0x38] sm:$0xff]
        %v2180 = vld [vmem:[%s995 + $0x40] sm:$0xff]
        %v2181 = vld [vmem:[%s995 + $0x48] sm:$0xff]
        %v2182 = vld [vmem:[%s995 + $0x50] sm:$0xff]
        %v2183 = vld [vmem:[%s995 + $0x58] sm:$0xff]
        %v2184 = vld [vmem:[%s995 + $0x60] sm:$0xff]
        %v2185 = vld [vmem:[%s995 + $0x68] sm:$0xff]
        %v2186 = vld [vmem:[%s995 + $0x70] sm:$0xff]
        %v2187 = vld [vmem:[%s995 + $0x78] sm:$0xff]
        %v2188 = vld [vmem:[%s995 + $0x80] sm:$0xff]
        %v2189 = vld [vmem:[%s995 + $0x88] sm:$0xff]
        %v2190 = vld [vmem:[%s995 + $0x90] sm:$0xff]
        %v2191 = vld [vmem:[%s995 + $0x98] sm:$0xff]
        %v2192 = vld [vmem:[%s995 + $0xa0] sm:$0xff]
        %v2193 = vld [vmem:[%s995 + $0xa8] sm:$0xff]
        %v2194 = vld [vmem:[%s995 + $0xb0] sm:$0xff]
        %v2195 = vld [vmem:[%s995 + $0xb8] sm:$0xff]
        %v2196 = vld [vmem:[%s995 + $0xc0] sm:$0xff]
        %v2197 = vld [vmem:[%s995 + $0xc8] sm:$0xff]
        %v2198 = vld [vmem:[%s995 + $0xd0] sm:$0xff]
        %v2199 = vld [vmem:[%s995 + $0xd8] sm:$0xff]
        %v2200 = vld [vmem:[%s995 + $0xe0] sm:$0xff]
        %v2201 = vld [vmem:[%s995 + $0xe8] sm:$0xff]
        %v2202 = vld [vmem:[%s995 + $0xf0] sm:$0xff]
        %v2203 = vld [vmem:[%s995 + $0xf8] sm:$0xff]
        %v2204 = vld [vmem:[%s995 + $0x100] sm:$0xff]
        %v2205 = vld [vmem:[%s995 + $0x108] sm:$0xff]
        %v2206 = vld [vmem:[%s995 + $0x110] sm:$0xff]
        %v2207 = vld [vmem:[%s995 + $0x118] sm:$0xff]
        %v2208 = vld [vmem:[%s995 + $0x120] sm:$0xff]
        %v2209 = vld [vmem:[%s995 + $0x128] sm:$0xff]
        %v2210 = vld [vmem:[%s995 + $0x130] sm:$0xff]
        %v2211 = vld [vmem:[%s995 + $0x138] sm:$0xff]
        %v2212 = vld [vmem:[%s995 + $0x140] sm:$0xff]
        %v2213 = vld [vmem:[%s995 + $0x148] sm:$0xff]
        %v2214 = vld [vmem:[%s995 + $0x150] sm:$0xff]
        %v2215 = vld [vmem:[%s995 + $0x158] sm:$0xff]
        %v2216 = vld [vmem:[%s995 + $0x160] sm:$0xff]
        %v2217 = vld [vmem:[%s995 + $0x168] sm:$0xff]
        %v2218 = vld [vmem:[%s995 + $0x170] sm:$0xff]
        %v2219 = vld [vmem:[%s995 + $0x178] sm:$0xff]
        %v2220 = vld [vmem:[%s995 + $0x180] sm:$0xff]
        %v2221 = vld [vmem:[%s995 + $0x188] sm:$0xff]
        %v2222 = vld [vmem:[%s995 + $0x190] sm:$0xff]
        %v2223 = vld [vmem:[%s995 + $0x198] sm:$0xff]
        %v2224 = vld [vmem:[%s995 + $0x1a0] sm:$0xff]
        %v2225 = vld [vmem:[%s995 + $0x1a8] sm:$0xff]
        %v2226 = vld [vmem:[%s995 + $0x1b0] sm:$0xff]
        %v2227 = vld [vmem:[%s995 + $0x1b8] sm:$0xff]
        %v2228 = vld [vmem:[%s995 + $0x1c0] sm:$0xff]
        %v2229 = vld [vmem:[%s995 + $0x1c8] sm:$0xff]
        %v2230 = vld [vmem:[%s995 + $0x1d0] sm:$0xff]
        %v2231 = vld [vmem:[%s995 + $0x1d8] sm:$0xff]
        %v2232 = vld [vmem:[%s995 + $0x1e0] sm:$0xff]
        %v2233 = vld [vmem:[%s995 + $0x1e8] sm:$0xff]
        %v2234 = vld [vmem:[%s995 + $0x1f0] sm:$0xff]
        %v2235 = vld [vmem:[%s995 + $0x1f8] sm:$0xff]
        %v2240 = vrot.slane %v2100, 1
        %v2241 = vrot.slane %v2102, 1
        %v2242 = vsel %vm515, %v2240, %v2241
        %v2243 = vrot.slane %v2101, 1
        %v2244 = vrot.slane %v2103, 1
        %v2245 = vsel %vm515, %v2243, %v2244
        %2248 = vmatprep.subr.mxu0 %v2173
        %2249 = vmatpush1.msra.mxu0 %v2172
        %2250 = vmatprep.subr.mxu0 %v2175
        %2251 = vmatpush1.msra.mxu0 %v2174
        %2252 = vmatprep.subr.mxu0 %v2177
        %2253 = vmatpush1.msra.mxu0 %v2176
        %2254 = vmatprep.subr.mxu0 %v2179
        %2255 = vmatpush1.msra.mxu0 %v2178
        %2256 = vmatprep.subr.mxu0 %v2181
        %2257 = vmatpush1.msra.mxu0 %v2180
        %2258 = vmatprep.subr.mxu0 %v2183
        %2259 = vmatpush1.msra.mxu0 %v2182
        %2260 = vmatprep.subr.mxu0 %v2185
        %2261 = vmatpush1.msra.mxu0 %v2184
        %2262 = vmatprep.subr.mxu0 %v2187
        %2263 = vmatpush1.msra.mxu0 %v2186
        %2264 = vmatprep.subr.mxu0 %v2189
        %2265 = vmatpush1.msra.mxu0 %v2188
        %2266 = vmatprep.subr.mxu0 %v2191
        %2267 = vmatpush1.msra.mxu0 %v2190
        %2268 = vmatprep.subr.mxu0 %v2193
        %2269 = vmatpush1.msra.mxu0 %v2192
        %2270 = vmatprep.subr.mxu0 %v2195
        %2271 = vmatpush1.msra.mxu0 %v2194
        %2272 = vmatprep.subr.mxu0 %v2197
        %2273 = vmatpush1.msra.mxu0 %v2196
        %2274 = vmatprep.subr.mxu0 %v2199
        %2275 = vmatpush1.msra.mxu0 %v2198
        %2276 = vmatprep.subr.mxu0 %v2201
        %2277 = vmatpush1.msra.mxu0 %v2200
        %2278 = vmatprep.subr.mxu0 %v2203
        %2279 = vmatpush1.msra.mxu0 %v2202
        %2280 = vmatprep.subr.mxu0 %v2205
        %2281 = vmatpush1.msra.mxu0 %v2204
        %2282 = vmatprep.subr.mxu0 %v2207
        %2283 = vmatpush1.msra.mxu0 %v2206
        %2284 = vmatprep.subr.mxu0 %v2209
        %2285 = vmatpush1.msra.mxu0 %v2208
        %2286 = vmatprep.subr.mxu0 %v2211
        %2287 = vmatpush1.msra.mxu0 %v2210
        %2288 = vmatprep.subr.mxu0 %v2213
        %2289 = vmatpush1.msra.mxu0 %v2212
        %2290 = vmatprep.subr.mxu0 %v2215
        %2291 = vmatpush1.msra.mxu0 %v2214
        %2292 = vmatprep.subr.mxu0 %v2217
        %2293 = vmatpush1.msra.mxu0 %v2216
        %2294 = vmatprep.subr.mxu0 %v2219
        %2295 = vmatpush1.msra.mxu0 %v2218
        %2296 = vmatprep.subr.mxu0 %v2221
        %2297 = vmatpush1.msra.mxu0 %v2220
        %2298 = vmatprep.subr.mxu0 %v2223
        %2299 = vmatpush1.msra.mxu0 %v2222
        %2300 = vmatprep.subr.mxu0 %v2225
        %2301 = vmatpush1.msra.mxu0 %v2224
        %2302 = vmatprep.subr.mxu0 %v2227
        %2303 = vmatpush1.msra.mxu0 %v2226
        %2304 = vmatprep.subr.mxu0 %v2229
        %2305 = vmatpush1.msra.mxu0 %v2228
        %2306 = vmatprep.subr.mxu0 %v2231
        %2307 = vmatpush1.msra.mxu0 %v2230
        %2308 = vmatprep.subr.mxu0 %v2233
        %2309 = vmatpush1.msra.mxu0 %v2232
        %2310 = vmatprep.subr.mxu0 %v2235
        %2311 = vmatpush1.msra.mxu0 %v2234
        %2312 = vmatprep.mubr.f32.mxu0 %v2245
        %2313 = vmatmul.mubr.f32.gmra.mrb[0].mxu0 %v2242
        %v2314 = vpop.f32.mrb[0].mxu0
        %v2315 = vadd.f32 0.0, %v2314
        %v2316 = vpop.f32.mrb[0].mxu0
        %v2317 = vadd.f32 0.0, %v2316
        %2318 = vdwg.mxu0
        %2319 = vmatprep.subr.mxu0 %v2109
        %2320 = vmatpush1.msra.mxu0 %v2108
        %2321 = vmatprep.subr.mxu0 %v2111
        %2322 = vmatpush1.msra.mxu0 %v2110
        %2323 = vmatprep.subr.mxu0 %v2113
        %2324 = vmatpush1.msra.mxu0 %v2112
        %2325 = vmatprep.subr.mxu0 %v2115
        %2326 = vmatpush1.msra.mxu0 %v2114
        %2327 = vmatprep.subr.mxu0 %v2117
        %2328 = vmatpush1.msra.mxu0 %v2116
        %2329 = vmatprep.subr.mxu0 %v2119
        %2330 = vmatpush1.msra.mxu0 %v2118
        %2331 = vmatprep.subr.mxu0 %v2121
        %2332 = vmatpush1.msra.mxu0 %v2120
        %2333 = vmatprep.subr.mxu0 %v2123
        %2334 = vmatpush1.msra.mxu0 %v2122
        %2335 = vmatprep.subr.mxu0 %v2125
        %2336 = vmatpush1.msra.mxu0 %v2124
        %2337 = vmatprep.subr.mxu0 %v2127
        %2338 = vmatpush1.msra.mxu0 %v2126
        %2339 = vmatprep.subr.mxu0 %v2129
        %2340 = vmatpush1.msra.mxu0 %v2128
        %2341 = vmatprep.subr.mxu0 %v2131
        %2342 = vmatpush1.msra.mxu0 %v2130
        %2343 = vmatprep.subr.mxu0 %v2133
        %2344 = vmatpush1.msra.mxu0 %v2132
        %2345 = vmatprep.subr.mxu0 %v2135
        %2346 = vmatpush1.msra.mxu0 %v2134
        %2347 = vmatprep.subr.mxu0 %v2137
        %2348 = vmatpush1.msra.mxu0 %v2136
        %2349 = vmatprep.subr.mxu0 %v2139
        %2350 = vmatpush1.msra.mxu0 %v2138
        %2351 = vmatprep.subr.mxu0 %v2141
        %2352 = vmatpush1.msra.mxu0 %v2140
        %2353 = vmatprep.subr.mxu0 %v2143
        %2354 = vmatpush1.msra.mxu0 %v2142
        %2355 = vmatprep.subr.mxu0 %v2145
        %2356 = vmatpush1.msra.mxu0 %v2144
        %2357 = vmatprep.subr.mxu0 %v2147
        %2358 = vmatpush1.msra.mxu0 %v2146
        %2359 = vmatprep.subr.mxu0 %v2149
        %2360 = vmatpush1.msra.mxu0 %v2148
        %2361 = vmatprep.subr.mxu0 %v2151
        %2362 = vmatpush1.msra.mxu0 %v2150
        %2363 = vmatprep.subr.mxu0 %v2153
        %2364 = vmatpush1.msra.mxu0 %v2152
        %2365 = vmatprep.subr.mxu0 %v2155
        %2366 = vmatpush1.msra.mxu0 %v2154
        %2367 = vmatprep.subr.mxu0 %v2157
        %2368 = vmatpush1.msra.mxu0 %v2156
        %2369 = vmatprep.subr.mxu0 %v2159
        %2370 = vmatpush1.msra.mxu0 %v2158
        %2371 = vmatprep.subr.mxu0 %v2161
        %2372 = vmatpush1.msra.mxu0 %v2160
        %2373 = vmatprep.subr.mxu0 %v2163
        %2374 = vmatpush1.msra.mxu0 %v2162
        %2375 = vmatprep.subr.mxu0 %v2165
        %2376 = vmatpush1.msra.mxu0 %v2164
        %2377 = vmatprep.subr.mxu0 %v2167
        %2378 = vmatpush1.msra.mxu0 %v2166
        %2379 = vmatprep.subr.mxu0 %v2169
        %2380 = vmatpush1.msra.mxu0 %v2168
        %2381 = vmatprep.subr.mxu0 %v2171
        %2382 = vmatpush1.msra.mxu0 %v2170
        %2383 = vmatprep.mubr.f32.mxu0 %v2099
        %2384 = vmatmul.mubr.f32.gmra.mrb[0].mxu0 %v2098
        %v2385 = vpop.f32.mrb[0].mxu0
        %v2386 = vadd.f32 %v2315, %v2385
        %v2387 = vpop.f32.mrb[0].mxu0
        %v2388 = vadd.f32 %v2317, %v2387
        %2389 = vdwg.mxu0
        %v2390 = vld [vmem:[%s1234] sm:$0xff]
        %v2391 = vld [vmem:[%s1234 + $0x8] sm:$0xff]
        %v2392 = vld [vmem:[%s1234 + $0x10] sm:$0xff]
        %v2393 = vld [vmem:[%s1234 + $0x18] sm:$0xff]
        %v2394 = vld [vmem:[%s1234 + $0x20] sm:$0xff]
        %v2395 = vld [vmem:[%s1234 + $0x28] sm:$0xff]
        %v2396 = vld [vmem:[%s1234 + $0x30] sm:$0xff]
        %v2397 = vld [vmem:[%s1234 + $0x38] sm:$0xff]
        %v2398 = vld [vmem:[%s1234 + $0x40] sm:$0xff]
        %v2399 = vld [vmem:[%s1234 + $0x48] sm:$0xff]
        %v2400 = vld [vmem:[%s1234 + $0x50] sm:$0xff]
        %v2401 = vld [vmem:[%s1234 + $0x58] sm:$0xff]
        %v2402 = vld [vmem:[%s1234 + $0x60] sm:$0xff]
        %v2403 = vld [vmem:[%s1234 + $0x68] sm:$0xff]
        %v2404 = vld [vmem:[%s1234 + $0x70] sm:$0xff]
        %v2405 = vld [vmem:[%s1234 + $0x78] sm:$0xff]
        %v2406 = vld [vmem:[%s1234 + $0x80] sm:$0xff]
        %v2407 = vld [vmem:[%s1234 + $0x88] sm:$0xff]
        %v2408 = vld [vmem:[%s1234 + $0x90] sm:$0xff]
        %v2409 = vld [vmem:[%s1234 + $0x98] sm:$0xff]
        %v2410 = vld [vmem:[%s1234 + $0xa0] sm:$0xff]
        %v2411 = vld [vmem:[%s1234 + $0xa8] sm:$0xff]
        %v2412 = vld [vmem:[%s1234 + $0xb0] sm:$0xff]
        %v2413 = vld [vmem:[%s1234 + $0xb8] sm:$0xff]
        %v2414 = vld [vmem:[%s1234 + $0xc0] sm:$0xff]
        %v2415 = vld [vmem:[%s1234 + $0xc8] sm:$0xff]
        %v2416 = vld [vmem:[%s1234 + $0xd0] sm:$0xff]
        %v2417 = vld [vmem:[%s1234 + $0xd8] sm:$0xff]
        %v2418 = vld [vmem:[%s1234 + $0xe0] sm:$0xff]
        %v2419 = vld [vmem:[%s1234 + $0xe8] sm:$0xff]
        %v2420 = vld [vmem:[%s1234 + $0xf0] sm:$0xff]
        %v2421 = vld [vmem:[%s1234 + $0xf8] sm:$0xff]
        %v2422 = vld [vmem:[%s1234 + $0x100] sm:$0xff]
        %v2423 = vld [vmem:[%s1234 + $0x108] sm:$0xff]
        %v2424 = vld [vmem:[%s1234 + $0x110] sm:$0xff]
        %v2425 = vld [vmem:[%s1234 + $0x118] sm:$0xff]
        %v2426 = vld [vmem:[%s1234 + $0x120] sm:$0xff]
        %v2427 = vld [vmem:[%s1234 + $0x128] sm:$0xff]
        %v2428 = vld [vmem:[%s1234 + $0x130] sm:$0xff]
        %v2429 = vld [vmem:[%s1234 + $0x138] sm:$0xff]
        %v2430 = vld [vmem:[%s1234 + $0x140] sm:$0xff]
        %v2431 = vld [vmem:[%s1234 + $0x148] sm:$0xff]
        %v2432 = vld [vmem:[%s1234 + $0x150] sm:$0xff]
        %v2433 = vld [vmem:[%s1234 + $0x158] sm:$0xff]
        %v2434 = vld [vmem:[%s1234 + $0x160] sm:$0xff]
        %v2435 = vld [vmem:[%s1234 + $0x168] sm:$0xff]
        %v2436 = vld [vmem:[%s1234 + $0x170] sm:$0xff]
        %v2437 = vld [vmem:[%s1234 + $0x178] sm:$0xff]
        %v2438 = vld [vmem:[%s1234 + $0x180] sm:$0xff]
        %v2439 = vld [vmem:[%s1234 + $0x188] sm:$0xff]
        %v2440 = vld [vmem:[%s1234 + $0x190] sm:$0xff]
        %v2441 = vld [vmem:[%s1234 + $0x198] sm:$0xff]
        %v2442 = vld [vmem:[%s1234 + $0x1a0] sm:$0xff]
        %v2443 = vld [vmem:[%s1234 + $0x1a8] sm:$0xff]
        %v2444 = vld [vmem:[%s1234 + $0x1b0] sm:$0xff]
        %v2445 = vld [vmem:[%s1234 + $0x1b8] sm:$0xff]
        %v2446 = vld [vmem:[%s1234 + $0x1c0] sm:$0xff]
        %v2447 = vld [vmem:[%s1234 + $0x1c8] sm:$0xff]
        %v2448 = vld [vmem:[%s1234 + $0x1d0] sm:$0xff]
        %v2449 = vld [vmem:[%s1234 + $0x1d8] sm:$0xff]
        %v2450 = vld [vmem:[%s1234 + $0x1e0] sm:$0xff]
        %v2451 = vld [vmem:[%s1234 + $0x1e8] sm:$0xff]
        %v2452 = vld [vmem:[%s1234 + $0x1f0] sm:$0xff]
        %v2453 = vld [vmem:[%s1234 + $0x1f8] sm:$0xff]
        %v2458 = vrot.slane %v2104, 2
        %v2459 = vrot.slane %v2106, 2
        %v2460 = vsel %vm749, %v2458, %v2459
        %v2461 = vrot.slane %v2105, 2
        %v2462 = vrot.slane %v2107, 2
        %v2463 = vsel %vm749, %v2461, %v2462
        %2466 = vmatprep.subr.mxu0 %v2391
        %2467 = vmatpush1.msra.mxu0 %v2390
        %2468 = vmatprep.subr.mxu0 %v2393
        %2469 = vmatpush1.msra.mxu0 %v2392
        %2470 = vmatprep.subr.mxu0 %v2395
        %2471 = vmatpush1.msra.mxu0 %v2394
        %2472 = vmatprep.subr.mxu0 %v2397
        %2473 = vmatpush1.msra.mxu0 %v2396
        %2474 = vmatprep.subr.mxu0 %v2399
        %2475 = vmatpush1.msra.mxu0 %v2398
        %2476 = vmatprep.subr.mxu0 %v2401
        %2477 = vmatpush1.msra.mxu0 %v2400
        %2478 = vmatprep.subr.mxu0 %v2403
        %2479 = vmatpush1.msra.mxu0 %v2402
        %2480 = vmatprep.subr.mxu0 %v2405
        %2481 = vmatpush1.msra.mxu0 %v2404
        %2482 = vmatprep.subr.mxu0 %v2407
        %2483 = vmatpush1.msra.mxu0 %v2406
        %2484 = vmatprep.subr.mxu0 %v2409
        %2485 = vmatpush1.msra.mxu0 %v2408
        %2486 = vmatprep.subr.mxu0 %v2411
        %2487 = vmatpush1.msra.mxu0 %v2410
        %2488 = vmatprep.subr.mxu0 %v2413
        %2489 = vmatpush1.msra.mxu0 %v2412
        %2490 = vmatprep.subr.mxu0 %v2415
        %2491 = vmatpush1.msra.mxu0 %v2414
        %2492 = vmatprep.subr.mxu0 %v2417
        %2493 = vmatpush1.msra.mxu0 %v2416
        %2494 = vmatprep.subr.mxu0 %v2419
        %2495 = vmatpush1.msra.mxu0 %v2418
        %2496 = vmatprep.subr.mxu0 %v2421
        %2497 = vmatpush1.msra.mxu0 %v2420
        %2498 = vmatprep.subr.mxu0 %v2423
        %2499 = vmatpush1.msra.mxu0 %v2422
        %2500 = vmatprep.subr.mxu0 %v2425
        %2501 = vmatpush1.msra.mxu0 %v2424
        %2502 = vmatprep.subr.mxu0 %v2427
        %2503 = vmatpush1.msra.mxu0 %v2426
        %2504 = vmatprep.subr.mxu0 %v2429
        %2505 = vmatpush1.msra.mxu0 %v2428
        %2506 = vmatprep.subr.mxu0 %v2431
        %2507 = vmatpush1.msra.mxu0 %v2430
        %2508 = vmatprep.subr.mxu0 %v2433
        %2509 = vmatpush1.msra.mxu0 %v2432
        %2510 = vmatprep.subr.mxu0 %v2435
        %2511 = vmatpush1.msra.mxu0 %v2434
        %2512 = vmatprep.subr.mxu0 %v2437
        %2513 = vmatpush1.msra.mxu0 %v2436
        %2514 = vmatprep.subr.mxu0 %v2439
        %2515 = vmatpush1.msra.mxu0 %v2438
        %2516 = vmatprep.subr.mxu0 %v2441
        %2517 = vmatpush1.msra.mxu0 %v2440
        %2518 = vmatprep.subr.mxu0 %v2443
        %2519 = vmatpush1.msra.mxu0 %v2442
        %2520 = vmatprep.subr.mxu0 %v2445
        %2521 = vmatpush1.msra.mxu0 %v2444
        %2522 = vmatprep.subr.mxu0 %v2447
        %2523 = vmatpush1.msra.mxu0 %v2446
        %2524 = vmatprep.subr.mxu0 %v2449
        %2525 = vmatpush1.msra.mxu0 %v2448
        %2526 = vmatprep.subr.mxu0 %v2451
        %2527 = vmatpush1.msra.mxu0 %v2450
        %2528 = vmatprep.subr.mxu0 %v2453
        %2529 = vmatpush1.msra.mxu0 %v2452
        %2530 = vmatprep.mubr.f32.mxu0 %v2463
        %2531 = vmatmul.mubr.f32.gmra.mrb[0].mxu0 %v2460
        %v2532 = vpop.f32.mrb[0].mxu0
        %v2533 = vadd.f32 0.0, %v2532
        %v2534 = vpop.f32.mrb[0].mxu0
        %v2535 = vadd.f32 0.0, %v2534
        %2536 = vdwg.mxu0
        %v2537 = vadd.f32 %v2386, %v2533
        %v2538 = vadd.f32 %v2388, %v2535
        %v2539 = vadd.f32 %v2537, %v1402
        %v2540 = vadd.f32 %v2538, %v1406
        %v2541 = vmax.f32 %v2539, 0.0
        %v2542 = vmax.f32 %v2540, 0.0
        %2543 = vst.msk [vmem:[#allocation2] ss:$8 sm:$0x3] %vm859, 0.0
        %2544 = vst.msk [vmem:[#allocation2] ss:$8 sm:$0x0] %vm859, 0.0
        %2545 = vst.msk [vmem:[%s2085] ss:$8 sm:$0x3] %vm859, 0.0
        %2546 = vst.msk [vmem:[%s2085] ss:$8 sm:$0x0] %vm859, 0.0
        %v2549 = vrot.slane %v2541, 7
        %v2550 = vrot.slane %v2542, 7
        %2553 = vst [vmem:[#allocation2] sm:$0xfe] %v2549
        %2554 = vst [vmem:[#allocation2 + $0x8] sm:$0xfe] %v2550
        %2555 = vst [vmem:[#allocation2 + $0x10] sm:$0x1] %v2549
        %2556 = vst [vmem:[#allocation2 + $0x18] sm:$0x1] %v2550
        %v2557 = vld [vmem:[#allocation2] sm:$0xff]
        %v2558 = vld [vmem:[#allocation2 + $0x8] sm:$0xff]
        %v2559 = vld [vmem:[#allocation2] sm:$0xfe]
        %v2560 = vld [vmem:[#allocation2 + $0x8] sm:$0xfe]
        %v2561 = vld [vmem:[#allocation2 + $0x10] sm:$0x1]
        %v2562 = vld [vmem:[#allocation2 + $0x18] sm:$0x1]
        %v2563 = vld [vmem:[#allocation2] sm:$0xfc]
        %v2564 = vld [vmem:[#allocation2 + $0x8] sm:$0xfc]
        %v2565 = vld [vmem:[#allocation2 + $0x10] sm:$0x3]
        %v2566 = vld [vmem:[#allocation2 + $0x18] sm:$0x3]
        %v2567 = vld [vmem:[%s3] sm:$0xff]
        %v2568 = vld [vmem:[%s3 + $0x8] sm:$0xff]
        %v2569 = vld [vmem:[%s3 + $0x10] sm:$0xff]
        %v2570 = vld [vmem:[%s3 + $0x18] sm:$0xff]
        %v2571 = vld [vmem:[%s3 + $0x20] sm:$0xff]
        %v2572 = vld [vmem:[%s3 + $0x28] sm:$0xff]
        %v2573 = vld [vmem:[%s3 + $0x30] sm:$0xff]
        %v2574 = vld [vmem:[%s3 + $0x38] sm:$0xff]
        %v2575 = vld [vmem:[%s3 + $0x40] sm:$0xff]
        %v2576 = vld [vmem:[%s3 + $0x48] sm:$0xff]
        %v2577 = vld [vmem:[%s3 + $0x50] sm:$0xff]
        %v2578 = vld [vmem:[%s3 + $0x58] sm:$0xff]
        %v2579 = vld [vmem:[%s3 + $0x60] sm:$0xff]
        %v2580 = vld [vmem:[%s3 + $0x68] sm:$0xff]
        %v2581 = vld [vmem:[%s3 + $0x70] sm:$0xff]
        %v2582 = vld [vmem:[%s3 + $0x78] sm:$0xff]
        %v2583 = vld [vmem:[%s3 + $0x80] sm:$0xff]
        %v2584 = vld [vmem:[%s3 + $0x88] sm:$0xff]
        %v2585 = vld [vmem:[%s3 + $0x90] sm:$0xff]
        %v2586 = vld [vmem:[%s3 + $0x98] sm:$0xff]
        %v2587 = vld [vmem:[%s3 + $0xa0] sm:$0xff]
        %v2588 = vld [vmem:[%s3 + $0xa8] sm:$0xff]
        %v2589 = vld [vmem:[%s3 + $0xb0] sm:$0xff]
        %v2590 = vld [vmem:[%s3 + $0xb8] sm:$0xff]
        %v2591 = vld [vmem:[%s3 + $0xc0] sm:$0xff]
        %v2592 = vld [vmem:[%s3 + $0xc8] sm:$0xff]
        %v2593 = vld [vmem:[%s3 + $0xd0] sm:$0xff]
        %v2594 = vld [vmem:[%s3 + $0xd8] sm:$0xff]
        %v2595 = vld [vmem:[%s3 + $0xe0] sm:$0xff]
        %v2596 = vld [vmem:[%s3 + $0xe8] sm:$0xff]
        %v2597 = vld [vmem:[%s3 + $0xf0] sm:$0xff]
        %v2598 = vld [vmem:[%s3 + $0xf8] sm:$0xff]
        %v2599 = vld [vmem:[%s3 + $0x100] sm:$0xff]
        %v2600 = vld [vmem:[%s3 + $0x108] sm:$0xff]
        %v2601 = vld [vmem:[%s3 + $0x110] sm:$0xff]
        %v2602 = vld [vmem:[%s3 + $0x118] sm:$0xff]
        %v2603 = vld [vmem:[%s3 + $0x120] sm:$0xff]
        %v2604 = vld [vmem:[%s3 + $0x128] sm:$0xff]
        %v2605 = vld [vmem:[%s3 + $0x130] sm:$0xff]
        %v2606 = vld [vmem:[%s3 + $0x138] sm:$0xff]
        %v2607 = vld [vmem:[%s3 + $0x140] sm:$0xff]
        %v2608 = vld [vmem:[%s3 + $0x148] sm:$0xff]
        %v2609 = vld [vmem:[%s3 + $0x150] sm:$0xff]
        %v2610 = vld [vmem:[%s3 + $0x158] sm:$0xff]
        %v2611 = vld [vmem:[%s3 + $0x160] sm:$0xff]
        %v2612 = vld [vmem:[%s3 + $0x168] sm:$0xff]
        %v2613 = vld [vmem:[%s3 + $0x170] sm:$0xff]
        %v2614 = vld [vmem:[%s3 + $0x178] sm:$0xff]
        %v2615 = vld [vmem:[%s3 + $0x180] sm:$0xff]
        %v2616 = vld [vmem:[%s3 + $0x188] sm:$0xff]
        %v2617 = vld [vmem:[%s3 + $0x190] sm:$0xff]
        %v2618 = vld [vmem:[%s3 + $0x198] sm:$0xff]
        %v2619 = vld [vmem:[%s3 + $0x1a0] sm:$0xff]
        %v2620 = vld [vmem:[%s3 + $0x1a8] sm:$0xff]
        %v2621 = vld [vmem:[%s3 + $0x1b0] sm:$0xff]
        %v2622 = vld [vmem:[%s3 + $0x1b8] sm:$0xff]
        %v2623 = vld [vmem:[%s3 + $0x1c0] sm:$0xff]
        %v2624 = vld [vmem:[%s3 + $0x1c8] sm:$0xff]
        %v2625 = vld [vmem:[%s3 + $0x1d0] sm:$0xff]
        %v2626 = vld [vmem:[%s3 + $0x1d8] sm:$0xff]
        %v2627 = vld [vmem:[%s3 + $0x1e0] sm:$0xff]
        %v2628 = vld [vmem:[%s3 + $0x1e8] sm:$0xff]
        %v2629 = vld [vmem:[%s3 + $0x1f0] sm:$0xff]
        %v2630 = vld [vmem:[%s3 + $0x1f8] sm:$0xff]
        %v2631 = vld [vmem:[%s995] sm:$0xff]
        %v2632 = vld [vmem:[%s995 + $0x8] sm:$0xff]
        %v2633 = vld [vmem:[%s995 + $0x10] sm:$0xff]
        %v2634 = vld [vmem:[%s995 + $0x18] sm:$0xff]
        %v2635 = vld [vmem:[%s995 + $0x20] sm:$0xff]
        %v2636 = vld [vmem:[%s995 + $0x28] sm:$0xff]
        %v2637 = vld [vmem:[%s995 + $0x30] sm:$0xff]
        %v2638 = vld [vmem:[%s995 + $0x38] sm:$0xff]
        %v2639 = vld [vmem:[%s995 + $0x40] sm:$0xff]
        %v2640 = vld [vmem:[%s995 + $0x48] sm:$0xff]
        %v2641 = vld [vmem:[%s995 + $0x50] sm:$0xff]
        %v2642 = vld [vmem:[%s995 + $0x58] sm:$0xff]
        %v2643 = vld [vmem:[%s995 + $0x60] sm:$0xff]
        %v2644 = vld [vmem:[%s995 + $0x68] sm:$0xff]
        %v2645 = vld [vmem:[%s995 + $0x70] sm:$0xff]
        %v2646 = vld [vmem:[%s995 + $0x78] sm:$0xff]
        %v2647 = vld [vmem:[%s995 + $0x80] sm:$0xff]
        %v2648 = vld [vmem:[%s995 + $0x88] sm:$0xff]
        %v2649 = vld [vmem:[%s995 + $0x90] sm:$0xff]
        %v2650 = vld [vmem:[%s995 + $0x98] sm:$0xff]
        %v2651 = vld [vmem:[%s995 + $0xa0] sm:$0xff]
        %v2652 = vld [vmem:[%s995 + $0xa8] sm:$0xff]
        %v2653 = vld [vmem:[%s995 + $0xb0] sm:$0xff]
        %v2654 = vld [vmem:[%s995 + $0xb8] sm:$0xff]
        %v2655 = vld [vmem:[%s995 + $0xc0] sm:$0xff]
        %v2656 = vld [vmem:[%s995 + $0xc8] sm:$0xff]
        %v2657 = vld [vmem:[%s995 + $0xd0] sm:$0xff]
        %v2658 = vld [vmem:[%s995 + $0xd8] sm:$0xff]
        %v2659 = vld [vmem:[%s995 + $0xe0] sm:$0xff]
        %v2660 = vld [vmem:[%s995 + $0xe8] sm:$0xff]
        %v2661 = vld [vmem:[%s995 + $0xf0] sm:$0xff]
        %v2662 = vld [vmem:[%s995 + $0xf8] sm:$0xff]
        %v2663 = vld [vmem:[%s995 + $0x100] sm:$0xff]
        %v2664 = vld [vmem:[%s995 + $0x108] sm:$0xff]
        %v2665 = vld [vmem:[%s995 + $0x110] sm:$0xff]
        %v2666 = vld [vmem:[%s995 + $0x118] sm:$0xff]
        %v2667 = vld [vmem:[%s995 + $0x120] sm:$0xff]
        %v2668 = vld [vmem:[%s995 + $0x128] sm:$0xff]
        %v2669 = vld [vmem:[%s995 + $0x130] sm:$0xff]
        %v2670 = vld [vmem:[%s995 + $0x138] sm:$0xff]
        %v2671 = vld [vmem:[%s995 + $0x140] sm:$0xff]
        %v2672 = vld [vmem:[%s995 + $0x148] sm:$0xff]
        %v2673 = vld [vmem:[%s995 + $0x150] sm:$0xff]
        %v2674 = vld [vmem:[%s995 + $0x158] sm:$0xff]
        %v2675 = vld [vmem:[%s995 + $0x160] sm:$0xff]
        %v2676 = vld [vmem:[%s995 + $0x168] sm:$0xff]
        %v2677 = vld [vmem:[%s995 + $0x170] sm:$0xff]
        %v2678 = vld [vmem:[%s995 + $0x178] sm:$0xff]
        %v2679 = vld [vmem:[%s995 + $0x180] sm:$0xff]
        %v2680 = vld [vmem:[%s995 + $0x188] sm:$0xff]
        %v2681 = vld [vmem:[%s995 + $0x190] sm:$0xff]
        %v2682 = vld [vmem:[%s995 + $0x198] sm:$0xff]
        %v2683 = vld [vmem:[%s995 + $0x1a0] sm:$0xff]
        %v2684 = vld [vmem:[%s995 + $0x1a8] sm:$0xff]
        %v2685 = vld [vmem:[%s995 + $0x1b0] sm:$0xff]
        %v2686 = vld [vmem:[%s995 + $0x1b8] sm:$0xff]
        %v2687 = vld [vmem:[%s995 + $0x1c0] sm:$0xff]
        %v2688 = vld [vmem:[%s995 + $0x1c8] sm:$0xff]
        %v2689 = vld [vmem:[%s995 + $0x1d0] sm:$0xff]
        %v2690 = vld [vmem:[%s995 + $0x1d8] sm:$0xff]
        %v2691 = vld [vmem:[%s995 + $0x1e0] sm:$0xff]
        %v2692 = vld [vmem:[%s995 + $0x1e8] sm:$0xff]
        %v2693 = vld [vmem:[%s995 + $0x1f0] sm:$0xff]
        %v2694 = vld [vmem:[%s995 + $0x1f8] sm:$0xff]
        %v2699 = vrot.slane %v2559, 1
        %v2700 = vrot.slane %v2561, 1
        %v2701 = vsel %vm515, %v2699, %v2700
        %v2702 = vrot.slane %v2560, 1
        %v2703 = vrot.slane %v2562, 1
        %v2704 = vsel %vm515, %v2702, %v2703
        %2707 = vmatprep.subr.mxu0 %v2632
        %2708 = vmatpush1.msra.mxu0 %v2631
        %2709 = vmatprep.subr.mxu0 %v2634
        %2710 = vmatpush1.msra.mxu0 %v2633
        %2711 = vmatprep.subr.mxu0 %v2636
        %2712 = vmatpush1.msra.mxu0 %v2635
        %2713 = vmatprep.subr.mxu0 %v2638
        %2714 = vmatpush1.msra.mxu0 %v2637
        %2715 = vmatprep.subr.mxu0 %v2640
        %2716 = vmatpush1.msra.mxu0 %v2639
        %2717 = vmatprep.subr.mxu0 %v2642
        %2718 = vmatpush1.msra.mxu0 %v2641
        %2719 = vmatprep.subr.mxu0 %v2644
        %2720 = vmatpush1.msra.mxu0 %v2643
        %2721 = vmatprep.subr.mxu0 %v2646
        %2722 = vmatpush1.msra.mxu0 %v2645
        %2723 = vmatprep.subr.mxu0 %v2648
        %2724 = vmatpush1.msra.mxu0 %v2647
        %2725 = vmatprep.subr.mxu0 %v2650
        %2726 = vmatpush1.msra.mxu0 %v2649
        %2727 = vmatprep.subr.mxu0 %v2652
        %2728 = vmatpush1.msra.mxu0 %v2651
        %2729 = vmatprep.subr.mxu0 %v2654
        %2730 = vmatpush1.msra.mxu0 %v2653
        %2731 = vmatprep.subr.mxu0 %v2656
        %2732 = vmatpush1.msra.mxu0 %v2655
        %2733 = vmatprep.subr.mxu0 %v2658
        %2734 = vmatpush1.msra.mxu0 %v2657
        %2735 = vmatprep.subr.mxu0 %v2660
        %2736 = vmatpush1.msra.mxu0 %v2659
        %2737 = vmatprep.subr.mxu0 %v2662
        %2738 = vmatpush1.msra.mxu0 %v2661
        %2739 = vmatprep.subr.mxu0 %v2664
        %2740 = vmatpush1.msra.mxu0 %v2663
        %2741 = vmatprep.subr.mxu0 %v2666
        %2742 = vmatpush1.msra.mxu0 %v2665
        %2743 = vmatprep.subr.mxu0 %v2668
        %2744 = vmatpush1.msra.mxu0 %v2667
        %2745 = vmatprep.subr.mxu0 %v2670
        %2746 = vmatpush1.msra.mxu0 %v2669
        %2747 = vmatprep.subr.mxu0 %v2672
        %2748 = vmatpush1.msra.mxu0 %v2671
        %2749 = vmatprep.subr.mxu0 %v2674
        %2750 = vmatpush1.msra.mxu0 %v2673
        %2751 = vmatprep.subr.mxu0 %v2676
        %2752 = vmatpush1.msra.mxu0 %v2675
        %2753 = vmatprep.subr.mxu0 %v2678
        %2754 = vmatpush1.msra.mxu0 %v2677
        %2755 = vmatprep.subr.mxu0 %v2680
        %2756 = vmatpush1.msra.mxu0 %v2679
        %2757 = vmatprep.subr.mxu0 %v2682
        %2758 = vmatpush1.msra.mxu0 %v2681
        %2759 = vmatprep.subr.mxu0 %v2684
        %2760 = vmatpush1.msra.mxu0 %v2683
        %2761 = vmatprep.subr.mxu0 %v2686
        %2762 = vmatpush1.msra.mxu0 %v2685
        %2763 = vmatprep.subr.mxu0 %v2688
        %2764 = vmatpush1.msra.mxu0 %v2687
        %2765 = vmatprep.subr.mxu0 %v2690
        %2766 = vmatpush1.msra.mxu0 %v2689
        %2767 = vmatprep.subr.mxu0 %v2692
        %2768 = vmatpush1.msra.mxu0 %v2691
        %2769 = vmatprep.subr.mxu0 %v2694
        %2770 = vmatpush1.msra.mxu0 %v2693
        %2771 = vmatprep.mubr.f32.mxu0 %v2704
        %2772 = vmatmul.mubr.f32.gmra.mrb[0].mxu0 %v2701
        %v2773 = vpop.f32.mrb[0].mxu0
        %v2774 = vadd.f32 0.0, %v2773
        %v2775 = vpop.f32.mrb[0].mxu0
        %v2776 = vadd.f32 0.0, %v2775
        %2777 = vdwg.mxu0
        %2778 = vmatprep.subr.mxu0 %v2568
        %2779 = vmatpush1.msra.mxu0 %v2567
        %2780 = vmatprep.subr.mxu0 %v2570
        %2781 = vmatpush1.msra.mxu0 %v2569
        %2782 = vmatprep.subr.mxu0 %v2572
        %2783 = vmatpush1.msra.mxu0 %v2571
        %2784 = vmatprep.subr.mxu0 %v2574
        %2785 = vmatpush1.msra.mxu0 %v2573
        %2786 = vmatprep.subr.mxu0 %v2576
        %2787 = vmatpush1.msra.mxu0 %v2575
        %2788 = vmatprep.subr.mxu0 %v2578
        %2789 = vmatpush1.msra.mxu0 %v2577
        %2790 = vmatprep.subr.mxu0 %v2580
        %2791 = vmatpush1.msra.mxu0 %v2579
        %2792 = vmatprep.subr.mxu0 %v2582
        %2793 = vmatpush1.msra.mxu0 %v2581
        %2794 = vmatprep.subr.mxu0 %v2584
        %2795 = vmatpush1.msra.mxu0 %v2583
        %2796 = vmatprep.subr.mxu0 %v2586
        %2797 = vmatpush1.msra.mxu0 %v2585
        %2798 = vmatprep.subr.mxu0 %v2588
        %2799 = vmatpush1.msra.mxu0 %v2587
        %2800 = vmatprep.subr.mxu0 %v2590
        %2801 = vmatpush1.msra.mxu0 %v2589
        %2802 = vmatprep.subr.mxu0 %v2592
        %2803 = vmatpush1.msra.mxu0 %v2591
        %2804 = vmatprep.subr.mxu0 %v2594
        %2805 = vmatpush1.msra.mxu0 %v2593
        %2806 = vmatprep.subr.mxu0 %v2596
        %2807 = vmatpush1.msra.mxu0 %v2595
        %2808 = vmatprep.subr.mxu0 %v2598
        %2809 = vmatpush1.msra.mxu0 %v2597
        %2810 = vmatprep.subr.mxu0 %v2600
        %2811 = vmatpush1.msra.mxu0 %v2599
        %2812 = vmatprep.subr.mxu0 %v2602
        %2813 = vmatpush1.msra.mxu0 %v2601
        %2814 = vmatprep.subr.mxu0 %v2604
        %2815 = vmatpush1.msra.mxu0 %v2603
        %2816 = vmatprep.subr.mxu0 %v2606
        %2817 = vmatpush1.msra.mxu0 %v2605
        %2818 = vmatprep.subr.mxu0 %v2608
        %2819 = vmatpush1.msra.mxu0 %v2607
        %2820 = vmatprep.subr.mxu0 %v2610
        %2821 = vmatpush1.msra.mxu0 %v2609
        %2822 = vmatprep.subr.mxu0 %v2612
        %2823 = vmatpush1.msra.mxu0 %v2611
        %2824 = vmatprep.subr.mxu0 %v2614
        %2825 = vmatpush1.msra.mxu0 %v2613
        %2826 = vmatprep.subr.mxu0 %v2616
        %2827 = vmatpush1.msra.mxu0 %v2615
        %2828 = vmatprep.subr.mxu0 %v2618
        %2829 = vmatpush1.msra.mxu0 %v2617
        %2830 = vmatprep.subr.mxu0 %v2620
        %2831 = vmatpush1.msra.mxu0 %v2619
        %2832 = vmatprep.subr.mxu0 %v2622
        %2833 = vmatpush1.msra.mxu0 %v2621
        %2834 = vmatprep.subr.mxu0 %v2624
        %2835 = vmatpush1.msra.mxu0 %v2623
        %2836 = vmatprep.subr.mxu0 %v2626
        %2837 = vmatpush1.msra.mxu0 %v2625
        %2838 = vmatprep.subr.mxu0 %v2628
        %2839 = vmatpush1.msra.mxu0 %v2627
        %2840 = vmatprep.subr.mxu0 %v2630
        %2841 = vmatpush1.msra.mxu0 %v2629
        %2842 = vmatprep.mubr.f32.mxu0 %v2558
        %2843 = vmatmul.mubr.f32.gmra.mrb[0].mxu0 %v2557
        %v2844 = vpop.f32.mrb[0].mxu0
        %v2845 = vadd.f32 %v2774, %v2844
        %v2846 = vpop.f32.mrb[0].mxu0
        %v2847 = vadd.f32 %v2776, %v2846
        %2848 = vdwg.mxu0
        %v2849 = vld [vmem:[%s1234] sm:$0xff]
        %v2850 = vld [vmem:[%s1234 + $0x8] sm:$0xff]
        %v2851 = vld [vmem:[%s1234 + $0x10] sm:$0xff]
        %v2852 = vld [vmem:[%s1234 + $0x18] sm:$0xff]
        %v2853 = vld [vmem:[%s1234 + $0x20] sm:$0xff]
        %v2854 = vld [vmem:[%s1234 + $0x28] sm:$0xff]
        %v2855 = vld [vmem:[%s1234 + $0x30] sm:$0xff]
        %v2856 = vld [vmem:[%s1234 + $0x38] sm:$0xff]
        %v2857 = vld [vmem:[%s1234 + $0x40] sm:$0xff]
        %v2858 = vld [vmem:[%s1234 + $0x48] sm:$0xff]
        %v2859 = vld [vmem:[%s1234 + $0x50] sm:$0xff]
        %v2860 = vld [vmem:[%s1234 + $0x58] sm:$0xff]
        %v2861 = vld [vmem:[%s1234 + $0x60] sm:$0xff]
        %v2862 = vld [vmem:[%s1234 + $0x68] sm:$0xff]
        %v2863 = vld [vmem:[%s1234 + $0x70] sm:$0xff]
        %v2864 = vld [vmem:[%s1234 + $0x78] sm:$0xff]
        %v2865 = vld [vmem:[%s1234 + $0x80] sm:$0xff]
        %v2866 = vld [vmem:[%s1234 + $0x88] sm:$0xff]
        %v2867 = vld [vmem:[%s1234 + $0x90] sm:$0xff]
        %v2868 = vld [vmem:[%s1234 + $0x98] sm:$0xff]
        %v2869 = vld [vmem:[%s1234 + $0xa0] sm:$0xff]
        %v2870 = vld [vmem:[%s1234 + $0xa8] sm:$0xff]
        %v2871 = vld [vmem:[%s1234 + $0xb0] sm:$0xff]
        %v2872 = vld [vmem:[%s1234 + $0xb8] sm:$0xff]
        %v2873 = vld [vmem:[%s1234 + $0xc0] sm:$0xff]
        %v2874 = vld [vmem:[%s1234 + $0xc8] sm:$0xff]
        %v2875 = vld [vmem:[%s1234 + $0xd0] sm:$0xff]
        %v2876 = vld [vmem:[%s1234 + $0xd8] sm:$0xff]
        %v2877 = vld [vmem:[%s1234 + $0xe0] sm:$0xff]
        %v2878 = vld [vmem:[%s1234 + $0xe8] sm:$0xff]
        %v2879 = vld [vmem:[%s1234 + $0xf0] sm:$0xff]
        %v2880 = vld [vmem:[%s1234 + $0xf8] sm:$0xff]
        %v2881 = vld [vmem:[%s1234 + $0x100] sm:$0xff]
        %v2882 = vld [vmem:[%s1234 + $0x108] sm:$0xff]
        %v2883 = vld [vmem:[%s1234 + $0x110] sm:$0xff]
        %v2884 = vld [vmem:[%s1234 + $0x118] sm:$0xff]
        %v2885 = vld [vmem:[%s1234 + $0x120] sm:$0xff]
        %v2886 = vld [vmem:[%s1234 + $0x128] sm:$0xff]
        %v2887 = vld [vmem:[%s1234 + $0x130] sm:$0xff]
        %v2888 = vld [vmem:[%s1234 + $0x138] sm:$0xff]
        %v2889 = vld [vmem:[%s1234 + $0x140] sm:$0xff]
        %v2890 = vld [vmem:[%s1234 + $0x148] sm:$0xff]
        %v2891 = vld [vmem:[%s1234 + $0x150] sm:$0xff]
        %v2892 = vld [vmem:[%s1234 + $0x158] sm:$0xff]
        %v2893 = vld [vmem:[%s1234 + $0x160] sm:$0xff]
        %v2894 = vld [vmem:[%s1234 + $0x168] sm:$0xff]
        %v2895 = vld [vmem:[%s1234 + $0x170] sm:$0xff]
        %v2896 = vld [vmem:[%s1234 + $0x178] sm:$0xff]
        %v2897 = vld [vmem:[%s1234 + $0x180] sm:$0xff]
        %v2898 = vld [vmem:[%s1234 + $0x188] sm:$0xff]
        %v2899 = vld [vmem:[%s1234 + $0x190] sm:$0xff]
        %v2900 = vld [vmem:[%s1234 + $0x198] sm:$0xff]
        %v2901 = vld [vmem:[%s1234 + $0x1a0] sm:$0xff]
        %v2902 = vld [vmem:[%s1234 + $0x1a8] sm:$0xff]
        %v2903 = vld [vmem:[%s1234 + $0x1b0] sm:$0xff]
        %v2904 = vld [vmem:[%s1234 + $0x1b8] sm:$0xff]
        %v2905 = vld [vmem:[%s1234 + $0x1c0] sm:$0xff]
        %v2906 = vld [vmem:[%s1234 + $0x1c8] sm:$0xff]
        %v2907 = vld [vmem:[%s1234 + $0x1d0] sm:$0xff]
        %v2908 = vld [vmem:[%s1234 + $0x1d8] sm:$0xff]
        %v2909 = vld [vmem:[%s1234 + $0x1e0] sm:$0xff]
        %v2910 = vld [vmem:[%s1234 + $0x1e8] sm:$0xff]
        %v2911 = vld [vmem:[%s1234 + $0x1f0] sm:$0xff]
        %v2912 = vld [vmem:[%s1234 + $0x1f8] sm:$0xff]
        %v2917 = vrot.slane %v2563, 2
        %v2918 = vrot.slane %v2565, 2
        %v2919 = vsel %vm749, %v2917, %v2918
        %v2920 = vrot.slane %v2564, 2
        %v2921 = vrot.slane %v2566, 2
        %v2922 = vsel %vm749, %v2920, %v2921
        %2925 = vmatprep.subr.mxu0 %v2850
        %2926 = vmatpush1.msra.mxu0 %v2849
        %2927 = vmatprep.subr.mxu0 %v2852
        %2928 = vmatpush1.msra.mxu0 %v2851
        %2929 = vmatprep.subr.mxu0 %v2854
        %2930 = vmatpush1.msra.mxu0 %v2853
        %2931 = vmatprep.subr.mxu0 %v2856
        %2932 = vmatpush1.msra.mxu0 %v2855
        %2933 = vmatprep.subr.mxu0 %v2858
        %2934 = vmatpush1.msra.mxu0 %v2857
        %2935 = vmatprep.subr.mxu0 %v2860
        %2936 = vmatpush1.msra.mxu0 %v2859
        %2937 = vmatprep.subr.mxu0 %v2862
        %2938 = vmatpush1.msra.mxu0 %v2861
        %2939 = vmatprep.subr.mxu0 %v2864
        %2940 = vmatpush1.msra.mxu0 %v2863
        %2941 = vmatprep.subr.mxu0 %v2866
        %2942 = vmatpush1.msra.mxu0 %v2865
        %2943 = vmatprep.subr.mxu0 %v2868
        %2944 = vmatpush1.msra.mxu0 %v2867
        %2945 = vmatprep.subr.mxu0 %v2870
        %2946 = vmatpush1.msra.mxu0 %v2869
        %2947 = vmatprep.subr.mxu0 %v2872
        %2948 = vmatpush1.msra.mxu0 %v2871
        %2949 = vmatprep.subr.mxu0 %v2874
        %2950 = vmatpush1.msra.mxu0 %v2873
        %2951 = vmatprep.subr.mxu0 %v2876
        %2952 = vmatpush1.msra.mxu0 %v2875
        %2953 = vmatprep.subr.mxu0 %v2878
        %2954 = vmatpush1.msra.mxu0 %v2877
        %2955 = vmatprep.subr.mxu0 %v2880
        %2956 = vmatpush1.msra.mxu0 %v2879
        %2957 = vmatprep.subr.mxu0 %v2882
        %2958 = vmatpush1.msra.mxu0 %v2881
        %2959 = vmatprep.subr.mxu0 %v2884
        %2960 = vmatpush1.msra.mxu0 %v2883
        %2961 = vmatprep.subr.mxu0 %v2886
        %2962 = vmatpush1.msra.mxu0 %v2885
        %2963 = vmatprep.subr.mxu0 %v2888
        %2964 = vmatpush1.msra.mxu0 %v2887
        %2965 = vmatprep.subr.mxu0 %v2890
        %2966 = vmatpush1.msra.mxu0 %v2889
        %2967 = vmatprep.subr.mxu0 %v2892
        %2968 = vmatpush1.msra.mxu0 %v2891
        %2969 = vmatprep.subr.mxu0 %v2894
        %2970 = vmatpush1.msra.mxu0 %v2893
        %2971 = vmatprep.subr.mxu0 %v2896
        %2972 = vmatpush1.msra.mxu0 %v2895
        %2973 = vmatprep.subr.mxu0 %v2898
        %2974 = vmatpush1.msra.mxu0 %v2897
        %2975 = vmatprep.subr.mxu0 %v2900
        %2976 = vmatpush1.msra.mxu0 %v2899
        %2977 = vmatprep.subr.mxu0 %v2902
        %2978 = vmatpush1.msra.mxu0 %v2901
        %2979 = vmatprep.subr.mxu0 %v2904
        %2980 = vmatpush1.msra.mxu0 %v2903
        %2981 = vmatprep.subr.mxu0 %v2906
        %2982 = vmatpush1.msra.mxu0 %v2905
        %2983 = vmatprep.subr.mxu0 %v2908
        %2984 = vmatpush1.msra.mxu0 %v2907
        %2985 = vmatprep.subr.mxu0 %v2910
        %2986 = vmatpush1.msra.mxu0 %v2909
        %2987 = vmatprep.subr.mxu0 %v2912
        %2988 = vmatpush1.msra.mxu0 %v2911
        %2989 = vmatprep.mubr.f32.mxu0 %v2922
        %2990 = vmatmul.mubr.f32.gmra.mrb[0].mxu0 %v2919
        %v2991 = vpop.f32.mrb[0].mxu0
        %v2992 = vadd.f32 0.0, %v2991
        %v2993 = vpop.f32.mrb[0].mxu0
        %v2994 = vadd.f32 0.0, %v2993
        %2995 = vdwg.mxu0
        %v2996 = vadd.f32 %v2845, %v2992
        %v2997 = vadd.f32 %v2847, %v2994
        %v2998 = vadd.f32 %v2996, %v1402
        %v2999 = vadd.f32 %v2997, %v1406
        %v3000 = vadd.f32 %v2079, %v2998
        %v3001 = vadd.f32 %v2080, %v2999
        %v3002 = vld [vmem:[%s7] sm:$0xf]
        %v3003 = vld [vmem:[%s8] sm:$0xf]
        %vm3004 = vcmask 64512
        %v3006 = vsel %vm3004, %v3002, 0
        %3008 = vmatprep.subr.mxu0 %v3001
        %3009 = vmatpush1.msra.mxu0 %v3000
        %3010 = vmatprep.subr.mxu0 0.0
        %3011 = vmatpush1.msra.mxu0 0.0
        %3012 = vmatprep.subr.mxu0 0.0
        %3013 = vmatpush1.msra.mxu0 0.0
        %3014 = vmatprep.subr.mxu0 0.0
        %3015 = vmatpush1.msra.mxu0 0.0
        %3016 = vmatprep.subr.mxu0 0.0
        %3017 = vmatpush1.msra.mxu0 0.0
        %3018 = vmatprep.subr.mxu0 0.0
        %3019 = vmatpush1.msra.mxu0 0.0
        %3020 = vmatprep.subr.mxu0 0.0
        %3021 = vmatpush1.msra.mxu0 0.0
        %3022 = vmatprep.subr.mxu0 0.0
        %3023 = vmatpush1.msra.mxu0 0.0
        %3024 = vmatprep.subr.mxu0 0.0
        %3025 = vmatpush1.msra.mxu0 0.0
        %3026 = vmatprep.subr.mxu0 0.0
        %3027 = vmatpush1.msra.mxu0 0.0
        %3028 = vmatprep.subr.mxu0 0.0
        %3029 = vmatpush1.msra.mxu0 0.0
        %3030 = vmatprep.subr.mxu0 0.0
        %3031 = vmatpush1.msra.mxu0 0.0
        %3032 = vmatprep.subr.mxu0 0.0
        %3033 = vmatpush1.msra.mxu0 0.0
        %3034 = vmatprep.subr.mxu0 0.0
        %3035 = vmatpush1.msra.mxu0 0.0
        %3036 = vmatprep.subr.mxu0 0.0
        %3037 = vmatpush1.msra.mxu0 0.0
        %3038 = vmatprep.subr.mxu0 0.0
        %3039 = vmatpush1.msra.mxu0 0.0
        %3040 = vmatprep.subr.mxu0 0.0
        %3041 = vmatpush1.msra.mxu0 0.0
        %3042 = vmatprep.subr.mxu0 0.0
        %3043 = vmatpush1.msra.mxu0 0.0
        %3044 = vmatprep.subr.mxu0 0.0
        %3045 = vmatpush1.msra.mxu0 0.0
        %3046 = vmatprep.subr.mxu0 0.0
        %3047 = vmatpush1.msra.mxu0 0.0
        %3048 = vmatprep.subr.mxu0 0.0
        %3049 = vmatpush1.msra.mxu0 0.0
        %3050 = vmatprep.subr.mxu0 0.0
        %3051 = vmatpush1.msra.mxu0 0.0
        %3052 = vmatprep.subr.mxu0 0.0
        %3053 = vmatpush1.msra.mxu0 0.0
        %3054 = vmatprep.subr.mxu0 0.0
        %3055 = vmatpush1.msra.mxu0 0.0
        %3056 = vmatprep.subr.mxu0 0.0
        %3057 = vmatpush1.msra.mxu0 0.0
        %3058 = vmatprep.subr.mxu0 0.0
        %3059 = vmatpush1.msra.mxu0 0.0
        %3060 = vmatprep.subr.mxu0 0.0
        %3061 = vmatpush1.msra.mxu0 0.0
        %3062 = vmatprep.subr.mxu0 0.0
        %3063 = vmatpush1.msra.mxu0 0.0
        %3064 = vmatprep.subr.mxu0 0.0
        %3065 = vmatpush1.msra.mxu0 0.0
        %3066 = vmatprep.subr.mxu0 0.0
        %3067 = vmatpush1.msra.mxu0 0.0
        %3068 = vmatprep.subr.mxu0 0.0
        %3069 = vmatpush1.msra.mxu0 0.0
        %3070 = vmatprep.subr.mxu0 0.0
        %3071 = vmatpush1.msra.mxu0 0.0
        %3072 = vmatprep.mubr.f32.mxu0 0.0
        %3073 = vmatmul.mubr.f32.gmra.mrb[0].mxu0 %v3006
        %v3074 = vpop.f32.mrb[0].mxu0
        %v3075 = vadd.f32 0.0, %v3074
        %v3076 = vpop.f32.mrb[0].mxu0
        %v3077 = vadd.f32 0.0, %v3076
        %3078 = vdwg.mxu0
        %v3080 = vsel %vm3004, %v3003, 0
        %3082 = vmatprep.subr.mxu0 %v3001
        %3083 = vmatpush1.msra.mxu0 %v3000
        %3084 = vmatprep.subr.mxu0 0.0
        %3085 = vmatpush1.msra.mxu0 0.0
        %3086 = vmatprep.subr.mxu0 0.0
        %3087 = vmatpush1.msra.mxu0 0.0
        %3088 = vmatprep.subr.mxu0 0.0
        %3089 = vmatpush1.msra.mxu0 0.0
        %3090 = vmatprep.subr.mxu0 0.0
        %3091 = vmatpush1.msra.mxu0 0.0
        %3092 = vmatprep.subr.mxu0 0.0
        %3093 = vmatpush1.msra.mxu0 0.0
        %3094 = vmatprep.subr.mxu0 0.0
        %3095 = vmatpush1.msra.mxu0 0.0
        %3096 = vmatprep.subr.mxu0 0.0
        %3097 = vmatpush1.msra.mxu0 0.0
        %3098 = vmatprep.subr.mxu0 0.0
        %3099 = vmatpush1.msra.mxu0 0.0
        %3100 = vmatprep.subr.mxu0 0.0
        %3101 = vmatpush1.msra.mxu0 0.0
        %3102 = vmatprep.subr.mxu0 0.0
        %3103 = vmatpush1.msra.mxu0 0.0
        %3104 = vmatprep.subr.mxu0 0.0
        %3105 = vmatpush1.msra.mxu0 0.0
        %3106 = vmatprep.subr.mxu0 0.0
        %3107 = vmatpush1.msra.mxu0 0.0
        %3108 = vmatprep.subr.mxu0 0.0
        %3109 = vmatpush1.msra.mxu0 0.0
        %3110 = vmatprep.subr.mxu0 0.0
        %3111 = vmatpush1.msra.mxu0 0.0
        %3112 = vmatprep.subr.mxu0 0.0
        %3113 = vmatpush1.msra.mxu0 0.0
        %3114 = vmatprep.subr.mxu0 0.0
        %3115 = vmatpush1.msra.mxu0 0.0
        %3116 = vmatprep.subr.mxu0 0.0
        %3117 = vmatpush1.msra.mxu0 0.0
        %3118 = vmatprep.subr.mxu0 0.0
        %3119 = vmatpush1.msra.mxu0 0.0
        %3120 = vmatprep.subr.mxu0 0.0
        %3121 = vmatpush1.msra.mxu0 0.0
        %3122 = vmatprep.subr.mxu0 0.0
        %3123 = vmatpush1.msra.mxu0 0.0
        %3124 = vmatprep.subr.mxu0 0.0
        %3125 = vmatpush1.msra.mxu0 0.0
        %3126 = vmatprep.subr.mxu0 0.0
        %3127 = vmatpush1.msra.mxu0 0.0
        %3128 = vmatprep.subr.mxu0 0.0
        %3129 = vmatpush1.msra.mxu0 0.0
        %3130 = vmatprep.subr.mxu0 0.0
        %3131 = vmatpush1.msra.mxu0 0.0
        %3132 = vmatprep.subr.mxu0 0.0
        %3133 = vmatpush1.msra.mxu0 0.0
        %3134 = vmatprep.subr.mxu0 0.0
        %3135 = vmatpush1.msra.mxu0 0.0
        %3136 = vmatprep.subr.mxu0 0.0
        %3137 = vmatpush1.msra.mxu0 0.0
        %3138 = vmatprep.subr.mxu0 0.0
        %3139 = vmatpush1.msra.mxu0 0.0
        %3140 = vmatprep.subr.mxu0 0.0
        %3141 = vmatpush1.msra.mxu0 0.0
        %3142 = vmatprep.subr.mxu0 0.0
        %3143 = vmatpush1.msra.mxu0 0.0
        %3144 = vmatprep.subr.mxu0 0.0
        %3145 = vmatpush1.msra.mxu0 0.0
        %3146 = vmatprep.mubr.f32.mxu0 0.0
        %3147 = vmatmul.mubr.f32.gmra.mrb[0].mxu0 %v3080
        %v3148 = vpop.f32.mrb[0].mxu0
        %v3149 = vadd.f32 0.0, %v3148
        %v3150 = vpop.f32.mrb[0].mxu0
        %v3151 = vadd.f32 0.0, %v3150
        %3152 = vdwg.mxu0
        %v3153 = vmax.f32 %v3075, %v3149
        %v3154 = vmax.f32 %v3077, %v3151
        %v3155 = vmax.f32 %v3153, 0.0
        %v3156 = vmax.f32 %v3154, 0.0
        %3157 = vst.msk [vmem:[#allocation2] ss:$8 sm:$0x3] %vm859, 0.0
        %3158 = vst.msk [vmem:[#allocation2] ss:$8 sm:$0x0] %vm859, 0.0
        %s3159 = scalar_lea.vmem [#allocation2], 5
        %3160 = vst.msk [vmem:[%s3159] ss:$8 sm:$0x3] %vm859, 0.0
        %3161 = vst.msk [vmem:[%s3159] ss:$8 sm:$0x0] %vm859, 0.0
        %v3164 = vrot.slane %v3155, 7
        %v3165 = vrot.slane %v3156, 7
        %3168 = vst [vmem:[#allocation2] sm:$0x1e] %v3164
        %3169 = vst [vmem:[#allocation2 + $0x8] sm:$0x1e] %v3165
        %v3170 = vld [vmem:[#allocation2] sm:$0xf]
        %v3171 = vld [vmem:[#allocation2 + $0x8] sm:$0xf]
        %v3172 = vld [vmem:[#allocation2] sm:$0x1e]
        %v3173 = vld [vmem:[#allocation2 + $0x8] sm:$0x1e]
        %v3174 = vld [vmem:[#allocation2] sm:$0x3c]
        %v3175 = vld [vmem:[#allocation2 + $0x8] sm:$0x3c]
        %v3176 = vld [vmem:[%s3] sm:$0xff]
        %v3177 = vld [vmem:[%s3 + $0x8] sm:$0xff]
        %v3178 = vld [vmem:[%s3 + $0x10] sm:$0xff]
        %v3179 = vld [vmem:[%s3 + $0x18] sm:$0xff]
        %v3180 = vld [vmem:[%s3 + $0x20] sm:$0xff]
        %v3181 = vld [vmem:[%s3 + $0x28] sm:$0xff]
        %v3182 = vld [vmem:[%s3 + $0x30] sm:$0xff]
        %v3183 = vld [vmem:[%s3 + $0x38] sm:$0xff]
        %v3184 = vld [vmem:[%s3 + $0x40] sm:$0xff]
        %v3185 = vld [vmem:[%s3 + $0x48] sm:$0xff]
        %v3186 = vld [vmem:[%s3 + $0x50] sm:$0xff]
        %v3187 = vld [vmem:[%s3 + $0x58] sm:$0xff]
        %v3188 = vld [vmem:[%s3 + $0x60] sm:$0xff]
        %v3189 = vld [vmem:[%s3 + $0x68] sm:$0xff]
        %v3190 = vld [vmem:[%s3 + $0x70] sm:$0xff]
        %v3191 = vld [vmem:[%s3 + $0x78] sm:$0xff]
        %v3192 = vld [vmem:[%s3 + $0x80] sm:$0xff]
        %v3193 = vld [vmem:[%s3 + $0x88] sm:$0xff]
        %v3194 = vld [vmem:[%s3 + $0x90] sm:$0xff]
        %v3195 = vld [vmem:[%s3 + $0x98] sm:$0xff]
        %v3196 = vld [vmem:[%s3 + $0xa0] sm:$0xff]
        %v3197 = vld [vmem:[%s3 + $0xa8] sm:$0xff]
        %v3198 = vld [vmem:[%s3 + $0xb0] sm:$0xff]
        %v3199 = vld [vmem:[%s3 + $0xb8] sm:$0xff]
        %v3200 = vld [vmem:[%s3 + $0xc0] sm:$0xff]
        %v3201 = vld [vmem:[%s3 + $0xc8] sm:$0xff]
        %v3202 = vld [vmem:[%s3 + $0xd0] sm:$0xff]
        %v3203 = vld [vmem:[%s3 + $0xd8] sm:$0xff]
        %v3204 = vld [vmem:[%s3 + $0xe0] sm:$0xff]
        %v3205 = vld [vmem:[%s3 + $0xe8] sm:$0xff]
        %v3206 = vld [vmem:[%s3 + $0xf0] sm:$0xff]
        %v3207 = vld [vmem:[%s3 + $0xf8] sm:$0xff]
        %v3208 = vld [vmem:[%s3 + $0x100] sm:$0xff]
        %v3209 = vld [vmem:[%s3 + $0x108] sm:$0xff]
        %v3210 = vld [vmem:[%s3 + $0x110] sm:$0xff]
        %v3211 = vld [vmem:[%s3 + $0x118] sm:$0xff]
        %v3212 = vld [vmem:[%s3 + $0x120] sm:$0xff]
        %v3213 = vld [vmem:[%s3 + $0x128] sm:$0xff]
        %v3214 = vld [vmem:[%s3 + $0x130] sm:$0xff]
        %v3215 = vld [vmem:[%s3 + $0x138] sm:$0xff]
        %v3216 = vld [vmem:[%s3 + $0x140] sm:$0xff]
        %v3217 = vld [vmem:[%s3 + $0x148] sm:$0xff]
        %v3218 = vld [vmem:[%s3 + $0x150] sm:$0xff]
        %v3219 = vld [vmem:[%s3 + $0x158] sm:$0xff]
        %v3220 = vld [vmem:[%s3 + $0x160] sm:$0xff]
        %v3221 = vld [vmem:[%s3 + $0x168] sm:$0xff]
        %v3222 = vld [vmem:[%s3 + $0x170] sm:$0xff]
        %v3223 = vld [vmem:[%s3 + $0x178] sm:$0xff]
        %v3224 = vld [vmem:[%s3 + $0x180] sm:$0xff]
        %v3225 = vld [vmem:[%s3 + $0x188] sm:$0xff]
        %v3226 = vld [vmem:[%s3 + $0x190] sm:$0xff]
        %v3227 = vld [vmem:[%s3 + $0x198] sm:$0xff]
        %v3228 = vld [vmem:[%s3 + $0x1a0] sm:$0xff]
        %v3229 = vld [vmem:[%s3 + $0x1a8] sm:$0xff]
        %v3230 = vld [vmem:[%s3 + $0x1b0] sm:$0xff]
        %v3231 = vld [vmem:[%s3 + $0x1b8] sm:$0xff]
        %v3232 = vld [vmem:[%s3 + $0x1c0] sm:$0xff]
        %v3233 = vld [vmem:[%s3 + $0x1c8] sm:$0xff]
        %v3234 = vld [vmem:[%s3 + $0x1d0] sm:$0xff]
        %v3235 = vld [vmem:[%s3 + $0x1d8] sm:$0xff]
        %v3236 = vld [vmem:[%s3 + $0x1e0] sm:$0xff]
        %v3237 = vld [vmem:[%s3 + $0x1e8] sm:$0xff]
        %v3238 = vld [vmem:[%s3 + $0x1f0] sm:$0xff]
        %v3239 = vld [vmem:[%s3 + $0x1f8] sm:$0xff]
        %v3240 = vld [vmem:[%s995] sm:$0xff]
        %v3241 = vld [vmem:[%s995 + $0x8] sm:$0xff]
        %v3242 = vld [vmem:[%s995 + $0x10] sm:$0xff]
        %v3243 = vld [vmem:[%s995 + $0x18] sm:$0xff]
        %v3244 = vld [vmem:[%s995 + $0x20] sm:$0xff]
        %v3245 = vld [vmem:[%s995 + $0x28] sm:$0xff]
        %v3246 = vld [vmem:[%s995 + $0x30] sm:$0xff]
        %v3247 = vld [vmem:[%s995 + $0x38] sm:$0xff]
        %v3248 = vld [vmem:[%s995 + $0x40] sm:$0xff]
        %v3249 = vld [vmem:[%s995 + $0x48] sm:$0xff]
        %v3250 = vld [vmem:[%s995 + $0x50] sm:$0xff]
        %v3251 = vld [vmem:[%s995 + $0x58] sm:$0xff]
        %v3252 = vld [vmem:[%s995 + $0x60] sm:$0xff]
        %v3253 = vld [vmem:[%s995 + $0x68] sm:$0xff]
        %v3254 = vld [vmem:[%s995 + $0x70] sm:$0xff]
        %v3255 = vld [vmem:[%s995 + $0x78] sm:$0xff]
        %v3256 = vld [vmem:[%s995 + $0x80] sm:$0xff]
        %v3257 = vld [vmem:[%s995 + $0x88] sm:$0xff]
        %v3258 = vld [vmem:[%s995 + $0x90] sm:$0xff]
        %v3259 = vld [vmem:[%s995 + $0x98] sm:$0xff]
        %v3260 = vld [vmem:[%s995 + $0xa0] sm:$0xff]
        %v3261 = vld [vmem:[%s995 + $0xa8] sm:$0xff]
        %v3262 = vld [vmem:[%s995 + $0xb0] sm:$0xff]
        %v3263 = vld [vmem:[%s995 + $0xb8] sm:$0xff]
        %v3264 = vld [vmem:[%s995 + $0xc0] sm:$0xff]
        %v3265 = vld [vmem:[%s995 + $0xc8] sm:$0xff]
        %v3266 = vld [vmem:[%s995 + $0xd0] sm:$0xff]
        %v3267 = vld [vmem:[%s995 + $0xd8] sm:$0xff]
        %v3268 = vld [vmem:[%s995 + $0xe0] sm:$0xff]
        %v3269 = vld [vmem:[%s995 + $0xe8] sm:$0xff]
        %v3270 = vld [vmem:[%s995 + $0xf0] sm:$0xff]
        %v3271 = vld [vmem:[%s995 + $0xf8] sm:$0xff]
        %v3272 = vld [vmem:[%s995 + $0x100] sm:$0xff]
        %v3273 = vld [vmem:[%s995 + $0x108] sm:$0xff]
        %v3274 = vld [vmem:[%s995 + $0x110] sm:$0xff]
        %v3275 = vld [vmem:[%s995 + $0x118] sm:$0xff]
        %v3276 = vld [vmem:[%s995 + $0x120] sm:$0xff]
        %v3277 = vld [vmem:[%s995 + $0x128] sm:$0xff]
        %v3278 = vld [vmem:[%s995 + $0x130] sm:$0xff]
        %v3279 = vld [vmem:[%s995 + $0x138] sm:$0xff]
        %v3280 = vld [vmem:[%s995 + $0x140] sm:$0xff]
        %v3281 = vld [vmem:[%s995 + $0x148] sm:$0xff]
        %v3282 = vld [vmem:[%s995 + $0x150] sm:$0xff]
        %v3283 = vld [vmem:[%s995 + $0x158] sm:$0xff]
        %v3284 = vld [vmem:[%s995 + $0x160] sm:$0xff]
        %v3285 = vld [vmem:[%s995 + $0x168] sm:$0xff]
        %v3286 = vld [vmem:[%s995 + $0x170] sm:$0xff]
        %v3287 = vld [vmem:[%s995 + $0x178] sm:$0xff]
        %v3288 = vld [vmem:[%s995 + $0x180] sm:$0xff]
        %v3289 = vld [vmem:[%s995 + $0x188] sm:$0xff]
        %v3290 = vld [vmem:[%s995 + $0x190] sm:$0xff]
        %v3291 = vld [vmem:[%s995 + $0x198] sm:$0xff]
        %v3292 = vld [vmem:[%s995 + $0x1a0] sm:$0xff]
        %v3293 = vld [vmem:[%s995 + $0x1a8] sm:$0xff]
        %v3294 = vld [vmem:[%s995 + $0x1b0] sm:$0xff]
        %v3295 = vld [vmem:[%s995 + $0x1b8] sm:$0xff]
        %v3296 = vld [vmem:[%s995 + $0x1c0] sm:$0xff]
        %v3297 = vld [vmem:[%s995 + $0x1c8] sm:$0xff]
        %v3298 = vld [vmem:[%s995 + $0x1d0] sm:$0xff]
        %v3299 = vld [vmem:[%s995 + $0x1d8] sm:$0xff]
        %v3300 = vld [vmem:[%s995 + $0x1e0] sm:$0xff]
        %v3301 = vld [vmem:[%s995 + $0x1e8] sm:$0xff]
        %v3302 = vld [vmem:[%s995 + $0x1f0] sm:$0xff]
        %v3303 = vld [vmem:[%s995 + $0x1f8] sm:$0xff]
        %v3306 = vrot.slane %v3172, 1
        %v3307 = vrot.slane %v3173, 1
        %3310 = vmatprep.subr.mxu0 %v3241
        %3311 = vmatpush1.msra.mxu0 %v3240
        %3312 = vmatprep.subr.mxu0 %v3243
        %3313 = vmatpush1.msra.mxu0 %v3242
        %3314 = vmatprep.subr.mxu0 %v3245
        %3315 = vmatpush1.msra.mxu0 %v3244
        %3316 = vmatprep.subr.mxu0 %v3247
        %3317 = vmatpush1.msra.mxu0 %v3246
        %3318 = vmatprep.subr.mxu0 %v3249
        %3319 = vmatpush1.msra.mxu0 %v3248
        %3320 = vmatprep.subr.mxu0 %v3251
        %3321 = vmatpush1.msra.mxu0 %v3250
        %3322 = vmatprep.subr.mxu0 %v3253
        %3323 = vmatpush1.msra.mxu0 %v3252
        %3324 = vmatprep.subr.mxu0 %v3255
        %3325 = vmatpush1.msra.mxu0 %v3254
        %3326 = vmatprep.subr.mxu0 %v3257
        %3327 = vmatpush1.msra.mxu0 %v3256
        %3328 = vmatprep.subr.mxu0 %v3259
        %3329 = vmatpush1.msra.mxu0 %v3258
        %3330 = vmatprep.subr.mxu0 %v3261
        %3331 = vmatpush1.msra.mxu0 %v3260
        %3332 = vmatprep.subr.mxu0 %v3263
        %3333 = vmatpush1.msra.mxu0 %v3262
        %3334 = vmatprep.subr.mxu0 %v3265
        %3335 = vmatpush1.msra.mxu0 %v3264
        %3336 = vmatprep.subr.mxu0 %v3267
        %3337 = vmatpush1.msra.mxu0 %v3266
        %3338 = vmatprep.subr.mxu0 %v3269
        %3339 = vmatpush1.msra.mxu0 %v3268
        %3340 = vmatprep.subr.mxu0 %v3271
        %3341 = vmatpush1.msra.mxu0 %v3270
        %3342 = vmatprep.subr.mxu0 %v3273
        %3343 = vmatpush1.msra.mxu0 %v3272
        %3344 = vmatprep.subr.mxu0 %v3275
        %3345 = vmatpush1.msra.mxu0 %v3274
        %3346 = vmatprep.subr.mxu0 %v3277
        %3347 = vmatpush1.msra.mxu0 %v3276
        %3348 = vmatprep.subr.mxu0 %v3279
        %3349 = vmatpush1.msra.mxu0 %v3278
        %3350 = vmatprep.subr.mxu0 %v3281
        %3351 = vmatpush1.msra.mxu0 %v3280
        %3352 = vmatprep.subr.mxu0 %v3283
        %3353 = vmatpush1.msra.mxu0 %v3282
        %3354 = vmatprep.subr.mxu0 %v3285
        %3355 = vmatpush1.msra.mxu0 %v3284
        %3356 = vmatprep.subr.mxu0 %v3287
        %3357 = vmatpush1.msra.mxu0 %v3286
        %3358 = vmatprep.subr.mxu0 %v3289
        %3359 = vmatpush1.msra.mxu0 %v3288
        %3360 = vmatprep.subr.mxu0 %v3291
        %3361 = vmatpush1.msra.mxu0 %v3290
        %3362 = vmatprep.subr.mxu0 %v3293
        %3363 = vmatpush1.msra.mxu0 %v3292
        %3364 = vmatprep.subr.mxu0 %v3295
        %3365 = vmatpush1.msra.mxu0 %v3294
        %3366 = vmatprep.subr.mxu0 %v3297
        %3367 = vmatpush1.msra.mxu0 %v3296
        %3368 = vmatprep.subr.mxu0 %v3299
        %3369 = vmatpush1.msra.mxu0 %v3298
        %3370 = vmatprep.subr.mxu0 %v3301
        %3371 = vmatpush1.msra.mxu0 %v3300
        %3372 = vmatprep.subr.mxu0 %v3303
        %3373 = vmatpush1.msra.mxu0 %v3302
        %3374 = vmatprep.mubr.f32.mxu0 %v3307
        %3375 = vmatmul.mubr.f32.gmra.mrb[0].mxu0 %v3306
        %v3376 = vpop.f32.mrb[0].mxu0
        %v3377 = vadd.f32 0.0, %v3376
        %v3378 = vpop.f32.mrb[0].mxu0
        %v3379 = vadd.f32 0.0, %v3378
        %3380 = vdwg.mxu0
        %3381 = vmatprep.subr.mxu0 %v3177
        %3382 = vmatpush1.msra.mxu0 %v3176
        %3383 = vmatprep.subr.mxu0 %v3179
        %3384 = vmatpush1.msra.mxu0 %v3178
        %3385 = vmatprep.subr.mxu0 %v3181
        %3386 = vmatpush1.msra.mxu0 %v3180
        %3387 = vmatprep.subr.mxu0 %v3183
        %3388 = vmatpush1.msra.mxu0 %v3182
        %3389 = vmatprep.subr.mxu0 %v3185
        %3390 = vmatpush1.msra.mxu0 %v3184
        %3391 = vmatprep.subr.mxu0 %v3187
        %3392 = vmatpush1.msra.mxu0 %v3186
        %3393 = vmatprep.subr.mxu0 %v3189
        %3394 = vmatpush1.msra.mxu0 %v3188
        %3395 = vmatprep.subr.mxu0 %v3191
        %3396 = vmatpush1.msra.mxu0 %v3190
        %3397 = vmatprep.subr.mxu0 %v3193
        %3398 = vmatpush1.msra.mxu0 %v3192
        %3399 = vmatprep.subr.mxu0 %v3195
        %3400 = vmatpush1.msra.mxu0 %v3194
        %3401 = vmatprep.subr.mxu0 %v3197
        %3402 = vmatpush1.msra.mxu0 %v3196
        %3403 = vmatprep.subr.mxu0 %v3199
        %3404 = vmatpush1.msra.mxu0 %v3198
        %3405 = vmatprep.subr.mxu0 %v3201
        %3406 = vmatpush1.msra.mxu0 %v3200
        %3407 = vmatprep.subr.mxu0 %v3203
        %3408 = vmatpush1.msra.mxu0 %v3202
        %3409 = vmatprep.subr.mxu0 %v3205
        %3410 = vmatpush1.msra.mxu0 %v3204
        %3411 = vmatprep.subr.mxu0 %v3207
        %3412 = vmatpush1.msra.mxu0 %v3206
        %3413 = vmatprep.subr.mxu0 %v3209
        %3414 = vmatpush1.msra.mxu0 %v3208
        %3415 = vmatprep.subr.mxu0 %v3211
        %3416 = vmatpush1.msra.mxu0 %v3210
        %3417 = vmatprep.subr.mxu0 %v3213
        %3418 = vmatpush1.msra.mxu0 %v3212
        %3419 = vmatprep.subr.mxu0 %v3215
        %3420 = vmatpush1.msra.mxu0 %v3214
        %3421 = vmatprep.subr.mxu0 %v3217
        %3422 = vmatpush1.msra.mxu0 %v3216
        %3423 = vmatprep.subr.mxu0 %v3219
        %3424 = vmatpush1.msra.mxu0 %v3218
        %3425 = vmatprep.subr.mxu0 %v3221
        %3426 = vmatpush1.msra.mxu0 %v3220
        %3427 = vmatprep.subr.mxu0 %v3223
        %3428 = vmatpush1.msra.mxu0 %v3222
        %3429 = vmatprep.subr.mxu0 %v3225
        %3430 = vmatpush1.msra.mxu0 %v3224
        %3431 = vmatprep.subr.mxu0 %v3227
        %3432 = vmatpush1.msra.mxu0 %v3226
        %3433 = vmatprep.subr.mxu0 %v3229
        %3434 = vmatpush1.msra.mxu0 %v3228
        %3435 = vmatprep.subr.mxu0 %v3231
        %3436 = vmatpush1.msra.mxu0 %v3230
        %3437 = vmatprep.subr.mxu0 %v3233
        %3438 = vmatpush1.msra.mxu0 %v3232
        %3439 = vmatprep.subr.mxu0 %v3235
        %3440 = vmatpush1.msra.mxu0 %v3234
        %3441 = vmatprep.subr.mxu0 %v3237
        %3442 = vmatpush1.msra.mxu0 %v3236
        %3443 = vmatprep.subr.mxu0 %v3239
        %3444 = vmatpush1.msra.mxu0 %v3238
        %3445 = vmatprep.mubr.f32.mxu0 %v3171
        %3446 = vmatmul.mubr.f32.gmra.mrb[0].mxu0 %v3170
        %v3447 = vpop.f32.mrb[0].mxu0
        %v3448 = vadd.f32 %v3377, %v3447
        %v3449 = vpop.f32.mrb[0].mxu0
        %v3450 = vadd.f32 %v3379, %v3449
        %3451 = vdwg.mxu0
        %v3452 = vld [vmem:[%s1234] sm:$0xff]
        %v3453 = vld [vmem:[%s1234 + $0x8] sm:$0xff]
        %v3454 = vld [vmem:[%s1234 + $0x10] sm:$0xff]
        %v3455 = vld [vmem:[%s1234 + $0x18] sm:$0xff]
        %v3456 = vld [vmem:[%s1234 + $0x20] sm:$0xff]
        %v3457 = vld [vmem:[%s1234 + $0x28] sm:$0xff]
        %v3458 = vld [vmem:[%s1234 + $0x30] sm:$0xff]
        %v3459 = vld [vmem:[%s1234 + $0x38] sm:$0xff]
        %v3460 = vld [vmem:[%s1234 + $0x40] sm:$0xff]
        %v3461 = vld [vmem:[%s1234 + $0x48] sm:$0xff]
        %v3462 = vld [vmem:[%s1234 + $0x50] sm:$0xff]
        %v3463 = vld [vmem:[%s1234 + $0x58] sm:$0xff]
        %v3464 = vld [vmem:[%s1234 + $0x60] sm:$0xff]
        %v3465 = vld [vmem:[%s1234 + $0x68] sm:$0xff]
        %v3466 = vld [vmem:[%s1234 + $0x70] sm:$0xff]
        %v3467 = vld [vmem:[%s1234 + $0x78] sm:$0xff]
        %v3468 = vld [vmem:[%s1234 + $0x80] sm:$0xff]
        %v3469 = vld [vmem:[%s1234 + $0x88] sm:$0xff]
        %v3470 = vld [vmem:[%s1234 + $0x90] sm:$0xff]
        %v3471 = vld [vmem:[%s1234 + $0x98] sm:$0xff]
        %v3472 = vld [vmem:[%s1234 + $0xa0] sm:$0xff]
        %v3473 = vld [vmem:[%s1234 + $0xa8] sm:$0xff]
        %v3474 = vld [vmem:[%s1234 + $0xb0] sm:$0xff]
        %v3475 = vld [vmem:[%s1234 + $0xb8] sm:$0xff]
        %v3476 = vld [vmem:[%s1234 + $0xc0] sm:$0xff]
        %v3477 = vld [vmem:[%s1234 + $0xc8] sm:$0xff]
        %v3478 = vld [vmem:[%s1234 + $0xd0] sm:$0xff]
        %v3479 = vld [vmem:[%s1234 + $0xd8] sm:$0xff]
        %v3480 = vld [vmem:[%s1234 + $0xe0] sm:$0xff]
        %v3481 = vld [vmem:[%s1234 + $0xe8] sm:$0xff]
        %v3482 = vld [vmem:[%s1234 + $0xf0] sm:$0xff]
        %v3483 = vld [vmem:[%s1234 + $0xf8] sm:$0xff]
        %v3484 = vld [vmem:[%s1234 + $0x100] sm:$0xff]
        %v3485 = vld [vmem:[%s1234 + $0x108] sm:$0xff]
        %v3486 = vld [vmem:[%s1234 + $0x110] sm:$0xff]
        %v3487 = vld [vmem:[%s1234 + $0x118] sm:$0xff]
        %v3488 = vld [vmem:[%s1234 + $0x120] sm:$0xff]
        %v3489 = vld [vmem:[%s1234 + $0x128] sm:$0xff]
        %v3490 = vld [vmem:[%s1234 + $0x130] sm:$0xff]
        %v3491 = vld [vmem:[%s1234 + $0x138] sm:$0xff]
        %v3492 = vld [vmem:[%s1234 + $0x140] sm:$0xff]
        %v3493 = vld [vmem:[%s1234 + $0x148] sm:$0xff]
        %v3494 = vld [vmem:[%s1234 + $0x150] sm:$0xff]
        %v3495 = vld [vmem:[%s1234 + $0x158] sm:$0xff]
        %v3496 = vld [vmem:[%s1234 + $0x160] sm:$0xff]
        %v3497 = vld [vmem:[%s1234 + $0x168] sm:$0xff]
        %v3498 = vld [vmem:[%s1234 + $0x170] sm:$0xff]
        %v3499 = vld [vmem:[%s1234 + $0x178] sm:$0xff]
        %v3500 = vld [vmem:[%s1234 + $0x180] sm:$0xff]
        %v3501 = vld [vmem:[%s1234 + $0x188] sm:$0xff]
        %v3502 = vld [vmem:[%s1234 + $0x190] sm:$0xff]
        %v3503 = vld [vmem:[%s1234 + $0x198] sm:$0xff]
        %v3504 = vld [vmem:[%s1234 + $0x1a0] sm:$0xff]
        %v3505 = vld [vmem:[%s1234 + $0x1a8] sm:$0xff]
        %v3506 = vld [vmem:[%s1234 + $0x1b0] sm:$0xff]
        %v3507 = vld [vmem:[%s1234 + $0x1b8] sm:$0xff]
        %v3508 = vld [vmem:[%s1234 + $0x1c0] sm:$0xff]
        %v3509 = vld [vmem:[%s1234 + $0x1c8] sm:$0xff]
        %v3510 = vld [vmem:[%s1234 + $0x1d0] sm:$0xff]
        %v3511 = vld [vmem:[%s1234 + $0x1d8] sm:$0xff]
        %v3512 = vld [vmem:[%s1234 + $0x1e0] sm:$0xff]
        %v3513 = vld [vmem:[%s1234 + $0x1e8] sm:$0xff]
        %v3514 = vld [vmem:[%s1234 + $0x1f0] sm:$0xff]
        %v3515 = vld [vmem:[%s1234 + $0x1f8] sm:$0xff]
        %v3518 = vrot.slane %v3174, 2
        %v3519 = vrot.slane %v3175, 2
        %3522 = vmatprep.subr.mxu0 %v3453
        %3523 = vmatpush1.msra.mxu0 %v3452
        %3524 = vmatprep.subr.mxu0 %v3455
        %3525 = vmatpush1.msra.mxu0 %v3454
        %3526 = vmatprep.subr.mxu0 %v3457
        %3527 = vmatpush1.msra.mxu0 %v3456
        %3528 = vmatprep.subr.mxu0 %v3459
        %3529 = vmatpush1.msra.mxu0 %v3458
        %3530 = vmatprep.subr.mxu0 %v3461
        %3531 = vmatpush1.msra.mxu0 %v3460
        %3532 = vmatprep.subr.mxu0 %v3463
        %3533 = vmatpush1.msra.mxu0 %v3462
        %3534 = vmatprep.subr.mxu0 %v3465
        %3535 = vmatpush1.msra.mxu0 %v3464
        %3536 = vmatprep.subr.mxu0 %v3467
        %3537 = vmatpush1.msra.mxu0 %v3466
        %3538 = vmatprep.subr.mxu0 %v3469
        %3539 = vmatpush1.msra.mxu0 %v3468
        %3540 = vmatprep.subr.mxu0 %v3471
        %3541 = vmatpush1.msra.mxu0 %v3470
        %3542 = vmatprep.subr.mxu0 %v3473
        %3543 = vmatpush1.msra.mxu0 %v3472
        %3544 = vmatprep.subr.mxu0 %v3475
        %3545 = vmatpush1.msra.mxu0 %v3474
        %3546 = vmatprep.subr.mxu0 %v3477
        %3547 = vmatpush1.msra.mxu0 %v3476
        %3548 = vmatprep.subr.mxu0 %v3479
        %3549 = vmatpush1.msra.mxu0 %v3478
        %3550 = vmatprep.subr.mxu0 %v3481
        %3551 = vmatpush1.msra.mxu0 %v3480
        %3552 = vmatprep.subr.mxu0 %v3483
        %3553 = vmatpush1.msra.mxu0 %v3482
        %3554 = vmatprep.subr.mxu0 %v3485
        %3555 = vmatpush1.msra.mxu0 %v3484
        %3556 = vmatprep.subr.mxu0 %v3487
        %3557 = vmatpush1.msra.mxu0 %v3486
        %3558 = vmatprep.subr.mxu0 %v3489
        %3559 = vmatpush1.msra.mxu0 %v3488
        %3560 = vmatprep.subr.mxu0 %v3491
        %3561 = vmatpush1.msra.mxu0 %v3490
        %3562 = vmatprep.subr.mxu0 %v3493
        %3563 = vmatpush1.msra.mxu0 %v3492
        %3564 = vmatprep.subr.mxu0 %v3495
        %3565 = vmatpush1.msra.mxu0 %v3494
        %3566 = vmatprep.subr.mxu0 %v3497
        %3567 = vmatpush1.msra.mxu0 %v3496
        %3568 = vmatprep.subr.mxu0 %v3499
        %3569 = vmatpush1.msra.mxu0 %v3498
        %3570 = vmatprep.subr.mxu0 %v3501
        %3571 = vmatpush1.msra.mxu0 %v3500
        %3572 = vmatprep.subr.mxu0 %v3503
        %3573 = vmatpush1.msra.mxu0 %v3502
        %3574 = vmatprep.subr.mxu0 %v3505
        %3575 = vmatpush1.msra.mxu0 %v3504
        %3576 = vmatprep.subr.mxu0 %v3507
        %3577 = vmatpush1.msra.mxu0 %v3506
        %3578 = vmatprep.subr.mxu0 %v3509
        %3579 = vmatpush1.msra.mxu0 %v3508
        %3580 = vmatprep.subr.mxu0 %v3511
        %3581 = vmatpush1.msra.mxu0 %v3510
        %3582 = vmatprep.subr.mxu0 %v3513
        %3583 = vmatpush1.msra.mxu0 %v3512
        %3584 = vmatprep.subr.mxu0 %v3515
        %3585 = vmatpush1.msra.mxu0 %v3514
        %3586 = vmatprep.mubr.f32.mxu0 %v3519
        %3587 = vmatmul.mubr.f32.gmra.mrb[0].mxu0 %v3518
        %v3588 = vpop.f32.mrb[0].mxu0
        %v3589 = vadd.f32 0.0, %v3588
        %v3590 = vpop.f32.mrb[0].mxu0
        %v3591 = vadd.f32 0.0, %v3590
        %3592 = vdwg.mxu0
        %v3593 = vadd.f32 %v3448, %v3589
        %v3594 = vadd.f32 %v3450, %v3591
        %v3595 = vadd.f32 %v3593, %v1402
        %v3596 = vadd.f32 %v3594, %v1406
        %v3597 = vmax.f32 %v3595, 0.0
        %v3598 = vmax.f32 %v3596, 0.0
        %3599 = vst.msk [vmem:[#allocation2] ss:$8 sm:$0x3] %vm859, 0.0
        %3600 = vst.msk [vmem:[#allocation2] ss:$8 sm:$0x0] %vm859, 0.0
        %3601 = vst.msk [vmem:[%s3159] ss:$8 sm:$0x3] %vm859, 0.0
        %3602 = vst.msk [vmem:[%s3159] ss:$8 sm:$0x0] %vm859, 0.0
        %v3605 = vrot.slane %v3597, 7
        %v3606 = vrot.slane %v3598, 7
        %3609 = vst [vmem:[#allocation2] sm:$0x1e] %v3605
        %3610 = vst [vmem:[#allocation2 + $0x8] sm:$0x1e] %v3606
        %v3611 = vld [vmem:[#allocation2] sm:$0xf]
        %v3612 = vld [vmem:[#allocation2 + $0x8] sm:$0xf]
        %v3613 = vld [vmem:[#allocation2] sm:$0x1e]
        %v3614 = vld [vmem:[#allocation2 + $0x8] sm:$0x1e]
        %v3615 = vld [vmem:[#allocation2] sm:$0x3c]
        %v3616 = vld [vmem:[#allocation2 + $0x8] sm:$0x3c]
        %v3617 = vld [vmem:[%s3] sm:$0xff]
        %v3618 = vld [vmem:[%s3 + $0x8] sm:$0xff]
        %v3619 = vld [vmem:[%s3 + $0x10] sm:$0xff]
        %v3620 = vld [vmem:[%s3 + $0x18] sm:$0xff]
        %v3621 = vld [vmem:[%s3 + $0x20] sm:$0xff]
        %v3622 = vld [vmem:[%s3 + $0x28] sm:$0xff]
        %v3623 = vld [vmem:[%s3 + $0x30] sm:$0xff]
        %v3624 = vld [vmem:[%s3 + $0x38] sm:$0xff]
        %v3625 = vld [vmem:[%s3 + $0x40] sm:$0xff]
        %v3626 = vld [vmem:[%s3 + $0x48] sm:$0xff]
        %v3627 = vld [vmem:[%s3 + $0x50] sm:$0xff]
        %v3628 = vld [vmem:[%s3 + $0x58] sm:$0xff]
        %v3629 = vld [vmem:[%s3 + $0x60] sm:$0xff]
        %v3630 = vld [vmem:[%s3 + $0x68] sm:$0xff]
        %v3631 = vld [vmem:[%s3 + $0x70] sm:$0xff]
        %v3632 = vld [vmem:[%s3 + $0x78] sm:$0xff]
        %v3633 = vld [vmem:[%s3 + $0x80] sm:$0xff]
        %v3634 = vld [vmem:[%s3 + $0x88] sm:$0xff]
        %v3635 = vld [vmem:[%s3 + $0x90] sm:$0xff]
        %v3636 = vld [vmem:[%s3 + $0x98] sm:$0xff]
        %v3637 = vld [vmem:[%s3 + $0xa0] sm:$0xff]
        %v3638 = vld [vmem:[%s3 + $0xa8] sm:$0xff]
        %v3639 = vld [vmem:[%s3 + $0xb0] sm:$0xff]
        %v3640 = vld [vmem:[%s3 + $0xb8] sm:$0xff]
        %v3641 = vld [vmem:[%s3 + $0xc0] sm:$0xff]
        %v3642 = vld [vmem:[%s3 + $0xc8] sm:$0xff]
        %v3643 = vld [vmem:[%s3 + $0xd0] sm:$0xff]
        %v3644 = vld [vmem:[%s3 + $0xd8] sm:$0xff]
        %v3645 = vld [vmem:[%s3 + $0xe0] sm:$0xff]
        %v3646 = vld [vmem:[%s3 + $0xe8] sm:$0xff]
        %v3647 = vld [vmem:[%s3 + $0xf0] sm:$0xff]
        %v3648 = vld [vmem:[%s3 + $0xf8] sm:$0xff]
        %v3649 = vld [vmem:[%s3 + $0x100] sm:$0xff]
        %v3650 = vld [vmem:[%s3 + $0x108] sm:$0xff]
        %v3651 = vld [vmem:[%s3 + $0x110] sm:$0xff]
        %v3652 = vld [vmem:[%s3 + $0x118] sm:$0xff]
        %v3653 = vld [vmem:[%s3 + $0x120] sm:$0xff]
        %v3654 = vld [vmem:[%s3 + $0x128] sm:$0xff]
        %v3655 = vld [vmem:[%s3 + $0x130] sm:$0xff]
        %v3656 = vld [vmem:[%s3 + $0x138] sm:$0xff]
        %v3657 = vld [vmem:[%s3 + $0x140] sm:$0xff]
        %v3658 = vld [vmem:[%s3 + $0x148] sm:$0xff]
        %v3659 = vld [vmem:[%s3 + $0x150] sm:$0xff]
        %v3660 = vld [vmem:[%s3 + $0x158] sm:$0xff]
        %v3661 = vld [vmem:[%s3 + $0x160] sm:$0xff]
        %v3662 = vld [vmem:[%s3 + $0x168] sm:$0xff]
        %v3663 = vld [vmem:[%s3 + $0x170] sm:$0xff]
        %v3664 = vld [vmem:[%s3 + $0x178] sm:$0xff]
        %v3665 = vld [vmem:[%s3 + $0x180] sm:$0xff]
        %v3666 = vld [vmem:[%s3 + $0x188] sm:$0xff]
        %v3667 = vld [vmem:[%s3 + $0x190] sm:$0xff]
        %v3668 = vld [vmem:[%s3 + $0x198] sm:$0xff]
        %v3669 = vld [vmem:[%s3 + $0x1a0] sm:$0xff]
        %v3670 = vld [vmem:[%s3 + $0x1a8] sm:$0xff]
        %v3671 = vld [vmem:[%s3 + $0x1b0] sm:$0xff]
        %v3672 = vld [vmem:[%s3 + $0x1b8] sm:$0xff]
        %v3673 = vld [vmem:[%s3 + $0x1c0] sm:$0xff]
        %v3674 = vld [vmem:[%s3 + $0x1c8] sm:$0xff]
        %v3675 = vld [vmem:[%s3 + $0x1d0] sm:$0xff]
        %v3676 = vld [vmem:[%s3 + $0x1d8] sm:$0xff]
        %v3677 = vld [vmem:[%s3 + $0x1e0] sm:$0xff]
        %v3678 = vld [vmem:[%s3 + $0x1e8] sm:$0xff]
        %v3679 = vld [vmem:[%s3 + $0x1f0] sm:$0xff]
        %v3680 = vld [vmem:[%s3 + $0x1f8] sm:$0xff]
        %v3681 = vld [vmem:[%s995] sm:$0xff]
        %v3682 = vld [vmem:[%s995 + $0x8] sm:$0xff]
        %v3683 = vld [vmem:[%s995 + $0x10] sm:$0xff]
        %v3684 = vld [vmem:[%s995 + $0x18] sm:$0xff]
        %v3685 = vld [vmem:[%s995 + $0x20] sm:$0xff]
        %v3686 = vld [vmem:[%s995 + $0x28] sm:$0xff]
        %v3687 = vld [vmem:[%s995 + $0x30] sm:$0xff]
        %v3688 = vld [vmem:[%s995 + $0x38] sm:$0xff]
        %v3689 = vld [vmem:[%s995 + $0x40] sm:$0xff]
        %v3690 = vld [vmem:[%s995 + $0x48] sm:$0xff]
        %v3691 = vld [vmem:[%s995 + $0x50] sm:$0xff]
        %v3692 = vld [vmem:[%s995 + $0x58] sm:$0xff]
        %v3693 = vld [vmem:[%s995 + $0x60] sm:$0xff]
        %v3694 = vld [vmem:[%s995 + $0x68] sm:$0xff]
        %v3695 = vld [vmem:[%s995 + $0x70] sm:$0xff]
        %v3696 = vld [vmem:[%s995 + $0x78] sm:$0xff]
        %v3697 = vld [vmem:[%s995 + $0x80] sm:$0xff]
        %v3698 = vld [vmem:[%s995 + $0x88] sm:$0xff]
        %v3699 = vld [vmem:[%s995 + $0x90] sm:$0xff]
        %v3700 = vld [vmem:[%s995 + $0x98] sm:$0xff]
        %v3701 = vld [vmem:[%s995 + $0xa0] sm:$0xff]
        %v3702 = vld [vmem:[%s995 + $0xa8] sm:$0xff]
        %v3703 = vld [vmem:[%s995 + $0xb0] sm:$0xff]
        %v3704 = vld [vmem:[%s995 + $0xb8] sm:$0xff]
        %v3705 = vld [vmem:[%s995 + $0xc0] sm:$0xff]
        %v3706 = vld [vmem:[%s995 + $0xc8] sm:$0xff]
        %v3707 = vld [vmem:[%s995 + $0xd0] sm:$0xff]
        %v3708 = vld [vmem:[%s995 + $0xd8] sm:$0xff]
        %v3709 = vld [vmem:[%s995 + $0xe0] sm:$0xff]
        %v3710 = vld [vmem:[%s995 + $0xe8] sm:$0xff]
        %v3711 = vld [vmem:[%s995 + $0xf0] sm:$0xff]
        %v3712 = vld [vmem:[%s995 + $0xf8] sm:$0xff]
        %v3713 = vld [vmem:[%s995 + $0x100] sm:$0xff]
        %v3714 = vld [vmem:[%s995 + $0x108] sm:$0xff]
        %v3715 = vld [vmem:[%s995 + $0x110] sm:$0xff]
        %v3716 = vld [vmem:[%s995 + $0x118] sm:$0xff]
        %v3717 = vld [vmem:[%s995 + $0x120] sm:$0xff]
        %v3718 = vld [vmem:[%s995 + $0x128] sm:$0xff]
        %v3719 = vld [vmem:[%s995 + $0x130] sm:$0xff]
        %v3720 = vld [vmem:[%s995 + $0x138] sm:$0xff]
        %v3721 = vld [vmem:[%s995 + $0x140] sm:$0xff]
        %v3722 = vld [vmem:[%s995 + $0x148] sm:$0xff]
        %v3723 = vld [vmem:[%s995 + $0x150] sm:$0xff]
        %v3724 = vld [vmem:[%s995 + $0x158] sm:$0xff]
        %v3725 = vld [vmem:[%s995 + $0x160] sm:$0xff]
        %v3726 = vld [vmem:[%s995 + $0x168] sm:$0xff]
        %v3727 = vld [vmem:[%s995 + $0x170] sm:$0xff]
        %v3728 = vld [vmem:[%s995 + $0x178] sm:$0xff]
        %v3729 = vld [vmem:[%s995 + $0x180] sm:$0xff]
        %v3730 = vld [vmem:[%s995 + $0x188] sm:$0xff]
        %v3731 = vld [vmem:[%s995 + $0x190] sm:$0xff]
        %v3732 = vld [vmem:[%s995 + $0x198] sm:$0xff]
        %v3733 = vld [vmem:[%s995 + $0x1a0] sm:$0xff]
        %v3734 = vld [vmem:[%s995 + $0x1a8] sm:$0xff]
        %v3735 = vld [vmem:[%s995 + $0x1b0] sm:$0xff]
        %v3736 = vld [vmem:[%s995 + $0x1b8] sm:$0xff]
        %v3737 = vld [vmem:[%s995 + $0x1c0] sm:$0xff]
        %v3738 = vld [vmem:[%s995 + $0x1c8] sm:$0xff]
        %v3739 = vld [vmem:[%s995 + $0x1d0] sm:$0xff]
        %v3740 = vld [vmem:[%s995 + $0x1d8] sm:$0xff]
        %v3741 = vld [vmem:[%s995 + $0x1e0] sm:$0xff]
        %v3742 = vld [vmem:[%s995 + $0x1e8] sm:$0xff]
        %v3743 = vld [vmem:[%s995 + $0x1f0] sm:$0xff]
        %v3744 = vld [vmem:[%s995 + $0x1f8] sm:$0xff]
        %v3747 = vrot.slane %v3613, 1
        %v3748 = vrot.slane %v3614, 1
        %3751 = vmatprep.subr.mxu0 %v3682
        %3752 = vmatpush1.msra.mxu0 %v3681
        %3753 = vmatprep.subr.mxu0 %v3684
        %3754 = vmatpush1.msra.mxu0 %v3683
        %3755 = vmatprep.subr.mxu0 %v3686
        %3756 = vmatpush1.msra.mxu0 %v3685
        %3757 = vmatprep.subr.mxu0 %v3688
        %3758 = vmatpush1.msra.mxu0 %v3687
        %3759 = vmatprep.subr.mxu0 %v3690
        %3760 = vmatpush1.msra.mxu0 %v3689
        %3761 = vmatprep.subr.mxu0 %v3692
        %3762 = vmatpush1.msra.mxu0 %v3691
        %3763 = vmatprep.subr.mxu0 %v3694
        %3764 = vmatpush1.msra.mxu0 %v3693
        %3765 = vmatprep.subr.mxu0 %v3696
        %3766 = vmatpush1.msra.mxu0 %v3695
        %3767 = vmatprep.subr.mxu0 %v3698
        %3768 = vmatpush1.msra.mxu0 %v3697
        %3769 = vmatprep.subr.mxu0 %v3700
        %3770 = vmatpush1.msra.mxu0 %v3699
        %3771 = vmatprep.subr.mxu0 %v3702
        %3772 = vmatpush1.msra.mxu0 %v3701
        %3773 = vmatprep.subr.mxu0 %v3704
        %3774 = vmatpush1.msra.mxu0 %v3703
        %3775 = vmatprep.subr.mxu0 %v3706
        %3776 = vmatpush1.msra.mxu0 %v3705
        %3777 = vmatprep.subr.mxu0 %v3708
        %3778 = vmatpush1.msra.mxu0 %v3707
        %3779 = vmatprep.subr.mxu0 %v3710
        %3780 = vmatpush1.msra.mxu0 %v3709
        %3781 = vmatprep.subr.mxu0 %v3712
        %3782 = vmatpush1.msra.mxu0 %v3711
        %3783 = vmatprep.subr.mxu0 %v3714
        %3784 = vmatpush1.msra.mxu0 %v3713
        %3785 = vmatprep.subr.mxu0 %v3716
        %3786 = vmatpush1.msra.mxu0 %v3715
        %3787 = vmatprep.subr.mxu0 %v3718
        %3788 = vmatpush1.msra.mxu0 %v3717
        %3789 = vmatprep.subr.mxu0 %v3720
        %3790 = vmatpush1.msra.mxu0 %v3719
        %3791 = vmatprep.subr.mxu0 %v3722
        %3792 = vmatpush1.msra.mxu0 %v3721
        %3793 = vmatprep.subr.mxu0 %v3724
        %3794 = vmatpush1.msra.mxu0 %v3723
        %3795 = vmatprep.subr.mxu0 %v3726
        %3796 = vmatpush1.msra.mxu0 %v3725
        %3797 = vmatprep.subr.mxu0 %v3728
        %3798 = vmatpush1.msra.mxu0 %v3727
        %3799 = vmatprep.subr.mxu0 %v3730
        %3800 = vmatpush1.msra.mxu0 %v3729
        %3801 = vmatprep.subr.mxu0 %v3732
        %3802 = vmatpush1.msra.mxu0 %v3731
        %3803 = vmatprep.subr.mxu0 %v3734
        %3804 = vmatpush1.msra.mxu0 %v3733
        %3805 = vmatprep.subr.mxu0 %v3736
        %3806 = vmatpush1.msra.mxu0 %v3735
        %3807 = vmatprep.subr.mxu0 %v3738
        %3808 = vmatpush1.msra.mxu0 %v3737
        %3809 = vmatprep.subr.mxu0 %v3740
        %3810 = vmatpush1.msra.mxu0 %v3739
        %3811 = vmatprep.subr.mxu0 %v3742
        %3812 = vmatpush1.msra.mxu0 %v3741
        %3813 = vmatprep.subr.mxu0 %v3744
        %3814 = vmatpush1.msra.mxu0 %v3743
        %3815 = vmatprep.mubr.f32.mxu0 %v3748
        %3816 = vmatmul.mubr.f32.gmra.mrb[0].mxu0 %v3747
        %v3817 = vpop.f32.mrb[0].mxu0
        %v3818 = vadd.f32 0.0, %v3817
        %v3819 = vpop.f32.mrb[0].mxu0
        %v3820 = vadd.f32 0.0, %v3819
        %3821 = vdwg.mxu0
        %3822 = vmatprep.subr.mxu0 %v3618
        %3823 = vmatpush1.msra.mxu0 %v3617
        %3824 = vmatprep.subr.mxu0 %v3620
        %3825 = vmatpush1.msra.mxu0 %v3619
        %3826 = vmatprep.subr.mxu0 %v3622
        %3827 = vmatpush1.msra.mxu0 %v3621
        %3828 = vmatprep.subr.mxu0 %v3624
        %3829 = vmatpush1.msra.mxu0 %v3623
        %3830 = vmatprep.subr.mxu0 %v3626
        %3831 = vmatpush1.msra.mxu0 %v3625
        %3832 = vmatprep.subr.mxu0 %v3628
        %3833 = vmatpush1.msra.mxu0 %v3627
        %3834 = vmatprep.subr.mxu0 %v3630
        %3835 = vmatpush1.msra.mxu0 %v3629
        %3836 = vmatprep.subr.mxu0 %v3632
        %3837 = vmatpush1.msra.mxu0 %v3631
        %3838 = vmatprep.subr.mxu0 %v3634
        %3839 = vmatpush1.msra.mxu0 %v3633
        %3840 = vmatprep.subr.mxu0 %v3636
        %3841 = vmatpush1.msra.mxu0 %v3635
        %3842 = vmatprep.subr.mxu0 %v3638
        %3843 = vmatpush1.msra.mxu0 %v3637
        %3844 = vmatprep.subr.mxu0 %v3640
        %3845 = vmatpush1.msra.mxu0 %v3639
        %3846 = vmatprep.subr.mxu0 %v3642
        %3847 = vmatpush1.msra.mxu0 %v3641
        %3848 = vmatprep.subr.mxu0 %v3644
        %3849 = vmatpush1.msra.mxu0 %v3643
        %3850 = vmatprep.subr.mxu0 %v3646
        %3851 = vmatpush1.msra.mxu0 %v3645
        %3852 = vmatprep.subr.mxu0 %v3648
        %3853 = vmatpush1.msra.mxu0 %v3647
        %3854 = vmatprep.subr.mxu0 %v3650
        %3855 = vmatpush1.msra.mxu0 %v3649
        %3856 = vmatprep.subr.mxu0 %v3652
        %3857 = vmatpush1.msra.mxu0 %v3651
        %3858 = vmatprep.subr.mxu0 %v3654
        %3859 = vmatpush1.msra.mxu0 %v3653
        %3860 = vmatprep.subr.mxu0 %v3656
        %3861 = vmatpush1.msra.mxu0 %v3655
        %3862 = vmatprep.subr.mxu0 %v3658
        %3863 = vmatpush1.msra.mxu0 %v3657
        %3864 = vmatprep.subr.mxu0 %v3660
        %3865 = vmatpush1.msra.mxu0 %v3659
        %3866 = vmatprep.subr.mxu0 %v3662
        %3867 = vmatpush1.msra.mxu0 %v3661
        %3868 = vmatprep.subr.mxu0 %v3664
        %3869 = vmatpush1.msra.mxu0 %v3663
        %3870 = vmatprep.subr.mxu0 %v3666
        %3871 = vmatpush1.msra.mxu0 %v3665
        %3872 = vmatprep.subr.mxu0 %v3668
        %3873 = vmatpush1.msra.mxu0 %v3667
        %3874 = vmatprep.subr.mxu0 %v3670
        %3875 = vmatpush1.msra.mxu0 %v3669
        %3876 = vmatprep.subr.mxu0 %v3672
        %3877 = vmatpush1.msra.mxu0 %v3671
        %3878 = vmatprep.subr.mxu0 %v3674
        %3879 = vmatpush1.msra.mxu0 %v3673
        %3880 = vmatprep.subr.mxu0 %v3676
        %3881 = vmatpush1.msra.mxu0 %v3675
        %3882 = vmatprep.subr.mxu0 %v3678
        %3883 = vmatpush1.msra.mxu0 %v3677
        %3884 = vmatprep.subr.mxu0 %v3680
        %3885 = vmatpush1.msra.mxu0 %v3679
        %3886 = vmatprep.mubr.f32.mxu0 %v3612
        %3887 = vmatmul.mubr.f32.gmra.mrb[0].mxu0 %v3611
        %v3888 = vpop.f32.mrb[0].mxu0
        %v3889 = vadd.f32 %v3818, %v3888
        %v3890 = vpop.f32.mrb[0].mxu0
        %v3891 = vadd.f32 %v3820, %v3890
        %3892 = vdwg.mxu0
        %v3893 = vld [vmem:[%s1234] sm:$0xff]
        %v3894 = vld [vmem:[%s1234 + $0x8] sm:$0xff]
        %v3895 = vld [vmem:[%s1234 + $0x10] sm:$0xff]
        %v3896 = vld [vmem:[%s1234 + $0x18] sm:$0xff]
        %v3897 = vld [vmem:[%s1234 + $0x20] sm:$0xff]
        %v3898 = vld [vmem:[%s1234 + $0x28] sm:$0xff]
        %v3899 = vld [vmem:[%s1234 + $0x30] sm:$0xff]
        %v3900 = vld [vmem:[%s1234 + $0x38] sm:$0xff]
        %v3901 = vld [vmem:[%s1234 + $0x40] sm:$0xff]
        %v3902 = vld [vmem:[%s1234 + $0x48] sm:$0xff]
        %v3903 = vld [vmem:[%s1234 + $0x50] sm:$0xff]
        %v3904 = vld [vmem:[%s1234 + $0x58] sm:$0xff]
        %v3905 = vld [vmem:[%s1234 + $0x60] sm:$0xff]
        %v3906 = vld [vmem:[%s1234 + $0x68] sm:$0xff]
        %v3907 = vld [vmem:[%s1234 + $0x70] sm:$0xff]
        %v3908 = vld [vmem:[%s1234 + $0x78] sm:$0xff]
        %v3909 = vld [vmem:[%s1234 + $0x80] sm:$0xff]
        %v3910 = vld [vmem:[%s1234 + $0x88] sm:$0xff]
        %v3911 = vld [vmem:[%s1234 + $0x90] sm:$0xff]
        %v3912 = vld [vmem:[%s1234 + $0x98] sm:$0xff]
        %v3913 = vld [vmem:[%s1234 + $0xa0] sm:$0xff]
        %v3914 = vld [vmem:[%s1234 + $0xa8] sm:$0xff]
        %v3915 = vld [vmem:[%s1234 + $0xb0] sm:$0xff]
        %v3916 = vld [vmem:[%s1234 + $0xb8] sm:$0xff]
        %v3917 = vld [vmem:[%s1234 + $0xc0] sm:$0xff]
        %v3918 = vld [vmem:[%s1234 + $0xc8] sm:$0xff]
        %v3919 = vld [vmem:[%s1234 + $0xd0] sm:$0xff]
        %v3920 = vld [vmem:[%s1234 + $0xd8] sm:$0xff]
        %v3921 = vld [vmem:[%s1234 + $0xe0] sm:$0xff]
        %v3922 = vld [vmem:[%s1234 + $0xe8] sm:$0xff]
        %v3923 = vld [vmem:[%s1234 + $0xf0] sm:$0xff]
        %v3924 = vld [vmem:[%s1234 + $0xf8] sm:$0xff]
        %v3925 = vld [vmem:[%s1234 + $0x100] sm:$0xff]
        %v3926 = vld [vmem:[%s1234 + $0x108] sm:$0xff]
        %v3927 = vld [vmem:[%s1234 + $0x110] sm:$0xff]
        %v3928 = vld [vmem:[%s1234 + $0x118] sm:$0xff]
        %v3929 = vld [vmem:[%s1234 + $0x120] sm:$0xff]
        %v3930 = vld [vmem:[%s1234 + $0x128] sm:$0xff]
        %v3931 = vld [vmem:[%s1234 + $0x130] sm:$0xff]
        %v3932 = vld [vmem:[%s1234 + $0x138] sm:$0xff]
        %v3933 = vld [vmem:[%s1234 + $0x140] sm:$0xff]
        %v3934 = vld [vmem:[%s1234 + $0x148] sm:$0xff]
        %v3935 = vld [vmem:[%s1234 + $0x150] sm:$0xff]
        %v3936 = vld [vmem:[%s1234 + $0x158] sm:$0xff]
        %v3937 = vld [vmem:[%s1234 + $0x160] sm:$0xff]
        %v3938 = vld [vmem:[%s1234 + $0x168] sm:$0xff]
        %v3939 = vld [vmem:[%s1234 + $0x170] sm:$0xff]
        %v3940 = vld [vmem:[%s1234 + $0x178] sm:$0xff]
        %v3941 = vld [vmem:[%s1234 + $0x180] sm:$0xff]
        %v3942 = vld [vmem:[%s1234 + $0x188] sm:$0xff]
        %v3943 = vld [vmem:[%s1234 + $0x190] sm:$0xff]
        %v3944 = vld [vmem:[%s1234 + $0x198] sm:$0xff]
        %v3945 = vld [vmem:[%s1234 + $0x1a0] sm:$0xff]
        %v3946 = vld [vmem:[%s1234 + $0x1a8] sm:$0xff]
        %v3947 = vld [vmem:[%s1234 + $0x1b0] sm:$0xff]
        %v3948 = vld [vmem:[%s1234 + $0x1b8] sm:$0xff]
        %v3949 = vld [vmem:[%s1234 + $0x1c0] sm:$0xff]
        %v3950 = vld [vmem:[%s1234 + $0x1c8] sm:$0xff]
        %v3951 = vld [vmem:[%s1234 + $0x1d0] sm:$0xff]
        %v3952 = vld [vmem:[%s1234 + $0x1d8] sm:$0xff]
        %v3953 = vld [vmem:[%s1234 + $0x1e0] sm:$0xff]
        %v3954 = vld [vmem:[%s1234 + $0x1e8] sm:$0xff]
        %v3955 = vld [vmem:[%s1234 + $0x1f0] sm:$0xff]
        %v3956 = vld [vmem:[%s1234 + $0x1f8] sm:$0xff]
        %v3959 = vrot.slane %v3615, 2
        %v3960 = vrot.slane %v3616, 2
        %3963 = vmatprep.subr.mxu0 %v3894
        %3964 = vmatpush1.msra.mxu0 %v3893
        %3965 = vmatprep.subr.mxu0 %v3896
        %3966 = vmatpush1.msra.mxu0 %v3895
        %3967 = vmatprep.subr.mxu0 %v3898
        %3968 = vmatpush1.msra.mxu0 %v3897
        %3969 = vmatprep.subr.mxu0 %v3900
        %3970 = vmatpush1.msra.mxu0 %v3899
        %3971 = vmatprep.subr.mxu0 %v3902
        %3972 = vmatpush1.msra.mxu0 %v3901
        %3973 = vmatprep.subr.mxu0 %v3904
        %3974 = vmatpush1.msra.mxu0 %v3903
        %3975 = vmatprep.subr.mxu0 %v3906
        %3976 = vmatpush1.msra.mxu0 %v3905
        %3977 = vmatprep.subr.mxu0 %v3908
        %3978 = vmatpush1.msra.mxu0 %v3907
        %3979 = vmatprep.subr.mxu0 %v3910
        %3980 = vmatpush1.msra.mxu0 %v3909
        %3981 = vmatprep.subr.mxu0 %v3912
        %3982 = vmatpush1.msra.mxu0 %v3911
        %3983 = vmatprep.subr.mxu0 %v3914
        %3984 = vmatpush1.msra.mxu0 %v3913
        %3985 = vmatprep.subr.mxu0 %v3916
        %3986 = vmatpush1.msra.mxu0 %v3915
        %3987 = vmatprep.subr.mxu0 %v3918
        %3988 = vmatpush1.msra.mxu0 %v3917
        %3989 = vmatprep.subr.mxu0 %v3920
        %3990 = vmatpush1.msra.mxu0 %v3919
        %3991 = vmatprep.subr.mxu0 %v3922
        %3992 = vmatpush1.msra.mxu0 %v3921
        %3993 = vmatprep.subr.mxu0 %v3924
        %3994 = vmatpush1.msra.mxu0 %v3923
        %3995 = vmatprep.subr.mxu0 %v3926
        %3996 = vmatpush1.msra.mxu0 %v3925
        %3997 = vmatprep.subr.mxu0 %v3928
        %3998 = vmatpush1.msra.mxu0 %v3927
        %3999 = vmatprep.subr.mxu0 %v3930
        %4000 = vmatpush1.msra.mxu0 %v3929
        %4001 = vmatprep.subr.mxu0 %v3932
        %4002 = vmatpush1.msra.mxu0 %v3931
        %4003 = vmatprep.subr.mxu0 %v3934
        %4004 = vmatpush1.msra.mxu0 %v3933
        %4005 = vmatprep.subr.mxu0 %v3936
        %4006 = vmatpush1.msra.mxu0 %v3935
        %4007 = vmatprep.subr.mxu0 %v3938
        %4008 = vmatpush1.msra.mxu0 %v3937
        %4009 = vmatprep.subr.mxu0 %v3940
        %4010 = vmatpush1.msra.mxu0 %v3939
        %4011 = vmatprep.subr.mxu0 %v3942
        %4012 = vmatpush1.msra.mxu0 %v3941
        %4013 = vmatprep.subr.mxu0 %v3944
        %4014 = vmatpush1.msra.mxu0 %v3943
        %4015 = vmatprep.subr.mxu0 %v3946
        %4016 = vmatpush1.msra.mxu0 %v3945
        %4017 = vmatprep.subr.mxu0 %v3948
        %4018 = vmatpush1.msra.mxu0 %v3947
        %4019 = vmatprep.subr.mxu0 %v3950
        %4020 = vmatpush1.msra.mxu0 %v3949
        %4021 = vmatprep.subr.mxu0 %v3952
        %4022 = vmatpush1.msra.mxu0 %v3951
        %4023 = vmatprep.subr.mxu0 %v3954
        %4024 = vmatpush1.msra.mxu0 %v3953
        %4025 = vmatprep.subr.mxu0 %v3956
        %4026 = vmatpush1.msra.mxu0 %v3955
        %4027 = vmatprep.mubr.f32.mxu0 %v3960
        %4028 = vmatmul.mubr.f32.gmra.mrb[0].mxu0 %v3959
        %v4029 = vpop.f32.mrb[0].mxu0
        %v4030 = vadd.f32 0.0, %v4029
        %v4031 = vpop.f32.mrb[0].mxu0
        %v4032 = vadd.f32 0.0, %v4031
        %4033 = vdwg.mxu0
        %v4034 = vadd.f32 %v3889, %v4030
        %v4035 = vadd.f32 %v3891, %v4032
        %v4036 = vadd.f32 %v4034, %v1402
        %v4037 = vadd.f32 %v4035, %v1406
        %v4038 = vadd.f32 %v3153, %v4036
        %v4039 = vadd.f32 %v3154, %v4037
        %v4040 = vld [vmem:[%s7] sm:$0x3]
        %v4041 = vld [vmem:[%s8] sm:$0x3]
        %vm4042 = vcmask 31744
        %v4044 = vsel %vm4042, %v4040, 0
        %vm4046 = vcmask 1043456
        %v4048 = vsel %vm4046, %v4038, 0
        %v4051 = vsel %vm4046, %v4039, 0
        %4053 = vmatprep.subr.mxu0 %v4051
        %4054 = vmatpush1.msra.mxu0 %v4048
        %4055 = vmatprep.subr.mxu0 0.0
        %4056 = vmatpush1.msra.mxu0 0.0
        %4057 = vmatprep.subr.mxu0 0.0
        %4058 = vmatpush1.msra.mxu0 0.0
        %4059 = vmatprep.subr.mxu0 0.0
        %4060 = vmatpush1.msra.mxu0 0.0
        %4061 = vmatprep.subr.mxu0 0.0
        %4062 = vmatpush1.msra.mxu0 0.0
        %4063 = vmatprep.subr.mxu0 0.0
        %4064 = vmatpush1.msra.mxu0 0.0
        %4065 = vmatprep.subr.mxu0 0.0
        %4066 = vmatpush1.msra.mxu0 0.0
        %4067 = vmatprep.subr.mxu0 0.0
        %4068 = vmatpush1.msra.mxu0 0.0
        %4069 = vmatprep.subr.mxu0 0.0
        %4070 = vmatpush1.msra.mxu0 0.0
        %4071 = vmatprep.subr.mxu0 0.0
        %4072 = vmatpush1.msra.mxu0 0.0
        %4073 = vmatprep.subr.mxu0 0.0
        %4074 = vmatpush1.msra.mxu0 0.0
        %4075 = vmatprep.subr.mxu0 0.0
        %4076 = vmatpush1.msra.mxu0 0.0
        %4077 = vmatprep.subr.mxu0 0.0
        %4078 = vmatpush1.msra.mxu0 0.0
        %4079 = vmatprep.subr.mxu0 0.0
        %4080 = vmatpush1.msra.mxu0 0.0
        %4081 = vmatprep.subr.mxu0 0.0
        %4082 = vmatpush1.msra.mxu0 0.0
        %4083 = vmatprep.subr.mxu0 0.0
        %4084 = vmatpush1.msra.mxu0 0.0
        %4085 = vmatprep.subr.mxu0 0.0
        %4086 = vmatpush1.msra.mxu0 0.0
        %4087 = vmatprep.subr.mxu0 0.0
        %4088 = vmatpush1.msra.mxu0 0.0
        %4089 = vmatprep.subr.mxu0 0.0
        %4090 = vmatpush1.msra.mxu0 0.0
        %4091 = vmatprep.subr.mxu0 0.0
        %4092 = vmatpush1.msra.mxu0 0.0
        %4093 = vmatprep.subr.mxu0 0.0
        %4094 = vmatpush1.msra.mxu0 0.0
        %4095 = vmatprep.subr.mxu0 0.0
        %4096 = vmatpush1.msra.mxu0 0.0
        %4097 = vmatprep.subr.mxu0 0.0
        %4098 = vmatpush1.msra.mxu0 0.0
        %4099 = vmatprep.subr.mxu0 0.0
        %4100 = vmatpush1.msra.mxu0 0.0
        %4101 = vmatprep.subr.mxu0 0.0
        %4102 = vmatpush1.msra.mxu0 0.0
        %4103 = vmatprep.subr.mxu0 0.0
        %4104 = vmatpush1.msra.mxu0 0.0
        %4105 = vmatprep.subr.mxu0 0.0
        %4106 = vmatpush1.msra.mxu0 0.0
        %4107 = vmatprep.subr.mxu0 0.0
        %4108 = vmatpush1.msra.mxu0 0.0
        %4109 = vmatprep.subr.mxu0 0.0
        %4110 = vmatpush1.msra.mxu0 0.0
        %4111 = vmatprep.subr.mxu0 0.0
        %4112 = vmatpush1.msra.mxu0 0.0
        %4113 = vmatprep.subr.mxu0 0.0
        %4114 = vmatpush1.msra.mxu0 0.0
        %4115 = vmatprep.subr.mxu0 0.0
        %4116 = vmatpush1.msra.mxu0 0.0
        %4117 = vmatprep.mubr.f32.mxu0 0.0
        %4118 = vmatmul.mubr.f32.gmra.mrb[0].mxu0 %v4044
        %v4119 = vpop.f32.mrb[0].mxu0
        %v4120 = vadd.f32 0.0, %v4119
        %v4121 = vpop.f32.mrb[0].mxu0
        %v4122 = vadd.f32 0.0, %v4121
        %4123 = vdwg.mxu0
        %v4125 = vsel %vm4042, %v4041, 0
        %4127 = vmatprep.subr.mxu0 %v4051
        %4128 = vmatpush1.msra.mxu0 %v4048
        %4129 = vmatprep.subr.mxu0 0.0
        %4130 = vmatpush1.msra.mxu0 0.0
        %4131 = vmatprep.subr.mxu0 0.0
        %4132 = vmatpush1.msra.mxu0 0.0
        %4133 = vmatprep.subr.mxu0 0.0
        %4134 = vmatpush1.msra.mxu0 0.0
        %4135 = vmatprep.subr.mxu0 0.0
        %4136 = vmatpush1.msra.mxu0 0.0
        %4137 = vmatprep.subr.mxu0 0.0
        %4138 = vmatpush1.msra.mxu0 0.0
        %4139 = vmatprep.subr.mxu0 0.0
        %4140 = vmatpush1.msra.mxu0 0.0
        %4141 = vmatprep.subr.mxu0 0.0
        %4142 = vmatpush1.msra.mxu0 0.0
        %4143 = vmatprep.subr.mxu0 0.0
        %4144 = vmatpush1.msra.mxu0 0.0
        %4145 = vmatprep.subr.mxu0 0.0
        %4146 = vmatpush1.msra.mxu0 0.0
        %4147 = vmatprep.subr.mxu0 0.0
        %4148 = vmatpush1.msra.mxu0 0.0
        %4149 = vmatprep.subr.mxu0 0.0
        %4150 = vmatpush1.msra.mxu0 0.0
        %4151 = vmatprep.subr.mxu0 0.0
        %4152 = vmatpush1.msra.mxu0 0.0
        %4153 = vmatprep.subr.mxu0 0.0
        %4154 = vmatpush1.msra.mxu0 0.0
        %4155 = vmatprep.subr.mxu0 0.0
        %4156 = vmatpush1.msra.mxu0 0.0
        %4157 = vmatprep.subr.mxu0 0.0
        %4158 = vmatpush1.msra.mxu0 0.0
        %4159 = vmatprep.subr.mxu0 0.0
        %4160 = vmatpush1.msra.mxu0 0.0
        %4161 = vmatprep.subr.mxu0 0.0
        %4162 = vmatpush1.msra.mxu0 0.0
        %4163 = vmatprep.subr.mxu0 0.0
        %4164 = vmatpush1.msra.mxu0 0.0
        %4165 = vmatprep.subr.mxu0 0.0
        %4166 = vmatpush1.msra.mxu0 0.0
        %4167 = vmatprep.subr.mxu0 0.0
        %4168 = vmatpush1.msra.mxu0 0.0
        %4169 = vmatprep.subr.mxu0 0.0
        %4170 = vmatpush1.msra.mxu0 0.0
        %4171 = vmatprep.subr.mxu0 0.0
        %4172 = vmatpush1.msra.mxu0 0.0
        %4173 = vmatprep.subr.mxu0 0.0
        %4174 = vmatpush1.msra.mxu0 0.0
        %4175 = vmatprep.subr.mxu0 0.0
        %4176 = vmatpush1.msra.mxu0 0.0
        %4177 = vmatprep.subr.mxu0 0.0
        %4178 = vmatpush1.msra.mxu0 0.0
        %4179 = vmatprep.subr.mxu0 0.0
        %4180 = vmatpush1.msra.mxu0 0.0
        %4181 = vmatprep.subr.mxu0 0.0
        %4182 = vmatpush1.msra.mxu0 0.0
        %4183 = vmatprep.subr.mxu0 0.0
        %4184 = vmatpush1.msra.mxu0 0.0
        %4185 = vmatprep.subr.mxu0 0.0
        %4186 = vmatpush1.msra.mxu0 0.0
        %4187 = vmatprep.subr.mxu0 0.0
        %4188 = vmatpush1.msra.mxu0 0.0
        %4189 = vmatprep.subr.mxu0 0.0
        %4190 = vmatpush1.msra.mxu0 0.0
        %4191 = vmatprep.mubr.f32.mxu0 0.0
        %4192 = vmatmul.mubr.f32.gmra.mrb[0].mxu0 %v4125
        %v4193 = vpop.f32.mrb[0].mxu0
        %v4194 = vadd.f32 0.0, %v4193
        %v4195 = vpop.f32.mrb[0].mxu0
        %v4196 = vadd.f32 0.0, %v4195
        %4197 = vdwg.mxu0
        %v4198 = vmax.f32 %v4120, %v4194
        %v4199 = vmax.f32 %v4122, %v4196
        %v4200 = vmax.f32 %v4198, 0.0
        %v4201 = vmax.f32 %v4199, 0.0
        %4202 = vst.msk [vmem:[#allocation2] ss:$8 sm:$0x3] %vm859, 0.0
        %4203 = vst.msk [vmem:[#allocation2] ss:$8 sm:$0x0] %vm859, 0.0
        %s4204 = scalar_lea.vmem [#allocation2], 3
        %4205 = vst.msk [vmem:[%s4204] ss:$8 sm:$0x3] %vm859, 0.0
        %4206 = vst.msk [vmem:[%s4204] ss:$8 sm:$0x0] %vm859, 0.0
        %v4209 = vrot.slane %v4200, 7
        %v4210 = vrot.slane %v4201, 7
        %4213 = vst [vmem:[#allocation2] sm:$0x6] %v4209
        %4214 = vst [vmem:[#allocation2 + $0x8] sm:$0x6] %v4210
        %v4215 = vld [vmem:[#allocation2] sm:$0x3]
        %v4216 = vld [vmem:[#allocation2 + $0x8] sm:$0x3]
        %v4217 = vld [vmem:[#allocation2] sm:$0x6]
        %v4218 = vld [vmem:[#allocation2 + $0x8] sm:$0x6]
        %v4219 = vld [vmem:[#allocation2] sm:$0xc]
        %v4220 = vld [vmem:[#allocation2 + $0x8] sm:$0xc]
        %v4221 = vld [vmem:[%s3] sm:$0xff]
        %v4222 = vld [vmem:[%s3 + $0x8] sm:$0xff]
        %v4223 = vld [vmem:[%s3 + $0x10] sm:$0xff]
        %v4224 = vld [vmem:[%s3 + $0x18] sm:$0xff]
        %v4225 = vld [vmem:[%s3 + $0x20] sm:$0xff]
        %v4226 = vld [vmem:[%s3 + $0x28] sm:$0xff]
        %v4227 = vld [vmem:[%s3 + $0x30] sm:$0xff]
        %v4228 = vld [vmem:[%s3 + $0x38] sm:$0xff]
        %v4229 = vld [vmem:[%s3 + $0x40] sm:$0xff]
        %v4230 = vld [vmem:[%s3 + $0x48] sm:$0xff]
        %v4231 = vld [vmem:[%s3 + $0x50] sm:$0xff]
        %v4232 = vld [vmem:[%s3 + $0x58] sm:$0xff]
        %v4233 = vld [vmem:[%s3 + $0x60] sm:$0xff]
        %v4234 = vld [vmem:[%s3 + $0x68] sm:$0xff]
        %v4235 = vld [vmem:[%s3 + $0x70] sm:$0xff]
        %v4236 = vld [vmem:[%s3 + $0x78] sm:$0xff]
        %v4237 = vld [vmem:[%s3 + $0x80] sm:$0xff]
        %v4238 = vld [vmem:[%s3 + $0x88] sm:$0xff]
        %v4239 = vld [vmem:[%s3 + $0x90] sm:$0xff]
        %v4240 = vld [vmem:[%s3 + $0x98] sm:$0xff]
        %v4241 = vld [vmem:[%s3 + $0xa0] sm:$0xff]
        %v4242 = vld [vmem:[%s3 + $0xa8] sm:$0xff]
        %v4243 = vld [vmem:[%s3 + $0xb0] sm:$0xff]
        %v4244 = vld [vmem:[%s3 + $0xb8] sm:$0xff]
        %v4245 = vld [vmem:[%s3 + $0xc0] sm:$0xff]
        %v4246 = vld [vmem:[%s3 + $0xc8] sm:$0xff]
        %v4247 = vld [vmem:[%s3 + $0xd0] sm:$0xff]
        %v4248 = vld [vmem:[%s3 + $0xd8] sm:$0xff]
        %v4249 = vld [vmem:[%s3 + $0xe0] sm:$0xff]
        %v4250 = vld [vmem:[%s3 + $0xe8] sm:$0xff]
        %v4251 = vld [vmem:[%s3 + $0xf0] sm:$0xff]
        %v4252 = vld [vmem:[%s3 + $0xf8] sm:$0xff]
        %v4253 = vld [vmem:[%s3 + $0x100] sm:$0xff]
        %v4254 = vld [vmem:[%s3 + $0x108] sm:$0xff]
        %v4255 = vld [vmem:[%s3 + $0x110] sm:$0xff]
        %v4256 = vld [vmem:[%s3 + $0x118] sm:$0xff]
        %v4257 = vld [vmem:[%s3 + $0x120] sm:$0xff]
        %v4258 = vld [vmem:[%s3 + $0x128] sm:$0xff]
        %v4259 = vld [vmem:[%s3 + $0x130] sm:$0xff]
        %v4260 = vld [vmem:[%s3 + $0x138] sm:$0xff]
        %v4261 = vld [vmem:[%s3 + $0x140] sm:$0xff]
        %v4262 = vld [vmem:[%s3 + $0x148] sm:$0xff]
        %v4263 = vld [vmem:[%s3 + $0x150] sm:$0xff]
        %v4264 = vld [vmem:[%s3 + $0x158] sm:$0xff]
        %v4265 = vld [vmem:[%s3 + $0x160] sm:$0xff]
        %v4266 = vld [vmem:[%s3 + $0x168] sm:$0xff]
        %v4267 = vld [vmem:[%s3 + $0x170] sm:$0xff]
        %v4268 = vld [vmem:[%s3 + $0x178] sm:$0xff]
        %v4269 = vld [vmem:[%s3 + $0x180] sm:$0xff]
        %v4270 = vld [vmem:[%s3 + $0x188] sm:$0xff]
        %v4271 = vld [vmem:[%s3 + $0x190] sm:$0xff]
        %v4272 = vld [vmem:[%s3 + $0x198] sm:$0xff]
        %v4273 = vld [vmem:[%s3 + $0x1a0] sm:$0xff]
        %v4274 = vld [vmem:[%s3 + $0x1a8] sm:$0xff]
        %v4275 = vld [vmem:[%s3 + $0x1b0] sm:$0xff]
        %v4276 = vld [vmem:[%s3 + $0x1b8] sm:$0xff]
        %v4277 = vld [vmem:[%s3 + $0x1c0] sm:$0xff]
        %v4278 = vld [vmem:[%s3 + $0x1c8] sm:$0xff]
        %v4279 = vld [vmem:[%s3 + $0x1d0] sm:$0xff]
        %v4280 = vld [vmem:[%s3 + $0x1d8] sm:$0xff]
        %v4281 = vld [vmem:[%s3 + $0x1e0] sm:$0xff]
        %v4282 = vld [vmem:[%s3 + $0x1e8] sm:$0xff]
        %v4283 = vld [vmem:[%s3 + $0x1f0] sm:$0xff]
        %v4284 = vld [vmem:[%s3 + $0x1f8] sm:$0xff]
        %v4285 = vld [vmem:[%s995] sm:$0xff]
        %v4286 = vld [vmem:[%s995 + $0x8] sm:$0xff]
        %v4287 = vld [vmem:[%s995 + $0x10] sm:$0xff]
        %v4288 = vld [vmem:[%s995 + $0x18] sm:$0xff]
        %v4289 = vld [vmem:[%s995 + $0x20] sm:$0xff]
        %v4290 = vld [vmem:[%s995 + $0x28] sm:$0xff]
        %v4291 = vld [vmem:[%s995 + $0x30] sm:$0xff]
        %v4292 = vld [vmem:[%s995 + $0x38] sm:$0xff]
        %v4293 = vld [vmem:[%s995 + $0x40] sm:$0xff]
        %v4294 = vld [vmem:[%s995 + $0x48] sm:$0xff]
        %v4295 = vld [vmem:[%s995 + $0x50] sm:$0xff]
        %v4296 = vld [vmem:[%s995 + $0x58] sm:$0xff]
        %v4297 = vld [vmem:[%s995 + $0x60] sm:$0xff]
        %v4298 = vld [vmem:[%s995 + $0x68] sm:$0xff]
        %v4299 = vld [vmem:[%s995 + $0x70] sm:$0xff]
        %v4300 = vld [vmem:[%s995 + $0x78] sm:$0xff]
        %v4301 = vld [vmem:[%s995 + $0x80] sm:$0xff]
        %v4302 = vld [vmem:[%s995 + $0x88] sm:$0xff]
        %v4303 = vld [vmem:[%s995 + $0x90] sm:$0xff]
        %v4304 = vld [vmem:[%s995 + $0x98] sm:$0xff]
        %v4305 = vld [vmem:[%s995 + $0xa0] sm:$0xff]
        %v4306 = vld [vmem:[%s995 + $0xa8] sm:$0xff]
        %v4307 = vld [vmem:[%s995 + $0xb0] sm:$0xff]
        %v4308 = vld [vmem:[%s995 + $0xb8] sm:$0xff]
        %v4309 = vld [vmem:[%s995 + $0xc0] sm:$0xff]
        %v4310 = vld [vmem:[%s995 + $0xc8] sm:$0xff]
        %v4311 = vld [vmem:[%s995 + $0xd0] sm:$0xff]
        %v4312 = vld [vmem:[%s995 + $0xd8] sm:$0xff]
        %v4313 = vld [vmem:[%s995 + $0xe0] sm:$0xff]
        %v4314 = vld [vmem:[%s995 + $0xe8] sm:$0xff]
        %v4315 = vld [vmem:[%s995 + $0xf0] sm:$0xff]
        %v4316 = vld [vmem:[%s995 + $0xf8] sm:$0xff]
        %v4317 = vld [vmem:[%s995 + $0x100] sm:$0xff]
        %v4318 = vld [vmem:[%s995 + $0x108] sm:$0xff]
        %v4319 = vld [vmem:[%s995 + $0x110] sm:$0xff]
        %v4320 = vld [vmem:[%s995 + $0x118] sm:$0xff]
        %v4321 = vld [vmem:[%s995 + $0x120] sm:$0xff]
        %v4322 = vld [vmem:[%s995 + $0x128] sm:$0xff]
        %v4323 = vld [vmem:[%s995 + $0x130] sm:$0xff]
        %v4324 = vld [vmem:[%s995 + $0x138] sm:$0xff]
        %v4325 = vld [vmem:[%s995 + $0x140] sm:$0xff]
        %v4326 = vld [vmem:[%s995 + $0x148] sm:$0xff]
        %v4327 = vld [vmem:[%s995 + $0x150] sm:$0xff]
        %v4328 = vld [vmem:[%s995 + $0x158] sm:$0xff]
        %v4329 = vld [vmem:[%s995 + $0x160] sm:$0xff]
        %v4330 = vld [vmem:[%s995 + $0x168] sm:$0xff]
        %v4331 = vld [vmem:[%s995 + $0x170] sm:$0xff]
        %v4332 = vld [vmem:[%s995 + $0x178] sm:$0xff]
        %v4333 = vld [vmem:[%s995 + $0x180] sm:$0xff]
        %v4334 = vld [vmem:[%s995 + $0x188] sm:$0xff]
        %v4335 = vld [vmem:[%s995 + $0x190] sm:$0xff]
        %v4336 = vld [vmem:[%s995 + $0x198] sm:$0xff]
        %v4337 = vld [vmem:[%s995 + $0x1a0] sm:$0xff]
        %v4338 = vld [vmem:[%s995 + $0x1a8] sm:$0xff]
        %v4339 = vld [vmem:[%s995 + $0x1b0] sm:$0xff]
        %v4340 = vld [vmem:[%s995 + $0x1b8] sm:$0xff]
        %v4341 = vld [vmem:[%s995 + $0x1c0] sm:$0xff]
        %v4342 = vld [vmem:[%s995 + $0x1c8] sm:$0xff]
        %v4343 = vld [vmem:[%s995 + $0x1d0] sm:$0xff]
        %v4344 = vld [vmem:[%s995 + $0x1d8] sm:$0xff]
        %v4345 = vld [vmem:[%s995 + $0x1e0] sm:$0xff]
        %v4346 = vld [vmem:[%s995 + $0x1e8] sm:$0xff]
        %v4347 = vld [vmem:[%s995 + $0x1f0] sm:$0xff]
        %v4348 = vld [vmem:[%s995 + $0x1f8] sm:$0xff]
        %v4351 = vrot.slane %v4217, 1
        %v4352 = vrot.slane %v4218, 1
        %4355 = vmatprep.subr.mxu0 %v4286
        %4356 = vmatpush1.msra.mxu0 %v4285
        %4357 = vmatprep.subr.mxu0 %v4288
        %4358 = vmatpush1.msra.mxu0 %v4287
        %4359 = vmatprep.subr.mxu0 %v4290
        %4360 = vmatpush1.msra.mxu0 %v4289
        %4361 = vmatprep.subr.mxu0 %v4292
        %4362 = vmatpush1.msra.mxu0 %v4291
        %4363 = vmatprep.subr.mxu0 %v4294
        %4364 = vmatpush1.msra.mxu0 %v4293
        %4365 = vmatprep.subr.mxu0 %v4296
        %4366 = vmatpush1.msra.mxu0 %v4295
        %4367 = vmatprep.subr.mxu0 %v4298
        %4368 = vmatpush1.msra.mxu0 %v4297
        %4369 = vmatprep.subr.mxu0 %v4300
        %4370 = vmatpush1.msra.mxu0 %v4299
        %4371 = vmatprep.subr.mxu0 %v4302
        %4372 = vmatpush1.msra.mxu0 %v4301
        %4373 = vmatprep.subr.mxu0 %v4304
        %4374 = vmatpush1.msra.mxu0 %v4303
        %4375 = vmatprep.subr.mxu0 %v4306
        %4376 = vmatpush1.msra.mxu0 %v4305
        %4377 = vmatprep.subr.mxu0 %v4308
        %4378 = vmatpush1.msra.mxu0 %v4307
        %4379 = vmatprep.subr.mxu0 %v4310
        %4380 = vmatpush1.msra.mxu0 %v4309
        %4381 = vmatprep.subr.mxu0 %v4312
        %4382 = vmatpush1.msra.mxu0 %v4311
        %4383 = vmatprep.subr.mxu0 %v4314
        %4384 = vmatpush1.msra.mxu0 %v4313
        %4385 = vmatprep.subr.mxu0 %v4316
        %4386 = vmatpush1.msra.mxu0 %v4315
        %4387 = vmatprep.subr.mxu0 %v4318
        %4388 = vmatpush1.msra.mxu0 %v4317
        %4389 = vmatprep.subr.mxu0 %v4320
        %4390 = vmatpush1.msra.mxu0 %v4319
        %4391 = vmatprep.subr.mxu0 %v4322
        %4392 = vmatpush1.msra.mxu0 %v4321
        %4393 = vmatprep.subr.mxu0 %v4324
        %4394 = vmatpush1.msra.mxu0 %v4323
        %4395 = vmatprep.subr.mxu0 %v4326
        %4396 = vmatpush1.msra.mxu0 %v4325
        %4397 = vmatprep.subr.mxu0 %v4328
        %4398 = vmatpush1.msra.mxu0 %v4327
        %4399 = vmatprep.subr.mxu0 %v4330
        %4400 = vmatpush1.msra.mxu0 %v4329
        %4401 = vmatprep.subr.mxu0 %v4332
        %4402 = vmatpush1.msra.mxu0 %v4331
        %4403 = vmatprep.subr.mxu0 %v4334
        %4404 = vmatpush1.msra.mxu0 %v4333
        %4405 = vmatprep.subr.mxu0 %v4336
        %4406 = vmatpush1.msra.mxu0 %v4335
        %4407 = vmatprep.subr.mxu0 %v4338
        %4408 = vmatpush1.msra.mxu0 %v4337
        %4409 = vmatprep.subr.mxu0 %v4340
        %4410 = vmatpush1.msra.mxu0 %v4339
        %4411 = vmatprep.subr.mxu0 %v4342
        %4412 = vmatpush1.msra.mxu0 %v4341
        %4413 = vmatprep.subr.mxu0 %v4344
        %4414 = vmatpush1.msra.mxu0 %v4343
        %4415 = vmatprep.subr.mxu0 %v4346
        %4416 = vmatpush1.msra.mxu0 %v4345
        %4417 = vmatprep.subr.mxu0 %v4348
        %4418 = vmatpush1.msra.mxu0 %v4347
        %4419 = vmatprep.mubr.f32.mxu0 %v4352
        %4420 = vmatmul.mubr.f32.gmra.mrb[0].mxu0 %v4351
        %v4421 = vpop.f32.mrb[0].mxu0
        %v4422 = vadd.f32 0.0, %v4421
        %v4423 = vpop.f32.mrb[0].mxu0
        %v4424 = vadd.f32 0.0, %v4423
        %4425 = vdwg.mxu0
        %4426 = vmatprep.subr.mxu0 %v4222
        %4427 = vmatpush1.msra.mxu0 %v4221
        %4428 = vmatprep.subr.mxu0 %v4224
        %4429 = vmatpush1.msra.mxu0 %v4223
        %4430 = vmatprep.subr.mxu0 %v4226
        %4431 = vmatpush1.msra.mxu0 %v4225
        %4432 = vmatprep.subr.mxu0 %v4228
        %4433 = vmatpush1.msra.mxu0 %v4227
        %4434 = vmatprep.subr.mxu0 %v4230
        %4435 = vmatpush1.msra.mxu0 %v4229
        %4436 = vmatprep.subr.mxu0 %v4232
        %4437 = vmatpush1.msra.mxu0 %v4231
        %4438 = vmatprep.subr.mxu0 %v4234
        %4439 = vmatpush1.msra.mxu0 %v4233
        %4440 = vmatprep.subr.mxu0 %v4236
        %4441 = vmatpush1.msra.mxu0 %v4235
        %4442 = vmatprep.subr.mxu0 %v4238
        %4443 = vmatpush1.msra.mxu0 %v4237
        %4444 = vmatprep.subr.mxu0 %v4240
        %4445 = vmatpush1.msra.mxu0 %v4239
        %4446 = vmatprep.subr.mxu0 %v4242
        %4447 = vmatpush1.msra.mxu0 %v4241
        %4448 = vmatprep.subr.mxu0 %v4244
        %4449 = vmatpush1.msra.mxu0 %v4243
        %4450 = vmatprep.subr.mxu0 %v4246
        %4451 = vmatpush1.msra.mxu0 %v4245
        %4452 = vmatprep.subr.mxu0 %v4248
        %4453 = vmatpush1.msra.mxu0 %v4247
        %4454 = vmatprep.subr.mxu0 %v4250
        %4455 = vmatpush1.msra.mxu0 %v4249
        %4456 = vmatprep.subr.mxu0 %v4252
        %4457 = vmatpush1.msra.mxu0 %v4251
        %4458 = vmatprep.subr.mxu0 %v4254
        %4459 = vmatpush1.msra.mxu0 %v4253
        %4460 = vmatprep.subr.mxu0 %v4256
        %4461 = vmatpush1.msra.mxu0 %v4255
        %4462 = vmatprep.subr.mxu0 %v4258
        %4463 = vmatpush1.msra.mxu0 %v4257
        %4464 = vmatprep.subr.mxu0 %v4260
        %4465 = vmatpush1.msra.mxu0 %v4259
        %4466 = vmatprep.subr.mxu0 %v4262
        %4467 = vmatpush1.msra.mxu0 %v4261
        %4468 = vmatprep.subr.mxu0 %v4264
        %4469 = vmatpush1.msra.mxu0 %v4263
        %4470 = vmatprep.subr.mxu0 %v4266
        %4471 = vmatpush1.msra.mxu0 %v4265
        %4472 = vmatprep.subr.mxu0 %v4268
        %4473 = vmatpush1.msra.mxu0 %v4267
        %4474 = vmatprep.subr.mxu0 %v4270
        %4475 = vmatpush1.msra.mxu0 %v4269
        %4476 = vmatprep.subr.mxu0 %v4272
        %4477 = vmatpush1.msra.mxu0 %v4271
        %4478 = vmatprep.subr.mxu0 %v4274
        %4479 = vmatpush1.msra.mxu0 %v4273
        %4480 = vmatprep.subr.mxu0 %v4276
        %4481 = vmatpush1.msra.mxu0 %v4275
        %4482 = vmatprep.subr.mxu0 %v4278
        %4483 = vmatpush1.msra.mxu0 %v4277
        %4484 = vmatprep.subr.mxu0 %v4280
        %4485 = vmatpush1.msra.mxu0 %v4279
        %4486 = vmatprep.subr.mxu0 %v4282
        %4487 = vmatpush1.msra.mxu0 %v4281
        %4488 = vmatprep.subr.mxu0 %v4284
        %4489 = vmatpush1.msra.mxu0 %v4283
        %4490 = vmatprep.mubr.f32.mxu0 %v4216
        %4491 = vmatmul.mubr.f32.gmra.mrb[0].mxu0 %v4215
        %v4492 = vpop.f32.mrb[0].mxu0
        %v4493 = vadd.f32 %v4422, %v4492
        %v4494 = vpop.f32.mrb[0].mxu0
        %v4495 = vadd.f32 %v4424, %v4494
        %4496 = vdwg.mxu0
        %v4497 = vld [vmem:[%s1234] sm:$0xff]
        %v4498 = vld [vmem:[%s1234 + $0x8] sm:$0xff]
        %v4499 = vld [vmem:[%s1234 + $0x10] sm:$0xff]
        %v4500 = vld [vmem:[%s1234 + $0x18] sm:$0xff]
        %v4501 = vld [vmem:[%s1234 + $0x20] sm:$0xff]
        %v4502 = vld [vmem:[%s1234 + $0x28] sm:$0xff]
        %v4503 = vld [vmem:[%s1234 + $0x30] sm:$0xff]
        %v4504 = vld [vmem:[%s1234 + $0x38] sm:$0xff]
        %v4505 = vld [vmem:[%s1234 + $0x40] sm:$0xff]
        %v4506 = vld [vmem:[%s1234 + $0x48] sm:$0xff]
        %v4507 = vld [vmem:[%s1234 + $0x50] sm:$0xff]
        %v4508 = vld [vmem:[%s1234 + $0x58] sm:$0xff]
        %v4509 = vld [vmem:[%s1234 + $0x60] sm:$0xff]
        %v4510 = vld [vmem:[%s1234 + $0x68] sm:$0xff]
        %v4511 = vld [vmem:[%s1234 + $0x70] sm:$0xff]
        %v4512 = vld [vmem:[%s1234 + $0x78] sm:$0xff]
        %v4513 = vld [vmem:[%s1234 + $0x80] sm:$0xff]
        %v4514 = vld [vmem:[%s1234 + $0x88] sm:$0xff]
        %v4515 = vld [vmem:[%s1234 + $0x90] sm:$0xff]
        %v4516 = vld [vmem:[%s1234 + $0x98] sm:$0xff]
        %v4517 = vld [vmem:[%s1234 + $0xa0] sm:$0xff]
        %v4518 = vld [vmem:[%s1234 + $0xa8] sm:$0xff]
        %v4519 = vld [vmem:[%s1234 + $0xb0] sm:$0xff]
        %v4520 = vld [vmem:[%s1234 + $0xb8] sm:$0xff]
        %v4521 = vld [vmem:[%s1234 + $0xc0] sm:$0xff]
        %v4522 = vld [vmem:[%s1234 + $0xc8] sm:$0xff]
        %v4523 = vld [vmem:[%s1234 + $0xd0] sm:$0xff]
        %v4524 = vld [vmem:[%s1234 + $0xd8] sm:$0xff]
        %v4525 = vld [vmem:[%s1234 + $0xe0] sm:$0xff]
        %v4526 = vld [vmem:[%s1234 + $0xe8] sm:$0xff]
        %v4527 = vld [vmem:[%s1234 + $0xf0] sm:$0xff]
        %v4528 = vld [vmem:[%s1234 + $0xf8] sm:$0xff]
        %v4529 = vld [vmem:[%s1234 + $0x100] sm:$0xff]
        %v4530 = vld [vmem:[%s1234 + $0x108] sm:$0xff]
        %v4531 = vld [vmem:[%s1234 + $0x110] sm:$0xff]
        %v4532 = vld [vmem:[%s1234 + $0x118] sm:$0xff]
        %v4533 = vld [vmem:[%s1234 + $0x120] sm:$0xff]
        %v4534 = vld [vmem:[%s1234 + $0x128] sm:$0xff]
        %v4535 = vld [vmem:[%s1234 + $0x130] sm:$0xff]
        %v4536 = vld [vmem:[%s1234 + $0x138] sm:$0xff]
        %v4537 = vld [vmem:[%s1234 + $0x140] sm:$0xff]
        %v4538 = vld [vmem:[%s1234 + $0x148] sm:$0xff]
        %v4539 = vld [vmem:[%s1234 + $0x150] sm:$0xff]
        %v4540 = vld [vmem:[%s1234 + $0x158] sm:$0xff]
        %v4541 = vld [vmem:[%s1234 + $0x160] sm:$0xff]
        %v4542 = vld [vmem:[%s1234 + $0x168] sm:$0xff]
        %v4543 = vld [vmem:[%s1234 + $0x170] sm:$0xff]
        %v4544 = vld [vmem:[%s1234 + $0x178] sm:$0xff]
        %v4545 = vld [vmem:[%s1234 + $0x180] sm:$0xff]
        %v4546 = vld [vmem:[%s1234 + $0x188] sm:$0xff]
        %v4547 = vld [vmem:[%s1234 + $0x190] sm:$0xff]
        %v4548 = vld [vmem:[%s1234 + $0x198] sm:$0xff]
        %v4549 = vld [vmem:[%s1234 + $0x1a0] sm:$0xff]
        %v4550 = vld [vmem:[%s1234 + $0x1a8] sm:$0xff]
        %v4551 = vld [vmem:[%s1234 + $0x1b0] sm:$0xff]
        %v4552 = vld [vmem:[%s1234 + $0x1b8] sm:$0xff]
        %v4553 = vld [vmem:[%s1234 + $0x1c0] sm:$0xff]
        %v4554 = vld [vmem:[%s1234 + $0x1c8] sm:$0xff]
        %v4555 = vld [vmem:[%s1234 + $0x1d0] sm:$0xff]
        %v4556 = vld [vmem:[%s1234 + $0x1d8] sm:$0xff]
        %v4557 = vld [vmem:[%s1234 + $0x1e0] sm:$0xff]
        %v4558 = vld [vmem:[%s1234 + $0x1e8] sm:$0xff]
        %v4559 = vld [vmem:[%s1234 + $0x1f0] sm:$0xff]
        %v4560 = vld [vmem:[%s1234 + $0x1f8] sm:$0xff]
        %v4563 = vrot.slane %v4219, 2
        %v4564 = vrot.slane %v4220, 2
        %4567 = vmatprep.subr.mxu0 %v4498
        %4568 = vmatpush1.msra.mxu0 %v4497
        %4569 = vmatprep.subr.mxu0 %v4500
        %4570 = vmatpush1.msra.mxu0 %v4499
        %4571 = vmatprep.subr.mxu0 %v4502
        %4572 = vmatpush1.msra.mxu0 %v4501
        %4573 = vmatprep.subr.mxu0 %v4504
        %4574 = vmatpush1.msra.mxu0 %v4503
        %4575 = vmatprep.subr.mxu0 %v4506
        %4576 = vmatpush1.msra.mxu0 %v4505
        %4577 = vmatprep.subr.mxu0 %v4508
        %4578 = vmatpush1.msra.mxu0 %v4507
        %4579 = vmatprep.subr.mxu0 %v4510
        %4580 = vmatpush1.msra.mxu0 %v4509
        %4581 = vmatprep.subr.mxu0 %v4512
        %4582 = vmatpush1.msra.mxu0 %v4511
        %4583 = vmatprep.subr.mxu0 %v4514
        %4584 = vmatpush1.msra.mxu0 %v4513
        %4585 = vmatprep.subr.mxu0 %v4516
        %4586 = vmatpush1.msra.mxu0 %v4515
        %4587 = vmatprep.subr.mxu0 %v4518
        %4588 = vmatpush1.msra.mxu0 %v4517
        %4589 = vmatprep.subr.mxu0 %v4520
        %4590 = vmatpush1.msra.mxu0 %v4519
        %4591 = vmatprep.subr.mxu0 %v4522
        %4592 = vmatpush1.msra.mxu0 %v4521
        %4593 = vmatprep.subr.mxu0 %v4524
        %4594 = vmatpush1.msra.mxu0 %v4523
        %4595 = vmatprep.subr.mxu0 %v4526
        %4596 = vmatpush1.msra.mxu0 %v4525
        %4597 = vmatprep.subr.mxu0 %v4528
        %4598 = vmatpush1.msra.mxu0 %v4527
        %4599 = vmatprep.subr.mxu0 %v4530
        %4600 = vmatpush1.msra.mxu0 %v4529
        %4601 = vmatprep.subr.mxu0 %v4532
        %4602 = vmatpush1.msra.mxu0 %v4531
        %4603 = vmatprep.subr.mxu0 %v4534
        %4604 = vmatpush1.msra.mxu0 %v4533
        %4605 = vmatprep.subr.mxu0 %v4536
        %4606 = vmatpush1.msra.mxu0 %v4535
        %4607 = vmatprep.subr.mxu0 %v4538
        %4608 = vmatpush1.msra.mxu0 %v4537
        %4609 = vmatprep.subr.mxu0 %v4540
        %4610 = vmatpush1.msra.mxu0 %v4539
        %4611 = vmatprep.subr.mxu0 %v4542
        %4612 = vmatpush1.msra.mxu0 %v4541
        %4613 = vmatprep.subr.mxu0 %v4544
        %4614 = vmatpush1.msra.mxu0 %v4543
        %4615 = vmatprep.subr.mxu0 %v4546
        %4616 = vmatpush1.msra.mxu0 %v4545
        %4617 = vmatprep.subr.mxu0 %v4548
        %4618 = vmatpush1.msra.mxu0 %v4547
        %4619 = vmatprep.subr.mxu0 %v4550
        %4620 = vmatpush1.msra.mxu0 %v4549
        %4621 = vmatprep.subr.mxu0 %v4552
        %4622 = vmatpush1.msra.mxu0 %v4551
        %4623 = vmatprep.subr.mxu0 %v4554
        %4624 = vmatpush1.msra.mxu0 %v4553
        %4625 = vmatprep.subr.mxu0 %v4556
        %4626 = vmatpush1.msra.mxu0 %v4555
        %4627 = vmatprep.subr.mxu0 %v4558
        %4628 = vmatpush1.msra.mxu0 %v4557
        %4629 = vmatprep.subr.mxu0 %v4560
        %4630 = vmatpush1.msra.mxu0 %v4559
        %4631 = vmatprep.mubr.f32.mxu0 %v4564
        %4632 = vmatmul.mubr.f32.gmra.mrb[0].mxu0 %v4563
        %v4633 = vpop.f32.mrb[0].mxu0
        %v4634 = vadd.f32 0.0, %v4633
        %v4635 = vpop.f32.mrb[0].mxu0
        %v4636 = vadd.f32 0.0, %v4635
        %4637 = vdwg.mxu0
        %v4638 = vadd.f32 %v4493, %v4634
        %v4639 = vadd.f32 %v4495, %v4636
        %v4640 = vadd.f32 %v4638, %v1402
        %v4641 = vadd.f32 %v4639, %v1406
        %v4642 = vmax.f32 %v4640, 0.0
        %v4643 = vmax.f32 %v4641, 0.0
        %4644 = vst.msk [vmem:[#allocation2] ss:$8 sm:$0x3] %vm859, 0.0
        %4645 = vst.msk [vmem:[#allocation2] ss:$8 sm:$0x0] %vm859, 0.0
        %4646 = vst.msk [vmem:[%s4204] ss:$8 sm:$0x3] %vm859, 0.0
        %4647 = vst.msk [vmem:[%s4204] ss:$8 sm:$0x0] %vm859, 0.0
        %v4650 = vrot.slane %v4642, 7
        %v4651 = vrot.slane %v4643, 7
        %4654 = vst [vmem:[#allocation2] sm:$0x6] %v4650
        %4655 = vst [vmem:[#allocation2 + $0x8] sm:$0x6] %v4651
        %v4656 = vld [vmem:[#allocation2] sm:$0x3]
        %v4657 = vld [vmem:[#allocation2 + $0x8] sm:$0x3]
        %v4658 = vld [vmem:[#allocation2] sm:$0x6]
        %v4659 = vld [vmem:[#allocation2 + $0x8] sm:$0x6]
        %v4660 = vld [vmem:[#allocation2] sm:$0xc]
        %v4661 = vld [vmem:[#allocation2 + $0x8] sm:$0xc]
        %v4662 = vld [vmem:[%s3] sm:$0xff]
        %v4663 = vld [vmem:[%s3 + $0x8] sm:$0xff]
        %v4664 = vld [vmem:[%s3 + $0x10] sm:$0xff]
        %v4665 = vld [vmem:[%s3 + $0x18] sm:$0xff]
        %v4666 = vld [vmem:[%s3 + $0x20] sm:$0xff]
        %v4667 = vld [vmem:[%s3 + $0x28] sm:$0xff]
        %v4668 = vld [vmem:[%s3 + $0x30] sm:$0xff]
        %v4669 = vld [vmem:[%s3 + $0x38] sm:$0xff]
        %v4670 = vld [vmem:[%s3 + $0x40] sm:$0xff]
        %v4671 = vld [vmem:[%s3 + $0x48] sm:$0xff]
        %v4672 = vld [vmem:[%s3 + $0x50] sm:$0xff]
        %v4673 = vld [vmem:[%s3 + $0x58] sm:$0xff]
        %v4674 = vld [vmem:[%s3 + $0x60] sm:$0xff]
        %v4675 = vld [vmem:[%s3 + $0x68] sm:$0xff]
        %v4676 = vld [vmem:[%s3 + $0x70] sm:$0xff]
        %v4677 = vld [vmem:[%s3 + $0x78] sm:$0xff]
        %v4678 = vld [vmem:[%s3 + $0x80] sm:$0xff]
        %v4679 = vld [vmem:[%s3 + $0x88] sm:$0xff]
        %v4680 = vld [vmem:[%s3 + $0x90] sm:$0xff]
        %v4681 = vld [vmem:[%s3 + $0x98] sm:$0xff]
        %v4682 = vld [vmem:[%s3 + $0xa0] sm:$0xff]
        %v4683 = vld [vmem:[%s3 + $0xa8] sm:$0xff]
        %v4684 = vld [vmem:[%s3 + $0xb0] sm:$0xff]
        %v4685 = vld [vmem:[%s3 + $0xb8] sm:$0xff]
        %v4686 = vld [vmem:[%s3 + $0xc0] sm:$0xff]
        %v4687 = vld [vmem:[%s3 + $0xc8] sm:$0xff]
        %v4688 = vld [vmem:[%s3 + $0xd0] sm:$0xff]
        %v4689 = vld [vmem:[%s3 + $0xd8] sm:$0xff]
        %v4690 = vld [vmem:[%s3 + $0xe0] sm:$0xff]
        %v4691 = vld [vmem:[%s3 + $0xe8] sm:$0xff]
        %v4692 = vld [vmem:[%s3 + $0xf0] sm:$0xff]
        %v4693 = vld [vmem:[%s3 + $0xf8] sm:$0xff]
        %v4694 = vld [vmem:[%s3 + $0x100] sm:$0xff]
        %v4695 = vld [vmem:[%s3 + $0x108] sm:$0xff]
        %v4696 = vld [vmem:[%s3 + $0x110] sm:$0xff]
        %v4697 = vld [vmem:[%s3 + $0x118] sm:$0xff]
        %v4698 = vld [vmem:[%s3 + $0x120] sm:$0xff]
        %v4699 = vld [vmem:[%s3 + $0x128] sm:$0xff]
        %v4700 = vld [vmem:[%s3 + $0x130] sm:$0xff]
        %v4701 = vld [vmem:[%s3 + $0x138] sm:$0xff]
        %v4702 = vld [vmem:[%s3 + $0x140] sm:$0xff]
        %v4703 = vld [vmem:[%s3 + $0x148] sm:$0xff]
        %v4704 = vld [vmem:[%s3 + $0x150] sm:$0xff]
        %v4705 = vld [vmem:[%s3 + $0x158] sm:$0xff]
        %v4706 = vld [vmem:[%s3 + $0x160] sm:$0xff]
        %v4707 = vld [vmem:[%s3 + $0x168] sm:$0xff]
        %v4708 = vld [vmem:[%s3 + $0x170] sm:$0xff]
        %v4709 = vld [vmem:[%s3 + $0x178] sm:$0xff]
        %v4710 = vld [vmem:[%s3 + $0x180] sm:$0xff]
        %v4711 = vld [vmem:[%s3 + $0x188] sm:$0xff]
        %v4712 = vld [vmem:[%s3 + $0x190] sm:$0xff]
        %v4713 = vld [vmem:[%s3 + $0x198] sm:$0xff]
        %v4714 = vld [vmem:[%s3 + $0x1a0] sm:$0xff]
        %v4715 = vld [vmem:[%s3 + $0x1a8] sm:$0xff]
        %v4716 = vld [vmem:[%s3 + $0x1b0] sm:$0xff]
        %v4717 = vld [vmem:[%s3 + $0x1b8] sm:$0xff]
        %v4718 = vld [vmem:[%s3 + $0x1c0] sm:$0xff]
        %v4719 = vld [vmem:[%s3 + $0x1c8] sm:$0xff]
        %v4720 = vld [vmem:[%s3 + $0x1d0] sm:$0xff]
        %v4721 = vld [vmem:[%s3 + $0x1d8] sm:$0xff]
        %v4722 = vld [vmem:[%s3 + $0x1e0] sm:$0xff]
        %v4723 = vld [vmem:[%s3 + $0x1e8] sm:$0xff]
        %v4724 = vld [vmem:[%s3 + $0x1f0] sm:$0xff]
        %v4725 = vld [vmem:[%s3 + $0x1f8] sm:$0xff]
        %v4726 = vld [vmem:[%s995] sm:$0xff]
        %v4727 = vld [vmem:[%s995 + $0x8] sm:$0xff]
        %v4728 = vld [vmem:[%s995 + $0x10] sm:$0xff]
        %v4729 = vld [vmem:[%s995 + $0x18] sm:$0xff]
        %v4730 = vld [vmem:[%s995 + $0x20] sm:$0xff]
        %v4731 = vld [vmem:[%s995 + $0x28] sm:$0xff]
        %v4732 = vld [vmem:[%s995 + $0x30] sm:$0xff]
        %v4733 = vld [vmem:[%s995 + $0x38] sm:$0xff]
        %v4734 = vld [vmem:[%s995 + $0x40] sm:$0xff]
        %v4735 = vld [vmem:[%s995 + $0x48] sm:$0xff]
        %v4736 = vld [vmem:[%s995 + $0x50] sm:$0xff]
        %v4737 = vld [vmem:[%s995 + $0x58] sm:$0xff]
        %v4738 = vld [vmem:[%s995 + $0x60] sm:$0xff]
        %v4739 = vld [vmem:[%s995 + $0x68] sm:$0xff]
        %v4740 = vld [vmem:[%s995 + $0x70] sm:$0xff]
        %v4741 = vld [vmem:[%s995 + $0x78] sm:$0xff]
        %v4742 = vld [vmem:[%s995 + $0x80] sm:$0xff]
        %v4743 = vld [vmem:[%s995 + $0x88] sm:$0xff]
        %v4744 = vld [vmem:[%s995 + $0x90] sm:$0xff]
        %v4745 = vld [vmem:[%s995 + $0x98] sm:$0xff]
        %v4746 = vld [vmem:[%s995 + $0xa0] sm:$0xff]
        %v4747 = vld [vmem:[%s995 + $0xa8] sm:$0xff]
        %v4748 = vld [vmem:[%s995 + $0xb0] sm:$0xff]
        %v4749 = vld [vmem:[%s995 + $0xb8] sm:$0xff]
        %v4750 = vld [vmem:[%s995 + $0xc0] sm:$0xff]
        %v4751 = vld [vmem:[%s995 + $0xc8] sm:$0xff]
        %v4752 = vld [vmem:[%s995 + $0xd0] sm:$0xff]
        %v4753 = vld [vmem:[%s995 + $0xd8] sm:$0xff]
        %v4754 = vld [vmem:[%s995 + $0xe0] sm:$0xff]
        %v4755 = vld [vmem:[%s995 + $0xe8] sm:$0xff]
        %v4756 = vld [vmem:[%s995 + $0xf0] sm:$0xff]
        %v4757 = vld [vmem:[%s995 + $0xf8] sm:$0xff]
        %v4758 = vld [vmem:[%s995 + $0x100] sm:$0xff]
        %v4759 = vld [vmem:[%s995 + $0x108] sm:$0xff]
        %v4760 = vld [vmem:[%s995 + $0x110] sm:$0xff]
        %v4761 = vld [vmem:[%s995 + $0x118] sm:$0xff]
        %v4762 = vld [vmem:[%s995 + $0x120] sm:$0xff]
        %v4763 = vld [vmem:[%s995 + $0x128] sm:$0xff]
        %v4764 = vld [vmem:[%s995 + $0x130] sm:$0xff]
        %v4765 = vld [vmem:[%s995 + $0x138] sm:$0xff]
        %v4766 = vld [vmem:[%s995 + $0x140] sm:$0xff]
        %v4767 = vld [vmem:[%s995 + $0x148] sm:$0xff]
        %v4768 = vld [vmem:[%s995 + $0x150] sm:$0xff]
        %v4769 = vld [vmem:[%s995 + $0x158] sm:$0xff]
        %v4770 = vld [vmem:[%s995 + $0x160] sm:$0xff]
        %v4771 = vld [vmem:[%s995 + $0x168] sm:$0xff]
        %v4772 = vld [vmem:[%s995 + $0x170] sm:$0xff]
        %v4773 = vld [vmem:[%s995 + $0x178] sm:$0xff]
        %v4774 = vld [vmem:[%s995 + $0x180] sm:$0xff]
        %v4775 = vld [vmem:[%s995 + $0x188] sm:$0xff]
        %v4776 = vld [vmem:[%s995 + $0x190] sm:$0xff]
        %v4777 = vld [vmem:[%s995 + $0x198] sm:$0xff]
        %v4778 = vld [vmem:[%s995 + $0x1a0] sm:$0xff]
        %v4779 = vld [vmem:[%s995 + $0x1a8] sm:$0xff]
        %v4780 = vld [vmem:[%s995 + $0x1b0] sm:$0xff]
        %v4781 = vld [vmem:[%s995 + $0x1b8] sm:$0xff]
        %v4782 = vld [vmem:[%s995 + $0x1c0] sm:$0xff]
        %v4783 = vld [vmem:[%s995 + $0x1c8] sm:$0xff]
        %v4784 = vld [vmem:[%s995 + $0x1d0] sm:$0xff]
        %v4785 = vld [vmem:[%s995 + $0x1d8] sm:$0xff]
        %v4786 = vld [vmem:[%s995 + $0x1e0] sm:$0xff]
        %v4787 = vld [vmem:[%s995 + $0x1e8] sm:$0xff]
        %v4788 = vld [vmem:[%s995 + $0x1f0] sm:$0xff]
        %v4789 = vld [vmem:[%s995 + $0x1f8] sm:$0xff]
        %v4792 = vrot.slane %v4658, 1
        %v4793 = vrot.slane %v4659, 1
        %4796 = vmatprep.subr.mxu0 %v4727
        %4797 = vmatpush1.msra.mxu0 %v4726
        %4798 = vmatprep.subr.mxu0 %v4729
        %4799 = vmatpush1.msra.mxu0 %v4728
        %4800 = vmatprep.subr.mxu0 %v4731
        %4801 = vmatpush1.msra.mxu0 %v4730
        %4802 = vmatprep.subr.mxu0 %v4733
        %4803 = vmatpush1.msra.mxu0 %v4732
        %4804 = vmatprep.subr.mxu0 %v4735
        %4805 = vmatpush1.msra.mxu0 %v4734
        %4806 = vmatprep.subr.mxu0 %v4737
        %4807 = vmatpush1.msra.mxu0 %v4736
        %4808 = vmatprep.subr.mxu0 %v4739
        %4809 = vmatpush1.msra.mxu0 %v4738
        %4810 = vmatprep.subr.mxu0 %v4741
        %4811 = vmatpush1.msra.mxu0 %v4740
        %4812 = vmatprep.subr.mxu0 %v4743
        %4813 = vmatpush1.msra.mxu0 %v4742
        %4814 = vmatprep.subr.mxu0 %v4745
        %4815 = vmatpush1.msra.mxu0 %v4744
        %4816 = vmatprep.subr.mxu0 %v4747
        %4817 = vmatpush1.msra.mxu0 %v4746
        %4818 = vmatprep.subr.mxu0 %v4749
        %4819 = vmatpush1.msra.mxu0 %v4748
        %4820 = vmatprep.subr.mxu0 %v4751
        %4821 = vmatpush1.msra.mxu0 %v4750
        %4822 = vmatprep.subr.mxu0 %v4753
        %4823 = vmatpush1.msra.mxu0 %v4752
        %4824 = vmatprep.subr.mxu0 %v4755
        %4825 = vmatpush1.msra.mxu0 %v4754
        %4826 = vmatprep.subr.mxu0 %v4757
        %4827 = vmatpush1.msra.mxu0 %v4756
        %4828 = vmatprep.subr.mxu0 %v4759
        %4829 = vmatpush1.msra.mxu0 %v4758
        %4830 = vmatprep.subr.mxu0 %v4761
        %4831 = vmatpush1.msra.mxu0 %v4760
        %4832 = vmatprep.subr.mxu0 %v4763
        %4833 = vmatpush1.msra.mxu0 %v4762
        %4834 = vmatprep.subr.mxu0 %v4765
        %4835 = vmatpush1.msra.mxu0 %v4764
        %4836 = vmatprep.subr.mxu0 %v4767
        %4837 = vmatpush1.msra.mxu0 %v4766
        %4838 = vmatprep.subr.mxu0 %v4769
        %4839 = vmatpush1.msra.mxu0 %v4768
        %4840 = vmatprep.subr.mxu0 %v4771
        %4841 = vmatpush1.msra.mxu0 %v4770
        %4842 = vmatprep.subr.mxu0 %v4773
        %4843 = vmatpush1.msra.mxu0 %v4772
        %4844 = vmatprep.subr.mxu0 %v4775
        %4845 = vmatpush1.msra.mxu0 %v4774
        %4846 = vmatprep.subr.mxu0 %v4777
        %4847 = vmatpush1.msra.mxu0 %v4776
        %4848 = vmatprep.subr.mxu0 %v4779
        %4849 = vmatpush1.msra.mxu0 %v4778
        %4850 = vmatprep.subr.mxu0 %v4781
        %4851 = vmatpush1.msra.mxu0 %v4780
        %4852 = vmatprep.subr.mxu0 %v4783
        %4853 = vmatpush1.msra.mxu0 %v4782
        %4854 = vmatprep.subr.mxu0 %v4785
        %4855 = vmatpush1.msra.mxu0 %v4784
        %4856 = vmatprep.subr.mxu0 %v4787
        %4857 = vmatpush1.msra.mxu0 %v4786
        %4858 = vmatprep.subr.mxu0 %v4789
        %4859 = vmatpush1.msra.mxu0 %v4788
        %4860 = vmatprep.mubr.f32.mxu0 %v4793
        %4861 = vmatmul.mubr.f32.gmra.mrb[0].mxu0 %v4792
        %v4862 = vpop.f32.mrb[0].mxu0
        %v4863 = vadd.f32 0.0, %v4862
        %v4864 = vpop.f32.mrb[0].mxu0
        %v4865 = vadd.f32 0.0, %v4864
        %4866 = vdwg.mxu0
        %4867 = vmatprep.subr.mxu0 %v4663
        %4868 = vmatpush1.msra.mxu0 %v4662
        %4869 = vmatprep.subr.mxu0 %v4665
        %4870 = vmatpush1.msra.mxu0 %v4664
        %4871 = vmatprep.subr.mxu0 %v4667
        %4872 = vmatpush1.msra.mxu0 %v4666
        %4873 = vmatprep.subr.mxu0 %v4669
        %4874 = vmatpush1.msra.mxu0 %v4668
        %4875 = vmatprep.subr.mxu0 %v4671
        %4876 = vmatpush1.msra.mxu0 %v4670
        %4877 = vmatprep.subr.mxu0 %v4673
        %4878 = vmatpush1.msra.mxu0 %v4672
        %4879 = vmatprep.subr.mxu0 %v4675
        %4880 = vmatpush1.msra.mxu0 %v4674
        %4881 = vmatprep.subr.mxu0 %v4677
        %4882 = vmatpush1.msra.mxu0 %v4676
        %4883 = vmatprep.subr.mxu0 %v4679
        %4884 = vmatpush1.msra.mxu0 %v4678
        %4885 = vmatprep.subr.mxu0 %v4681
        %4886 = vmatpush1.msra.mxu0 %v4680
        %4887 = vmatprep.subr.mxu0 %v4683
        %4888 = vmatpush1.msra.mxu0 %v4682
        %4889 = vmatprep.subr.mxu0 %v4685
        %4890 = vmatpush1.msra.mxu0 %v4684
        %4891 = vmatprep.subr.mxu0 %v4687
        %4892 = vmatpush1.msra.mxu0 %v4686
        %4893 = vmatprep.subr.mxu0 %v4689
        %4894 = vmatpush1.msra.mxu0 %v4688
        %4895 = vmatprep.subr.mxu0 %v4691
        %4896 = vmatpush1.msra.mxu0 %v4690
        %4897 = vmatprep.subr.mxu0 %v4693
        %4898 = vmatpush1.msra.mxu0 %v4692
        %4899 = vmatprep.subr.mxu0 %v4695
        %4900 = vmatpush1.msra.mxu0 %v4694
        %4901 = vmatprep.subr.mxu0 %v4697
        %4902 = vmatpush1.msra.mxu0 %v4696
        %4903 = vmatprep.subr.mxu0 %v4699
        %4904 = vmatpush1.msra.mxu0 %v4698
        %4905 = vmatprep.subr.mxu0 %v4701
        %4906 = vmatpush1.msra.mxu0 %v4700
        %4907 = vmatprep.subr.mxu0 %v4703
        %4908 = vmatpush1.msra.mxu0 %v4702
        %4909 = vmatprep.subr.mxu0 %v4705
        %4910 = vmatpush1.msra.mxu0 %v4704
        %4911 = vmatprep.subr.mxu0 %v4707
        %4912 = vmatpush1.msra.mxu0 %v4706
        %4913 = vmatprep.subr.mxu0 %v4709
        %4914 = vmatpush1.msra.mxu0 %v4708
        %4915 = vmatprep.subr.mxu0 %v4711
        %4916 = vmatpush1.msra.mxu0 %v4710
        %4917 = vmatprep.subr.mxu0 %v4713
        %4918 = vmatpush1.msra.mxu0 %v4712
        %4919 = vmatprep.subr.mxu0 %v4715
        %4920 = vmatpush1.msra.mxu0 %v4714
        %4921 = vmatprep.subr.mxu0 %v4717
        %4922 = vmatpush1.msra.mxu0 %v4716
        %4923 = vmatprep.subr.mxu0 %v4719
        %4924 = vmatpush1.msra.mxu0 %v4718
        %4925 = vmatprep.subr.mxu0 %v4721
        %4926 = vmatpush1.msra.mxu0 %v4720
        %4927 = vmatprep.subr.mxu0 %v4723
        %4928 = vmatpush1.msra.mxu0 %v4722
        %4929 = vmatprep.subr.mxu0 %v4725
        %4930 = vmatpush1.msra.mxu0 %v4724
        %4931 = vmatprep.mubr.f32.mxu0 %v4657
        %4932 = vmatmul.mubr.f32.gmra.mrb[0].mxu0 %v4656
        %v4933 = vpop.f32.mrb[0].mxu0
        %v4934 = vadd.f32 %v4863, %v4933
        %v4935 = vpop.f32.mrb[0].mxu0
        %v4936 = vadd.f32 %v4865, %v4935
        %4937 = vdwg.mxu0
        %v4938 = vld [vmem:[%s1234] sm:$0xff]
        %v4939 = vld [vmem:[%s1234 + $0x8] sm:$0xff]
        %v4940 = vld [vmem:[%s1234 + $0x10] sm:$0xff]
        %v4941 = vld [vmem:[%s1234 + $0x18] sm:$0xff]
        %v4942 = vld [vmem:[%s1234 + $0x20] sm:$0xff]
        %v4943 = vld [vmem:[%s1234 + $0x28] sm:$0xff]
        %v4944 = vld [vmem:[%s1234 + $0x30] sm:$0xff]
        %v4945 = vld [vmem:[%s1234 + $0x38] sm:$0xff]
        %v4946 = vld [vmem:[%s1234 + $0x40] sm:$0xff]
        %v4947 = vld [vmem:[%s1234 + $0x48] sm:$0xff]
        %v4948 = vld [vmem:[%s1234 + $0x50] sm:$0xff]
        %v4949 = vld [vmem:[%s1234 + $0x58] sm:$0xff]
        %v4950 = vld [vmem:[%s1234 + $0x60] sm:$0xff]
        %v4951 = vld [vmem:[%s1234 + $0x68] sm:$0xff]
        %v4952 = vld [vmem:[%s1234 + $0x70] sm:$0xff]
        %v4953 = vld [vmem:[%s1234 + $0x78] sm:$0xff]
        %v4954 = vld [vmem:[%s1234 + $0x80] sm:$0xff]
        %v4955 = vld [vmem:[%s1234 + $0x88] sm:$0xff]
        %v4956 = vld [vmem:[%s1234 + $0x90] sm:$0xff]
        %v4957 = vld [vmem:[%s1234 + $0x98] sm:$0xff]
        %v4958 = vld [vmem:[%s1234 + $0xa0] sm:$0xff]
        %v4959 = vld [vmem:[%s1234 + $0xa8] sm:$0xff]
        %v4960 = vld [vmem:[%s1234 + $0xb0] sm:$0xff]
        %v4961 = vld [vmem:[%s1234 + $0xb8] sm:$0xff]
        %v4962 = vld [vmem:[%s1234 + $0xc0] sm:$0xff]
        %v4963 = vld [vmem:[%s1234 + $0xc8] sm:$0xff]
        %v4964 = vld [vmem:[%s1234 + $0xd0] sm:$0xff]
        %v4965 = vld [vmem:[%s1234 + $0xd8] sm:$0xff]
        %v4966 = vld [vmem:[%s1234 + $0xe0] sm:$0xff]
        %v4967 = vld [vmem:[%s1234 + $0xe8] sm:$0xff]
        %v4968 = vld [vmem:[%s1234 + $0xf0] sm:$0xff]
        %v4969 = vld [vmem:[%s1234 + $0xf8] sm:$0xff]
        %v4970 = vld [vmem:[%s1234 + $0x100] sm:$0xff]
        %v4971 = vld [vmem:[%s1234 + $0x108] sm:$0xff]
        %v4972 = vld [vmem:[%s1234 + $0x110] sm:$0xff]
        %v4973 = vld [vmem:[%s1234 + $0x118] sm:$0xff]
        %v4974 = vld [vmem:[%s1234 + $0x120] sm:$0xff]
        %v4975 = vld [vmem:[%s1234 + $0x128] sm:$0xff]
        %v4976 = vld [vmem:[%s1234 + $0x130] sm:$0xff]
        %v4977 = vld [vmem:[%s1234 + $0x138] sm:$0xff]
        %v4978 = vld [vmem:[%s1234 + $0x140] sm:$0xff]
        %v4979 = vld [vmem:[%s1234 + $0x148] sm:$0xff]
        %v4980 = vld [vmem:[%s1234 + $0x150] sm:$0xff]
        %v4981 = vld [vmem:[%s1234 + $0x158] sm:$0xff]
        %v4982 = vld [vmem:[%s1234 + $0x160] sm:$0xff]
        %v4983 = vld [vmem:[%s1234 + $0x168] sm:$0xff]
        %v4984 = vld [vmem:[%s1234 + $0x170] sm:$0xff]
        %v4985 = vld [vmem:[%s1234 + $0x178] sm:$0xff]
        %v4986 = vld [vmem:[%s1234 + $0x180] sm:$0xff]
        %v4987 = vld [vmem:[%s1234 + $0x188] sm:$0xff]
        %v4988 = vld [vmem:[%s1234 + $0x190] sm:$0xff]
        %v4989 = vld [vmem:[%s1234 + $0x198] sm:$0xff]
        %v4990 = vld [vmem:[%s1234 + $0x1a0] sm:$0xff]
        %v4991 = vld [vmem:[%s1234 + $0x1a8] sm:$0xff]
        %v4992 = vld [vmem:[%s1234 + $0x1b0] sm:$0xff]
        %v4993 = vld [vmem:[%s1234 + $0x1b8] sm:$0xff]
        %v4994 = vld [vmem:[%s1234 + $0x1c0] sm:$0xff]
        %v4995 = vld [vmem:[%s1234 + $0x1c8] sm:$0xff]
        %v4996 = vld [vmem:[%s1234 + $0x1d0] sm:$0xff]
        %v4997 = vld [vmem:[%s1234 + $0x1d8] sm:$0xff]
        %v4998 = vld [vmem:[%s1234 + $0x1e0] sm:$0xff]
        %v4999 = vld [vmem:[%s1234 + $0x1e8] sm:$0xff]
        %v5000 = vld [vmem:[%s1234 + $0x1f0] sm:$0xff]
        %v5001 = vld [vmem:[%s1234 + $0x1f8] sm:$0xff]
        %v5004 = vrot.slane %v4660, 2
        %v5005 = vrot.slane %v4661, 2
        %5008 = vmatprep.subr.mxu0 %v4939
        %5009 = vmatpush1.msra.mxu0 %v4938
        %5010 = vmatprep.subr.mxu0 %v4941
        %5011 = vmatpush1.msra.mxu0 %v4940
        %5012 = vmatprep.subr.mxu0 %v4943
        %5013 = vmatpush1.msra.mxu0 %v4942
        %5014 = vmatprep.subr.mxu0 %v4945
        %5015 = vmatpush1.msra.mxu0 %v4944
        %5016 = vmatprep.subr.mxu0 %v4947
        %5017 = vmatpush1.msra.mxu0 %v4946
        %5018 = vmatprep.subr.mxu0 %v4949
        %5019 = vmatpush1.msra.mxu0 %v4948
        %5020 = vmatprep.subr.mxu0 %v4951
        %5021 = vmatpush1.msra.mxu0 %v4950
        %5022 = vmatprep.subr.mxu0 %v4953
        %5023 = vmatpush1.msra.mxu0 %v4952
        %5024 = vmatprep.subr.mxu0 %v4955
        %5025 = vmatpush1.msra.mxu0 %v4954
        %5026 = vmatprep.subr.mxu0 %v4957
        %5027 = vmatpush1.msra.mxu0 %v4956
        %5028 = vmatprep.subr.mxu0 %v4959
        %5029 = vmatpush1.msra.mxu0 %v4958
        %5030 = vmatprep.subr.mxu0 %v4961
        %5031 = vmatpush1.msra.mxu0 %v4960
        %5032 = vmatprep.subr.mxu0 %v4963
        %5033 = vmatpush1.msra.mxu0 %v4962
        %5034 = vmatprep.subr.mxu0 %v4965
        %5035 = vmatpush1.msra.mxu0 %v4964
        %5036 = vmatprep.subr.mxu0 %v4967
        %5037 = vmatpush1.msra.mxu0 %v4966
        %5038 = vmatprep.subr.mxu0 %v4969
        %5039 = vmatpush1.msra.mxu0 %v4968
        %5040 = vmatprep.subr.mxu0 %v4971
        %5041 = vmatpush1.msra.mxu0 %v4970
        %5042 = vmatprep.subr.mxu0 %v4973
        %5043 = vmatpush1.msra.mxu0 %v4972
        %5044 = vmatprep.subr.mxu0 %v4975
        %5045 = vmatpush1.msra.mxu0 %v4974
        %5046 = vmatprep.subr.mxu0 %v4977
        %5047 = vmatpush1.msra.mxu0 %v4976
        %5048 = vmatprep.subr.mxu0 %v4979
        %5049 = vmatpush1.msra.mxu0 %v4978
        %5050 = vmatprep.subr.mxu0 %v4981
        %5051 = vmatpush1.msra.mxu0 %v4980
        %5052 = vmatprep.subr.mxu0 %v4983
        %5053 = vmatpush1.msra.mxu0 %v4982
        %5054 = vmatprep.subr.mxu0 %v4985
        %5055 = vmatpush1.msra.mxu0 %v4984
        %5056 = vmatprep.subr.mxu0 %v4987
        %5057 = vmatpush1.msra.mxu0 %v4986
        %5058 = vmatprep.subr.mxu0 %v4989
        %5059 = vmatpush1.msra.mxu0 %v4988
        %5060 = vmatprep.subr.mxu0 %v4991
        %5061 = vmatpush1.msra.mxu0 %v4990
        %5062 = vmatprep.subr.mxu0 %v4993
        %5063 = vmatpush1.msra.mxu0 %v4992
        %5064 = vmatprep.subr.mxu0 %v4995
        %5065 = vmatpush1.msra.mxu0 %v4994
        %5066 = vmatprep.subr.mxu0 %v4997
        %5067 = vmatpush1.msra.mxu0 %v4996
        %5068 = vmatprep.subr.mxu0 %v4999
        %5069 = vmatpush1.msra.mxu0 %v4998
        %5070 = vmatprep.subr.mxu0 %v5001
        %5071 = vmatpush1.msra.mxu0 %v5000
        %5072 = vmatprep.mubr.f32.mxu0 %v5005
        %5073 = vmatmul.mubr.f32.gmra.mrb[0].mxu0 %v5004
        %v5074 = vpop.f32.mrb[0].mxu0
        %v5075 = vadd.f32 0.0, %v5074
        %v5076 = vpop.f32.mrb[0].mxu0
        %v5077 = vadd.f32 0.0, %v5076
        %5078 = vdwg.mxu0
        %v5079 = vadd.f32 %v4934, %v5075
        %v5080 = vadd.f32 %v4936, %v5077
        %v5081 = vadd.f32 %v5079, %v1402
        %v5082 = vadd.f32 %v5080, %v1406
        %v5083 = vadd.f32 %v4198, %v5081
        %v5084 = vadd.f32 %v4199, %v5082
        %v5085 = vld [vmem:[%s7] sm:$0x1]
        %v5086 = vld [vmem:[%s8] sm:$0x1]
        %vm5087 = vcmask 15360
        %v5089 = vsel %vm5087, %v5085, 0
        %vm5091 = vcmask 1041408
        %v5093 = vsel %vm5091, %v5083, 0
        %v5096 = vsel %vm5091, %v5084, 0
        %5098 = vmatprep.subr.mxu0 %v5096
        %5099 = vmatpush1.msra.mxu0 %v5093
        %5100 = vmatprep.subr.mxu0 0.0
        %5101 = vmatpush1.msra.mxu0 0.0
        %5102 = vmatprep.subr.mxu0 0.0
        %5103 = vmatpush1.msra.mxu0 0.0
        %5104 = vmatprep.subr.mxu0 0.0
        %5105 = vmatpush1.msra.mxu0 0.0
        %5106 = vmatprep.subr.mxu0 0.0
        %5107 = vmatpush1.msra.mxu0 0.0
        %5108 = vmatprep.subr.mxu0 0.0
        %5109 = vmatpush1.msra.mxu0 0.0
        %5110 = vmatprep.subr.mxu0 0.0
        %5111 = vmatpush1.msra.mxu0 0.0
        %5112 = vmatprep.subr.mxu0 0.0
        %5113 = vmatpush1.msra.mxu0 0.0
        %5114 = vmatprep.subr.mxu0 0.0
        %5115 = vmatpush1.msra.mxu0 0.0
        %5116 = vmatprep.subr.mxu0 0.0
        %5117 = vmatpush1.msra.mxu0 0.0
        %5118 = vmatprep.subr.mxu0 0.0
        %5119 = vmatpush1.msra.mxu0 0.0
        %5120 = vmatprep.subr.mxu0 0.0
        %5121 = vmatpush1.msra.mxu0 0.0
        %5122 = vmatprep.subr.mxu0 0.0
        %5123 = vmatpush1.msra.mxu0 0.0
        %5124 = vmatprep.subr.mxu0 0.0
        %5125 = vmatpush1.msra.mxu0 0.0
        %5126 = vmatprep.subr.mxu0 0.0
        %5127 = vmatpush1.msra.mxu0 0.0
        %5128 = vmatprep.subr.mxu0 0.0
        %5129 = vmatpush1.msra.mxu0 0.0
        %5130 = vmatprep.subr.mxu0 0.0
        %5131 = vmatpush1.msra.mxu0 0.0
        %5132 = vmatprep.subr.mxu0 0.0
        %5133 = vmatpush1.msra.mxu0 0.0
        %5134 = vmatprep.subr.mxu0 0.0
        %5135 = vmatpush1.msra.mxu0 0.0
        %5136 = vmatprep.subr.mxu0 0.0
        %5137 = vmatpush1.msra.mxu0 0.0
        %5138 = vmatprep.subr.mxu0 0.0
        %5139 = vmatpush1.msra.mxu0 0.0
        %5140 = vmatprep.subr.mxu0 0.0
        %5141 = vmatpush1.msra.mxu0 0.0
        %5142 = vmatprep.subr.mxu0 0.0
        %5143 = vmatpush1.msra.mxu0 0.0
        %5144 = vmatprep.subr.mxu0 0.0
        %5145 = vmatpush1.msra.mxu0 0.0
        %5146 = vmatprep.subr.mxu0 0.0
        %5147 = vmatpush1.msra.mxu0 0.0
        %5148 = vmatprep.subr.mxu0 0.0
        %5149 = vmatpush1.msra.mxu0 0.0
        %5150 = vmatprep.subr.mxu0 0.0
        %5151 = vmatpush1.msra.mxu0 0.0
        %5152 = vmatprep.subr.mxu0 0.0
        %5153 = vmatpush1.msra.mxu0 0.0
        %5154 = vmatprep.subr.mxu0 0.0
        %5155 = vmatpush1.msra.mxu0 0.0
        %5156 = vmatprep.subr.mxu0 0.0
        %5157 = vmatpush1.msra.mxu0 0.0
        %5158 = vmatprep.subr.mxu0 0.0
        %5159 = vmatpush1.msra.mxu0 0.0
        %5160 = vmatprep.subr.mxu0 0.0
        %5161 = vmatpush1.msra.mxu0 0.0
        %5162 = vmatprep.mubr.f32.mxu0 0.0
        %5163 = vmatmul.mubr.f32.gmra.mrb[0].mxu0 %v5089
        %v5164 = vpop.f32.mrb[0].mxu0
        %v5165 = vadd.f32 0.0, %v5164
        %v5166 = vpop.f32.mrb[0].mxu0
        %v5167 = vadd.f32 0.0, %v5166
        %5168 = vdwg.mxu0
        %v5170 = vsel %vm5087, %v5086, 0
        %5172 = vmatprep.subr.mxu0 %v5096
        %5173 = vmatpush1.msra.mxu0 %v5093
        %5174 = vmatprep.subr.mxu0 0.0
        %5175 = vmatpush1.msra.mxu0 0.0
        %5176 = vmatprep.subr.mxu0 0.0
        %5177 = vmatpush1.msra.mxu0 0.0
        %5178 = vmatprep.subr.mxu0 0.0
        %5179 = vmatpush1.msra.mxu0 0.0
        %5180 = vmatprep.subr.mxu0 0.0
        %5181 = vmatpush1.msra.mxu0 0.0
        %5182 = vmatprep.subr.mxu0 0.0
        %5183 = vmatpush1.msra.mxu0 0.0
        %5184 = vmatprep.subr.mxu0 0.0
        %5185 = vmatpush1.msra.mxu0 0.0
        %5186 = vmatprep.subr.mxu0 0.0
        %5187 = vmatpush1.msra.mxu0 0.0
        %5188 = vmatprep.subr.mxu0 0.0
        %5189 = vmatpush1.msra.mxu0 0.0
        %5190 = vmatprep.subr.mxu0 0.0
        %5191 = vmatpush1.msra.mxu0 0.0
        %5192 = vmatprep.subr.mxu0 0.0
        %5193 = vmatpush1.msra.mxu0 0.0
        %5194 = vmatprep.subr.mxu0 0.0
        %5195 = vmatpush1.msra.mxu0 0.0
        %5196 = vmatprep.subr.mxu0 0.0
        %5197 = vmatpush1.msra.mxu0 0.0
        %5198 = vmatprep.subr.mxu0 0.0
        %5199 = vmatpush1.msra.mxu0 0.0
        %5200 = vmatprep.subr.mxu0 0.0
        %5201 = vmatpush1.msra.mxu0 0.0
        %5202 = vmatprep.subr.mxu0 0.0
        %5203 = vmatpush1.msra.mxu0 0.0
        %5204 = vmatprep.subr.mxu0 0.0
        %5205 = vmatpush1.msra.mxu0 0.0
        %5206 = vmatprep.subr.mxu0 0.0
        %5207 = vmatpush1.msra.mxu0 0.0
        %5208 = vmatprep.subr.mxu0 0.0
        %5209 = vmatpush1.msra.mxu0 0.0
        %5210 = vmatprep.subr.mxu0 0.0
        %5211 = vmatpush1.msra.mxu0 0.0
        %5212 = vmatprep.subr.mxu0 0.0
        %5213 = vmatpush1.msra.mxu0 0.0
        %5214 = vmatprep.subr.mxu0 0.0
        %5215 = vmatpush1.msra.mxu0 0.0
        %5216 = vmatprep.subr.mxu0 0.0
        %5217 = vmatpush1.msra.mxu0 0.0
        %5218 = vmatprep.subr.mxu0 0.0
        %5219 = vmatpush1.msra.mxu0 0.0
        %5220 = vmatprep.subr.mxu0 0.0
        %5221 = vmatpush1.msra.mxu0 0.0
        %5222 = vmatprep.subr.mxu0 0.0
        %5223 = vmatpush1.msra.mxu0 0.0
        %5224 = vmatprep.subr.mxu0 0.0
        %5225 = vmatpush1.msra.mxu0 0.0
        %5226 = vmatprep.subr.mxu0 0.0
        %5227 = vmatpush1.msra.mxu0 0.0
        %5228 = vmatprep.subr.mxu0 0.0
        %5229 = vmatpush1.msra.mxu0 0.0
        %5230 = vmatprep.subr.mxu0 0.0
        %5231 = vmatpush1.msra.mxu0 0.0
        %5232 = vmatprep.subr.mxu0 0.0
        %5233 = vmatpush1.msra.mxu0 0.0
        %5234 = vmatprep.subr.mxu0 0.0
        %5235 = vmatpush1.msra.mxu0 0.0
        %5236 = vmatprep.mubr.f32.mxu0 0.0
        %5237 = vmatmul.mubr.f32.gmra.mrb[0].mxu0 %v5170
        %v5238 = vpop.f32.mrb[0].mxu0
        %v5239 = vadd.f32 0.0, %v5238
        %v5240 = vpop.f32.mrb[0].mxu0
        %v5241 = vadd.f32 0.0, %v5240
        %5242 = vdwg.mxu0
        %v5243 = vmax.f32 %v5165, %v5239
        %v5244 = vmax.f32 %v5167, %v5241
        %v5245 = vmax.f32 %v5243, 0.0
        %v5246 = vmax.f32 %v5244, 0.0
        %5247 = vst.msk [vmem:[#allocation2] ss:$8 sm:$0x3] %vm859, 0.0
        %5248 = vst.msk [vmem:[#allocation2] ss:$8 sm:$0x0] %vm859, 0.0
        %s5249 = scalar_lea.vmem [#allocation2], 2
        %5250 = vst.msk [vmem:[%s5249] ss:$8 sm:$0x3] %vm859, 0.0
        %5251 = vst.msk [vmem:[%s5249] ss:$8 sm:$0x0] %vm859, 0.0
        %v5254 = vcombine.low %v5245, %v5246
        %v5256 = vunpack.c.l.s4 1966171168
        %v5257 = vunpack.c.0.s8 %v5256
        %v5258 = vlaneseq
        %v5259 = vshrl.u32 %v5258, 7
        %v5260 = vsub.s32 %v5257, %v5259
        %v5261 = vrot.slane %v5254, %v5260
        %v5263 = vunpack.c.l.s4 1966171168
        %v5264 = vunpack.c.0.s8 %v5263
        %v5265 = vlaneseq
        %v5266 = vshrl.u32 %v5265, 7
        %v5267 = vsub.s32 %v5264, %v5266
        %v5268 = vrot.slane %v5261, %v5267
        %s5270 = scalar_lea.vmem [#allocation2], 1
        %5271 = vst.msk [vmem:[%s5270] ss:$8 sm:$0x3] %vm859, %v5268
        %5272 = vst.msk [vmem:[%s5270] ss:$8 sm:$0x0] %vm859, %v5268
        %v5273 = vld [vmem:[#allocation2] ss:$8 sm:$0x3]
        %v5274 = vld [vmem:[%s5270] ss:$8 sm:$0x3]
        %v5275 = vld [vmem:[%s5249] ss:$8 sm:$0x3]
        %v5276 = vld [vmem:[%s3] sm:$0xff]
        %v5277 = vld [vmem:[%s3 + $0x8] sm:$0xff]
        %v5278 = vld [vmem:[%s3 + $0x10] sm:$0xff]
        %v5279 = vld [vmem:[%s3 + $0x18] sm:$0xff]
        %v5280 = vld [vmem:[%s3 + $0x20] sm:$0xff]
        %v5281 = vld [vmem:[%s3 + $0x28] sm:$0xff]
        %v5282 = vld [vmem:[%s3 + $0x30] sm:$0xff]
        %v5283 = vld [vmem:[%s3 + $0x38] sm:$0xff]
        %v5284 = vld [vmem:[%s3 + $0x40] sm:$0xff]
        %v5285 = vld [vmem:[%s3 + $0x48] sm:$0xff]
        %v5286 = vld [vmem:[%s3 + $0x50] sm:$0xff]
        %v5287 = vld [vmem:[%s3 + $0x58] sm:$0xff]
        %v5288 = vld [vmem:[%s3 + $0x60] sm:$0xff]
        %v5289 = vld [vmem:[%s3 + $0x68] sm:$0xff]
        %v5290 = vld [vmem:[%s3 + $0x70] sm:$0xff]
        %v5291 = vld [vmem:[%s3 + $0x78] sm:$0xff]
        %v5292 = vld [vmem:[%s3 + $0x80] sm:$0xff]
        %v5293 = vld [vmem:[%s3 + $0x88] sm:$0xff]
        %v5294 = vld [vmem:[%s3 + $0x90] sm:$0xff]
        %v5295 = vld [vmem:[%s3 + $0x98] sm:$0xff]
        %v5296 = vld [vmem:[%s3 + $0xa0] sm:$0xff]
        %v5297 = vld [vmem:[%s3 + $0xa8] sm:$0xff]
        %v5298 = vld [vmem:[%s3 + $0xb0] sm:$0xff]
        %v5299 = vld [vmem:[%s3 + $0xb8] sm:$0xff]
        %v5300 = vld [vmem:[%s3 + $0xc0] sm:$0xff]
        %v5301 = vld [vmem:[%s3 + $0xc8] sm:$0xff]
        %v5302 = vld [vmem:[%s3 + $0xd0] sm:$0xff]
        %v5303 = vld [vmem:[%s3 + $0xd8] sm:$0xff]
        %v5304 = vld [vmem:[%s3 + $0xe0] sm:$0xff]
        %v5305 = vld [vmem:[%s3 + $0xe8] sm:$0xff]
        %v5306 = vld [vmem:[%s3 + $0xf0] sm:$0xff]
        %v5307 = vld [vmem:[%s3 + $0xf8] sm:$0xff]
        %v5308 = vld [vmem:[%s3 + $0x100] sm:$0xff]
        %v5309 = vld [vmem:[%s3 + $0x108] sm:$0xff]
        %v5310 = vld [vmem:[%s3 + $0x110] sm:$0xff]
        %v5311 = vld [vmem:[%s3 + $0x118] sm:$0xff]
        %v5312 = vld [vmem:[%s3 + $0x120] sm:$0xff]
        %v5313 = vld [vmem:[%s3 + $0x128] sm:$0xff]
        %v5314 = vld [vmem:[%s3 + $0x130] sm:$0xff]
        %v5315 = vld [vmem:[%s3 + $0x138] sm:$0xff]
        %v5316 = vld [vmem:[%s3 + $0x140] sm:$0xff]
        %v5317 = vld [vmem:[%s3 + $0x148] sm:$0xff]
        %v5318 = vld [vmem:[%s3 + $0x150] sm:$0xff]
        %v5319 = vld [vmem:[%s3 + $0x158] sm:$0xff]
        %v5320 = vld [vmem:[%s3 + $0x160] sm:$0xff]
        %v5321 = vld [vmem:[%s3 + $0x168] sm:$0xff]
        %v5322 = vld [vmem:[%s3 + $0x170] sm:$0xff]
        %v5323 = vld [vmem:[%s3 + $0x178] sm:$0xff]
        %v5324 = vld [vmem:[%s3 + $0x180] sm:$0xff]
        %v5325 = vld [vmem:[%s3 + $0x188] sm:$0xff]
        %v5326 = vld [vmem:[%s3 + $0x190] sm:$0xff]
        %v5327 = vld [vmem:[%s3 + $0x198] sm:$0xff]
        %v5328 = vld [vmem:[%s3 + $0x1a0] sm:$0xff]
        %v5329 = vld [vmem:[%s3 + $0x1a8] sm:$0xff]
        %v5330 = vld [vmem:[%s3 + $0x1b0] sm:$0xff]
        %v5331 = vld [vmem:[%s3 + $0x1b8] sm:$0xff]
        %v5332 = vld [vmem:[%s3 + $0x1c0] sm:$0xff]
        %v5333 = vld [vmem:[%s3 + $0x1c8] sm:$0xff]
        %v5334 = vld [vmem:[%s3 + $0x1d0] sm:$0xff]
        %v5335 = vld [vmem:[%s3 + $0x1d8] sm:$0xff]
        %v5336 = vld [vmem:[%s3 + $0x1e0] sm:$0xff]
        %v5337 = vld [vmem:[%s3 + $0x1e8] sm:$0xff]
        %v5338 = vld [vmem:[%s3 + $0x1f0] sm:$0xff]
        %v5339 = vld [vmem:[%s3 + $0x1f8] sm:$0xff]
        %v5340 = vld [vmem:[%s995] sm:$0xff]
        %v5341 = vld [vmem:[%s995 + $0x8] sm:$0xff]
        %v5342 = vld [vmem:[%s995 + $0x10] sm:$0xff]
        %v5343 = vld [vmem:[%s995 + $0x18] sm:$0xff]
        %v5344 = vld [vmem:[%s995 + $0x20] sm:$0xff]
        %v5345 = vld [vmem:[%s995 + $0x28] sm:$0xff]
        %v5346 = vld [vmem:[%s995 + $0x30] sm:$0xff]
        %v5347 = vld [vmem:[%s995 + $0x38] sm:$0xff]
        %v5348 = vld [vmem:[%s995 + $0x40] sm:$0xff]
        %v5349 = vld [vmem:[%s995 + $0x48] sm:$0xff]
        %v5350 = vld [vmem:[%s995 + $0x50] sm:$0xff]
        %v5351 = vld [vmem:[%s995 + $0x58] sm:$0xff]
        %v5352 = vld [vmem:[%s995 + $0x60] sm:$0xff]
        %v5353 = vld [vmem:[%s995 + $0x68] sm:$0xff]
        %v5354 = vld [vmem:[%s995 + $0x70] sm:$0xff]
        %v5355 = vld [vmem:[%s995 + $0x78] sm:$0xff]
        %v5356 = vld [vmem:[%s995 + $0x80] sm:$0xff]
        %v5357 = vld [vmem:[%s995 + $0x88] sm:$0xff]
        %v5358 = vld [vmem:[%s995 + $0x90] sm:$0xff]
        %v5359 = vld [vmem:[%s995 + $0x98] sm:$0xff]
        %v5360 = vld [vmem:[%s995 + $0xa0] sm:$0xff]
        %v5361 = vld [vmem:[%s995 + $0xa8] sm:$0xff]
        %v5362 = vld [vmem:[%s995 + $0xb0] sm:$0xff]
        %v5363 = vld [vmem:[%s995 + $0xb8] sm:$0xff]
        %v5364 = vld [vmem:[%s995 + $0xc0] sm:$0xff]
        %v5365 = vld [vmem:[%s995 + $0xc8] sm:$0xff]
        %v5366 = vld [vmem:[%s995 + $0xd0] sm:$0xff]
        %v5367 = vld [vmem:[%s995 + $0xd8] sm:$0xff]
        %v5368 = vld [vmem:[%s995 + $0xe0] sm:$0xff]
        %v5369 = vld [vmem:[%s995 + $0xe8] sm:$0xff]
        %v5370 = vld [vmem:[%s995 + $0xf0] sm:$0xff]
        %v5371 = vld [vmem:[%s995 + $0xf8] sm:$0xff]
        %v5372 = vld [vmem:[%s995 + $0x100] sm:$0xff]
        %v5373 = vld [vmem:[%s995 + $0x108] sm:$0xff]
        %v5374 = vld [vmem:[%s995 + $0x110] sm:$0xff]
        %v5375 = vld [vmem:[%s995 + $0x118] sm:$0xff]
        %v5376 = vld [vmem:[%s995 + $0x120] sm:$0xff]
        %v5377 = vld [vmem:[%s995 + $0x128] sm:$0xff]
        %v5378 = vld [vmem:[%s995 + $0x130] sm:$0xff]
        %v5379 = vld [vmem:[%s995 + $0x138] sm:$0xff]
        %v5380 = vld [vmem:[%s995 + $0x140] sm:$0xff]
        %v5381 = vld [vmem:[%s995 + $0x148] sm:$0xff]
        %v5382 = vld [vmem:[%s995 + $0x150] sm:$0xff]
        %v5383 = vld [vmem:[%s995 + $0x158] sm:$0xff]
        %v5384 = vld [vmem:[%s995 + $0x160] sm:$0xff]
        %v5385 = vld [vmem:[%s995 + $0x168] sm:$0xff]
        %v5386 = vld [vmem:[%s995 + $0x170] sm:$0xff]
        %v5387 = vld [vmem:[%s995 + $0x178] sm:$0xff]
        %v5388 = vld [vmem:[%s995 + $0x180] sm:$0xff]
        %v5389 = vld [vmem:[%s995 + $0x188] sm:$0xff]
        %v5390 = vld [vmem:[%s995 + $0x190] sm:$0xff]
        %v5391 = vld [vmem:[%s995 + $0x198] sm:$0xff]
        %v5392 = vld [vmem:[%s995 + $0x1a0] sm:$0xff]
        %v5393 = vld [vmem:[%s995 + $0x1a8] sm:$0xff]
        %v5394 = vld [vmem:[%s995 + $0x1b0] sm:$0xff]
        %v5395 = vld [vmem:[%s995 + $0x1b8] sm:$0xff]
        %v5396 = vld [vmem:[%s995 + $0x1c0] sm:$0xff]
        %v5397 = vld [vmem:[%s995 + $0x1c8] sm:$0xff]
        %v5398 = vld [vmem:[%s995 + $0x1d0] sm:$0xff]
        %v5399 = vld [vmem:[%s995 + $0x1d8] sm:$0xff]
        %v5400 = vld [vmem:[%s995 + $0x1e0] sm:$0xff]
        %v5401 = vld [vmem:[%s995 + $0x1e8] sm:$0xff]
        %v5402 = vld [vmem:[%s995 + $0x1f0] sm:$0xff]
        %v5403 = vld [vmem:[%s995 + $0x1f8] sm:$0xff]
        %v5405 = vlaneseq
        %v5406 = vshrl.u32 %v5405, 7
        %v5407 = vsub.s32 0, %v5406
        %v5408 = vrot.slane %v5274, %v5407
        %v5409 = vlaneseq
        %v5410 = vshrl.u32 %v5409, 7
        %v5411 = vsub.s32 1, %v5410
        %v5412 = vrot.slane %v5274, %v5411
        %5415 = vmatprep.subr.mxu0 %v5341
        %5416 = vmatpush1.msra.mxu0 %v5340
        %5417 = vmatprep.subr.mxu0 %v5343
        %5418 = vmatpush1.msra.mxu0 %v5342
        %5419 = vmatprep.subr.mxu0 %v5345
        %5420 = vmatpush1.msra.mxu0 %v5344
        %5421 = vmatprep.subr.mxu0 %v5347
        %5422 = vmatpush1.msra.mxu0 %v5346
        %5423 = vmatprep.subr.mxu0 %v5349
        %5424 = vmatpush1.msra.mxu0 %v5348
        %5425 = vmatprep.subr.mxu0 %v5351
        %5426 = vmatpush1.msra.mxu0 %v5350
        %5427 = vmatprep.subr.mxu0 %v5353
        %5428 = vmatpush1.msra.mxu0 %v5352
        %5429 = vmatprep.subr.mxu0 %v5355
        %5430 = vmatpush1.msra.mxu0 %v5354
        %5431 = vmatprep.subr.mxu0 %v5357
        %5432 = vmatpush1.msra.mxu0 %v5356
        %5433 = vmatprep.subr.mxu0 %v5359
        %5434 = vmatpush1.msra.mxu0 %v5358
        %5435 = vmatprep.subr.mxu0 %v5361
        %5436 = vmatpush1.msra.mxu0 %v5360
        %5437 = vmatprep.subr.mxu0 %v5363
        %5438 = vmatpush1.msra.mxu0 %v5362
        %5439 = vmatprep.subr.mxu0 %v5365
        %5440 = vmatpush1.msra.mxu0 %v5364
        %5441 = vmatprep.subr.mxu0 %v5367
        %5442 = vmatpush1.msra.mxu0 %v5366
        %5443 = vmatprep.subr.mxu0 %v5369
        %5444 = vmatpush1.msra.mxu0 %v5368
        %5445 = vmatprep.subr.mxu0 %v5371
        %5446 = vmatpush1.msra.mxu0 %v5370
        %5447 = vmatprep.subr.mxu0 %v5373
        %5448 = vmatpush1.msra.mxu0 %v5372
        %5449 = vmatprep.subr.mxu0 %v5375
        %5450 = vmatpush1.msra.mxu0 %v5374
        %5451 = vmatprep.subr.mxu0 %v5377
        %5452 = vmatpush1.msra.mxu0 %v5376
        %5453 = vmatprep.subr.mxu0 %v5379
        %5454 = vmatpush1.msra.mxu0 %v5378
        %5455 = vmatprep.subr.mxu0 %v5381
        %5456 = vmatpush1.msra.mxu0 %v5380
        %5457 = vmatprep.subr.mxu0 %v5383
        %5458 = vmatpush1.msra.mxu0 %v5382
        %5459 = vmatprep.subr.mxu0 %v5385
        %5460 = vmatpush1.msra.mxu0 %v5384
        %5461 = vmatprep.subr.mxu0 %v5387
        %5462 = vmatpush1.msra.mxu0 %v5386
        %5463 = vmatprep.subr.mxu0 %v5389
        %5464 = vmatpush1.msra.mxu0 %v5388
        %5465 = vmatprep.subr.mxu0 %v5391
        %5466 = vmatpush1.msra.mxu0 %v5390
        %5467 = vmatprep.subr.mxu0 %v5393
        %5468 = vmatpush1.msra.mxu0 %v5392
        %5469 = vmatprep.subr.mxu0 %v5395
        %5470 = vmatpush1.msra.mxu0 %v5394
        %5471 = vmatprep.subr.mxu0 %v5397
        %5472 = vmatpush1.msra.mxu0 %v5396
        %5473 = vmatprep.subr.mxu0 %v5399
        %5474 = vmatpush1.msra.mxu0 %v5398
        %5475 = vmatprep.subr.mxu0 %v5401
        %5476 = vmatpush1.msra.mxu0 %v5400
        %5477 = vmatprep.subr.mxu0 %v5403
        %5478 = vmatpush1.msra.mxu0 %v5402
        %5479 = vmatprep.mubr.f32.mxu0 %v5412
        %5480 = vmatmul.mubr.f32.gmra.mrb[0].mxu0 %v5408
        %v5481 = vpop.f32.mrb[0].mxu0
        %v5482 = vadd.f32 0.0, %v5481
        %v5483 = vpop.f32.mrb[0].mxu0
        %v5484 = vadd.f32 0.0, %v5483
        %5485 = vdwg.mxu0
        %v5487 = vlaneseq
        %v5488 = vshrl.u32 %v5487, 7
        %v5489 = vsub.s32 0, %v5488
        %v5490 = vrot.slane %v5273, %v5489
        %v5491 = vlaneseq
        %v5492 = vshrl.u32 %v5491, 7
        %v5493 = vsub.s32 1, %v5492
        %v5494 = vrot.slane %v5273, %v5493
        %5497 = vmatprep.subr.mxu0 %v5277
        %5498 = vmatpush1.msra.mxu0 %v5276
        %5499 = vmatprep.subr.mxu0 %v5279
        %5500 = vmatpush1.msra.mxu0 %v5278
        %5501 = vmatprep.subr.mxu0 %v5281
        %5502 = vmatpush1.msra.mxu0 %v5280
        %5503 = vmatprep.subr.mxu0 %v5283
        %5504 = vmatpush1.msra.mxu0 %v5282
        %5505 = vmatprep.subr.mxu0 %v5285
        %5506 = vmatpush1.msra.mxu0 %v5284
        %5507 = vmatprep.subr.mxu0 %v5287
        %5508 = vmatpush1.msra.mxu0 %v5286
        %5509 = vmatprep.subr.mxu0 %v5289
        %5510 = vmatpush1.msra.mxu0 %v5288
        %5511 = vmatprep.subr.mxu0 %v5291
        %5512 = vmatpush1.msra.mxu0 %v5290
        %5513 = vmatprep.subr.mxu0 %v5293
        %5514 = vmatpush1.msra.mxu0 %v5292
        %5515 = vmatprep.subr.mxu0 %v5295
        %5516 = vmatpush1.msra.mxu0 %v5294
        %5517 = vmatprep.subr.mxu0 %v5297
        %5518 = vmatpush1.msra.mxu0 %v5296
        %5519 = vmatprep.subr.mxu0 %v5299
        %5520 = vmatpush1.msra.mxu0 %v5298
        %5521 = vmatprep.subr.mxu0 %v5301
        %5522 = vmatpush1.msra.mxu0 %v5300
        %5523 = vmatprep.subr.mxu0 %v5303
        %5524 = vmatpush1.msra.mxu0 %v5302
        %5525 = vmatprep.subr.mxu0 %v5305
        %5526 = vmatpush1.msra.mxu0 %v5304
        %5527 = vmatprep.subr.mxu0 %v5307
        %5528 = vmatpush1.msra.mxu0 %v5306
        %5529 = vmatprep.subr.mxu0 %v5309
        %5530 = vmatpush1.msra.mxu0 %v5308
        %5531 = vmatprep.subr.mxu0 %v5311
        %5532 = vmatpush1.msra.mxu0 %v5310
        %5533 = vmatprep.subr.mxu0 %v5313
        %5534 = vmatpush1.msra.mxu0 %v5312
        %5535 = vmatprep.subr.mxu0 %v5315
        %5536 = vmatpush1.msra.mxu0 %v5314
        %5537 = vmatprep.subr.mxu0 %v5317
        %5538 = vmatpush1.msra.mxu0 %v5316
        %5539 = vmatprep.subr.mxu0 %v5319
        %5540 = vmatpush1.msra.mxu0 %v5318
        %5541 = vmatprep.subr.mxu0 %v5321
        %5542 = vmatpush1.msra.mxu0 %v5320
        %5543 = vmatprep.subr.mxu0 %v5323
        %5544 = vmatpush1.msra.mxu0 %v5322
        %5545 = vmatprep.subr.mxu0 %v5325
        %5546 = vmatpush1.msra.mxu0 %v5324
        %5547 = vmatprep.subr.mxu0 %v5327
        %5548 = vmatpush1.msra.mxu0 %v5326
        %5549 = vmatprep.subr.mxu0 %v5329
        %5550 = vmatpush1.msra.mxu0 %v5328
        %5551 = vmatprep.subr.mxu0 %v5331
        %5552 = vmatpush1.msra.mxu0 %v5330
        %5553 = vmatprep.subr.mxu0 %v5333
        %5554 = vmatpush1.msra.mxu0 %v5332
        %5555 = vmatprep.subr.mxu0 %v5335
        %5556 = vmatpush1.msra.mxu0 %v5334
        %5557 = vmatprep.subr.mxu0 %v5337
        %5558 = vmatpush1.msra.mxu0 %v5336
        %5559 = vmatprep.subr.mxu0 %v5339
        %5560 = vmatpush1.msra.mxu0 %v5338
        %5561 = vmatprep.mubr.f32.mxu0 %v5494
        %5562 = vmatmul.mubr.f32.gmra.mrb[0].mxu0 %v5490
        %v5563 = vpop.f32.mrb[0].mxu0
        %v5564 = vadd.f32 %v5482, %v5563
        %v5565 = vpop.f32.mrb[0].mxu0
        %v5566 = vadd.f32 %v5484, %v5565
        %5567 = vdwg.mxu0
        %v5568 = vld [vmem:[%s1234] sm:$0xff]
        %v5569 = vld [vmem:[%s1234 + $0x8] sm:$0xff]
        %v5570 = vld [vmem:[%s1234 + $0x10] sm:$0xff]
        %v5571 = vld [vmem:[%s1234 + $0x18] sm:$0xff]
        %v5572 = vld [vmem:[%s1234 + $0x20] sm:$0xff]
        %v5573 = vld [vmem:[%s1234 + $0x28] sm:$0xff]
        %v5574 = vld [vmem:[%s1234 + $0x30] sm:$0xff]
        %v5575 = vld [vmem:[%s1234 + $0x38] sm:$0xff]
        %v5576 = vld [vmem:[%s1234 + $0x40] sm:$0xff]
        %v5577 = vld [vmem:[%s1234 + $0x48] sm:$0xff]
        %v5578 = vld [vmem:[%s1234 + $0x50] sm:$0xff]
        %v5579 = vld [vmem:[%s1234 + $0x58] sm:$0xff]
        %v5580 = vld [vmem:[%s1234 + $0x60] sm:$0xff]
        %v5581 = vld [vmem:[%s1234 + $0x68] sm:$0xff]
        %v5582 = vld [vmem:[%s1234 + $0x70] sm:$0xff]
        %v5583 = vld [vmem:[%s1234 + $0x78] sm:$0xff]
        %v5584 = vld [vmem:[%s1234 + $0x80] sm:$0xff]
        %v5585 = vld [vmem:[%s1234 + $0x88] sm:$0xff]
        %v5586 = vld [vmem:[%s1234 + $0x90] sm:$0xff]
        %v5587 = vld [vmem:[%s1234 + $0x98] sm:$0xff]
        %v5588 = vld [vmem:[%s1234 + $0xa0] sm:$0xff]
        %v5589 = vld [vmem:[%s1234 + $0xa8] sm:$0xff]
        %v5590 = vld [vmem:[%s1234 + $0xb0] sm:$0xff]
        %v5591 = vld [vmem:[%s1234 + $0xb8] sm:$0xff]
        %v5592 = vld [vmem:[%s1234 + $0xc0] sm:$0xff]
        %v5593 = vld [vmem:[%s1234 + $0xc8] sm:$0xff]
        %v5594 = vld [vmem:[%s1234 + $0xd0] sm:$0xff]
        %v5595 = vld [vmem:[%s1234 + $0xd8] sm:$0xff]
        %v5596 = vld [vmem:[%s1234 + $0xe0] sm:$0xff]
        %v5597 = vld [vmem:[%s1234 + $0xe8] sm:$0xff]
        %v5598 = vld [vmem:[%s1234 + $0xf0] sm:$0xff]
        %v5599 = vld [vmem:[%s1234 + $0xf8] sm:$0xff]
        %v5600 = vld [vmem:[%s1234 + $0x100] sm:$0xff]
        %v5601 = vld [vmem:[%s1234 + $0x108] sm:$0xff]
        %v5602 = vld [vmem:[%s1234 + $0x110] sm:$0xff]
        %v5603 = vld [vmem:[%s1234 + $0x118] sm:$0xff]
        %v5604 = vld [vmem:[%s1234 + $0x120] sm:$0xff]
        %v5605 = vld [vmem:[%s1234 + $0x128] sm:$0xff]
        %v5606 = vld [vmem:[%s1234 + $0x130] sm:$0xff]
        %v5607 = vld [vmem:[%s1234 + $0x138] sm:$0xff]
        %v5608 = vld [vmem:[%s1234 + $0x140] sm:$0xff]
        %v5609 = vld [vmem:[%s1234 + $0x148] sm:$0xff]
        %v5610 = vld [vmem:[%s1234 + $0x150] sm:$0xff]
        %v5611 = vld [vmem:[%s1234 + $0x158] sm:$0xff]
        %v5612 = vld [vmem:[%s1234 + $0x160] sm:$0xff]
        %v5613 = vld [vmem:[%s1234 + $0x168] sm:$0xff]
        %v5614 = vld [vmem:[%s1234 + $0x170] sm:$0xff]
        %v5615 = vld [vmem:[%s1234 + $0x178] sm:$0xff]
        %v5616 = vld [vmem:[%s1234 + $0x180] sm:$0xff]
        %v5617 = vld [vmem:[%s1234 + $0x188] sm:$0xff]
        %v5618 = vld [vmem:[%s1234 + $0x190] sm:$0xff]
        %v5619 = vld [vmem:[%s1234 + $0x198] sm:$0xff]
        %v5620 = vld [vmem:[%s1234 + $0x1a0] sm:$0xff]
        %v5621 = vld [vmem:[%s1234 + $0x1a8] sm:$0xff]
        %v5622 = vld [vmem:[%s1234 + $0x1b0] sm:$0xff]
        %v5623 = vld [vmem:[%s1234 + $0x1b8] sm:$0xff]
        %v5624 = vld [vmem:[%s1234 + $0x1c0] sm:$0xff]
        %v5625 = vld [vmem:[%s1234 + $0x1c8] sm:$0xff]
        %v5626 = vld [vmem:[%s1234 + $0x1d0] sm:$0xff]
        %v5627 = vld [vmem:[%s1234 + $0x1d8] sm:$0xff]
        %v5628 = vld [vmem:[%s1234 + $0x1e0] sm:$0xff]
        %v5629 = vld [vmem:[%s1234 + $0x1e8] sm:$0xff]
        %v5630 = vld [vmem:[%s1234 + $0x1f0] sm:$0xff]
        %v5631 = vld [vmem:[%s1234 + $0x1f8] sm:$0xff]
        %v5633 = vlaneseq
        %v5634 = vshrl.u32 %v5633, 7
        %v5635 = vsub.s32 0, %v5634
        %v5636 = vrot.slane %v5275, %v5635
        %v5637 = vlaneseq
        %v5638 = vshrl.u32 %v5637, 7
        %v5639 = vsub.s32 1, %v5638
        %v5640 = vrot.slane %v5275, %v5639
        %5643 = vmatprep.subr.mxu0 %v5569
        %5644 = vmatpush1.msra.mxu0 %v5568
        %5645 = vmatprep.subr.mxu0 %v5571
        %5646 = vmatpush1.msra.mxu0 %v5570
        %5647 = vmatprep.subr.mxu0 %v5573
        %5648 = vmatpush1.msra.mxu0 %v5572
        %5649 = vmatprep.subr.mxu0 %v5575
        %5650 = vmatpush1.msra.mxu0 %v5574
        %5651 = vmatprep.subr.mxu0 %v5577
        %5652 = vmatpush1.msra.mxu0 %v5576
        %5653 = vmatprep.subr.mxu0 %v5579
        %5654 = vmatpush1.msra.mxu0 %v5578
        %5655 = vmatprep.subr.mxu0 %v5581
        %5656 = vmatpush1.msra.mxu0 %v5580
        %5657 = vmatprep.subr.mxu0 %v5583
        %5658 = vmatpush1.msra.mxu0 %v5582
        %5659 = vmatprep.subr.mxu0 %v5585
        %5660 = vmatpush1.msra.mxu0 %v5584
        %5661 = vmatprep.subr.mxu0 %v5587
        %5662 = vmatpush1.msra.mxu0 %v5586
        %5663 = vmatprep.subr.mxu0 %v5589
        %5664 = vmatpush1.msra.mxu0 %v5588
        %5665 = vmatprep.subr.mxu0 %v5591
        %5666 = vmatpush1.msra.mxu0 %v5590
        %5667 = vmatprep.subr.mxu0 %v5593
        %5668 = vmatpush1.msra.mxu0 %v5592
        %5669 = vmatprep.subr.mxu0 %v5595
        %5670 = vmatpush1.msra.mxu0 %v5594
        %5671 = vmatprep.subr.mxu0 %v5597
        %5672 = vmatpush1.msra.mxu0 %v5596
        %5673 = vmatprep.subr.mxu0 %v5599
        %5674 = vmatpush1.msra.mxu0 %v5598
        %5675 = vmatprep.subr.mxu0 %v5601
        %5676 = vmatpush1.msra.mxu0 %v5600
        %5677 = vmatprep.subr.mxu0 %v5603
        %5678 = vmatpush1.msra.mxu0 %v5602
        %5679 = vmatprep.subr.mxu0 %v5605
        %5680 = vmatpush1.msra.mxu0 %v5604
        %5681 = vmatprep.subr.mxu0 %v5607
        %5682 = vmatpush1.msra.mxu0 %v5606
        %5683 = vmatprep.subr.mxu0 %v5609
        %5684 = vmatpush1.msra.mxu0 %v5608
        %5685 = vmatprep.subr.mxu0 %v5611
        %5686 = vmatpush1.msra.mxu0 %v5610
        %5687 = vmatprep.subr.mxu0 %v5613
        %5688 = vmatpush1.msra.mxu0 %v5612
        %5689 = vmatprep.subr.mxu0 %v5615
        %5690 = vmatpush1.msra.mxu0 %v5614
        %5691 = vmatprep.subr.mxu0 %v5617
        %5692 = vmatpush1.msra.mxu0 %v5616
        %5693 = vmatprep.subr.mxu0 %v5619
        %5694 = vmatpush1.msra.mxu0 %v5618
        %5695 = vmatprep.subr.mxu0 %v5621
        %5696 = vmatpush1.msra.mxu0 %v5620
        %5697 = vmatprep.subr.mxu0 %v5623
        %5698 = vmatpush1.msra.mxu0 %v5622
        %5699 = vmatprep.subr.mxu0 %v5625
        %5700 = vmatpush1.msra.mxu0 %v5624
        %5701 = vmatprep.subr.mxu0 %v5627
        %5702 = vmatpush1.msra.mxu0 %v5626
        %5703 = vmatprep.subr.mxu0 %v5629
        %5704 = vmatpush1.msra.mxu0 %v5628
        %5705 = vmatprep.subr.mxu0 %v5631
        %5706 = vmatpush1.msra.mxu0 %v5630
        %5707 = vmatprep.mubr.f32.mxu0 %v5640
        %5708 = vmatmul.mubr.f32.gmra.mrb[0].mxu0 %v5636
        %v5709 = vpop.f32.mrb[0].mxu0
        %v5710 = vadd.f32 0.0, %v5709
        %v5711 = vpop.f32.mrb[0].mxu0
        %v5712 = vadd.f32 0.0, %v5711
        %5713 = vdwg.mxu0
        %v5714 = vadd.f32 %v5564, %v5710
        %v5715 = vadd.f32 %v5566, %v5712
        %v5716 = vadd.f32 %v5714, %v1402
        %v5717 = vadd.f32 %v5715, %v1406
        %v5718 = vmax.f32 %v5716, 0.0
        %v5719 = vmax.f32 %v5717, 0.0
        %5720 = vst.msk [vmem:[#allocation2] ss:$8 sm:$0x3] %vm859, 0.0
        %5721 = vst.msk [vmem:[#allocation2] ss:$8 sm:$0x0] %vm859, 0.0
        %5722 = vst.msk [vmem:[%s5249] ss:$8 sm:$0x3] %vm859, 0.0
        %5723 = vst.msk [vmem:[%s5249] ss:$8 sm:$0x0] %vm859, 0.0
        %v5726 = vcombine.low %v5718, %v5719
        %v5728 = vunpack.c.l.s4 1966171168
        %v5729 = vunpack.c.0.s8 %v5728
        %v5730 = vlaneseq
        %v5731 = vshrl.u32 %v5730, 7
        %v5732 = vsub.s32 %v5729, %v5731
        %v5733 = vrot.slane %v5726, %v5732
        %v5735 = vunpack.c.l.s4 1966171168
        %v5736 = vunpack.c.0.s8 %v5735
        %v5737 = vlaneseq
        %v5738 = vshrl.u32 %v5737, 7
        %v5739 = vsub.s32 %v5736, %v5738
        %v5740 = vrot.slane %v5733, %v5739
        %5742 = vst.msk [vmem:[%s5270] ss:$8 sm:$0x3] %vm859, %v5740
        %5743 = vst.msk [vmem:[%s5270] ss:$8 sm:$0x0] %vm859, %v5740
        %v5744 = vld [vmem:[#allocation2] ss:$8 sm:$0x3]
        %v5745 = vld [vmem:[%s5270] ss:$8 sm:$0x3]
        %v5746 = vld [vmem:[%s5249] ss:$8 sm:$0x3]
        %v5747 = vld [vmem:[%s3] sm:$0xff]
        %v5748 = vld [vmem:[%s3 + $0x8] sm:$0xff]
        %v5749 = vld [vmem:[%s3 + $0x10] sm:$0xff]
        %v5750 = vld [vmem:[%s3 + $0x18] sm:$0xff]
        %v5751 = vld [vmem:[%s3 + $0x20] sm:$0xff]
        %v5752 = vld [vmem:[%s3 + $0x28] sm:$0xff]
        %v5753 = vld [vmem:[%s3 + $0x30] sm:$0xff]
        %v5754 = vld [vmem:[%s3 + $0x38] sm:$0xff]
        %v5755 = vld [vmem:[%s3 + $0x40] sm:$0xff]
        %v5756 = vld [vmem:[%s3 + $0x48] sm:$0xff]
        %v5757 = vld [vmem:[%s3 + $0x50] sm:$0xff]
        %v5758 = vld [vmem:[%s3 + $0x58] sm:$0xff]
        %v5759 = vld [vmem:[%s3 + $0x60] sm:$0xff]
        %v5760 = vld [vmem:[%s3 + $0x68] sm:$0xff]
        %v5761 = vld [vmem:[%s3 + $0x70] sm:$0xff]
        %v5762 = vld [vmem:[%s3 + $0x78] sm:$0xff]
        %v5763 = vld [vmem:[%s3 + $0x80] sm:$0xff]
        %v5764 = vld [vmem:[%s3 + $0x88] sm:$0xff]
        %v5765 = vld [vmem:[%s3 + $0x90] sm:$0xff]
        %v5766 = vld [vmem:[%s3 + $0x98] sm:$0xff]
        %v5767 = vld [vmem:[%s3 + $0xa0] sm:$0xff]
        %v5768 = vld [vmem:[%s3 + $0xa8] sm:$0xff]
        %v5769 = vld [vmem:[%s3 + $0xb0] sm:$0xff]
        %v5770 = vld [vmem:[%s3 + $0xb8] sm:$0xff]
        %v5771 = vld [vmem:[%s3 + $0xc0] sm:$0xff]
        %v5772 = vld [vmem:[%s3 + $0xc8] sm:$0xff]
        %v5773 = vld [vmem:[%s3 + $0xd0] sm:$0xff]
        %v5774 = vld [vmem:[%s3 + $0xd8] sm:$0xff]
        %v5775 = vld [vmem:[%s3 + $0xe0] sm:$0xff]
        %v5776 = vld [vmem:[%s3 + $0xe8] sm:$0xff]
        %v5777 = vld [vmem:[%s3 + $0xf0] sm:$0xff]
        %v5778 = vld [vmem:[%s3 + $0xf8] sm:$0xff]
        %v5779 = vld [vmem:[%s3 + $0x100] sm:$0xff]
        %v5780 = vld [vmem:[%s3 + $0x108] sm:$0xff]
        %v5781 = vld [vmem:[%s3 + $0x110] sm:$0xff]
        %v5782 = vld [vmem:[%s3 + $0x118] sm:$0xff]
        %v5783 = vld [vmem:[%s3 + $0x120] sm:$0xff]
        %v5784 = vld [vmem:[%s3 + $0x128] sm:$0xff]
        %v5785 = vld [vmem:[%s3 + $0x130] sm:$0xff]
        %v5786 = vld [vmem:[%s3 + $0x138] sm:$0xff]
        %v5787 = vld [vmem:[%s3 + $0x140] sm:$0xff]
        %v5788 = vld [vmem:[%s3 + $0x148] sm:$0xff]
        %v5789 = vld [vmem:[%s3 + $0x150] sm:$0xff]
        %v5790 = vld [vmem:[%s3 + $0x158] sm:$0xff]
        %v5791 = vld [vmem:[%s3 + $0x160] sm:$0xff]
        %v5792 = vld [vmem:[%s3 + $0x168] sm:$0xff]
        %v5793 = vld [vmem:[%s3 + $0x170] sm:$0xff]
        %v5794 = vld [vmem:[%s3 + $0x178] sm:$0xff]
        %v5795 = vld [vmem:[%s3 + $0x180] sm:$0xff]
        %v5796 = vld [vmem:[%s3 + $0x188] sm:$0xff]
        %v5797 = vld [vmem:[%s3 + $0x190] sm:$0xff]
        %v5798 = vld [vmem:[%s3 + $0x198] sm:$0xff]
        %v5799 = vld [vmem:[%s3 + $0x1a0] sm:$0xff]
        %v5800 = vld [vmem:[%s3 + $0x1a8] sm:$0xff]
        %v5801 = vld [vmem:[%s3 + $0x1b0] sm:$0xff]
        %v5802 = vld [vmem:[%s3 + $0x1b8] sm:$0xff]
        %v5803 = vld [vmem:[%s3 + $0x1c0] sm:$0xff]
        %v5804 = vld [vmem:[%s3 + $0x1c8] sm:$0xff]
        %v5805 = vld [vmem:[%s3 + $0x1d0] sm:$0xff]
        %v5806 = vld [vmem:[%s3 + $0x1d8] sm:$0xff]
        %v5807 = vld [vmem:[%s3 + $0x1e0] sm:$0xff]
        %v5808 = vld [vmem:[%s3 + $0x1e8] sm:$0xff]
        %v5809 = vld [vmem:[%s3 + $0x1f0] sm:$0xff]
        %v5810 = vld [vmem:[%s3 + $0x1f8] sm:$0xff]
        %v5811 = vld [vmem:[%s995] sm:$0xff]
        %v5812 = vld [vmem:[%s995 + $0x8] sm:$0xff]
        %v5813 = vld [vmem:[%s995 + $0x10] sm:$0xff]
        %v5814 = vld [vmem:[%s995 + $0x18] sm:$0xff]
        %v5815 = vld [vmem:[%s995 + $0x20] sm:$0xff]
        %v5816 = vld [vmem:[%s995 + $0x28] sm:$0xff]
        %v5817 = vld [vmem:[%s995 + $0x30] sm:$0xff]
        %v5818 = vld [vmem:[%s995 + $0x38] sm:$0xff]
        %v5819 = vld [vmem:[%s995 + $0x40] sm:$0xff]
        %v5820 = vld [vmem:[%s995 + $0x48] sm:$0xff]
        %v5821 = vld [vmem:[%s995 + $0x50] sm:$0xff]
        %v5822 = vld [vmem:[%s995 + $0x58] sm:$0xff]
        %v5823 = vld [vmem:[%s995 + $0x60] sm:$0xff]
        %v5824 = vld [vmem:[%s995 + $0x68] sm:$0xff]
        %v5825 = vld [vmem:[%s995 + $0x70] sm:$0xff]
        %v5826 = vld [vmem:[%s995 + $0x78] sm:$0xff]
        %v5827 = vld [vmem:[%s995 + $0x80] sm:$0xff]
        %v5828 = vld [vmem:[%s995 + $0x88] sm:$0xff]
        %v5829 = vld [vmem:[%s995 + $0x90] sm:$0xff]
        %v5830 = vld [vmem:[%s995 + $0x98] sm:$0xff]
        %v5831 = vld [vmem:[%s995 + $0xa0] sm:$0xff]
        %v5832 = vld [vmem:[%s995 + $0xa8] sm:$0xff]
        %v5833 = vld [vmem:[%s995 + $0xb0] sm:$0xff]
        %v5834 = vld [vmem:[%s995 + $0xb8] sm:$0xff]
        %v5835 = vld [vmem:[%s995 + $0xc0] sm:$0xff]
        %v5836 = vld [vmem:[%s995 + $0xc8] sm:$0xff]
        %v5837 = vld [vmem:[%s995 + $0xd0] sm:$0xff]
        %v5838 = vld [vmem:[%s995 + $0xd8] sm:$0xff]
        %v5839 = vld [vmem:[%s995 + $0xe0] sm:$0xff]
        %v5840 = vld [vmem:[%s995 + $0xe8] sm:$0xff]
        %v5841 = vld [vmem:[%s995 + $0xf0] sm:$0xff]
        %v5842 = vld [vmem:[%s995 + $0xf8] sm:$0xff]
        %v5843 = vld [vmem:[%s995 + $0x100] sm:$0xff]
        %v5844 = vld [vmem:[%s995 + $0x108] sm:$0xff]
        %v5845 = vld [vmem:[%s995 + $0x110] sm:$0xff]
        %v5846 = vld [vmem:[%s995 + $0x118] sm:$0xff]
        %v5847 = vld [vmem:[%s995 + $0x120] sm:$0xff]
        %v5848 = vld [vmem:[%s995 + $0x128] sm:$0xff]
        %v5849 = vld [vmem:[%s995 + $0x130] sm:$0xff]
        %v5850 = vld [vmem:[%s995 + $0x138] sm:$0xff]
        %v5851 = vld [vmem:[%s995 + $0x140] sm:$0xff]
        %v5852 = vld [vmem:[%s995 + $0x148] sm:$0xff]
        %v5853 = vld [vmem:[%s995 + $0x150] sm:$0xff]
        %v5854 = vld [vmem:[%s995 + $0x158] sm:$0xff]
        %v5855 = vld [vmem:[%s995 + $0x160] sm:$0xff]
        %v5856 = vld [vmem:[%s995 + $0x168] sm:$0xff]
        %v5857 = vld [vmem:[%s995 + $0x170] sm:$0xff]
        %v5858 = vld [vmem:[%s995 + $0x178] sm:$0xff]
        %v5859 = vld [vmem:[%s995 + $0x180] sm:$0xff]
        %v5860 = vld [vmem:[%s995 + $0x188] sm:$0xff]
        %v5861 = vld [vmem:[%s995 + $0x190] sm:$0xff]
        %v5862 = vld [vmem:[%s995 + $0x198] sm:$0xff]
        %v5863 = vld [vmem:[%s995 + $0x1a0] sm:$0xff]
        %v5864 = vld [vmem:[%s995 + $0x1a8] sm:$0xff]
        %v5865 = vld [vmem:[%s995 + $0x1b0] sm:$0xff]
        %v5866 = vld [vmem:[%s995 + $0x1b8] sm:$0xff]
        %v5867 = vld [vmem:[%s995 + $0x1c0] sm:$0xff]
        %v5868 = vld [vmem:[%s995 + $0x1c8] sm:$0xff]
        %v5869 = vld [vmem:[%s995 + $0x1d0] sm:$0xff]
        %v5870 = vld [vmem:[%s995 + $0x1d8] sm:$0xff]
        %v5871 = vld [vmem:[%s995 + $0x1e0] sm:$0xff]
        %v5872 = vld [vmem:[%s995 + $0x1e8] sm:$0xff]
        %v5873 = vld [vmem:[%s995 + $0x1f0] sm:$0xff]
        %v5874 = vld [vmem:[%s995 + $0x1f8] sm:$0xff]
        %v5876 = vlaneseq
        %v5877 = vshrl.u32 %v5876, 7
        %v5878 = vsub.s32 0, %v5877
        %v5879 = vrot.slane %v5745, %v5878
        %v5880 = vlaneseq
        %v5881 = vshrl.u32 %v5880, 7
        %v5882 = vsub.s32 1, %v5881
        %v5883 = vrot.slane %v5745, %v5882
        %5886 = vmatprep.subr.mxu0 %v5812
        %5887 = vmatpush1.msra.mxu0 %v5811
        %5888 = vmatprep.subr.mxu0 %v5814
        %5889 = vmatpush1.msra.mxu0 %v5813
        %5890 = vmatprep.subr.mxu0 %v5816
        %5891 = vmatpush1.msra.mxu0 %v5815
        %5892 = vmatprep.subr.mxu0 %v5818
        %5893 = vmatpush1.msra.mxu0 %v5817
        %5894 = vmatprep.subr.mxu0 %v5820
        %5895 = vmatpush1.msra.mxu0 %v5819
        %5896 = vmatprep.subr.mxu0 %v5822
        %5897 = vmatpush1.msra.mxu0 %v5821
        %5898 = vmatprep.subr.mxu0 %v5824
        %5899 = vmatpush1.msra.mxu0 %v5823
        %5900 = vmatprep.subr.mxu0 %v5826
        %5901 = vmatpush1.msra.mxu0 %v5825
        %5902 = vmatprep.subr.mxu0 %v5828
        %5903 = vmatpush1.msra.mxu0 %v5827
        %5904 = vmatprep.subr.mxu0 %v5830
        %5905 = vmatpush1.msra.mxu0 %v5829
        %5906 = vmatprep.subr.mxu0 %v5832
        %5907 = vmatpush1.msra.mxu0 %v5831
        %5908 = vmatprep.subr.mxu0 %v5834
        %5909 = vmatpush1.msra.mxu0 %v5833
        %5910 = vmatprep.subr.mxu0 %v5836
        %5911 = vmatpush1.msra.mxu0 %v5835
        %5912 = vmatprep.subr.mxu0 %v5838
        %5913 = vmatpush1.msra.mxu0 %v5837
        %5914 = vmatprep.subr.mxu0 %v5840
        %5915 = vmatpush1.msra.mxu0 %v5839
        %5916 = vmatprep.subr.mxu0 %v5842
        %5917 = vmatpush1.msra.mxu0 %v5841
        %5918 = vmatprep.subr.mxu0 %v5844
        %5919 = vmatpush1.msra.mxu0 %v5843
        %5920 = vmatprep.subr.mxu0 %v5846
        %5921 = vmatpush1.msra.mxu0 %v5845
        %5922 = vmatprep.subr.mxu0 %v5848
        %5923 = vmatpush1.msra.mxu0 %v5847
        %5924 = vmatprep.subr.mxu0 %v5850
        %5925 = vmatpush1.msra.mxu0 %v5849
        %5926 = vmatprep.subr.mxu0 %v5852
        %5927 = vmatpush1.msra.mxu0 %v5851
        %5928 = vmatprep.subr.mxu0 %v5854
        %5929 = vmatpush1.msra.mxu0 %v5853
        %5930 = vmatprep.subr.mxu0 %v5856
        %5931 = vmatpush1.msra.mxu0 %v5855
        %5932 = vmatprep.subr.mxu0 %v5858
        %5933 = vmatpush1.msra.mxu0 %v5857
        %5934 = vmatprep.subr.mxu0 %v5860
        %5935 = vmatpush1.msra.mxu0 %v5859
        %5936 = vmatprep.subr.mxu0 %v5862
        %5937 = vmatpush1.msra.mxu0 %v5861
        %5938 = vmatprep.subr.mxu0 %v5864
        %5939 = vmatpush1.msra.mxu0 %v5863
        %5940 = vmatprep.subr.mxu0 %v5866
        %5941 = vmatpush1.msra.mxu0 %v5865
        %5942 = vmatprep.subr.mxu0 %v5868
        %5943 = vmatpush1.msra.mxu0 %v5867
        %5944 = vmatprep.subr.mxu0 %v5870
        %5945 = vmatpush1.msra.mxu0 %v5869
        %5946 = vmatprep.subr.mxu0 %v5872
        %5947 = vmatpush1.msra.mxu0 %v5871
        %5948 = vmatprep.subr.mxu0 %v5874
        %5949 = vmatpush1.msra.mxu0 %v5873
        %5950 = vmatprep.mubr.f32.mxu0 %v5883
        %5951 = vmatmul.mubr.f32.gmra.mrb[0].mxu0 %v5879
        %v5952 = vpop.f32.mrb[0].mxu0
        %v5953 = vadd.f32 0.0, %v5952
        %v5954 = vpop.f32.mrb[0].mxu0
        %v5955 = vadd.f32 0.0, %v5954
        %5956 = vdwg.mxu0
        %v5958 = vlaneseq
        %v5959 = vshrl.u32 %v5958, 7
        %v5960 = vsub.s32 0, %v5959
        %v5961 = vrot.slane %v5744, %v5960
        %v5962 = vlaneseq
        %v5963 = vshrl.u32 %v5962, 7
        %v5964 = vsub.s32 1, %v5963
        %v5965 = vrot.slane %v5744, %v5964
        %5968 = vmatprep.subr.mxu0 %v5748
        %5969 = vmatpush1.msra.mxu0 %v5747
        %5970 = vmatprep.subr.mxu0 %v5750
        %5971 = vmatpush1.msra.mxu0 %v5749
        %5972 = vmatprep.subr.mxu0 %v5752
        %5973 = vmatpush1.msra.mxu0 %v5751
        %5974 = vmatprep.subr.mxu0 %v5754
        %5975 = vmatpush1.msra.mxu0 %v5753
        %5976 = vmatprep.subr.mxu0 %v5756
        %5977 = vmatpush1.msra.mxu0 %v5755
        %5978 = vmatprep.subr.mxu0 %v5758
        %5979 = vmatpush1.msra.mxu0 %v5757
        %5980 = vmatprep.subr.mxu0 %v5760
        %5981 = vmatpush1.msra.mxu0 %v5759
        %5982 = vmatprep.subr.mxu0 %v5762
        %5983 = vmatpush1.msra.mxu0 %v5761
        %5984 = vmatprep.subr.mxu0 %v5764
        %5985 = vmatpush1.msra.mxu0 %v5763
        %5986 = vmatprep.subr.mxu0 %v5766
        %5987 = vmatpush1.msra.mxu0 %v5765
        %5988 = vmatprep.subr.mxu0 %v5768
        %5989 = vmatpush1.msra.mxu0 %v5767
        %5990 = vmatprep.subr.mxu0 %v5770
        %5991 = vmatpush1.msra.mxu0 %v5769
        %5992 = vmatprep.subr.mxu0 %v5772
        %5993 = vmatpush1.msra.mxu0 %v5771
        %5994 = vmatprep.subr.mxu0 %v5774
        %5995 = vmatpush1.msra.mxu0 %v5773
        %5996 = vmatprep.subr.mxu0 %v5776
        %5997 = vmatpush1.msra.mxu0 %v5775
        %5998 = vmatprep.subr.mxu0 %v5778
        %5999 = vmatpush1.msra.mxu0 %v5777
        %6000 = vmatprep.subr.mxu0 %v5780
        %6001 = vmatpush1.msra.mxu0 %v5779
        %6002 = vmatprep.subr.mxu0 %v5782
        %6003 = vmatpush1.msra.mxu0 %v5781
        %6004 = vmatprep.subr.mxu0 %v5784
        %6005 = vmatpush1.msra.mxu0 %v5783
        %6006 = vmatprep.subr.mxu0 %v5786
        %6007 = vmatpush1.msra.mxu0 %v5785
        %6008 = vmatprep.subr.mxu0 %v5788
        %6009 = vmatpush1.msra.mxu0 %v5787
        %6010 = vmatprep.subr.mxu0 %v5790
        %6011 = vmatpush1.msra.mxu0 %v5789
        %6012 = vmatprep.subr.mxu0 %v5792
        %6013 = vmatpush1.msra.mxu0 %v5791
        %6014 = vmatprep.subr.mxu0 %v5794
        %6015 = vmatpush1.msra.mxu0 %v5793
        %6016 = vmatprep.subr.mxu0 %v5796
        %6017 = vmatpush1.msra.mxu0 %v5795
        %6018 = vmatprep.subr.mxu0 %v5798
        %6019 = vmatpush1.msra.mxu0 %v5797
        %6020 = vmatprep.subr.mxu0 %v5800
        %6021 = vmatpush1.msra.mxu0 %v5799
        %6022 = vmatprep.subr.mxu0 %v5802
        %6023 = vmatpush1.msra.mxu0 %v5801
        %6024 = vmatprep.subr.mxu0 %v5804
        %6025 = vmatpush1.msra.mxu0 %v5803
        %6026 = vmatprep.subr.mxu0 %v5806
        %6027 = vmatpush1.msra.mxu0 %v5805
        %6028 = vmatprep.subr.mxu0 %v5808
        %6029 = vmatpush1.msra.mxu0 %v5807
        %6030 = vmatprep.subr.mxu0 %v5810
        %6031 = vmatpush1.msra.mxu0 %v5809
        %6032 = vmatprep.mubr.f32.mxu0 %v5965
        %6033 = vmatmul.mubr.f32.gmra.mrb[0].mxu0 %v5961
        %v6034 = vpop.f32.mrb[0].mxu0
        %v6035 = vadd.f32 %v5953, %v6034
        %v6036 = vpop.f32.mrb[0].mxu0
        %v6037 = vadd.f32 %v5955, %v6036
        %6038 = vdwg.mxu0
        %v6039 = vld [vmem:[%s1234] sm:$0xff]
        %v6040 = vld [vmem:[%s1234 + $0x8] sm:$0xff]
        %v6041 = vld [vmem:[%s1234 + $0x10] sm:$0xff]
        %v6042 = vld [vmem:[%s1234 + $0x18] sm:$0xff]
        %v6043 = vld [vmem:[%s1234 + $0x20] sm:$0xff]
        %v6044 = vld [vmem:[%s1234 + $0x28] sm:$0xff]
        %v6045 = vld [vmem:[%s1234 + $0x30] sm:$0xff]
        %v6046 = vld [vmem:[%s1234 + $0x38] sm:$0xff]
        %v6047 = vld [vmem:[%s1234 + $0x40] sm:$0xff]
        %v6048 = vld [vmem:[%s1234 + $0x48] sm:$0xff]
        %v6049 = vld [vmem:[%s1234 + $0x50] sm:$0xff]
        %v6050 = vld [vmem:[%s1234 + $0x58] sm:$0xff]
        %v6051 = vld [vmem:[%s1234 + $0x60] sm:$0xff]
        %v6052 = vld [vmem:[%s1234 + $0x68] sm:$0xff]
        %v6053 = vld [vmem:[%s1234 + $0x70] sm:$0xff]
        %v6054 = vld [vmem:[%s1234 + $0x78] sm:$0xff]
        %v6055 = vld [vmem:[%s1234 + $0x80] sm:$0xff]
        %v6056 = vld [vmem:[%s1234 + $0x88] sm:$0xff]
        %v6057 = vld [vmem:[%s1234 + $0x90] sm:$0xff]
        %v6058 = vld [vmem:[%s1234 + $0x98] sm:$0xff]
        %v6059 = vld [vmem:[%s1234 + $0xa0] sm:$0xff]
        %v6060 = vld [vmem:[%s1234 + $0xa8] sm:$0xff]
        %v6061 = vld [vmem:[%s1234 + $0xb0] sm:$0xff]
        %v6062 = vld [vmem:[%s1234 + $0xb8] sm:$0xff]
        %v6063 = vld [vmem:[%s1234 + $0xc0] sm:$0xff]
        %v6064 = vld [vmem:[%s1234 + $0xc8] sm:$0xff]
        %v6065 = vld [vmem:[%s1234 + $0xd0] sm:$0xff]
        %v6066 = vld [vmem:[%s1234 + $0xd8] sm:$0xff]
        %v6067 = vld [vmem:[%s1234 + $0xe0] sm:$0xff]
        %v6068 = vld [vmem:[%s1234 + $0xe8] sm:$0xff]
        %v6069 = vld [vmem:[%s1234 + $0xf0] sm:$0xff]
        %v6070 = vld [vmem:[%s1234 + $0xf8] sm:$0xff]
        %v6071 = vld [vmem:[%s1234 + $0x100] sm:$0xff]
        %v6072 = vld [vmem:[%s1234 + $0x108] sm:$0xff]
        %v6073 = vld [vmem:[%s1234 + $0x110] sm:$0xff]
        %v6074 = vld [vmem:[%s1234 + $0x118] sm:$0xff]
        %v6075 = vld [vmem:[%s1234 + $0x120] sm:$0xff]
        %v6076 = vld [vmem:[%s1234 + $0x128] sm:$0xff]
        %v6077 = vld [vmem:[%s1234 + $0x130] sm:$0xff]
        %v6078 = vld [vmem:[%s1234 + $0x138] sm:$0xff]
        %v6079 = vld [vmem:[%s1234 + $0x140] sm:$0xff]
        %v6080 = vld [vmem:[%s1234 + $0x148] sm:$0xff]
        %v6081 = vld [vmem:[%s1234 + $0x150] sm:$0xff]
        %v6082 = vld [vmem:[%s1234 + $0x158] sm:$0xff]
        %v6083 = vld [vmem:[%s1234 + $0x160] sm:$0xff]
        %v6084 = vld [vmem:[%s1234 + $0x168] sm:$0xff]
        %v6085 = vld [vmem:[%s1234 + $0x170] sm:$0xff]
        %v6086 = vld [vmem:[%s1234 + $0x178] sm:$0xff]
        %v6087 = vld [vmem:[%s1234 + $0x180] sm:$0xff]
        %v6088 = vld [vmem:[%s1234 + $0x188] sm:$0xff]
        %v6089 = vld [vmem:[%s1234 + $0x190] sm:$0xff]
        %v6090 = vld [vmem:[%s1234 + $0x198] sm:$0xff]
        %v6091 = vld [vmem:[%s1234 + $0x1a0] sm:$0xff]
        %v6092 = vld [vmem:[%s1234 + $0x1a8] sm:$0xff]
        %v6093 = vld [vmem:[%s1234 + $0x1b0] sm:$0xff]
        %v6094 = vld [vmem:[%s1234 + $0x1b8] sm:$0xff]
        %v6095 = vld [vmem:[%s1234 + $0x1c0] sm:$0xff]
        %v6096 = vld [vmem:[%s1234 + $0x1c8] sm:$0xff]
        %v6097 = vld [vmem:[%s1234 + $0x1d0] sm:$0xff]
        %v6098 = vld [vmem:[%s1234 + $0x1d8] sm:$0xff]
        %v6099 = vld [vmem:[%s1234 + $0x1e0] sm:$0xff]
        %v6100 = vld [vmem:[%s1234 + $0x1e8] sm:$0xff]
        %v6101 = vld [vmem:[%s1234 + $0x1f0] sm:$0xff]
        %v6102 = vld [vmem:[%s1234 + $0x1f8] sm:$0xff]
        %v6104 = vlaneseq
        %v6105 = vshrl.u32 %v6104, 7
        %v6106 = vsub.s32 0, %v6105
        %v6107 = vrot.slane %v5746, %v6106
        %v6108 = vlaneseq
        %v6109 = vshrl.u32 %v6108, 7
        %v6110 = vsub.s32 1, %v6109
        %v6111 = vrot.slane %v5746, %v6110
        %6114 = vmatprep.subr.mxu0 %v6040
        %6115 = vmatpush1.msra.mxu0 %v6039
        %6116 = vmatprep.subr.mxu0 %v6042
        %6117 = vmatpush1.msra.mxu0 %v6041
        %6118 = vmatprep.subr.mxu0 %v6044
        %6119 = vmatpush1.msra.mxu0 %v6043
        %6120 = vmatprep.subr.mxu0 %v6046
        %6121 = vmatpush1.msra.mxu0 %v6045
        %6122 = vmatprep.subr.mxu0 %v6048
        %6123 = vmatpush1.msra.mxu0 %v6047
        %6124 = vmatprep.subr.mxu0 %v6050
        %6125 = vmatpush1.msra.mxu0 %v6049
        %6126 = vmatprep.subr.mxu0 %v6052
        %6127 = vmatpush1.msra.mxu0 %v6051
        %6128 = vmatprep.subr.mxu0 %v6054
        %6129 = vmatpush1.msra.mxu0 %v6053
        %6130 = vmatprep.subr.mxu0 %v6056
        %6131 = vmatpush1.msra.mxu0 %v6055
        %6132 = vmatprep.subr.mxu0 %v6058
        %6133 = vmatpush1.msra.mxu0 %v6057
        %6134 = vmatprep.subr.mxu0 %v6060
        %6135 = vmatpush1.msra.mxu0 %v6059
        %6136 = vmatprep.subr.mxu0 %v6062
        %6137 = vmatpush1.msra.mxu0 %v6061
        %6138 = vmatprep.subr.mxu0 %v6064
        %6139 = vmatpush1.msra.mxu0 %v6063
        %6140 = vmatprep.subr.mxu0 %v6066
        %6141 = vmatpush1.msra.mxu0 %v6065
        %6142 = vmatprep.subr.mxu0 %v6068
        %6143 = vmatpush1.msra.mxu0 %v6067
        %6144 = vmatprep.subr.mxu0 %v6070
        %6145 = vmatpush1.msra.mxu0 %v6069
        %6146 = vmatprep.subr.mxu0 %v6072
        %6147 = vmatpush1.msra.mxu0 %v6071
        %6148 = vmatprep.subr.mxu0 %v6074
        %6149 = vmatpush1.msra.mxu0 %v6073
        %6150 = vmatprep.subr.mxu0 %v6076
        %6151 = vmatpush1.msra.mxu0 %v6075
        %6152 = vmatprep.subr.mxu0 %v6078
        %6153 = vmatpush1.msra.mxu0 %v6077
        %6154 = vmatprep.subr.mxu0 %v6080
        %6155 = vmatpush1.msra.mxu0 %v6079
        %6156 = vmatprep.subr.mxu0 %v6082
        %6157 = vmatpush1.msra.mxu0 %v6081
        %6158 = vmatprep.subr.mxu0 %v6084
        %6159 = vmatpush1.msra.mxu0 %v6083
        %6160 = vmatprep.subr.mxu0 %v6086
        %6161 = vmatpush1.msra.mxu0 %v6085
        %6162 = vmatprep.subr.mxu0 %v6088
        %6163 = vmatpush1.msra.mxu0 %v6087
        %6164 = vmatprep.subr.mxu0 %v6090
        %6165 = vmatpush1.msra.mxu0 %v6089
        %6166 = vmatprep.subr.mxu0 %v6092
        %6167 = vmatpush1.msra.mxu0 %v6091
        %6168 = vmatprep.subr.mxu0 %v6094
        %6169 = vmatpush1.msra.mxu0 %v6093
        %6170 = vmatprep.subr.mxu0 %v6096
        %6171 = vmatpush1.msra.mxu0 %v6095
        %6172 = vmatprep.subr.mxu0 %v6098
        %6173 = vmatpush1.msra.mxu0 %v6097
        %6174 = vmatprep.subr.mxu0 %v6100
        %6175 = vmatpush1.msra.mxu0 %v6099
        %6176 = vmatprep.subr.mxu0 %v6102
        %6177 = vmatpush1.msra.mxu0 %v6101
        %6178 = vmatprep.mubr.f32.mxu0 %v6111
        %6179 = vmatmul.mubr.f32.gmra.mrb[0].mxu0 %v6107
        %v6180 = vpop.f32.mrb[0].mxu0
        %v6181 = vadd.f32 0.0, %v6180
        %v6182 = vpop.f32.mrb[0].mxu0
        %v6183 = vadd.f32 0.0, %v6182
        %6184 = vdwg.mxu0
        %v6185 = vadd.f32 %v6035, %v6181
        %v6186 = vadd.f32 %v6037, %v6183
        %v6187 = vadd.f32 %v6185, %v1402
        %v6188 = vadd.f32 %v6186, %v1406
        %v6189 = vadd.f32 %v5243, %v6187
        %v6190 = vadd.f32 %v5244, %v6188
        %v6193 = vcombine.low %v6189, %v6190
        %v6195 = vunpack.c.l.s4 1966171168
        %v6196 = vunpack.c.0.s8 %v6195
        %v6197 = vlaneseq
        %v6198 = vshrl.u32 %v6197, 7
        %v6199 = vsub.s32 %v6196, %v6198
        %v6200 = vrot.slane %v6193, %v6199
        %v6202 = vunpack.c.l.s4 1966171168
        %v6203 = vunpack.c.0.s8 %v6202
        %v6204 = vlaneseq
        %v6205 = vshrl.u32 %v6204, 7
        %v6206 = vsub.s32 %v6203, %v6205
        %v6207 = vrot.slane %v6200, %v6206
        %6209 = vst.msk [vmem:[%s367] sm:$0x3] %vm859, %v6207
        %v6210 = vld [vmem:[%s5] sm:$0xff]
        %v6211 = vld [vmem:[%s5 + $0x8] sm:$0xff]
        %v6212 = vld [vmem:[%s5 + $0x10] sm:$0xff]
        %v6213 = vld [vmem:[%s5 + $0x18] sm:$0xff]
        %v6214 = vld [vmem:[%s5 + $0x20] sm:$0xff]
        %v6215 = vld [vmem:[%s5 + $0x28] sm:$0xff]
        %v6216 = vld [vmem:[%s5 + $0x30] sm:$0xff]
        %v6217 = vld [vmem:[%s5 + $0x38] sm:$0xff]
        %v6218 = vld [vmem:[%s5 + $0x40] sm:$0xff]
        %v6219 = vld [vmem:[%s5 + $0x48] sm:$0xff]
        %v6220 = vld [vmem:[%s5 + $0x50] sm:$0xff]
        %v6221 = vld [vmem:[%s5 + $0x58] sm:$0xff]
        %v6222 = vld [vmem:[%s5 + $0x60] sm:$0xff]
        %v6223 = vld [vmem:[%s5 + $0x68] sm:$0xff]
        %v6224 = vld [vmem:[%s5 + $0x70] sm:$0xff]
        %v6225 = vld [vmem:[%s5 + $0x78] sm:$0xff]
        %v6226 = vld [vmem:[%s5 + $0x80] sm:$0xff]
        %v6227 = vld [vmem:[%s5 + $0x88] sm:$0xff]
        %v6228 = vld [vmem:[%s5 + $0x90] sm:$0xff]
        %v6229 = vld [vmem:[%s5 + $0x98] sm:$0xff]
        %v6230 = vld [vmem:[%s5 + $0xa0] sm:$0xff]
        %v6231 = vld [vmem:[%s5 + $0xa8] sm:$0xff]
        %v6232 = vld [vmem:[%s5 + $0xb0] sm:$0xff]
        %v6233 = vld [vmem:[%s5 + $0xb8] sm:$0xff]
        %v6234 = vld [vmem:[%s5 + $0xc0] sm:$0xff]
        %v6235 = vld [vmem:[%s5 + $0xc8] sm:$0xff]
        %v6236 = vld [vmem:[%s5 + $0xd0] sm:$0xff]
        %v6237 = vld [vmem:[%s5 + $0xd8] sm:$0xff]
        %v6238 = vld [vmem:[%s5 + $0xe0] sm:$0xff]
        %v6239 = vld [vmem:[%s5 + $0xe8] sm:$0xff]
        %v6240 = vld [vmem:[%s5 + $0xf0] sm:$0xff]
        %v6241 = vld [vmem:[%s5 + $0xf8] sm:$0xff]
        %v6242 = vld [vmem:[%s6] sm:$0x1]
        %6243 = vmatprep.subr.mxu0 0.0
        %6244 = vmatpush1.msra.mxu0 %v6210
        %6245 = vmatprep.subr.mxu0 0.0
        %6246 = vmatpush1.msra.mxu0 %v6211
        %6247 = vmatprep.subr.mxu0 0.0
        %6248 = vmatpush1.msra.mxu0 %v6212
        %6249 = vmatprep.subr.mxu0 0.0
        %6250 = vmatpush1.msra.mxu0 %v6213
        %6251 = vmatprep.subr.mxu0 0.0
        %6252 = vmatpush1.msra.mxu0 %v6214
        %6253 = vmatprep.subr.mxu0 0.0
        %6254 = vmatpush1.msra.mxu0 %v6215
        %6255 = vmatprep.subr.mxu0 0.0
        %6256 = vmatpush1.msra.mxu0 %v6216
        %6257 = vmatprep.subr.mxu0 0.0
        %6258 = vmatpush1.msra.mxu0 %v6217
        %6259 = vmatprep.subr.mxu0 0.0
        %6260 = vmatpush1.msra.mxu0 %v6218
        %6261 = vmatprep.subr.mxu0 0.0
        %6262 = vmatpush1.msra.mxu0 %v6219
        %6263 = vmatprep.subr.mxu0 0.0
        %6264 = vmatpush1.msra.mxu0 %v6220
        %6265 = vmatprep.subr.mxu0 0.0
        %6266 = vmatpush1.msra.mxu0 %v6221
        %6267 = vmatprep.subr.mxu0 0.0
        %6268 = vmatpush1.msra.mxu0 %v6222
        %6269 = vmatprep.subr.mxu0 0.0
        %6270 = vmatpush1.msra.mxu0 %v6223
        %6271 = vmatprep.subr.mxu0 0.0
        %6272 = vmatpush1.msra.mxu0 %v6224
        %6273 = vmatprep.subr.mxu0 0.0
        %6274 = vmatpush1.msra.mxu0 %v6225
        %6275 = vmatprep.subr.mxu0 0.0
        %6276 = vmatpush1.msra.mxu0 %v6226
        %6277 = vmatprep.subr.mxu0 0.0
        %6278 = vmatpush1.msra.mxu0 %v6227
        %6279 = vmatprep.subr.mxu0 0.0
        %6280 = vmatpush1.msra.mxu0 %v6228
        %6281 = vmatprep.subr.mxu0 0.0
        %6282 = vmatpush1.msra.mxu0 %v6229
        %6283 = vmatprep.subr.mxu0 0.0
        %6284 = vmatpush1.msra.mxu0 %v6230
        %6285 = vmatprep.subr.mxu0 0.0
        %6286 = vmatpush1.msra.mxu0 %v6231
        %6287 = vmatprep.subr.mxu0 0.0
        %6288 = vmatpush1.msra.mxu0 %v6232
        %6289 = vmatprep.subr.mxu0 0.0
        %6290 = vmatpush1.msra.mxu0 %v6233
        %6291 = vmatprep.subr.mxu0 0.0
        %6292 = vmatpush1.msra.mxu0 %v6234
        %6293 = vmatprep.subr.mxu0 0.0
        %6294 = vmatpush1.msra.mxu0 %v6235
        %6295 = vmatprep.subr.mxu0 0.0
        %6296 = vmatpush1.msra.mxu0 %v6236
        %6297 = vmatprep.subr.mxu0 0.0
        %6298 = vmatpush1.msra.mxu0 %v6237
        %6299 = vmatprep.subr.mxu0 0.0
        %6300 = vmatpush1.msra.mxu0 %v6238
        %6301 = vmatprep.subr.mxu0 0.0
        %6302 = vmatpush1.msra.mxu0 %v6239
        %6303 = vmatprep.subr.mxu0 0.0
        %6304 = vmatpush1.msra.mxu0 %v6240
        %6305 = vmatprep.subr.mxu0 0.0
        %6306 = vmatpush1.msra.mxu0 %v6241
        %6307 = vmatprep.mubr.f32.mxu0 %v6190
        %6308 = vmatmul.mubr.f32.gmra.mrb[0].mxu0 %v6189
        %v6309 = vpop.f32.mrb[0].mxu0
        %v6310 = vadd.f32 %v6242, %v6309
        %v6311 = vpop.f32.mrb[0].mxu0
        %6312 = vdwg.mxu0
        %v6313 = vsel %vm869, %v6310, -inf
        %6314 = vmax.xlane.f32.xlu0 %v6313
        %v6315 = vpop.xlane.xlu0 %6314
        %v6316 = vsub.f32 %v6310, %v6315
        %v6317 = vmul.f32 %v6316, 1.442695
        %v6318 = vpow.pop %v6317
        %v6319 = vsel %vm869, %v6318, 0.0
        %6320 = vadd.xlane.f32.xlu0 %v6319
        %v6321 = vpop.xlane.xlu0 %6320
        %v6322 = vrcp.pop %v6321
        %v6323 = vmul.f32 %v6318, %v6322
        %6324 = vst [vmem:[%s352] sm:$0x1] %v6323
        %s6325 = sand.u32 %s227, 1
        %s6326 = scalar_lea.sflag [#allocation4], %s6325
        %s6327 = sand.u32 %s227, 1
        %s6328 = scalar_lea.vmem [#allocation3], %s6327
        %p6329 = scmp.lt.s32.totalorder %s25, 1
        %s6330 = scalar_select %p6329, %s25, 1
        %s6331 = smul.addr %s6330, 2
        %s6332 = scalar_lea.vmem %s10, %s6331
        // Predicated region
        $region57: #{dpcnn_forward.1} parent=55 // pred_check
          %p6333 = pneg %p237
        $region58: #{dpcnn_forward.1} parent=55 // pred_check_branch
          %6335 = sbr.rel (%p6333) target = $region60
        $region59: #{dpcnn_forward.1} parent=55 // pred_region
          %s6337 = ssub.s32 16, 16
          %6338 = vsyncadd %s6326, %s6337
          %s6339 = smul.addr %s25, 16
          %s6340 = scalar_lea.hbm %s9, %s6339
          %s6342 = sshll.u32 %s6328, 4
          %s6343 = int_to_ptr.vmem [resolvable:$true] %s6342
          %6345 = dma.vmem_to_hbm [thread:$0]  %s6343, 16, %s6340, %s6326
        $region60: #{dpcnn_forward.1} parent=55 // pred_fallthru
          _
        // Predicated region
        $region61: #{dpcnn_forward.1} parent=55 // pred_check
          %p6346 = pneg %p263
        $region62: #{dpcnn_forward.1} parent=55 // pred_check_branch
          %6348 = sbr.rel (%p6346) target = $region64
        $region63: #{dpcnn_forward.1} parent=55 // pred_region
          _
        $region64: #{dpcnn_forward.1} parent=55 // pred_fallthru
          _
      $region56: #{dpcnn_forward.1} parent=5 // pred_fallthru
        _
      %p6349 = scmp.le.s32.totalorder 2, %s20
      // Predicated region
      $region65: #{dpcnn_forward.1} parent=5 // pred_check
        %p6350 = pneg %p6349
      $region66: #{dpcnn_forward.1} parent=5 // pred_check_branch
        %6352 = sbr.rel (%p6350) target = $region68
      $region67: #{dpcnn_forward.1} parent=5 // pred_region
        %s6353 = ssub.s32 %s20, 2
        // Predicated region
        $region69: #{dpcnn_forward.1} parent=67 // pred_check
          %p6354 = pneg %p243
        $region70: #{dpcnn_forward.1} parent=67 // pred_check_branch
          %6356 = sbr.rel (%p6354) target = $region72
        $region71: #{dpcnn_forward.1} parent=67 // pred_region
          %s6357 = sand.u32 %s228, 1
          %s6358 = scalar_lea.sflag [#allocation4], %s6357
          %s6359 = sand.u32 %s228, 1
          %s6360 = scalar_lea.vmem [#allocation3], %s6359
          %6361 = dma.done %s6358, 16
        $region72: #{dpcnn_forward.1} parent=67 // pred_fallthru
          _
        // Predicated region
        $region73: #{dpcnn_forward.1} parent=67 // pred_check
          %p6362 = pneg %p269
        $region74: #{dpcnn_forward.1} parent=67 // pred_check_branch
          %6364 = sbr.rel (%p6362) target = $region76
        $region75: #{dpcnn_forward.1} parent=67 // pred_region
          %p6365 = scmp.lt.s32.totalorder %s26, 1
          %s6366 = scalar_select %p6365, %s26, 1
          %s6367 = smul.addr %s6366, 2
          %s6368 = scalar_lea.vmem %s10, %s6367
        $region76: #{dpcnn_forward.1} parent=67 // pred_fallthru
          _
      $region68: #{dpcnn_forward.1} parent=5 // pred_fallthru
        _
    $region6: #{dpcnn_forward.1} parent=1 // loop_footer
      %s24 = sadd.s32 1, %s20
    $region7: #{dpcnn_forward.1} parent=1 // loop_footer_branch
      %19 = sbr.rel target = $region3
    $region8: #{dpcnn_forward.1} parent=1 // loop_exit
      _
    %6369 = vsyncpa [#allocation4], 1
    %s6370 = scalar_lea.sflag [#allocation4], 1
    %6371 = vsyncpa %s6370, 1

</llo_original>
